<compile_context>
chip_gen: v7x
topology: tpu7x:2x2x1
jax: 0.10.0
libtpu: 0.0.40
codegen_flags: <defaults>
</compile_context>

<pallas_src>
import functools

import numpy as np
import jax
import jax.numpy as jnp
from jax.experimental import pallas as pl
from jax.experimental.pallas import tpu as pltpu

_LN_EPS = 1e-6


# ----------------------------------------------------------------------------
# in-kernel math helpers
# ----------------------------------------------------------------------------
def _layernorm(x, w, b, eps=_LN_EPS):
    mu = jnp.mean(x, axis=-1, keepdims=True)
    var = jnp.mean(jnp.square(x - mu), axis=-1, keepdims=True)
    return (x - mu) * jax.lax.rsqrt(var + eps) * w + b


def _gelu_tanh(x):
    # TODO(synk): PyTorch nn.GELU() is the exact erf form; tanh form (EUP slot)
    # differs by ~1e-3 abs but is much cheaper on the widest (tt, 4*D) tensor.
    c = 0.7978845608028654  # sqrt(2/pi)
    return 0.5 * x * (1.0 + jnp.tanh(c * (x + 0.044715 * x * x * x)))


# ----------------------------------------------------------------------------
# Pallas kernels
# ----------------------------------------------------------------------------
def embed_kernel(xp_ref, w_ref, b_ref, cls_ref, pos_ref, out_ref):
    # xp: (1, N, Kp) bf16, w: (Kp, D) bf16, b/cls: (1, D) f32, pos: (T, D) f32
    tokens = (jnp.dot(xp_ref[0], w_ref[...], preferred_element_type=jnp.float32)
              + b_ref[...])                                        # (N, D) f32
    # fused cls prepend + positional embedding add
    out_ref[0] = jnp.concatenate([cls_ref[...], tokens], axis=0) + pos_ref[...]


def ln_qkv_kernel(x_ref, ln1w_ref, ln1b_ref, wq_ref, wk_ref, wv_ref,
                  bq_ref, bk_ref, bv_ref, q_ref, k_ref, v_ref):
    # x block: (1, tt, D) f32.  Softmax scale pre-folded into wq/bq.
    x = x_ref[0]
    xn = _layernorm(x, ln1w_ref[...], ln1b_ref[...]).astype(jnp.bfloat16)
    for w_r, b_r, o_r in ((wq_ref, bq_ref, q_ref),
                          (wk_ref, bk_ref, k_ref),
                          (wv_ref, bv_ref, v_ref)):
        o = jnp.dot(xn, w_r[...], preferred_element_type=jnp.float32) + b_r[...]
        o_r[0] = o.astype(o_r.dtype)


def attention_kernel(q_ref, k_ref, v_ref, o_ref, *, hg, hd):
    # blocks: (1, T, hg*hd) bf16 sliced lane-wise straight out of (B, T, D);
    # grid = (B, D // (hg*hd)).  Heads of the group handled by an unrolled
    # Python loop; output re-assembled lane-dense (>=128 lanes) for the store.
    q = q_ref[0]
    k = k_ref[0]
    v = v_ref[0]
    outs = []
    for h in range(hg):
        lo, hi = h * hd, (h + 1) * hd
        qh = q[:, lo:hi]
        kh = k[:, lo:hi]
        vh = v[:, lo:hi]
        s = jax.lax.dot_general(qh, kh, (((1,), (1,)), ((), ())),
                                preferred_element_type=jnp.float32)   # (T, T)
        s = s - jnp.max(s, axis=-1, keepdims=True)
        e = jnp.exp(s)
        p = e * pl.reciprocal(jnp.sum(e, axis=-1, keepdims=True), approx=True)
        outs.append(jnp.dot(p.astype(jnp.bfloat16), vh,
                            preferred_element_type=jnp.float32))
    o_ref[0] = jnp.concatenate(outs, axis=-1).astype(o_ref.dtype)


def proj_mlp_kernel(x_ref, a_ref, pw_ref, pb_ref, ln2w_ref, ln2b_ref,
                    f1w_ref, f1b_ref, f2w_ref, f2b_ref, fnw_ref, fnb_ref,
                    out_ref, *, final_ln):
    # x block: (1, tt, D) f32 residual stream; attn block: (1, tt, D) bf16.
    x = x_ref[0]
    attn = (jnp.dot(a_ref[0], pw_ref[...], preferred_element_type=jnp.float32)
            + pb_ref[...])                        # LayerScale ls1 folded in
    x1 = x + attn
    xn2 = _layernorm(x1, ln2w_ref[...], ln2b_ref[...]).astype(jnp.bfloat16)
    h = jnp.dot(xn2, f1w_ref[...], preferred_element_type=jnp.float32) + f1b_ref[...]
    h = _gelu_tanh(h).astype(jnp.bfloat16)
    mlp = jnp.dot(h, f2w_ref[...], preferred_element_type=jnp.float32) + f2b_ref[...]
    y = x1 + mlp                                  # LayerScale ls2 folded in
    if final_ln:                                  # fused final LayerNorm
        y = _layernorm(y, fnw_ref[...], fnb_ref[...])
    out_ref[0] = y


# ----------------------------------------------------------------------------
# tiling / compiler-param helpers
# ----------------------------------------------------------------------------
def _token_tile(T, per_token_bytes, budget=24 << 20, max_tile=256):
    """Largest token tile that (a) divides T, (b) is a multiple of 8 and
    (c) keeps the per-step working set within a v7x-safe VMEM budget."""
    cap = min(max_tile, max(8, budget // max(per_token_bytes, 1)))
    start = min(cap, T)
    start -= start % 8
    for cand in range(start, 7, -8):
        if T % cand == 0:
            return cand
    # TODO(synk): T not divisible by 8 -> fall back to full sequence; a cdiv
    # grid + token masking would allow tiling ragged T.
    return T


def _mosaic_params(dim_sem, need_bytes):
    # Explicit scoped-VMEM limit sized from resident weights + double-buffered
    # tiles (+ headroom), floored at the 32 MiB default and capped below
    # v7x's 64 MiB physical VMEM.
    limit = int(min(max(need_bytes + (8 << 20), 32 << 20), 56 << 20))
    return pltpu.CompilerParams(dimension_semantics=dim_sem,
                                vmem_limit_bytes=limit)


# ----------------------------------------------------------------------------
# pallas_call wrappers
# ----------------------------------------------------------------------------
def embed_call(xp, w, b, cls, pos):
    B, N, Kp = xp.shape
    D = w.shape[1]
    T = pos.shape[0]
    need = 2 * N * Kp * 2 + Kp * D * 2 + 2 * T * D * 4 + T * D * 4
    return pl.pallas_call(
        embed_kernel,
        out_shape=jax.ShapeDtypeStruct((B, T, D), jnp.float32),
        grid=(B,),
        in_specs=[
            pl.BlockSpec((1, N, Kp), lambda bi: (bi, 0, 0)),
            pl.BlockSpec((Kp, D), lambda bi: (0, 0)),
            pl.BlockSpec((1, D), lambda bi: (0, 0)),
            pl.BlockSpec((1, D), lambda bi: (0, 0)),
            pl.BlockSpec((T, D), lambda bi: (0, 0)),
        ],
        out_specs=pl.BlockSpec((1, T, D), lambda bi: (bi, 0, 0)),
        compiler_params=_mosaic_params(("parallel",), need),
    )(xp, w, b, cls, pos)


def ln_qkv_call(x, layer, *, tt):
    B, T, D = x.shape
    xspec = pl.BlockSpec((1, tt, D), lambda b, t: (b, t, 0))
    wspec = pl.BlockSpec((D, D), lambda b, t: (0, 0))
    vspec = pl.BlockSpec((1, D), lambda b, t: (0, 0))
    out_shape = jax.ShapeDtypeStruct((B, T, D), jnp.bfloat16)
    need = 3 * D * D * 2 + 2 * tt * D * 4 + 6 * tt * D * 2 + 2 * tt * D * 4
    return pl.pallas_call(
        ln_qkv_kernel,
        out_shape=(out_shape,) * 3,
        grid=(B, T // tt),
        in_specs=[xspec, vspec, vspec, wspec, wspec, wspec, vspec, vspec, vspec],
        out_specs=(xspec,) * 3,
        compiler_params=_mosaic_params(("parallel", "parallel"), need),
    )(x, layer["ln1_w"], layer["ln1_b"],
      layer["wq"], layer["wk"], layer["wv"],
      layer["bq"], layer["bk"], layer["bv"])


def attention_call(q, k, v, *, heads):
    B, T, D = q.shape
    hd = D // heads
    # pack enough heads per grid step to make the block lane width >= 128
    hg = max(1, min(heads, 128 // hd)) if hd < 128 else 1
    while heads % hg:
        hg -= 1
    gw = hg * hd
    if gw % 128 != 0 and gw != D:
        hg, gw = heads, D            # fall back: all heads in one block
    ng = D // gw
    spec = pl.BlockSpec((1, T, gw), lambda b, g: (b, 0, g))
    need = 8 * T * gw * 2 + 2 * T * T * 4
    kernel = functools.partial(attention_kernel, hg=hg, hd=hd)
    return pl.pallas_call(
        kernel,
        out_shape=jax.ShapeDtypeStruct((B, T, D), jnp.bfloat16),
        grid=(B, ng),
        in_specs=[spec] * 3,
        out_specs=spec,
        compiler_params=_mosaic_params(("parallel", "parallel"), need),
    )(q, k, v)


def proj_mlp_call(x, attn_o, layer, norm_w, norm_b, *, tt, final_ln):
    B, T, D = x.shape
    Dh = layer["fc1_w"].shape[1]
    xspec = pl.BlockSpec((1, tt, D), lambda b, t: (b, t, 0))

    def full(shape):
        return pl.BlockSpec(shape, lambda b, t: (0,) * len(shape))

    need = (D * D + 2 * D * Dh) * 2 + 4 * tt * D * 4 + 2 * tt * D * 2 + 2 * tt * Dh * 4
    kernel = functools.partial(proj_mlp_kernel, final_ln=final_ln)
    return pl.pallas_call(
        kernel,
        out_shape=jax.ShapeDtypeStruct((B, T, D), jnp.float32),
        grid=(B, T // tt),
        in_specs=[
            xspec, xspec,
            full((D, D)), full((1, D)),
            full((1, D)), full((1, D)),
            full((D, Dh)), full((1, Dh)),
            full((Dh, D)), full((1, D)),
            full((1, D)), full((1, D)),
        ],
        out_specs=xspec,
        input_output_aliases={0: 0},   # residual stream updated in place
        compiler_params=_mosaic_params(("parallel", "parallel"), need),
    )(x, attn_o, layer["proj_w_ls"], layer["proj_b_ls"],
      layer["ln2_w"], layer["ln2_b"],
      layer["fc1_w"], layer["fc1_b"],
      layer["fc2_w_ls"], layer["fc2_b_ls"],
      norm_w, norm_b)


# ----------------------------------------------------------------------------
# forward pass (mirrors DinoV2FeatureExtractor.forward)
# ----------------------------------------------------------------------------
def dinov2_feature_extractor(x, params, *, patch, heads):
    B, C, Himg, Wimg = x.shape
    sh, sw = Himg // patch, Wimg // patch
    N = sh * sw
    T = N + 1
    D = params["patch_w"].shape[1]
    Dh = params["blocks"][0]["fc1_w"].shape[1] if params["blocks"] else 4 * D

    # --- patchify (glue): Conv2d(k=p, s=p) == matmul over flattened patches ---
    xp = x.reshape(B, C, sh, patch, sw, patch)
    xp = jnp.transpose(xp, (0, 2, 4, 1, 3, 5)).reshape(B, N, C * patch * patch)
    Kp = params["patch_w"].shape[0]      # K zero-padded to a 128 multiple
    xp = jnp.pad(xp, ((0, 0), (0, 0), (0, Kp - xp.shape[-1]))).astype(jnp.bfloat16)

    # --- patch embed + cls prepend + pos_embed add, fused in one kernel ---
    # TODO(synk): DINOv2 bicubically interpolates pos_embed for non-518 inputs;
    # pos_embed here is built at the target token count, so interpolation is identity.
    h = embed_call(xp, params["patch_w"], params["patch_b"],
                   params["cls_token"], params["pos_embed"])       # (B, T, D) f32

    tt_qkv = _token_tile(T, per_token_bytes=20 * D)
    tt_mlp = _token_tile(T, per_token_bytes=20 * D + 8 * Dh)

    # --- transformer blocks (Pallas; no head relayout transposes) ---
    n_blocks = len(params["blocks"])
    for i, layer in enumerate(params["blocks"]):
        q, k, v = ln_qkv_call(h, layer, tt=tt_qkv)                 # (B, T, D) bf16
        o = attention_call(q, k, v, heads=heads)                   # (B, T, D) bf16
        h = proj_mlp_call(h, o, layer, params["norm_w"], params["norm_b"],
                          tt=tt_mlp, final_ln=(i == n_blocks - 1)) # final LN fused

    # --- x_norm_patchtokens -> NCHW feature map (glue) ---
    dino_feature = h[:, 1:, :]                                     # (B, N, D)
    assert dino_feature.shape[1] == sh * sw
    fmap = dino_feature.reshape(B, sh, sw, D)
    return jnp.transpose(fmap, (0, 3, 1, 2))                       # (B, D, sh, sw)


# ----------------------------------------------------------------------------
# synthetic parameters (PyTorch-like layout), then offline folding / bf16 cast
# ----------------------------------------------------------------------------
def init_params(key, *, depth, dim, in_chans, patch, num_tokens, mlp_ratio=4):
    D = dim
    Dh = mlp_ratio * D
    K = in_chans * patch * patch
    keys = iter(jax.random.split(key, 8 + depth * 8))

    def randn(shape, scale=0.02):
        return scale * jax.random.normal(next(keys), shape, jnp.float32)

    params = {
        "patch_w": randn((K, D)),
        "patch_b": randn((1, D)),
        "cls_token": randn((1, 1, D)),
        "pos_embed": randn((1, num_tokens, D)),
        "norm_w": jnp.ones((1, D), jnp.float32),
        "norm_b": jnp.zeros((1, D), jnp.float32),
        "blocks": [],
    }
    for _ in range(depth):
        params["blocks"].append({
            "ln1_w": jnp.ones((1, D), jnp.float32),
            "ln1_b": jnp.zeros((1, D), jnp.float32),
            "qkv_w": randn((D, 3 * D)),
            "qkv_b": randn((1, 3 * D)),
            "proj_w": randn((D, D)),
            "proj_b": randn((1, D)),
            "ls1": jnp.ones((1, D), jnp.float32),     # LayerScale init_values=1.0
            "ln2_w": jnp.ones((1, D), jnp.float32),
            "ln2_b": jnp.zeros((1, D), jnp.float32),
            "fc1_w": randn((D, Dh)),
            "fc1_b": randn((1, Dh)),
            "fc2_w": randn((Dh, D)),
            "fc2_b": randn((1, D)),
            "ls2": jnp.ones((1, D), jnp.float32),
        })
    return params


def prepare_params(raw, *, heads):
    """Offline folding: split qkv, fold softmax scale + LayerScale, bf16 weights."""
    D = raw["patch_w"].shape[1]
    hd = D // heads
    scale = 1.0 / np.sqrt(hd)
    K = raw["patch_w"].shape[0]
    Kp = ((K + 127) // 128) * 128

    p = {
        "patch_w": jnp.pad(raw["patch_w"], ((0, Kp - K), (0, 0))).astype(jnp.bfloat16),
        "patch_b": raw["patch_b"],
        "cls_token": raw["cls_token"][0],          # (1, D)
        "pos_embed": raw["pos_embed"][0],          # (T, D)
        "norm_w": raw["norm_w"],
        "norm_b": raw["norm_b"],
        "blocks": [],
    }
    for blk in raw["blocks"]:
        qkv_w, qkv_b = blk["qkv_w"], blk["qkv_b"]
        p["blocks"].append({
            "ln1_w": blk["ln1_w"], "ln1_b": blk["ln1_b"],
            "wq": (qkv_w[:, :D] * scale).astype(jnp.bfloat16),
            "wk": qkv_w[:, D:2 * D].astype(jnp.bfloat16),
            "wv": qkv_w[:, 2 * D:].astype(jnp.bfloat16),
            "bq": qkv_b[:, :D] * scale,
            "bk": qkv_b[:, D:2 * D],
            "bv": qkv_b[:, 2 * D:],
            "proj_w_ls": (blk["proj_w"] * blk["ls1"]).astype(jnp.bfloat16),
            "proj_b_ls": blk["proj_b"] * blk["ls1"],
            "ln2_w": blk["ln2_w"], "ln2_b": blk["ln2_b"],
            "fc1_w": blk["fc1_w"].astype(jnp.bfloat16),
            "fc1_b": blk["fc1_b"],
            "fc2_w_ls": (blk["fc2_w"] * blk["ls2"]).astype(jnp.bfloat16),
            "fc2_b_ls": blk["fc2_b"] * blk["ls2"],
        })
    return p


# ----------------------------------------------------------------------------
if __name__ == "__main__":
    # Small config consistent with the module (patch_size=14); the real model
    # is ViT-L/14 (D=1024, depth=24, heads=16) — scaled down here.
    B, C_IN, IMG = 2, 3, 56
    PATCH = 14
    DIM, HEADS, DEPTH = 128, 4, 2
    SIDE = IMG // PATCH          # 4
    N_PATCH = SIDE * SIDE        # 16
    N_TOKENS = N_PATCH + 1       # 17 (cls + patches)

    root = jax.random.PRNGKey(0)
    k_x, k_p = jax.random.split(root)
    x = jax.random.normal(k_x, (B, C_IN, IMG, IMG), jnp.float32)   # NCHW input
    raw = init_params(k_p, depth=DEPTH, dim=DIM, in_chans=C_IN,
                      patch=PATCH, num_tokens=N_TOKENS)
    params = prepare_params(raw, heads=HEADS)

    fwd = jax.jit(functools.partial(dinov2_feature_extractor,
                                    patch=PATCH, heads=HEADS))
    feat = jax.block_until_ready(fwd(x, params))

    assert feat.shape == (B, DIM, SIDE, SIDE), feat.shape
    assert bool(jnp.all(jnp.isfinite(feat)))
    print("KERNEL_OK")
</pallas_src>

<mosaic_0001>
module attributes {stable_mosaic.version = 11 : i64} {
  func.func @ln_qkv_kernel(%arg0: i32, %arg1: i32, %arg2: memref<1x17x128xf32, #tpu.memory_space<vmem>>, %arg3: memref<1x128xf32, #tpu.memory_space<vmem>>, %arg4: memref<1x128xf32, #tpu.memory_space<vmem>>, %arg5: memref<128x128xbf16, #tpu.memory_space<vmem>>, %arg6: memref<128x128xbf16, #tpu.memory_space<vmem>>, %arg7: memref<128x128xbf16, #tpu.memory_space<vmem>>, %arg8: memref<1x128xf32, #tpu.memory_space<vmem>>, %arg9: memref<1x128xf32, #tpu.memory_space<vmem>>, %arg10: memref<1x128xf32, #tpu.memory_space<vmem>>, %arg11: memref<1x17x128xbf16, #tpu.memory_space<vmem>>, %arg12: memref<1x17x128xbf16, #tpu.memory_space<vmem>>, %arg13: memref<1x17x128xbf16, #tpu.memory_space<vmem>>) attributes {dimension_semantics = [#tpu.dimension_semantics<parallel>, #tpu.dimension_semantics<parallel>], iteration_bounds = array<i64: 2, 1>, scalar_prefetch = 0 : i64, scratch_operands = 0 : i64, tpu.core_type = #tpu.core_type<tc>, window_params = [{transform_indices = @transform_0, window_bounds = array<i64: 1, 17, 128>}, {pipeline_mode = #tpu.pipeline_mode<synchronous>, transform_indices = @transform_1, window_bounds = array<i64: 1, 128>}, {pipeline_mode = #tpu.pipeline_mode<synchronous>, transform_indices = @transform_2, window_bounds = array<i64: 1, 128>}, {pipeline_mode = #tpu.pipeline_mode<synchronous>, transform_indices = @transform_3, window_bounds = array<i64: 128, 128>}, {pipeline_mode = #tpu.pipeline_mode<synchronous>, transform_indices = @transform_4, window_bounds = array<i64: 128, 128>}, {pipeline_mode = #tpu.pipeline_mode<synchronous>, transform_indices = @transform_5, window_bounds = array<i64: 128, 128>}, {pipeline_mode = #tpu.pipeline_mode<synchronous>, transform_indices = @transform_6, window_bounds = array<i64: 1, 128>}, {pipeline_mode = #tpu.pipeline_mode<synchronous>, transform_indices = @transform_7, window_bounds = array<i64: 1, 128>}, {pipeline_mode = #tpu.pipeline_mode<synchronous>, transform_indices = @transform_8, window_bounds = array<i64: 1, 128>}, {transform_indices = @transform_9, window_bounds = array<i64: 1, 17, 128>}, {transform_indices = @transform_10, window_bounds = array<i64: 1, 17, 128>}, {transform_indices = @transform_11, window_bounds = array<i64: 1, 17, 128>}]} {
    %c0 = arith.constant 0 : index
    %c0_0 = arith.constant 0 : index
    %c0_1 = arith.constant 0 : index
    %0 = vector.load %arg2[%c0, %c0_0, %c0_1] : memref<1x17x128xf32, #tpu.memory_space<vmem>>, vector<1x17x128xf32>
    %1 = vector.shape_cast %0 : vector<1x17x128xf32> to vector<17x128xf32>
    %c0_2 = arith.constant 0 : index
    %c0_3 = arith.constant 0 : index
    %2 = vector.load %arg3[%c0_2, %c0_3] : memref<1x128xf32, #tpu.memory_space<vmem>>, vector<1x128xf32>
    %c0_4 = arith.constant 0 : index
    %c0_5 = arith.constant 0 : index
    %3 = vector.load %arg4[%c0_4, %c0_5] : memref<1x128xf32, #tpu.memory_space<vmem>>, vector<1x128xf32>
    %cst = arith.constant dense<0.000000e+00> : vector<17xf32>
    %4 = vector.multi_reduction <add>, %1, %cst [1] : vector<17x128xf32> to vector<17xf32>
    %5 = vector.shape_cast %4 : vector<17xf32> to vector<17x1xf32>
    %cst_6 = arith.constant 1.280000e+02 : f32
    %6 = vector.broadcast %cst_6 : f32 to vector<17x1xf32>
    %7 = arith.divf %5, %6 : vector<17x1xf32>
    %8 = vector.broadcast %7 : vector<17x1xf32> to vector<17x128xf32>
    %9 = arith.subf %1, %8 : vector<17x128xf32>
    %10 = arith.mulf %9, %9 : vector<17x128xf32>
    %cst_7 = arith.constant dense<0.000000e+00> : vector<17xf32>
    %11 = vector.multi_reduction <add>, %10, %cst_7 [1] : vector<17x128xf32> to vector<17xf32>
    %12 = vector.shape_cast %11 : vector<17xf32> to vector<17x1xf32>
    %cst_8 = arith.constant 1.280000e+02 : f32
    %13 = vector.broadcast %cst_8 : f32 to vector<17x1xf32>
    %14 = arith.divf %12, %13 : vector<17x1xf32>
    %15 = vector.broadcast %7 : vector<17x1xf32> to vector<17x128xf32>
    %16 = arith.subf %1, %15 : vector<17x128xf32>
    %cst_9 = arith.constant 9.99999997E-7 : f32
    %17 = vector.broadcast %cst_9 : f32 to vector<17x1xf32>
    %18 = arith.addf %14, %17 : vector<17x1xf32>
    %19 = math.rsqrt %18 : vector<17x1xf32>
    %20 = vector.broadcast %19 : vector<17x1xf32> to vector<17x128xf32>
    %21 = arith.mulf %16, %20 : vector<17x128xf32>
    %22 = vector.broadcast %2 : vector<1x128xf32> to vector<17x128xf32>
    %23 = arith.mulf %21, %22 : vector<17x128xf32>
    %24 = vector.broadcast %3 : vector<1x128xf32> to vector<17x128xf32>
    %25 = arith.addf %23, %24 : vector<17x128xf32>
    %26 = arith.truncf %25 : vector<17x128xf32> to vector<17x128xbf16>
    %c0_10 = arith.constant 0 : index
    %c0_11 = arith.constant 0 : index
    %27 = vector.load %arg5[%c0_10, %c0_11] : memref<128x128xbf16, #tpu.memory_space<vmem>>, vector<128x128xbf16>
    %cst_12 = arith.constant dense<0.000000e+00> : vector<17x128xf32>
    %28 = tpu.matmul %26, %27, %cst_12 {dimension_numbers = #tpu.dot_dimension_numbers<[1], [0], [0], [1], [0, 0, 1, 1], [], []>} : vector<17x128xbf16>, vector<128x128xbf16>, vector<17x128xf32> -> vector<17x128xf32>
    %c0_13 = arith.constant 0 : index
    %c0_14 = arith.constant 0 : index
    %29 = vector.load %arg8[%c0_13, %c0_14] : memref<1x128xf32, #tpu.memory_space<vmem>>, vector<1x128xf32>
    %30 = vector.broadcast %29 : vector<1x128xf32> to vector<17x128xf32>
    %31 = arith.addf %28, %30 : vector<17x128xf32>
    %32 = arith.truncf %31 : vector<17x128xf32> to vector<17x128xbf16>
    %c0_15 = arith.constant 0 : index
    %c0_16 = arith.constant 0 : index
    %c0_17 = arith.constant 0 : index
    %33 = vector.load %arg11[%c0_15, %c0_16, %c0_17] : memref<1x17x128xbf16, #tpu.memory_space<vmem>>, vector<1x17x128xbf16>
    %34 = vector.shape_cast %33 : vector<1x17x128xbf16> to vector<17x128xbf16>
    %35 = vector.shape_cast %32 : vector<17x128xbf16> to vector<1x17x128xbf16>
    tpu.vector_store %arg11[%c0_15, %c0_16, %c0_17], %35 {strides = array<i32>} : memref<1x17x128xbf16, #tpu.memory_space<vmem>>, vector<1x17x128xbf16>,
    %c0_18 = arith.constant 0 : index
    %c0_19 = arith.constant 0 : index
    %36 = vector.load %arg6[%c0_18, %c0_19] : memref<128x128xbf16, #tpu.memory_space<vmem>>, vector<128x128xbf16>
    %cst_20 = arith.constant dense<0.000000e+00> : vector<17x128xf32>
    %37 = tpu.matmul %26, %36, %cst_20 {dimension_numbers = #tpu.dot_dimension_numbers<[1], [0], [0], [1], [0, 0, 1, 1], [], []>} : vector<17x128xbf16>, vector<128x128xbf16>, vector<17x128xf32> -> vector<17x128xf32>
    %c0_21 = arith.constant 0 : index
    %c0_22 = arith.constant 0 : index
    %38 = vector.load %arg9[%c0_21, %c0_22] : memref<1x128xf32, #tpu.memory_space<vmem>>, vector<1x128xf32>
    %39 = vector.broadcast %38 : vector<1x128xf32> to vector<17x128xf32>
    %40 = arith.addf %37, %39 : vector<17x128xf32>
    %41 = arith.truncf %40 : vector<17x128xf32> to vector<17x128xbf16>
    %c0_23 = arith.constant 0 : index
    %c0_24 = arith.constant 0 : index
    %c0_25 = arith.constant 0 : index
    %42 = vector.load %arg12[%c0_23, %c0_24, %c0_25] : memref<1x17x128xbf16, #tpu.memory_space<vmem>>, vector<1x17x128xbf16>
    %43 = vector.shape_cast %42 : vector<1x17x128xbf16> to vector<17x128xbf16>
    %44 = vector.shape_cast %41 : vector<17x128xbf16> to vector<1x17x128xbf16>
    tpu.vector_store %arg12[%c0_23, %c0_24, %c0_25], %44 {strides = array<i32>} : memref<1x17x128xbf16, #tpu.memory_space<vmem>>, vector<1x17x128xbf16>,
    %c0_26 = arith.constant 0 : index
    %c0_27 = arith.constant 0 : index
    %45 = vector.load %arg7[%c0_26, %c0_27] : memref<128x128xbf16, #tpu.memory_space<vmem>>, vector<128x128xbf16>
    %cst_28 = arith.constant dense<0.000000e+00> : vector<17x128xf32>
    %46 = tpu.matmul %26, %45, %cst_28 {dimension_numbers = #tpu.dot_dimension_numbers<[1], [0], [0], [1], [0, 0, 1, 1], [], []>} : vector<17x128xbf16>, vector<128x128xbf16>, vector<17x128xf32> -> vector<17x128xf32>
    %c0_29 = arith.constant 0 : index
    %c0_30 = arith.constant 0 : index
    %47 = vector.load %arg10[%c0_29, %c0_30] : memref<1x128xf32, #tpu.memory_space<vmem>>, vector<1x128xf32>
    %48 = vector.broadcast %47 : vector<1x128xf32> to vector<17x128xf32>
    %49 = arith.addf %46, %48 : vector<17x128xf32>
    %50 = arith.truncf %49 : vector<17x128xf32> to vector<17x128xbf16>
    %c0_31 = arith.constant 0 : index
    %c0_32 = arith.constant 0 : index
    %c0_33 = arith.constant 0 : index
    %51 = vector.load %arg13[%c0_31, %c0_32, %c0_33] : memref<1x17x128xbf16, #tpu.memory_space<vmem>>, vector<1x17x128xbf16>
    %52 = vector.shape_cast %51 : vector<1x17x128xbf16> to vector<17x128xbf16>
    %53 = vector.shape_cast %50 : vector<17x128xbf16> to vector<1x17x128xbf16>
    tpu.vector_store %arg13[%c0_31, %c0_32, %c0_33], %53 {strides = array<i32>} : memref<1x17x128xbf16, #tpu.memory_space<vmem>>, vector<1x17x128xbf16>,
    return
  }
  func.func @transform_0(%arg0: i32, %arg1: i32) -> (i32, i32, i32) {
    %c0_i32 = arith.constant 0 : i32
    %c0_i32_0 = arith.constant 0 : i32
    return %arg0, %arg1, %c0_i32 : i32, i32, i32
  }
  func.func @transform_1(%arg0: i32, %arg1: i32) -> (i32, i32) {
    %c0_i32 = arith.constant 0 : i32
    %c0_i32_0 = arith.constant 0 : i32
    %c0_i32_1 = arith.constant 0 : i32
    return %c0_i32, %c0_i32_0 : i32, i32
  }
  func.func @transform_2(%arg0: i32, %arg1: i32) -> (i32, i32) {
    %c0_i32 = arith.constant 0 : i32
    %c0_i32_0 = arith.constant 0 : i32
    %c0_i32_1 = arith.constant 0 : i32
    return %c0_i32, %c0_i32_0 : i32, i32
  }
  func.func @transform_3(%arg0: i32, %arg1: i32) -> (i32, i32) {
    %c0_i32 = arith.constant 0 : i32
    %c0_i32_0 = arith.constant 0 : i32
    %c0_i32_1 = arith.constant 0 : i32
    return %c0_i32, %c0_i32_0 : i32, i32
  }
  func.func @transform_4(%arg0: i32, %arg1: i32) -> (i32, i32) {
    %c0_i32 = arith.constant 0 : i32
    %c0_i32_0 = arith.constant 0 : i32
    %c0_i32_1 = arith.constant 0 : i32
    return %c0_i32, %c0_i32_0 : i32, i32
  }
  func.func @transform_5(%arg0: i32, %arg1: i32) -> (i32, i32) {
    %c0_i32 = arith.constant 0 : i32
    %c0_i32_0 = arith.constant 0 : i32
    %c0_i32_1 = arith.constant 0 : i32
    return %c0_i32, %c0_i32_0 : i32, i32
  }
  func.func @transform_6(%arg0: i32, %arg1: i32) -> (i32, i32) {
    %c0_i32 = arith.constant 0 : i32
    %c0_i32_0 = arith.constant 0 : i32
    %c0_i32_1 = arith.constant 0 : i32
    return %c0_i32, %c0_i32_0 : i32, i32
  }
  func.func @transform_7(%arg0: i32, %arg1: i32) -> (i32, i32) {
    %c0_i32 = arith.constant 0 : i32
    %c0_i32_0 = arith.constant 0 : i32
    %c0_i32_1 = arith.constant 0 : i32
    return %c0_i32, %c0_i32_0 : i32, i32
  }
  func.func @transform_8(%arg0: i32, %arg1: i32) -> (i32, i32) {
    %c0_i32 = arith.constant 0 : i32
    %c0_i32_0 = arith.constant 0 : i32
    %c0_i32_1 = arith.constant 0 : i32
    return %c0_i32, %c0_i32_0 : i32, i32
  }
  func.func @transform_9(%arg0: i32, %arg1: i32) -> (i32, i32, i32) {
    %c0_i32 = arith.constant 0 : i32
    %c0_i32_0 = arith.constant 0 : i32
    return %arg0, %arg1, %c0_i32 : i32, i32, i32
  }
  func.func @transform_10(%arg0: i32, %arg1: i32) -> (i32, i32, i32) {
    %c0_i32 = arith.constant 0 : i32
    %c0_i32_0 = arith.constant 0 : i32
    return %arg0, %arg1, %c0_i32 : i32, i32, i32
  }
  func.func @transform_11(%arg0: i32, %arg1: i32) -> (i32, i32, i32) {
    %c0_i32 = arith.constant 0 : i32
    %c0_i32_0 = arith.constant 0 : i32
    return %arg0, %arg1, %c0_i32 : i32, i32, i32
  }
}

module attributes {stable_mosaic.version = 11 : i64} {
  func.func @embed_kernel(%arg0: i32, %arg1: memref<1x16x640xbf16, #tpu.memory_space<vmem>>, %arg2: memref<640x128xbf16, #tpu.memory_space<vmem>>, %arg3: memref<1x128xf32, #tpu.memory_space<vmem>>, %arg4: memref<1x128xf32, #tpu.memory_space<vmem>>, %arg5: memref<17x128xf32, #tpu.memory_space<vmem>>, %arg6: memref<1x17x128xf32, #tpu.memory_space<vmem>>) attributes {dimension_semantics = [#tpu.dimension_semantics<parallel>], iteration_bounds = array<i64: 2>, scalar_prefetch = 0 : i64, scratch_operands = 0 : i64, tpu.core_type = #tpu.core_type<tc>, window_params = [{transform_indices = @transform_0, window_bounds = array<i64: 1, 16, 640>}, {pipeline_mode = #tpu.pipeline_mode<synchronous>, transform_indices = @transform_1, window_bounds = array<i64: 640, 128>}, {pipeline_mode = #tpu.pipeline_mode<synchronous>, transform_indices = @transform_2, window_bounds = array<i64: 1, 128>}, {pipeline_mode = #tpu.pipeline_mode<synchronous>, transform_indices = @transform_3, window_bounds = array<i64: 1, 128>}, {pipeline_mode = #tpu.pipeline_mode<synchronous>, transform_indices = @transform_4, window_bounds = array<i64: 17, 128>}, {transform_indices = @transform_5, window_bounds = array<i64: 1, 17, 128>}]} {
    %c0 = arith.constant 0 : index
    %c0_0 = arith.constant 0 : index
    %c0_1 = arith.constant 0 : index
    %0 = vector.load %arg1[%c0, %c0_0, %c0_1] : memref<1x16x640xbf16, #tpu.memory_space<vmem>>, vector<1x16x640xbf16>
    %1 = vector.shape_cast %0 : vector<1x16x640xbf16> to vector<16x640xbf16>
    %c0_2 = arith.constant 0 : index
    %c0_3 = arith.constant 0 : index
    %2 = vector.load %arg2[%c0_2, %c0_3] : memref<640x128xbf16, #tpu.memory_space<vmem>>, vector<640x128xbf16>
    %cst = arith.constant dense<0.000000e+00> : vector<16x128xf32>
    %3 = tpu.matmul %1, %2, %cst {dimension_numbers = #tpu.dot_dimension_numbers<[1], [0], [0], [1], [0, 0, 1, 1], [], []>} : vector<16x640xbf16>, vector<640x128xbf16>, vector<16x128xf32> -> vector<16x128xf32>
    %c0_4 = arith.constant 0 : index
    %c0_5 = arith.constant 0 : index
    %4 = vector.load %arg3[%c0_4, %c0_5] : memref<1x128xf32, #tpu.memory_space<vmem>>, vector<1x128xf32>
    %5 = vector.broadcast %4 : vector<1x128xf32> to vector<16x128xf32>
    %6 = arith.addf %3, %5 : vector<16x128xf32>
    %c0_6 = arith.constant 0 : index
    %c0_7 = arith.constant 0 : index
    %7 = vector.load %arg4[%c0_6, %c0_7] : memref<1x128xf32, #tpu.memory_space<vmem>>, vector<1x128xf32>
    %8 = tpu.concatenate %7, %6 in 0 : vector<1x128xf32>, vector<16x128xf32> -> vector<17x128xf32>
    %c0_8 = arith.constant 0 : index
    %c0_9 = arith.constant 0 : index
    %9 = vector.load %arg5[%c0_8, %c0_9] : memref<17x128xf32, #tpu.memory_space<vmem>>, vector<17x128xf32>
    %10 = arith.addf %8, %9 : vector<17x128xf32>
    %c0_10 = arith.constant 0 : index
    %c0_11 = arith.constant 0 : index
    %c0_12 = arith.constant 0 : index
    %11 = vector.load %arg6[%c0_10, %c0_11, %c0_12] : memref<1x17x128xf32, #tpu.memory_space<vmem>>, vector<1x17x128xf32>
    %12 = vector.shape_cast %11 : vector<1x17x128xf32> to vector<17x128xf32>
    %13 = vector.shape_cast %10 : vector<17x128xf32> to vector<1x17x128xf32>
    tpu.vector_store %arg6[%c0_10, %c0_11, %c0_12], %13 {strides = array<i32>} : memref<1x17x128xf32, #tpu.memory_space<vmem>>, vector<1x17x128xf32>,
    return
  }
  func.func @transform_0(%arg0: i32) -> (i32, i32, i32) {
    %c0_i32 = arith.constant 0 : i32
    %c0_i32_0 = arith.constant 0 : i32
    %c0_i32_1 = arith.constant 0 : i32
    return %arg0, %c0_i32, %c0_i32_0 : i32, i32, i32
  }
  func.func @transform_1(%arg0: i32) -> (i32, i32) {
    %c0_i32 = arith.constant 0 : i32
    %c0_i32_0 = arith.constant 0 : i32
    %c0_i32_1 = arith.constant 0 : i32
    return %c0_i32, %c0_i32_0 : i32, i32
  }
  func.func @transform_2(%arg0: i32) -> (i32, i32) {
    %c0_i32 = arith.constant 0 : i32
    %c0_i32_0 = arith.constant 0 : i32
    %c0_i32_1 = arith.constant 0 : i32
    return %c0_i32, %c0_i32_0 : i32, i32
  }
  func.func @transform_3(%arg0: i32) -> (i32, i32) {
    %c0_i32 = arith.constant 0 : i32
    %c0_i32_0 = arith.constant 0 : i32
    %c0_i32_1 = arith.constant 0 : i32
    return %c0_i32, %c0_i32_0 : i32, i32
  }
  func.func @transform_4(%arg0: i32) -> (i32, i32) {
    %c0_i32 = arith.constant 0 : i32
    %c0_i32_0 = arith.constant 0 : i32
    %c0_i32_1 = arith.constant 0 : i32
    return %c0_i32, %c0_i32_0 : i32, i32
  }
  func.func @transform_5(%arg0: i32) -> (i32, i32, i32) {
    %c0_i32 = arith.constant 0 : i32
    %c0_i32_0 = arith.constant 0 : i32
    %c0_i32_1 = arith.constant 0 : i32
    return %arg0, %c0_i32, %c0_i32_0 : i32, i32, i32
  }
}

module attributes {stable_mosaic.version = 11 : i64} {
  func.func @attention_kernel(%arg0: i32, %arg1: i32, %arg2: memref<1x17x128xbf16, #tpu.memory_space<vmem>>, %arg3: memref<1x17x128xbf16, #tpu.memory_space<vmem>>, %arg4: memref<1x17x128xbf16, #tpu.memory_space<vmem>>, %arg5: memref<1x17x128xbf16, #tpu.memory_space<vmem>>) attributes {dimension_semantics = [#tpu.dimension_semantics<parallel>, #tpu.dimension_semantics<parallel>], iteration_bounds = array<i64: 2, 1>, scalar_prefetch = 0 : i64, scratch_operands = 0 : i64, tpu.core_type = #tpu.core_type<tc>, window_params = [{transform_indices = @transform_0, window_bounds = array<i64: 1, 17, 128>}, {transform_indices = @transform_1, window_bounds = array<i64: 1, 17, 128>}, {transform_indices = @transform_2, window_bounds = array<i64: 1, 17, 128>}, {transform_indices = @transform_3, window_bounds = array<i64: 1, 17, 128>}]} {
    %c0 = arith.constant 0 : index
    %c0_0 = arith.constant 0 : index
    %c0_1 = arith.constant 0 : index
    %0 = vector.load %arg2[%c0, %c0_0, %c0_1] : memref<1x17x128xbf16, #tpu.memory_space<vmem>>, vector<1x17x128xbf16>
    %1 = vector.shape_cast %0 : vector<1x17x128xbf16> to vector<17x128xbf16>
    %c0_2 = arith.constant 0 : index
    %c0_3 = arith.constant 0 : index
    %c0_4 = arith.constant 0 : index
    %2 = vector.load %arg3[%c0_2, %c0_3, %c0_4] : memref<1x17x128xbf16, #tpu.memory_space<vmem>>, vector<1x17x128xbf16>
    %3 = vector.shape_cast %2 : vector<1x17x128xbf16> to vector<17x128xbf16>
    %c0_5 = arith.constant 0 : index
    %c0_6 = arith.constant 0 : index
    %c0_7 = arith.constant 0 : index
    %4 = vector.load %arg4[%c0_5, %c0_6, %c0_7] : memref<1x17x128xbf16, #tpu.memory_space<vmem>>, vector<1x17x128xbf16>
    %5 = vector.shape_cast %4 : vector<1x17x128xbf16> to vector<17x128xbf16>
    %6 = vector.extract_strided_slice %1 {offsets = [0, 0], sizes = [17, 32], strides = [1, 1]} : vector<17x128xbf16> to vector<17x32xbf16>
    %7 = vector.extract_strided_slice %3 {offsets = [0, 0], sizes = [17, 32], strides = [1, 1]} : vector<17x128xbf16> to vector<17x32xbf16>
    %8 = vector.extract_strided_slice %5 {offsets = [0, 0], sizes = [17, 32], strides = [1, 1]} : vector<17x128xbf16> to vector<17x32xbf16>
    %cst = arith.constant dense<0.000000e+00> : vector<17x17xf32>
    %9 = tpu.matmul %6, %7, %cst {dimension_numbers = #tpu.dot_dimension_numbers<[1], [1], [0], [0], [0, 0, 1, 0], [], []>} : vector<17x32xbf16>, vector<17x32xbf16>, vector<17x17xf32> -> vector<17x17xf32>
    %cst_8 = arith.constant dense<0xFF800000> : vector<17xf32>
    %10 = vector.multi_reduction <maximumf>, %9, %cst_8 [1] : vector<17x17xf32> to vector<17xf32>
    %11 = vector.shape_cast %10 : vector<17xf32> to vector<17x1xf32>
    %12 = vector.broadcast %11 : vector<17x1xf32> to vector<17x17xf32>
    %13 = arith.subf %9, %12 : vector<17x17xf32>
    %14 = math.exp %13 : vector<17x17xf32>
    %cst_9 = arith.constant dense<0.000000e+00> : vector<17xf32>
    %15 = vector.multi_reduction <add>, %14, %cst_9 [1] : vector<17x17xf32> to vector<17xf32>
    %16 = vector.shape_cast %15 : vector<17xf32> to vector<17x1xf32>
    %17 = tpu.reciprocal %16 {approx = true} : vector<17x1xf32> -> vector<17x1xf32>
    %18 = vector.broadcast %17 : vector<17x1xf32> to vector<17x17xf32>
    %19 = arith.mulf %14, %18 : vector<17x17xf32>
    %20 = arith.truncf %19 : vector<17x17xf32> to vector<17x17xbf16>
    %cst_10 = arith.constant dense<0.000000e+00> : vector<17x32xf32>
    %21 = tpu.matmul %20, %8, %cst_10 {dimension_numbers = #tpu.dot_dimension_numbers<[1], [0], [0], [1], [0, 0, 1, 1], [], []>} : vector<17x17xbf16>, vector<17x32xbf16>, vector<17x32xf32> -> vector<17x32xf32>
    %22 = vector.extract_strided_slice %1 {offsets = [0, 32], sizes = [17, 32], strides = [1, 1]} : vector<17x128xbf16> to vector<17x32xbf16>
    %23 = vector.extract_strided_slice %3 {offsets = [0, 32], sizes = [17, 32], strides = [1, 1]} : vector<17x128xbf16> to vector<17x32xbf16>
    %24 = vector.extract_strided_slice %5 {offsets = [0, 32], sizes = [17, 32], strides = [1, 1]} : vector<17x128xbf16> to vector<17x32xbf16>
    %cst_11 = arith.constant dense<0.000000e+00> : vector<17x17xf32>
    %25 = tpu.matmul %22, %23, %cst_11 {dimension_numbers = #tpu.dot_dimension_numbers<[1], [1], [0], [0], [0, 0, 1, 0], [], []>} : vector<17x32xbf16>, vector<17x32xbf16>, vector<17x17xf32> -> vector<17x17xf32>
    %cst_12 = arith.constant dense<0xFF800000> : vector<17xf32>
    %26 = vector.multi_reduction <maximumf>, %25, %cst_12 [1] : vector<17x17xf32> to vector<17xf32>
    %27 = vector.shape_cast %26 : vector<17xf32> to vector<17x1xf32>
    %28 = vector.broadcast %27 : vector<17x1xf32> to vector<17x17xf32>
    %29 = arith.subf %25, %28 : vector<17x17xf32>
    %30 = math.exp %29 : vector<17x17xf32>
    %cst_13 = arith.constant dense<0.000000e+00> : vector<17xf32>
    %31 = vector.multi_reduction <add>, %30, %cst_13 [1] : vector<17x17xf32> to vector<17xf32>
    %32 = vector.shape_cast %31 : vector<17xf32> to vector<17x1xf32>
    %33 = tpu.reciprocal %32 {approx = true} : vector<17x1xf32> -> vector<17x1xf32>
    %34 = vector.broadcast %33 : vector<17x1xf32> to vector<17x17xf32>
    %35 = arith.mulf %30, %34 : vector<17x17xf32>
    %36 = arith.truncf %35 : vector<17x17xf32> to vector<17x17xbf16>
    %cst_14 = arith.constant dense<0.000000e+00> : vector<17x32xf32>
    %37 = tpu.matmul %36, %24, %cst_14 {dimension_numbers = #tpu.dot_dimension_numbers<[1], [0], [0], [1], [0, 0, 1, 1], [], []>} : vector<17x17xbf16>, vector<17x32xbf16>, vector<17x32xf32> -> vector<17x32xf32>
    %38 = vector.extract_strided_slice %1 {offsets = [0, 64], sizes = [17, 32], strides = [1, 1]} : vector<17x128xbf16> to vector<17x32xbf16>
    %39 = vector.extract_strided_slice %3 {offsets = [0, 64], sizes = [17, 32], strides = [1, 1]} : vector<17x128xbf16> to vector<17x32xbf16>
    %40 = vector.extract_strided_slice %5 {offsets = [0, 64], sizes = [17, 32], strides = [1, 1]} : vector<17x128xbf16> to vector<17x32xbf16>
    %cst_15 = arith.constant dense<0.000000e+00> : vector<17x17xf32>
    %41 = tpu.matmul %38, %39, %cst_15 {dimension_numbers = #tpu.dot_dimension_numbers<[1], [1], [0], [0], [0, 0, 1, 0], [], []>} : vector<17x32xbf16>, vector<17x32xbf16>, vector<17x17xf32> -> vector<17x17xf32>
    %cst_16 = arith.constant dense<0xFF800000> : vector<17xf32>
    %42 = vector.multi_reduction <maximumf>, %41, %cst_16 [1] : vector<17x17xf32> to vector<17xf32>
    %43 = vector.shape_cast %42 : vector<17xf32> to vector<17x1xf32>
    %44 = vector.broadcast %43 : vector<17x1xf32> to vector<17x17xf32>
    %45 = arith.subf %41, %44 : vector<17x17xf32>
    %46 = math.exp %45 : vector<17x17xf32>
    %cst_17 = arith.constant dense<0.000000e+00> : vector<17xf32>
    %47 = vector.multi_reduction <add>, %46, %cst_17 [1] : vector<17x17xf32> to vector<17xf32>
    %48 = vector.shape_cast %47 : vector<17xf32> to vector<17x1xf32>
    %49 = tpu.reciprocal %48 {approx = true} : vector<17x1xf32> -> vector<17x1xf32>
    %50 = vector.broadcast %49 : vector<17x1xf32> to vector<17x17xf32>
    %51 = arith.mulf %46, %50 : vector<17x17xf32>
    %52 = arith.truncf %51 : vector<17x17xf32> to vector<17x17xbf16>
    %cst_18 = arith.constant dense<0.000000e+00> : vector<17x32xf32>
    %53 = tpu.matmul %52, %40, %cst_18 {dimension_numbers = #tpu.dot_dimension_numbers<[1], [0], [0], [1], [0, 0, 1, 1], [], []>} : vector<17x17xbf16>, vector<17x32xbf16>, vector<17x32xf32> -> vector<17x32xf32>
    %54 = vector.extract_strided_slice %1 {offsets = [0, 96], sizes = [17, 32], strides = [1, 1]} : vector<17x128xbf16> to vector<17x32xbf16>
    %55 = vector.extract_strided_slice %3 {offsets = [0, 96], sizes = [17, 32], strides = [1, 1]} : vector<17x128xbf16> to vector<17x32xbf16>
    %56 = vector.extract_strided_slice %5 {offsets = [0, 96], sizes = [17, 32], strides = [1, 1]} : vector<17x128xbf16> to vector<17x32xbf16>
    %cst_19 = arith.constant dense<0.000000e+00> : vector<17x17xf32>
    %57 = tpu.matmul %54, %55, %cst_19 {dimension_numbers = #tpu.dot_dimension_numbers<[1], [1], [0], [0], [0, 0, 1, 0], [], []>} : vector<17x32xbf16>, vector<17x32xbf16>, vector<17x17xf32> -> vector<17x17xf32>
    %cst_20 = arith.constant dense<0xFF800000> : vector<17xf32>
    %58 = vector.multi_reduction <maximumf>, %57, %cst_20 [1] : vector<17x17xf32> to vector<17xf32>
    %59 = vector.shape_cast %58 : vector<17xf32> to vector<17x1xf32>
    %60 = vector.broadcast %59 : vector<17x1xf32> to vector<17x17xf32>
    %61 = arith.subf %57, %60 : vector<17x17xf32>
    %62 = math.exp %61 : vector<17x17xf32>
    %cst_21 = arith.constant dense<0.000000e+00> : vector<17xf32>
    %63 = vector.multi_reduction <add>, %62, %cst_21 [1] : vector<17x17xf32> to vector<17xf32>
    %64 = vector.shape_cast %63 : vector<17xf32> to vector<17x1xf32>
    %65 = tpu.reciprocal %64 {approx = true} : vector<17x1xf32> -> vector<17x1xf32>
    %66 = vector.broadcast %65 : vector<17x1xf32> to vector<17x17xf32>
    %67 = arith.mulf %62, %66 : vector<17x17xf32>
    %68 = arith.truncf %67 : vector<17x17xf32> to vector<17x17xbf16>
    %cst_22 = arith.constant dense<0.000000e+00> : vector<17x32xf32>
    %69 = tpu.matmul %68, %56, %cst_22 {dimension_numbers = #tpu.dot_dimension_numbers<[1], [0], [0], [1], [0, 0, 1, 1], [], []>} : vector<17x17xbf16>, vector<17x32xbf16>, vector<17x32xf32> -> vector<17x32xf32>
    %70 = tpu.concatenate %21, %37, %53, %69 in 1 : vector<17x32xf32>, vector<17x32xf32>, vector<17x32xf32>, vector<17x32xf32> -> vector<17x128xf32>
    %71 = arith.truncf %70 : vector<17x128xf32> to vector<17x128xbf16>
    %c0_23 = arith.constant 0 : index
    %c0_24 = arith.constant 0 : index
    %c0_25 = arith.constant 0 : index
    %72 = vector.load %arg5[%c0_23, %c0_24, %c0_25] : memref<1x17x128xbf16, #tpu.memory_space<vmem>>, vector<1x17x128xbf16>
    %73 = vector.shape_cast %72 : vector<1x17x128xbf16> to vector<17x128xbf16>
    %74 = vector.shape_cast %71 : vector<17x128xbf16> to vector<1x17x128xbf16>
    tpu.vector_store %arg5[%c0_23, %c0_24, %c0_25], %74 {strides = array<i32>} : memref<1x17x128xbf16, #tpu.memory_space<vmem>>, vector<1x17x128xbf16>,
    return
  }
  func.func @transform_0(%arg0: i32, %arg1: i32) -> (i32, i32, i32) {
    %c0_i32 = arith.constant 0 : i32
    %c0_i32_0 = arith.constant 0 : i32
    return %arg0, %c0_i32, %arg1 : i32, i32, i32
  }
  func.func @transform_1(%arg0: i32, %arg1: i32) -> (i32, i32, i32) {
    %c0_i32 = arith.constant 0 : i32
    %c0_i32_0 = arith.constant 0 : i32
    return %arg0, %c0_i32, %arg1 : i32, i32, i32
  }
  func.func @transform_2(%arg0: i32, %arg1: i32) -> (i32, i32, i32) {
    %c0_i32 = arith.constant 0 : i32
    %c0_i32_0 = arith.constant 0 : i32
    return %arg0, %c0_i32, %arg1 : i32, i32, i32
  }
  func.func @transform_3(%arg0: i32, %arg1: i32) -> (i32, i32, i32) {
    %c0_i32 = arith.constant 0 : i32
    %c0_i32_0 = arith.constant 0 : i32
    return %arg0, %c0_i32, %arg1 : i32, i32, i32
  }
}

module attributes {stable_mosaic.version = 11 : i64} {
  func.func @proj_mlp_kernel(%arg0: i32, %arg1: i32, %arg2: memref<1x17x128xf32, #tpu.memory_space<vmem>>, %arg3: memref<1x17x128xbf16, #tpu.memory_space<vmem>>, %arg4: memref<128x128xbf16, #tpu.memory_space<vmem>>, %arg5: memref<1x128xf32, #tpu.memory_space<vmem>>, %arg6: memref<1x128xf32, #tpu.memory_space<vmem>>, %arg7: memref<1x128xf32, #tpu.memory_space<vmem>>, %arg8: memref<128x512xbf16, #tpu.memory_space<vmem>>, %arg9: memref<1x512xf32, #tpu.memory_space<vmem>>, %arg10: memref<512x128xbf16, #tpu.memory_space<vmem>>, %arg11: memref<1x128xf32, #tpu.memory_space<vmem>>, %arg12: memref<1x128xf32, #tpu.memory_space<vmem>>, %arg13: memref<1x128xf32, #tpu.memory_space<vmem>>, %arg14: memref<1x17x128xf32, #tpu.memory_space<vmem>>) attributes {dimension_semantics = [#tpu.dimension_semantics<parallel>, #tpu.dimension_semantics<parallel>], iteration_bounds = array<i64: 2, 1>, scalar_prefetch = 0 : i64, scratch_operands = 0 : i64, tpu.core_type = #tpu.core_type<tc>, window_params = [{transform_indices = @transform_0, window_bounds = array<i64: 1, 17, 128>}, {transform_indices = @transform_1, window_bounds = array<i64: 1, 17, 128>}, {pipeline_mode = #tpu.pipeline_mode<synchronous>, transform_indices = @transform_2, window_bounds = array<i64: 128, 128>}, {pipeline_mode = #tpu.pipeline_mode<synchronous>, transform_indices = @transform_3, window_bounds = array<i64: 1, 128>}, {pipeline_mode = #tpu.pipeline_mode<synchronous>, transform_indices = @transform_4, window_bounds = array<i64: 1, 128>}, {pipeline_mode = #tpu.pipeline_mode<synchronous>, transform_indices = @transform_5, window_bounds = array<i64: 1, 128>}, {pipeline_mode = #tpu.pipeline_mode<synchronous>, transform_indices = @transform_6, window_bounds = array<i64: 128, 512>}, {pipeline_mode = #tpu.pipeline_mode<synchronous>, transform_indices = @transform_7, window_bounds = array<i64: 1, 512>}, {pipeline_mode = #tpu.pipeline_mode<synchronous>, transform_indices = @transform_8, window_bounds = array<i64: 512, 128>}, {pipeline_mode = #tpu.pipeline_mode<synchronous>, transform_indices = @transform_9, window_bounds = array<i64: 1, 128>}, {pipeline_mode = #tpu.pipeline_mode<synchronous>, transform_indices = @transform_10, window_bounds = array<i64: 1, 128>}, {pipeline_mode = #tpu.pipeline_mode<synchronous>, transform_indices = @transform_11, window_bounds = array<i64: 1, 128>}, {transform_indices = @transform_12, window_bounds = array<i64: 1, 17, 128>}]} {
    %c0 = arith.constant 0 : index
    %c0_0 = arith.constant 0 : index
    %c0_1 = arith.constant 0 : index
    %0 = vector.load %arg2[%c0, %c0_0, %c0_1] : memref<1x17x128xf32, #tpu.memory_space<vmem>>, vector<1x17x128xf32>
    %1 = vector.shape_cast %0 : vector<1x17x128xf32> to vector<17x128xf32>
    %c0_2 = arith.constant 0 : index
    %c0_3 = arith.constant 0 : index
    %c0_4 = arith.constant 0 : index
    %2 = vector.load %arg3[%c0_2, %c0_3, %c0_4] : memref<1x17x128xbf16, #tpu.memory_space<vmem>>, vector<1x17x128xbf16>
    %3 = vector.shape_cast %2 : vector<1x17x128xbf16> to vector<17x128xbf16>
    %c0_5 = arith.constant 0 : index
    %c0_6 = arith.constant 0 : index
    %4 = vector.load %arg4[%c0_5, %c0_6] : memref<128x128xbf16, #tpu.memory_space<vmem>>, vector<128x128xbf16>
    %cst = arith.constant dense<0.000000e+00> : vector<17x128xf32>
    %5 = tpu.matmul %3, %4, %cst {dimension_numbers = #tpu.dot_dimension_numbers<[1], [0], [0], [1], [0, 0, 1, 1], [], []>} : vector<17x128xbf16>, vector<128x128xbf16>, vector<17x128xf32> -> vector<17x128xf32>
    %c0_7 = arith.constant 0 : index
    %c0_8 = arith.constant 0 : index
    %6 = vector.load %arg5[%c0_7, %c0_8] : memref<1x128xf32, #tpu.memory_space<vmem>>, vector<1x128xf32>
    %7 = vector.broadcast %6 : vector<1x128xf32> to vector<17x128xf32>
    %8 = arith.addf %5, %7 : vector<17x128xf32>
    %9 = arith.addf %1, %8 : vector<17x128xf32>
    %c0_9 = arith.constant 0 : index
    %c0_10 = arith.constant 0 : index
    %10 = vector.load %arg6[%c0_9, %c0_10] : memref<1x128xf32, #tpu.memory_space<vmem>>, vector<1x128xf32>
    %c0_11 = arith.constant 0 : index
    %c0_12 = arith.constant 0 : index
    %11 = vector.load %arg7[%c0_11, %c0_12] : memref<1x128xf32, #tpu.memory_space<vmem>>, vector<1x128xf32>
    %cst_13 = arith.constant dense<0.000000e+00> : vector<17xf32>
    %12 = vector.multi_reduction <add>, %9, %cst_13 [1] : vector<17x128xf32> to vector<17xf32>
    %13 = vector.shape_cast %12 : vector<17xf32> to vector<17x1xf32>
    %cst_14 = arith.constant 1.280000e+02 : f32
    %14 = vector.broadcast %cst_14 : f32 to vector<17x1xf32>
    %15 = arith.divf %13, %14 : vector<17x1xf32>
    %16 = vector.broadcast %15 : vector<17x1xf32> to vector<17x128xf32>
    %17 = arith.subf %9, %16 : vector<17x128xf32>
    %18 = arith.mulf %17, %17 : vector<17x128xf32>
    %cst_15 = arith.constant dense<0.000000e+00> : vector<17xf32>
    %19 = vector.multi_reduction <add>, %18, %cst_15 [1] : vector<17x128xf32> to vector<17xf32>
    %20 = vector.shape_cast %19 : vector<17xf32> to vector<17x1xf32>
    %cst_16 = arith.constant 1.280000e+02 : f32
    %21 = vector.broadcast %cst_16 : f32 to vector<17x1xf32>
    %22 = arith.divf %20, %21 : vector<17x1xf32>
    %23 = vector.broadcast %15 : vector<17x1xf32> to vector<17x128xf32>
    %24 = arith.subf %9, %23 : vector<17x128xf32>
    %cst_17 = arith.constant 9.99999997E-7 : f32
    %25 = vector.broadcast %cst_17 : f32 to vector<17x1xf32>
    %26 = arith.addf %22, %25 : vector<17x1xf32>
    %27 = math.rsqrt %26 : vector<17x1xf32>
    %28 = vector.broadcast %27 : vector<17x1xf32> to vector<17x128xf32>
    %29 = arith.mulf %24, %28 : vector<17x128xf32>
    %30 = vector.broadcast %10 : vector<1x128xf32> to vector<17x128xf32>
    %31 = arith.mulf %29, %30 : vector<17x128xf32>
    %32 = vector.broadcast %11 : vector<1x128xf32> to vector<17x128xf32>
    %33 = arith.addf %31, %32 : vector<17x128xf32>
    %34 = arith.truncf %33 : vector<17x128xf32> to vector<17x128xbf16>
    %c0_18 = arith.constant 0 : index
    %c0_19 = arith.constant 0 : index
    %35 = vector.load %arg8[%c0_18, %c0_19] : memref<128x512xbf16, #tpu.memory_space<vmem>>, vector<128x512xbf16>
    %cst_20 = arith.constant dense<0.000000e+00> : vector<17x512xf32>
    %36 = tpu.matmul %34, %35, %cst_20 {dimension_numbers = #tpu.dot_dimension_numbers<[1], [0], [0], [1], [0, 0, 1, 1], [], []>} : vector<17x128xbf16>, vector<128x512xbf16>, vector<17x512xf32> -> vector<17x512xf32>
    %c0_21 = arith.constant 0 : index
    %c0_22 = arith.constant 0 : index
    %37 = vector.load %arg9[%c0_21, %c0_22] : memref<1x512xf32, #tpu.memory_space<vmem>>, vector<1x512xf32>
    %38 = vector.broadcast %37 : vector<1x512xf32> to vector<17x512xf32>
    %39 = arith.addf %36, %38 : vector<17x512xf32>
    %cst_23 = arith.constant 5.000000e-01 : f32
    %40 = vector.broadcast %cst_23 : f32 to vector<17x512xf32>
    %41 = arith.mulf %40, %39 : vector<17x512xf32>
    %cst_24 = arith.constant 4.471500e-02 : f32
    %42 = vector.broadcast %cst_24 : f32 to vector<17x512xf32>
    %43 = arith.mulf %42, %39 : vector<17x512xf32>
    %44 = arith.mulf %43, %39 : vector<17x512xf32>
    %45 = arith.mulf %44, %39 : vector<17x512xf32>
    %46 = arith.addf %39, %45 : vector<17x512xf32>
    %cst_25 = arith.constant 0.797884583 : f32
    %47 = vector.broadcast %cst_25 : f32 to vector<17x512xf32>
    %48 = arith.mulf %47, %46 : vector<17x512xf32>
    %49 = math.tanh %48 : vector<17x512xf32>
    %cst_26 = arith.constant 1.000000e+00 : f32
    %50 = vector.broadcast %cst_26 : f32 to vector<17x512xf32>
    %51 = arith.addf %50, %49 : vector<17x512xf32>
    %52 = arith.mulf %41, %51 : vector<17x512xf32>
    %53 = arith.truncf %52 : vector<17x512xf32> to vector<17x512xbf16>
    %c0_27 = arith.constant 0 : index
    %c0_28 = arith.constant 0 : index
    %54 = vector.load %arg10[%c0_27, %c0_28] : memref<512x128xbf16, #tpu.memory_space<vmem>>, vector<512x128xbf16>
    %cst_29 = arith.constant dense<0.000000e+00> : vector<17x128xf32>
    %55 = tpu.matmul %53, %54, %cst_29 {dimension_numbers = #tpu.dot_dimension_numbers<[1], [0], [0], [1], [0, 0, 1, 1], [], []>} : vector<17x512xbf16>, vector<512x128xbf16>, vector<17x128xf32> -> vector<17x128xf32>
    %c0_30 = arith.constant 0 : index
    %c0_31 = arith.constant 0 : index
    %56 = vector.load %arg11[%c0_30, %c0_31] : memref<1x128xf32, #tpu.memory_space<vmem>>, vector<1x128xf32>
    %57 = vector.broadcast %56 : vector<1x128xf32> to vector<17x128xf32>
    %58 = arith.addf %55, %57 : vector<17x128xf32>
    %59 = arith.addf %9, %58 : vector<17x128xf32>
    %c0_32 = arith.constant 0 : index
    %c0_33 = arith.constant 0 : index
    %c0_34 = arith.constant 0 : index
    %60 = vector.load %arg14[%c0_32, %c0_33, %c0_34] : memref<1x17x128xf32, #tpu.memory_space<vmem>>, vector<1x17x128xf32>
    %61 = vector.shape_cast %60 : vector<1x17x128xf32> to vector<17x128xf32>
    %62 = vector.shape_cast %59 : vector<17x128xf32> to vector<1x17x128xf32>
    tpu.vector_store %arg14[%c0_32, %c0_33, %c0_34], %62 {strides = array<i32>} : memref<1x17x128xf32, #tpu.memory_space<vmem>>, vector<1x17x128xf32>,
    return
  }
  func.func @transform_0(%arg0: i32, %arg1: i32) -> (i32, i32, i32) {
    %c0_i32 = arith.constant 0 : i32
    %c0_i32_0 = arith.constant 0 : i32
    return %arg0, %arg1, %c0_i32 : i32, i32, i32
  }
  func.func @transform_1(%arg0: i32, %arg1: i32) -> (i32, i32, i32) {
    %c0_i32 = arith.constant 0 : i32
    %c0_i32_0 = arith.constant 0 : i32
    return %arg0, %arg1, %c0_i32 : i32, i32, i32
  }
  func.func @transform_2(%arg0: i32, %arg1: i32) -> (i32, i32) {
    %c0_i32 = arith.constant 0 : i32
    %c0_i32_0 = arith.constant 0 : i32
    %c0_i32_1 = arith.constant 0 : i32
    return %c0_i32, %c0_i32_0 : i32, i32
  }
  func.func @transform_3(%arg0: i32, %arg1: i32) -> (i32, i32) {
    %c0_i32 = arith.constant 0 : i32
    %c0_i32_0 = arith.constant 0 : i32
    %c0_i32_1 = arith.constant 0 : i32
    return %c0_i32, %c0_i32_0 : i32, i32
  }
  func.func @transform_4(%arg0: i32, %arg1: i32) -> (i32, i32) {
    %c0_i32 = arith.constant 0 : i32
    %c0_i32_0 = arith.constant 0 : i32
    %c0_i32_1 = arith.constant 0 : i32
    return %c0_i32, %c0_i32_0 : i32, i32
  }
  func.func @transform_5(%arg0: i32, %arg1: i32) -> (i32, i32) {
    %c0_i32 = arith.constant 0 : i32
    %c0_i32_0 = arith.constant 0 : i32
    %c0_i32_1 = arith.constant 0 : i32
    return %c0_i32, %c0_i32_0 : i32, i32
  }
  func.func @transform_6(%arg0: i32, %arg1: i32) -> (i32, i32) {
    %c0_i32 = arith.constant 0 : i32
    %c0_i32_0 = arith.constant 0 : i32
    %c0_i32_1 = arith.constant 0 : i32
    return %c0_i32, %c0_i32_0 : i32, i32
  }
  func.func @transform_7(%arg0: i32, %arg1: i32) -> (i32, i32) {
    %c0_i32 = arith.constant 0 : i32
    %c0_i32_0 = arith.constant 0 : i32
    %c0_i32_1 = arith.constant 0 : i32
    return %c0_i32, %c0_i32_0 : i32, i32
  }
  func.func @transform_8(%arg0: i32, %arg1: i32) -> (i32, i32) {
    %c0_i32 = arith.constant 0 : i32
    %c0_i32_0 = arith.constant 0 : i32
    %c0_i32_1 = arith.constant 0 : i32
    return %c0_i32, %c0_i32_0 : i32, i32
  }
  func.func @transform_9(%arg0: i32, %arg1: i32) -> (i32, i32) {
    %c0_i32 = arith.constant 0 : i32
    %c0_i32_0 = arith.constant 0 : i32
    %c0_i32_1 = arith.constant 0 : i32
    return %c0_i32, %c0_i32_0 : i32, i32
  }
  func.func @transform_10(%arg0: i32, %arg1: i32) -> (i32, i32) {
    %c0_i32 = arith.constant 0 : i32
    %c0_i32_0 = arith.constant 0 : i32
    %c0_i32_1 = arith.constant 0 : i32
    return %c0_i32, %c0_i32_0 : i32, i32
  }
  func.func @transform_11(%arg0: i32, %arg1: i32) -> (i32, i32) {
    %c0_i32 = arith.constant 0 : i32
    %c0_i32_0 = arith.constant 0 : i32
    %c0_i32_1 = arith.constant 0 : i32
    return %c0_i32, %c0_i32_0 : i32, i32
  }
  func.func @transform_12(%arg0: i32, %arg1: i32) -> (i32, i32, i32) {
    %c0_i32 = arith.constant 0 : i32
    %c0_i32_0 = arith.constant 0 : i32
    return %arg0, %arg1, %c0_i32 : i32, i32, i32
  }
}

module attributes {stable_mosaic.version = 11 : i64} {
  func.func @proj_mlp_kernel(%arg0: i32, %arg1: i32, %arg2: memref<1x17x128xf32, #tpu.memory_space<vmem>>, %arg3: memref<1x17x128xbf16, #tpu.memory_space<vmem>>, %arg4: memref<128x128xbf16, #tpu.memory_space<vmem>>, %arg5: memref<1x128xf32, #tpu.memory_space<vmem>>, %arg6: memref<1x128xf32, #tpu.memory_space<vmem>>, %arg7: memref<1x128xf32, #tpu.memory_space<vmem>>, %arg8: memref<128x512xbf16, #tpu.memory_space<vmem>>, %arg9: memref<1x512xf32, #tpu.memory_space<vmem>>, %arg10: memref<512x128xbf16, #tpu.memory_space<vmem>>, %arg11: memref<1x128xf32, #tpu.memory_space<vmem>>, %arg12: memref<1x128xf32, #tpu.memory_space<vmem>>, %arg13: memref<1x128xf32, #tpu.memory_space<vmem>>, %arg14: memref<1x17x128xf32, #tpu.memory_space<vmem>>) attributes {dimension_semantics = [#tpu.dimension_semantics<parallel>, #tpu.dimension_semantics<parallel>], iteration_bounds = array<i64: 2, 1>, scalar_prefetch = 0 : i64, scratch_operands = 0 : i64, tpu.core_type = #tpu.core_type<tc>, window_params = [{transform_indices = @transform_0, window_bounds = array<i64: 1, 17, 128>}, {transform_indices = @transform_1, window_bounds = array<i64: 1, 17, 128>}, {pipeline_mode = #tpu.pipeline_mode<synchronous>, transform_indices = @transform_2, window_bounds = array<i64: 128, 128>}, {pipeline_mode = #tpu.pipeline_mode<synchronous>, transform_indices = @transform_3, window_bounds = array<i64: 1, 128>}, {pipeline_mode = #tpu.pipeline_mode<synchronous>, transform_indices = @transform_4, window_bounds = array<i64: 1, 128>}, {pipeline_mode = #tpu.pipeline_mode<synchronous>, transform_indices = @transform_5, window_bounds = array<i64: 1, 128>}, {pipeline_mode = #tpu.pipeline_mode<synchronous>, transform_indices = @transform_6, window_bounds = array<i64: 128, 512>}, {pipeline_mode = #tpu.pipeline_mode<synchronous>, transform_indices = @transform_7, window_bounds = array<i64: 1, 512>}, {pipeline_mode = #tpu.pipeline_mode<synchronous>, transform_indices = @transform_8, window_bounds = array<i64: 512, 128>}, {pipeline_mode = #tpu.pipeline_mode<synchronous>, transform_indices = @transform_9, window_bounds = array<i64: 1, 128>}, {pipeline_mode = #tpu.pipeline_mode<synchronous>, transform_indices = @transform_10, window_bounds = array<i64: 1, 128>}, {pipeline_mode = #tpu.pipeline_mode<synchronous>, transform_indices = @transform_11, window_bounds = array<i64: 1, 128>}, {transform_indices = @transform_12, window_bounds = array<i64: 1, 17, 128>}]} {
    %c0 = arith.constant 0 : index
    %c0_0 = arith.constant 0 : index
    %c0_1 = arith.constant 0 : index
    %0 = vector.load %arg2[%c0, %c0_0, %c0_1] : memref<1x17x128xf32, #tpu.memory_space<vmem>>, vector<1x17x128xf32>
    %1 = vector.shape_cast %0 : vector<1x17x128xf32> to vector<17x128xf32>
    %c0_2 = arith.constant 0 : index
    %c0_3 = arith.constant 0 : index
    %c0_4 = arith.constant 0 : index
    %2 = vector.load %arg3[%c0_2, %c0_3, %c0_4] : memref<1x17x128xbf16, #tpu.memory_space<vmem>>, vector<1x17x128xbf16>
    %3 = vector.shape_cast %2 : vector<1x17x128xbf16> to vector<17x128xbf16>
    %c0_5 = arith.constant 0 : index
    %c0_6 = arith.constant 0 : index
    %4 = vector.load %arg4[%c0_5, %c0_6] : memref<128x128xbf16, #tpu.memory_space<vmem>>, vector<128x128xbf16>
    %cst = arith.constant dense<0.000000e+00> : vector<17x128xf32>
    %5 = tpu.matmul %3, %4, %cst {dimension_numbers = #tpu.dot_dimension_numbers<[1], [0], [0], [1], [0, 0, 1, 1], [], []>} : vector<17x128xbf16>, vector<128x128xbf16>, vector<17x128xf32> -> vector<17x128xf32>
    %c0_7 = arith.constant 0 : index
    %c0_8 = arith.constant 0 : index
    %6 = vector.load %arg5[%c0_7, %c0_8] : memref<1x128xf32, #tpu.memory_space<vmem>>, vector<1x128xf32>
    %7 = vector.broadcast %6 : vector<1x128xf32> to vector<17x128xf32>
    %8 = arith.addf %5, %7 : vector<17x128xf32>
    %9 = arith.addf %1, %8 : vector<17x128xf32>
    %c0_9 = arith.constant 0 : index
    %c0_10 = arith.constant 0 : index
    %10 = vector.load %arg6[%c0_9, %c0_10] : memref<1x128xf32, #tpu.memory_space<vmem>>, vector<1x128xf32>
    %c0_11 = arith.constant 0 : index
    %c0_12 = arith.constant 0 : index
    %11 = vector.load %arg7[%c0_11, %c0_12] : memref<1x128xf32, #tpu.memory_space<vmem>>, vector<1x128xf32>
    %cst_13 = arith.constant dense<0.000000e+00> : vector<17xf32>
    %12 = vector.multi_reduction <add>, %9, %cst_13 [1] : vector<17x128xf32> to vector<17xf32>
    %13 = vector.shape_cast %12 : vector<17xf32> to vector<17x1xf32>
    %cst_14 = arith.constant 1.280000e+02 : f32
    %14 = vector.broadcast %cst_14 : f32 to vector<17x1xf32>
    %15 = arith.divf %13, %14 : vector<17x1xf32>
    %16 = vector.broadcast %15 : vector<17x1xf32> to vector<17x128xf32>
    %17 = arith.subf %9, %16 : vector<17x128xf32>
    %18 = arith.mulf %17, %17 : vector<17x128xf32>
    %cst_15 = arith.constant dense<0.000000e+00> : vector<17xf32>
    %19 = vector.multi_reduction <add>, %18, %cst_15 [1] : vector<17x128xf32> to vector<17xf32>
    %20 = vector.shape_cast %19 : vector<17xf32> to vector<17x1xf32>
    %cst_16 = arith.constant 1.280000e+02 : f32
    %21 = vector.broadcast %cst_16 : f32 to vector<17x1xf32>
    %22 = arith.divf %20, %21 : vector<17x1xf32>
    %23 = vector.broadcast %15 : vector<17x1xf32> to vector<17x128xf32>
    %24 = arith.subf %9, %23 : vector<17x128xf32>
    %cst_17 = arith.constant 9.99999997E-7 : f32
    %25 = vector.broadcast %cst_17 : f32 to vector<17x1xf32>
    %26 = arith.addf %22, %25 : vector<17x1xf32>
    %27 = math.rsqrt %26 : vector<17x1xf32>
    %28 = vector.broadcast %27 : vector<17x1xf32> to vector<17x128xf32>
    %29 = arith.mulf %24, %28 : vector<17x128xf32>
    %30 = vector.broadcast %10 : vector<1x128xf32> to vector<17x128xf32>
    %31 = arith.mulf %29, %30 : vector<17x128xf32>
    %32 = vector.broadcast %11 : vector<1x128xf32> to vector<17x128xf32>
    %33 = arith.addf %31, %32 : vector<17x128xf32>
    %34 = arith.truncf %33 : vector<17x128xf32> to vector<17x128xbf16>
    %c0_18 = arith.constant 0 : index
    %c0_19 = arith.constant 0 : index
    %35 = vector.load %arg8[%c0_18, %c0_19] : memref<128x512xbf16, #tpu.memory_space<vmem>>, vector<128x512xbf16>
    %cst_20 = arith.constant dense<0.000000e+00> : vector<17x512xf32>
    %36 = tpu.matmul %34, %35, %cst_20 {dimension_numbers = #tpu.dot_dimension_numbers<[1], [0], [0], [1], [0, 0, 1, 1], [], []>} : vector<17x128xbf16>, vector<128x512xbf16>, vector<17x512xf32> -> vector<17x512xf32>
    %c0_21 = arith.constant 0 : index
    %c0_22 = arith.constant 0 : index
    %37 = vector.load %arg9[%c0_21, %c0_22] : memref<1x512xf32, #tpu.memory_space<vmem>>, vector<1x512xf32>
    %38 = vector.broadcast %37 : vector<1x512xf32> to vector<17x512xf32>
    %39 = arith.addf %36, %38 : vector<17x512xf32>
    %cst_23 = arith.constant 5.000000e-01 : f32
    %40 = vector.broadcast %cst_23 : f32 to vector<17x512xf32>
    %41 = arith.mulf %40, %39 : vector<17x512xf32>
    %cst_24 = arith.constant 4.471500e-02 : f32
    %42 = vector.broadcast %cst_24 : f32 to vector<17x512xf32>
    %43 = arith.mulf %42, %39 : vector<17x512xf32>
    %44 = arith.mulf %43, %39 : vector<17x512xf32>
    %45 = arith.mulf %44, %39 : vector<17x512xf32>
    %46 = arith.addf %39, %45 : vector<17x512xf32>
    %cst_25 = arith.constant 0.797884583 : f32
    %47 = vector.broadcast %cst_25 : f32 to vector<17x512xf32>
    %48 = arith.mulf %47, %46 : vector<17x512xf32>
    %49 = math.tanh %48 : vector<17x512xf32>
    %cst_26 = arith.constant 1.000000e+00 : f32
    %50 = vector.broadcast %cst_26 : f32 to vector<17x512xf32>
    %51 = arith.addf %50, %49 : vector<17x512xf32>
    %52 = arith.mulf %41, %51 : vector<17x512xf32>
    %53 = arith.truncf %52 : vector<17x512xf32> to vector<17x512xbf16>
    %c0_27 = arith.constant 0 : index
    %c0_28 = arith.constant 0 : index
    %54 = vector.load %arg10[%c0_27, %c0_28] : memref<512x128xbf16, #tpu.memory_space<vmem>>, vector<512x128xbf16>
    %cst_29 = arith.constant dense<0.000000e+00> : vector<17x128xf32>
    %55 = tpu.matmul %53, %54, %cst_29 {dimension_numbers = #tpu.dot_dimension_numbers<[1], [0], [0], [1], [0, 0, 1, 1], [], []>} : vector<17x512xbf16>, vector<512x128xbf16>, vector<17x128xf32> -> vector<17x128xf32>
    %c0_30 = arith.constant 0 : index
    %c0_31 = arith.constant 0 : index
    %56 = vector.load %arg11[%c0_30, %c0_31] : memref<1x128xf32, #tpu.memory_space<vmem>>, vector<1x128xf32>
    %57 = vector.broadcast %56 : vector<1x128xf32> to vector<17x128xf32>
    %58 = arith.addf %55, %57 : vector<17x128xf32>
    %59 = arith.addf %9, %58 : vector<17x128xf32>
    %c0_32 = arith.constant 0 : index
    %c0_33 = arith.constant 0 : index
    %60 = vector.load %arg12[%c0_32, %c0_33] : memref<1x128xf32, #tpu.memory_space<vmem>>, vector<1x128xf32>
    %c0_34 = arith.constant 0 : index
    %c0_35 = arith.constant 0 : index
    %61 = vector.load %arg13[%c0_34, %c0_35] : memref<1x128xf32, #tpu.memory_space<vmem>>, vector<1x128xf32>
    %cst_36 = arith.constant dense<0.000000e+00> : vector<17xf32>
    %62 = vector.multi_reduction <add>, %59, %cst_36 [1] : vector<17x128xf32> to vector<17xf32>
    %63 = vector.shape_cast %62 : vector<17xf32> to vector<17x1xf32>
    %cst_37 = arith.constant 1.280000e+02 : f32
    %64 = vector.broadcast %cst_37 : f32 to vector<17x1xf32>
    %65 = arith.divf %63, %64 : vector<17x1xf32>
    %66 = vector.broadcast %65 : vector<17x1xf32> to vector<17x128xf32>
    %67 = arith.subf %59, %66 : vector<17x128xf32>
    %68 = arith.mulf %67, %67 : vector<17x128xf32>
    %cst_38 = arith.constant dense<0.000000e+00> : vector<17xf32>
    %69 = vector.multi_reduction <add>, %68, %cst_38 [1] : vector<17x128xf32> to vector<17xf32>
    %70 = vector.shape_cast %69 : vector<17xf32> to vector<17x1xf32>
    %cst_39 = arith.constant 1.280000e+02 : f32
    %71 = vector.broadcast %cst_39 : f32 to vector<17x1xf32>
    %72 = arith.divf %70, %71 : vector<17x1xf32>
    %73 = vector.broadcast %65 : vector<17x1xf32> to vector<17x128xf32>
    %74 = arith.subf %59, %73 : vector<17x128xf32>
    %cst_40 = arith.constant 9.99999997E-7 : f32
    %75 = vector.broadcast %cst_40 : f32 to vector<17x1xf32>
    %76 = arith.addf %72, %75 : vector<17x1xf32>
    %77 = math.rsqrt %76 : vector<17x1xf32>
    %78 = vector.broadcast %77 : vector<17x1xf32> to vector<17x128xf32>
    %79 = arith.mulf %74, %78 : vector<17x128xf32>
    %80 = vector.broadcast %60 : vector<1x128xf32> to vector<17x128xf32>
    %81 = arith.mulf %79, %80 : vector<17x128xf32>
    %82 = vector.broadcast %61 : vector<1x128xf32> to vector<17x128xf32>
    %83 = arith.addf %81, %82 : vector<17x128xf32>
    %c0_41 = arith.constant 0 : index
    %c0_42 = arith.constant 0 : index
    %c0_43 = arith.constant 0 : index
    %84 = vector.load %arg14[%c0_41, %c0_42, %c0_43] : memref<1x17x128xf32, #tpu.memory_space<vmem>>, vector<1x17x128xf32>
    %85 = vector.shape_cast %84 : vector<1x17x128xf32> to vector<17x128xf32>
    %86 = vector.shape_cast %83 : vector<17x128xf32> to vector<1x17x128xf32>
    tpu.vector_store %arg14[%c0_41, %c0_42, %c0_43], %86 {strides = array<i32>} : memref<1x17x128xf32, #tpu.memory_space<vmem>>, vector<1x17x128xf32>,
    return
  }
  func.func @transform_0(%arg0: i32, %arg1: i32) -> (i32, i32, i32) {
    %c0_i32 = arith.constant 0 : i32
    %c0_i32_0 = arith.constant 0 : i32
    return %arg0, %arg1, %c0_i32 : i32, i32, i32
  }
  func.func @transform_1(%arg0: i32, %arg1: i32) -> (i32, i32, i32) {
    %c0_i32 = arith.constant 0 : i32
    %c0_i32_0 = arith.constant 0 : i32
    return %arg0, %arg1, %c0_i32 : i32, i32, i32
  }
  func.func @transform_2(%arg0: i32, %arg1: i32) -> (i32, i32) {
    %c0_i32 = arith.constant 0 : i32
    %c0_i32_0 = arith.constant 0 : i32
    %c0_i32_1 = arith.constant 0 : i32
    return %c0_i32, %c0_i32_0 : i32, i32
  }
  func.func @transform_3(%arg0: i32, %arg1: i32) -> (i32, i32) {
    %c0_i32 = arith.constant 0 : i32
    %c0_i32_0 = arith.constant 0 : i32
    %c0_i32_1 = arith.constant 0 : i32
    return %c0_i32, %c0_i32_0 : i32, i32
  }
  func.func @transform_4(%arg0: i32, %arg1: i32) -> (i32, i32) {
    %c0_i32 = arith.constant 0 : i32
    %c0_i32_0 = arith.constant 0 : i32
    %c0_i32_1 = arith.constant 0 : i32
    return %c0_i32, %c0_i32_0 : i32, i32
  }
  func.func @transform_5(%arg0: i32, %arg1: i32) -> (i32, i32) {
    %c0_i32 = arith.constant 0 : i32
    %c0_i32_0 = arith.constant 0 : i32
    %c0_i32_1 = arith.constant 0 : i32
    return %c0_i32, %c0_i32_0 : i32, i32
  }
  func.func @transform_6(%arg0: i32, %arg1: i32) -> (i32, i32) {
    %c0_i32 = arith.constant 0 : i32
    %c0_i32_0 = arith.constant 0 : i32
    %c0_i32_1 = arith.constant 0 : i32
    return %c0_i32, %c0_i32_0 : i32, i32
  }
  func.func @transform_7(%arg0: i32, %arg1: i32) -> (i32, i32) {
    %c0_i32 = arith.constant 0 : i32
    %c0_i32_0 = arith.constant 0 : i32
    %c0_i32_1 = arith.constant 0 : i32
    return %c0_i32, %c0_i32_0 : i32, i32
  }
  func.func @transform_8(%arg0: i32, %arg1: i32) -> (i32, i32) {
    %c0_i32 = arith.constant 0 : i32
    %c0_i32_0 = arith.constant 0 : i32
    %c0_i32_1 = arith.constant 0 : i32
    return %c0_i32, %c0_i32_0 : i32, i32
  }
  func.func @transform_9(%arg0: i32, %arg1: i32) -> (i32, i32) {
    %c0_i32 = arith.constant 0 : i32
    %c0_i32_0 = arith.constant 0 : i32
    %c0_i32_1 = arith.constant 0 : i32
    return %c0_i32, %c0_i32_0 : i32, i32
  }
  func.func @transform_10(%arg0: i32, %arg1: i32) -> (i32, i32) {
    %c0_i32 = arith.constant 0 : i32
    %c0_i32_0 = arith.constant 0 : i32
    %c0_i32_1 = arith.constant 0 : i32
    return %c0_i32, %c0_i32_0 : i32, i32
  }
  func.func @transform_11(%arg0: i32, %arg1: i32) -> (i32, i32) {
    %c0_i32 = arith.constant 0 : i32
    %c0_i32_0 = arith.constant 0 : i32
    %c0_i32_1 = arith.constant 0 : i32
    return %c0_i32, %c0_i32_0 : i32, i32
  }
  func.func @transform_12(%arg0: i32, %arg1: i32) -> (i32, i32, i32) {
    %c0_i32 = arith.constant 0 : i32
    %c0_i32_0 = arith.constant 0 : i32
    return %arg0, %arg1, %c0_i32 : i32, i32, i32
  }
}

</mosaic_0001>

<llo_original>
// kernel: dinov2_feature_extractor.7
$region0: #{dinov2_feature_extractor.7}
  #allocation0 [shape = 'u32[]', space=smem, size = 0x4, offset = 0x4, fixed_abs, tag = 'smem constant byte address 0x4 - core index']
  #allocation1 [shape = 'u32[144,128]{1,0:T(1,128)}', space=vmem, size = 0x12000, scoped, tag = 'internal scratch']
  %s0 = inlined_call_operand.vmem [shape: bf16[2,16,640], index: 0, kind: input, shape index: {}]
  %s1 = inlined_call_operand.vmem [shape: bf16[640,128], index: 1, kind: input, shape index: {}]
  %s2 = inlined_call_operand.vmem [shape: f32[1,128], index: 2, kind: input, shape index: {}]
  %s3 = inlined_call_operand.vmem [shape: f32[1,128], index: 3, kind: input, shape index: {}]
  %s4 = inlined_call_operand.vmem [shape: f32[17,128], index: 4, kind: input, shape index: {}]
  %s5 = inlined_call_operand.vmem [shape: f32[2,17,128], index: 5, kind: output, shape index: {}]
  %s6 = sld [smem:[#allocation0]]
  $region53: #{dinov2_feature_extractor.7} parent=0
    _
  %s8 = ssub.s32 1, %s6
  %s9 = scalar_select 0, %s8, %s6
  loop: start=0, step=1, limit=4
  $region2: #{dinov2_feature_extractor.7} parent=0 // loop_pre_header
    _
  $region3: #{dinov2_feature_extractor.7} parent=0 // loop_header
    %s11 = sphi 0, %s15
    %p12 = scmp.ge.s32.totalorder %s11, 4
    %s21 = sphi 0, %s23
    %s24 = sphi 0, %s21
    %s25 = sphi 0, %s24
    %s41 = sphi 0, %s25
    %s45 = sphi 0, %s45
    %s47 = sphi 0, %s45
    %s48 = sphi 0, %s47
    %s62 = sphi 0, %s48
    %s66 = sphi 0, %s66
    %s68 = sphi 0, %s66
    %s69 = sphi 0, %s68
    %s83 = sphi 0, %s69
    %s87 = sphi 0, %s87
    %s89 = sphi 0, %s87
    %s90 = sphi 0, %s89
    %s104 = sphi 0, %s90
    %s108 = sphi 0, %s108
    %s110 = sphi 0, %s108
    %s111 = sphi 0, %s110
    %s125 = sphi 0, %s111
    %s131 = sphi 0, %s133
    %s134 = sphi 0, %s131
    %s135 = sphi 0, %s134
    %s151 = sphi 0, %s135
  $region4: #{dinov2_feature_extractor.7} parent=0 // loop_header_branch
    %14 = sbr.rel (%p12) target = $region8
  $region5: #{dinov2_feature_extractor.7} parent=0 // loop_body
    %s16 = ssub.s32 %s11, 1
    %s17 = ssub.s32 %s11, 2
    %s18 = sadd.s32 %s11, 1
    %s19 = ssub.s32 %s11, %s18
    %p20 = scmp.eq.s32.totalorder %s19, 0
    %s22 = sadd.s32 %s21, 1
    %s23 = scalar_select %p20, %s21, %s22
    %p26 = pneg %p20
    %p27 = scmp.eq.s32.totalorder %s11, 1
    %p28 = por %p26, %p27
    %p29 = scmp.ne.s32.totalorder %s21, %s24
    %p30 = scmp.eq.s32.totalorder %s11, 0
    %p31 = por %p29, %p30
    %p32 = scmp.ne.s32.totalorder %s21, %s24
    %p33 = scmp.eq.s32.totalorder %s16, 1
    %p34 = por %p32, %p33
    %p35 = scmp.ne.s32.totalorder %s24, %s25
    %p36 = scmp.eq.s32.totalorder %s16, 0
    %p37 = por %p35, %p36
    %p38 = scmp.ne.s32.totalorder %s24, %s25
    %p39 = scmp.eq.s32.totalorder %s17, 1
    %p40 = por %p38, %p39
    %p42 = scmp.ne.s32.totalorder %s25, %s41
    %p43 = scmp.eq.s32.totalorder %s17, 0
    %p44 = por %p42, %p43
    %s46 = sadd.s32 %s45, 1
    %p49 = scmp.eq.s32.totalorder %s11, 1
    %p50 = scmp.ne.s32.totalorder %s45, %s47
    %p51 = scmp.eq.s32.totalorder %s11, 0
    %p52 = por %p50, %p51
    %p53 = scmp.ne.s32.totalorder %s45, %s47
    %p54 = scmp.eq.s32.totalorder %s16, 1
    %p55 = por %p53, %p54
    %p56 = scmp.ne.s32.totalorder %s47, %s48
    %p57 = scmp.eq.s32.totalorder %s16, 0
    %p58 = por %p56, %p57
    %p59 = scmp.ne.s32.totalorder %s47, %s48
    %p60 = scmp.eq.s32.totalorder %s17, 1
    %p61 = por %p59, %p60
    %p63 = scmp.ne.s32.totalorder %s48, %s62
    %p64 = scmp.eq.s32.totalorder %s17, 0
    %p65 = por %p63, %p64
    %s67 = sadd.s32 %s66, 1
    %p70 = scmp.eq.s32.totalorder %s11, 1
    %p71 = scmp.ne.s32.totalorder %s66, %s68
    %p72 = scmp.eq.s32.totalorder %s11, 0
    %p73 = por %p71, %p72
    %p74 = scmp.ne.s32.totalorder %s66, %s68
    %p75 = scmp.eq.s32.totalorder %s16, 1
    %p76 = por %p74, %p75
    %p77 = scmp.ne.s32.totalorder %s68, %s69
    %p78 = scmp.eq.s32.totalorder %s16, 0
    %p79 = por %p77, %p78
    %p80 = scmp.ne.s32.totalorder %s68, %s69
    %p81 = scmp.eq.s32.totalorder %s17, 1
    %p82 = por %p80, %p81
    %p84 = scmp.ne.s32.totalorder %s69, %s83
    %p85 = scmp.eq.s32.totalorder %s17, 0
    %p86 = por %p84, %p85
    %s88 = sadd.s32 %s87, 1
    %p91 = scmp.eq.s32.totalorder %s11, 1
    %p92 = scmp.ne.s32.totalorder %s87, %s89
    %p93 = scmp.eq.s32.totalorder %s11, 0
    %p94 = por %p92, %p93
    %p95 = scmp.ne.s32.totalorder %s87, %s89
    %p96 = scmp.eq.s32.totalorder %s16, 1
    %p97 = por %p95, %p96
    %p98 = scmp.ne.s32.totalorder %s89, %s90
    %p99 = scmp.eq.s32.totalorder %s16, 0
    %p100 = por %p98, %p99
    %p101 = scmp.ne.s32.totalorder %s89, %s90
    %p102 = scmp.eq.s32.totalorder %s17, 1
    %p103 = por %p101, %p102
    %p105 = scmp.ne.s32.totalorder %s90, %s104
    %p106 = scmp.eq.s32.totalorder %s17, 0
    %p107 = por %p105, %p106
    %s109 = sadd.s32 %s108, 1
    %p112 = scmp.eq.s32.totalorder %s11, 1
    %p113 = scmp.ne.s32.totalorder %s108, %s110
    %p114 = scmp.eq.s32.totalorder %s11, 0
    %p115 = por %p113, %p114
    %p116 = scmp.ne.s32.totalorder %s108, %s110
    %p117 = scmp.eq.s32.totalorder %s16, 1
    %p118 = por %p116, %p117
    %p119 = scmp.ne.s32.totalorder %s110, %s111
    %p120 = scmp.eq.s32.totalorder %s16, 0
    %p121 = por %p119, %p120
    %p122 = scmp.ne.s32.totalorder %s110, %s111
    %p123 = scmp.eq.s32.totalorder %s17, 1
    %p124 = por %p122, %p123
    %p126 = scmp.ne.s32.totalorder %s111, %s125
    %p127 = scmp.eq.s32.totalorder %s17, 0
    %p128 = por %p126, %p127
    %s129 = ssub.s32 %s11, %s18
    %p130 = scmp.eq.s32.totalorder %s129, 0
    %s132 = sadd.s32 %s131, 1
    %s133 = scalar_select %p130, %s131, %s132
    %p136 = pneg %p130
    %p137 = scmp.eq.s32.totalorder %s11, 1
    %p138 = por %p136, %p137
    %p139 = scmp.ne.s32.totalorder %s131, %s134
    %p140 = scmp.eq.s32.totalorder %s11, 0
    %p141 = por %p139, %p140
    %p142 = scmp.ne.s32.totalorder %s131, %s134
    %p143 = scmp.eq.s32.totalorder %s16, 1
    %p144 = por %p142, %p143
    %p145 = scmp.ne.s32.totalorder %s134, %s135
    %p146 = scmp.eq.s32.totalorder %s16, 0
    %p147 = por %p145, %p146
    %p148 = scmp.ne.s32.totalorder %s134, %s135
    %p149 = scmp.eq.s32.totalorder %s17, 1
    %p150 = por %p148, %p149
    %p152 = scmp.ne.s32.totalorder %s135, %s151
    %p153 = scmp.eq.s32.totalorder %s17, 0
    %p154 = por %p152, %p153
    %p155 = scmp.le.s32.totalorder 1, %s11
    %p156 = scmp.lt.s32.totalorder %s11, 3
    %p157 = pnand %p155, %p156
    %p158 = pneg %p157
    // Predicated region
    $region9: #{dinov2_feature_extractor.7} parent=5 // pred_check
      _
    $region10: #{dinov2_feature_extractor.7} parent=5 // pred_check_branch
      %160 = sbr.rel (%p157) target = $region12
    $region11: #{dinov2_feature_extractor.7} parent=5 // pred_region
      %s161 = ssub.s32 %s11, 1
      // Predicated region
      $region13: #{dinov2_feature_extractor.7} parent=11 // pred_check
        %p162 = pneg %p58
      $region14: #{dinov2_feature_extractor.7} parent=11 // pred_check_branch
        %164 = sbr.rel (%p162) target = $region16
      $region15: #{dinov2_feature_extractor.7} parent=11 // pred_region
        _
      $region16: #{dinov2_feature_extractor.7} parent=11 // pred_fallthru
        _
      // Predicated region
      $region17: #{dinov2_feature_extractor.7} parent=11 // pred_check
        %p165 = pneg %p79
      $region18: #{dinov2_feature_extractor.7} parent=11 // pred_check_branch
        %167 = sbr.rel (%p165) target = $region20
      $region19: #{dinov2_feature_extractor.7} parent=11 // pred_region
        _
      $region20: #{dinov2_feature_extractor.7} parent=11 // pred_fallthru
        _
      // Predicated region
      $region21: #{dinov2_feature_extractor.7} parent=11 // pred_check
        %p168 = pneg %p100
      $region22: #{dinov2_feature_extractor.7} parent=11 // pred_check_branch
        %170 = sbr.rel (%p168) target = $region24
      $region23: #{dinov2_feature_extractor.7} parent=11 // pred_region
        _
      $region24: #{dinov2_feature_extractor.7} parent=11 // pred_fallthru
        _
      // Predicated region
      $region25: #{dinov2_feature_extractor.7} parent=11 // pred_check
        %p171 = pneg %p121
      $region26: #{dinov2_feature_extractor.7} parent=11 // pred_check_branch
        %173 = sbr.rel (%p171) target = $region28
      $region27: #{dinov2_feature_extractor.7} parent=11 // pred_region
        _
      $region28: #{dinov2_feature_extractor.7} parent=11 // pred_fallthru
        _
    $region12: #{dinov2_feature_extractor.7} parent=5 // pred_fallthru
      _
    %p174 = scmp.lt.s32.totalorder %s11, 2
    // Predicated region
    $region29: #{dinov2_feature_extractor.7} parent=5 // pred_check
      %p175 = pneg %p174
    $region30: #{dinov2_feature_extractor.7} parent=5 // pred_check_branch
      %177 = sbr.rel (%p175) target = $region32
    $region31: #{dinov2_feature_extractor.7} parent=5 // pred_region
      // Predicated region
      $region33: #{dinov2_feature_extractor.7} parent=31 // pred_check
        %p178 = pneg %p31
      $region34: #{dinov2_feature_extractor.7} parent=31 // pred_check_branch
        %180 = sbr.rel (%p178) target = $region36
      $region35: #{dinov2_feature_extractor.7} parent=31 // pred_region
        %p181 = scmp.lt.s32.totalorder %s11, 1
        %s182 = scalar_select %p181, %s11, 1
        %s183 = smul.addr %s182, 10
        %s184 = smul.addr %s183, 4
        %s185 = scalar_lea.vmem %s0, %s184
      $region36: #{dinov2_feature_extractor.7} parent=31 // pred_fallthru
        _
    $region32: #{dinov2_feature_extractor.7} parent=5 // pred_fallthru
      _
    %p186 = scmp.le.s32.totalorder 1, %s11
    %p187 = scmp.lt.s32.totalorder %s11, 3
    %p188 = pnand %p186, %p187
    %p189 = pneg %p188
    // Predicated region
    $region37: #{dinov2_feature_extractor.7} parent=5 // pred_check
      _
    $region38: #{dinov2_feature_extractor.7} parent=5 // pred_check_branch
      %191 = sbr.rel (%p188) target = $region40
    $region39: #{dinov2_feature_extractor.7} parent=5 // pred_region
      %s192 = ssub.s32 %s11, 1
      %p193 = scmp.lt.s32.totalorder %s16, 1
      %s194 = scalar_select %p193, %s16, 1
      %s195 = smul.addr %s194, 10
      %s196 = smul.addr %s195, 4
      %s197 = scalar_lea.vmem %s0, %s196
      %p198 = pneg %p37
      %p199 = pneg %p34
      %p200 = pneg %p58
      %p201 = pneg %p55
      %p202 = pneg %p79
      %p203 = pneg %p76
      %p204 = pneg %p100
      %p205 = pneg %p97
      %p206 = pneg %p121
      %p207 = pneg %p118
      %p208 = pneg %p147
      %p209 = pneg %p144
      %p210 = scmp.lt.s32.totalorder %s16, 1
      %s211 = scalar_select %p210, %s16, 1
      %s212 = smul.addr %s211, 3
      %s213 = smul.addr %s212, 8
      %s214 = scalar_lea.vmem %s5, %s213
      %p215 = scmp.lt.s32.totalorder %s16, 1
      %s216 = scalar_select %p215, %s16, 1
      %s217 = smul.addr %s216, 10
      %s218 = smul.addr %s217, 4
      %s219 = scalar_lea.vmem %s0, %s218
      %p220 = scmp.lt.s32.totalorder %s16, 1
      %s221 = scalar_select %p220, %s16, 1
      %s222 = smul.addr %s221, 3
      %s223 = smul.addr %s222, 8
      %s224 = scalar_lea.vmem %s5, %s223
      %v226 = vld [vmem:[%s219] sm:$0xff]
      %v227 = vld [vmem:[%s219 + $0x8] sm:$0xff]
      %v228 = vld [vmem:[%s219 + $0x10] sm:$0xf]
      %v229 = vld [vmem:[%s219 + $0x14] sm:$0xff]
      %v230 = vld [vmem:[%s219 + $0x1c] sm:$0xff]
      %v231 = vld [vmem:[%s219 + $0x24] sm:$0xf]
      %v232 = vld [vmem:[%s1] sm:$0xf]
      %v233 = vld [vmem:[%s1 + $0x4] sm:$0xf]
      %v234 = vld [vmem:[%s1 + $0x8] sm:$0xf]
      %v235 = vld [vmem:[%s1 + $0xc] sm:$0xf]
      %v236 = vld [vmem:[%s1 + $0x10] sm:$0xf]
      %v237 = vld [vmem:[%s1 + $0x14] sm:$0xf]
      %v238 = vld [vmem:[%s1 + $0x18] sm:$0xf]
      %v239 = vld [vmem:[%s1 + $0x1c] sm:$0xf]
      %v240 = vld [vmem:[%s1 + $0x20] sm:$0xf]
      %v241 = vld [vmem:[%s1 + $0x24] sm:$0xf]
      %v242 = vld [vmem:[%s1 + $0x28] sm:$0xf]
      %v243 = vld [vmem:[%s1 + $0x2c] sm:$0xf]
      %v244 = vld [vmem:[%s1 + $0x30] sm:$0xf]
      %v245 = vld [vmem:[%s1 + $0x34] sm:$0xf]
      %v246 = vld [vmem:[%s1 + $0x38] sm:$0xf]
      %v247 = vld [vmem:[%s1 + $0x3c] sm:$0xf]
      %v248 = vld [vmem:[%s1 + $0x40] sm:$0xf]
      %v249 = vld [vmem:[%s1 + $0x44] sm:$0xf]
      %v250 = vld [vmem:[%s1 + $0x48] sm:$0xf]
      %v251 = vld [vmem:[%s1 + $0x4c] sm:$0xf]
      %v252 = vld [vmem:[%s1 + $0x50] sm:$0xf]
      %v253 = vld [vmem:[%s1 + $0x54] sm:$0xf]
      %v254 = vld [vmem:[%s1 + $0x58] sm:$0xf]
      %v255 = vld [vmem:[%s1 + $0x5c] sm:$0xf]
      %v256 = vld [vmem:[%s1 + $0x60] sm:$0xf]
      %v257 = vld [vmem:[%s1 + $0x64] sm:$0xf]
      %v258 = vld [vmem:[%s1 + $0x68] sm:$0xf]
      %v259 = vld [vmem:[%s1 + $0x6c] sm:$0xf]
      %v260 = vld [vmem:[%s1 + $0x70] sm:$0xf]
      %v261 = vld [vmem:[%s1 + $0x74] sm:$0xf]
      %v262 = vld [vmem:[%s1 + $0x78] sm:$0xf]
      %v263 = vld [vmem:[%s1 + $0x7c] sm:$0xf]
      %v264 = vld [vmem:[%s1 + $0x80] sm:$0xf]
      %v265 = vld [vmem:[%s1 + $0x84] sm:$0xf]
      %v266 = vld [vmem:[%s1 + $0x88] sm:$0xf]
      %v267 = vld [vmem:[%s1 + $0x8c] sm:$0xf]
      %v268 = vld [vmem:[%s1 + $0x90] sm:$0xf]
      %v269 = vld [vmem:[%s1 + $0x94] sm:$0xf]
      %v270 = vld [vmem:[%s1 + $0x98] sm:$0xf]
      %v271 = vld [vmem:[%s1 + $0x9c] sm:$0xf]
      %v272 = vld [vmem:[%s1 + $0xa0] sm:$0xf]
      %v273 = vld [vmem:[%s1 + $0xa4] sm:$0xf]
      %v274 = vld [vmem:[%s1 + $0xa8] sm:$0xf]
      %v275 = vld [vmem:[%s1 + $0xac] sm:$0xf]
      %v276 = vld [vmem:[%s1 + $0xb0] sm:$0xf]
      %v277 = vld [vmem:[%s1 + $0xb4] sm:$0xf]
      %v278 = vld [vmem:[%s1 + $0xb8] sm:$0xf]
      %v279 = vld [vmem:[%s1 + $0xbc] sm:$0xf]
      %v280 = vld [vmem:[%s1 + $0xc0] sm:$0xf]
      %v281 = vld [vmem:[%s1 + $0xc4] sm:$0xf]
      %v282 = vld [vmem:[%s1 + $0xc8] sm:$0xf]
      %v283 = vld [vmem:[%s1 + $0xcc] sm:$0xf]
      %v284 = vld [vmem:[%s1 + $0xd0] sm:$0xf]
      %v285 = vld [vmem:[%s1 + $0xd4] sm:$0xf]
      %v286 = vld [vmem:[%s1 + $0xd8] sm:$0xf]
      %v287 = vld [vmem:[%s1 + $0xdc] sm:$0xf]
      %v288 = vld [vmem:[%s1 + $0xe0] sm:$0xf]
      %v289 = vld [vmem:[%s1 + $0xe4] sm:$0xf]
      %v290 = vld [vmem:[%s1 + $0xe8] sm:$0xf]
      %v291 = vld [vmem:[%s1 + $0xec] sm:$0xf]
      %v292 = vld [vmem:[%s1 + $0xf0] sm:$0xf]
      %v293 = vld [vmem:[%s1 + $0xf4] sm:$0xf]
      %v294 = vld [vmem:[%s1 + $0xf8] sm:$0xf]
      %v295 = vld [vmem:[%s1 + $0xfc] sm:$0xf]
      %v296 = vld [vmem:[%s1 + $0x100] sm:$0xf]
      %v297 = vld [vmem:[%s1 + $0x104] sm:$0xf]
      %v298 = vld [vmem:[%s1 + $0x108] sm:$0xf]
      %v299 = vld [vmem:[%s1 + $0x10c] sm:$0xf]
      %v300 = vld [vmem:[%s1 + $0x110] sm:$0xf]
      %v301 = vld [vmem:[%s1 + $0x114] sm:$0xf]
      %v302 = vld [vmem:[%s1 + $0x118] sm:$0xf]
      %v303 = vld [vmem:[%s1 + $0x11c] sm:$0xf]
      %v304 = vld [vmem:[%s1 + $0x120] sm:$0xf]
      %v305 = vld [vmem:[%s1 + $0x124] sm:$0xf]
      %v306 = vld [vmem:[%s1 + $0x128] sm:$0xf]
      %v307 = vld [vmem:[%s1 + $0x12c] sm:$0xf]
      %v308 = vld [vmem:[%s1 + $0x130] sm:$0xf]
      %v309 = vld [vmem:[%s1 + $0x134] sm:$0xf]
      %v310 = vld [vmem:[%s1 + $0x138] sm:$0xf]
      %v311 = vld [vmem:[%s1 + $0x13c] sm:$0xf]
      %v312 = vld [vmem:[%s2] sm:$0x1]
      %v314 = vlaneseq
      %v315 = vshrl.u32 %v314, 7
      %v316 = vsub.s32 0, %v315
      %v317 = vrot.slane %v312, %v316
      %v325 = vunpack.c.l.b16 %v226
      %v326 = vunpack.c.h.b16 %v226
      %v327 = vunpack.c.l.b16 %v227
      %v328 = vunpack.c.h.b16 %v227
      %v329 = vunpack.c.l.b16 %v228
      %v330 = vunpack.c.l.b16 %v229
      %v331 = vunpack.c.h.b16 %v229
      %v332 = vunpack.c.l.b16 %v230
      %v333 = vunpack.c.h.b16 %v230
      %v334 = vunpack.c.l.b16 %v231
      %v335 = vpack.c.b16 %v330, %v325
      %v336 = vpack.c.b16 %v331, %v326
      %v337 = vpack.c.b16 %v332, %v327
      %v338 = vpack.c.b16 %v333, %v328
      %v339 = vpack.c.b16 %v334, %v329
      %v425 = vunpack.c.l.b16 %v232
      %v426 = vunpack.c.l.b16 %v233
      %v427 = vunpack.c.l.b16 %v234
      %v428 = vunpack.c.l.b16 %v235
      %v429 = vunpack.c.l.b16 %v236
      %v430 = vunpack.c.l.b16 %v237
      %v431 = vunpack.c.l.b16 %v238
      %v432 = vunpack.c.l.b16 %v239
      %v433 = vunpack.c.l.b16 %v240
      %v434 = vunpack.c.l.b16 %v241
      %v435 = vunpack.c.l.b16 %v242
      %v436 = vunpack.c.l.b16 %v243
      %v437 = vunpack.c.l.b16 %v244
      %v438 = vunpack.c.l.b16 %v245
      %v439 = vunpack.c.l.b16 %v246
      %v440 = vunpack.c.l.b16 %v247
      %v441 = vunpack.c.l.b16 %v248
      %v442 = vunpack.c.l.b16 %v249
      %v443 = vunpack.c.l.b16 %v250
      %v444 = vunpack.c.l.b16 %v251
      %v445 = vunpack.c.l.b16 %v252
      %v446 = vunpack.c.l.b16 %v253
      %v447 = vunpack.c.l.b16 %v254
      %v448 = vunpack.c.l.b16 %v255
      %v449 = vunpack.c.l.b16 %v256
      %v450 = vunpack.c.l.b16 %v257
      %v451 = vunpack.c.l.b16 %v258
      %v452 = vunpack.c.l.b16 %v259
      %v453 = vunpack.c.l.b16 %v260
      %v454 = vunpack.c.l.b16 %v261
      %v455 = vunpack.c.l.b16 %v262
      %v456 = vunpack.c.l.b16 %v263
      %v457 = vunpack.c.l.b16 %v264
      %v458 = vunpack.c.l.b16 %v265
      %v459 = vunpack.c.l.b16 %v266
      %v460 = vunpack.c.l.b16 %v267
      %v461 = vunpack.c.l.b16 %v268
      %v462 = vunpack.c.l.b16 %v269
      %v463 = vunpack.c.l.b16 %v270
      %v464 = vunpack.c.l.b16 %v271
      %v465 = vunpack.c.l.b16 %v272
      %v466 = vunpack.c.l.b16 %v273
      %v467 = vunpack.c.l.b16 %v274
      %v468 = vunpack.c.l.b16 %v275
      %v469 = vunpack.c.l.b16 %v276
      %v470 = vunpack.c.l.b16 %v277
      %v471 = vunpack.c.l.b16 %v278
      %v472 = vunpack.c.l.b16 %v279
      %v473 = vunpack.c.l.b16 %v280
      %v474 = vunpack.c.l.b16 %v281
      %v475 = vunpack.c.l.b16 %v282
      %v476 = vunpack.c.l.b16 %v283
      %v477 = vunpack.c.l.b16 %v284
      %v478 = vunpack.c.l.b16 %v285
      %v479 = vunpack.c.l.b16 %v286
      %v480 = vunpack.c.l.b16 %v287
      %v481 = vunpack.c.l.b16 %v288
      %v482 = vunpack.c.l.b16 %v289
      %v483 = vunpack.c.l.b16 %v290
      %v484 = vunpack.c.l.b16 %v291
      %v485 = vunpack.c.l.b16 %v292
      %v486 = vunpack.c.l.b16 %v293
      %v487 = vunpack.c.l.b16 %v294
      %v488 = vunpack.c.l.b16 %v295
      %v489 = vunpack.c.l.b16 %v296
      %v490 = vunpack.c.l.b16 %v297
      %v491 = vunpack.c.l.b16 %v298
      %v492 = vunpack.c.l.b16 %v299
      %v493 = vunpack.c.l.b16 %v300
      %v494 = vunpack.c.l.b16 %v301
      %v495 = vunpack.c.l.b16 %v302
      %v496 = vunpack.c.l.b16 %v303
      %v497 = vunpack.c.l.b16 %v304
      %v498 = vunpack.c.l.b16 %v305
      %v499 = vunpack.c.l.b16 %v306
      %v500 = vunpack.c.l.b16 %v307
      %v501 = vunpack.c.l.b16 %v308
      %v502 = vunpack.c.l.b16 %v309
      %v503 = vunpack.c.l.b16 %v310
      %v504 = vunpack.c.l.b16 %v311
      %v505 = vpack.c.b16 %v426, %v425
      %v506 = vpack.c.b16 %v428, %v427
      %v507 = vpack.c.b16 %v430, %v429
      %v508 = vpack.c.b16 %v432, %v431
      %v509 = vpack.c.b16 %v434, %v433
      %v510 = vpack.c.b16 %v436, %v435
      %v511 = vpack.c.b16 %v438, %v437
      %v512 = vpack.c.b16 %v440, %v439
      %v513 = vpack.c.b16 %v442, %v441
      %v514 = vpack.c.b16 %v444, %v443
      %v515 = vpack.c.b16 %v446, %v445
      %v516 = vpack.c.b16 %v448, %v447
      %v517 = vpack.c.b16 %v450, %v449
      %v518 = vpack.c.b16 %v452, %v451
      %v519 = vpack.c.b16 %v454, %v453
      %v520 = vpack.c.b16 %v456, %v455
      %v521 = vpack.c.b16 %v458, %v457
      %v522 = vpack.c.b16 %v460, %v459
      %v523 = vpack.c.b16 %v462, %v461
      %v524 = vpack.c.b16 %v464, %v463
      %v525 = vpack.c.b16 %v466, %v465
      %v526 = vpack.c.b16 %v468, %v467
      %v527 = vpack.c.b16 %v470, %v469
      %v528 = vpack.c.b16 %v472, %v471
      %v529 = vpack.c.b16 %v474, %v473
      %v530 = vpack.c.b16 %v476, %v475
      %v531 = vpack.c.b16 %v478, %v477
      %v532 = vpack.c.b16 %v480, %v479
      %v533 = vpack.c.b16 %v482, %v481
      %v534 = vpack.c.b16 %v484, %v483
      %v535 = vpack.c.b16 %v486, %v485
      %v536 = vpack.c.b16 %v488, %v487
      %v537 = vpack.c.b16 %v490, %v489
      %v538 = vpack.c.b16 %v492, %v491
      %v539 = vpack.c.b16 %v494, %v493
      %v540 = vpack.c.b16 %v496, %v495
      %v541 = vpack.c.b16 %v498, %v497
      %v542 = vpack.c.b16 %v500, %v499
      %v543 = vpack.c.b16 %v502, %v501
      %v544 = vpack.c.b16 %v504, %v503
      %585 = vmatprep.subr.bf16.mxu0 0
      %586 = vmatpush1.bf16.msra.mxu0 %v505
      %587 = vmatprep.subr.bf16.mxu0 0
      %588 = vmatpush1.bf16.msra.mxu0 %v506
      %589 = vmatprep.subr.bf16.mxu0 0
      %590 = vmatpush1.bf16.msra.mxu0 %v507
      %591 = vmatprep.subr.bf16.mxu0 0
      %592 = vmatpush1.bf16.msra.mxu0 %v508
      %593 = vmatprep.subr.bf16.mxu0 0
      %594 = vmatpush1.bf16.msra.mxu0 %v509
      %595 = vmatprep.subr.bf16.mxu0 0
      %596 = vmatpush1.bf16.msra.mxu0 %v510
      %597 = vmatprep.subr.bf16.mxu0 0
      %598 = vmatpush1.bf16.msra.mxu0 %v511
      %599 = vmatprep.subr.bf16.mxu0 0
      %600 = vmatpush1.bf16.msra.mxu0 %v512
      %601 = vmatprep.subr.bf16.mxu0 0
      %602 = vmatpush1.bf16.msra.mxu0 %v513
      %603 = vmatprep.subr.bf16.mxu0 0
      %604 = vmatpush1.bf16.msra.mxu0 %v514
      %605 = vmatprep.subr.bf16.mxu0 0
      %606 = vmatpush1.bf16.msra.mxu0 %v515
      %607 = vmatprep.subr.bf16.mxu0 0
      %608 = vmatpush1.bf16.msra.mxu0 %v516
      %609 = vmatprep.subr.bf16.mxu0 0
      %610 = vmatpush1.bf16.msra.mxu0 %v517
      %611 = vmatprep.subr.bf16.mxu0 0
      %612 = vmatpush1.bf16.msra.mxu0 %v518
      %613 = vmatprep.subr.bf16.mxu0 0
      %614 = vmatpush1.bf16.msra.mxu0 %v519
      %615 = vmatprep.subr.bf16.mxu0 0
      %616 = vmatpush1.bf16.msra.mxu0 %v520
      %617 = vmatprep.mubr.bf16.mxu0 %v336
      %618 = vmatmul.mubr.bf16.gmra.mrb[0].mxu0 %v335
      %v619 = vpop.f32.mrb[0].mxu0
      %v620 = vadd.f32 %v317, %v619
      %v621 = vpop.f32.mrb[0].mxu0
      %v622 = vpop.f32.mrb[0].mxu0
      %v623 = vadd.f32 %v317, %v622
      %v624 = vpop.f32.mrb[0].mxu0
      %625 = vdwg.mxu0
      %626 = vmatprep.subr.bf16.mxu0 0
      %627 = vmatpush1.bf16.msra.mxu0 %v521
      %628 = vmatprep.subr.bf16.mxu0 0
      %629 = vmatpush1.bf16.msra.mxu0 %v522
      %630 = vmatprep.subr.bf16.mxu0 0
      %631 = vmatpush1.bf16.msra.mxu0 %v523
      %632 = vmatprep.subr.bf16.mxu0 0
      %633 = vmatpush1.bf16.msra.mxu0 %v524
      %634 = vmatprep.subr.bf16.mxu0 0
      %635 = vmatpush1.bf16.msra.mxu0 %v525
      %636 = vmatprep.subr.bf16.mxu0 0
      %637 = vmatpush1.bf16.msra.mxu0 %v526
      %638 = vmatprep.subr.bf16.mxu0 0
      %639 = vmatpush1.bf16.msra.mxu0 %v527
      %640 = vmatprep.subr.bf16.mxu0 0
      %641 = vmatpush1.bf16.msra.mxu0 %v528
      %642 = vmatprep.subr.bf16.mxu0 0
      %643 = vmatpush1.bf16.msra.mxu0 %v529
      %644 = vmatprep.subr.bf16.mxu0 0
      %645 = vmatpush1.bf16.msra.mxu0 %v530
      %646 = vmatprep.subr.bf16.mxu0 0
      %647 = vmatpush1.bf16.msra.mxu0 %v531
      %648 = vmatprep.subr.bf16.mxu0 0
      %649 = vmatpush1.bf16.msra.mxu0 %v532
      %650 = vmatprep.subr.bf16.mxu0 0
      %651 = vmatpush1.bf16.msra.mxu0 %v533
      %652 = vmatprep.subr.bf16.mxu0 0
      %653 = vmatpush1.bf16.msra.mxu0 %v534
      %654 = vmatprep.subr.bf16.mxu0 0
      %655 = vmatpush1.bf16.msra.mxu0 %v535
      %656 = vmatprep.subr.bf16.mxu0 0
      %657 = vmatpush1.bf16.msra.mxu0 %v536
      %658 = vmatprep.mubr.bf16.mxu0 %v338
      %659 = vmatmul.mubr.bf16.gmra.mrb[0].mxu0 %v337
      %v660 = vpop.f32.mrb[0].mxu0
      %v661 = vadd.f32 %v620, %v660
      %v662 = vpop.f32.mrb[0].mxu0
      %v663 = vpop.f32.mrb[0].mxu0
      %v664 = vadd.f32 %v623, %v663
      %v665 = vpop.f32.mrb[0].mxu0
      %666 = vdwg.mxu0
      %667 = vmatprep.subr.bf16.mxu0 0
      %668 = vmatpush1.bf16.msra.mxu0 %v537
      %669 = vmatprep.subr.bf16.mxu0 0
      %670 = vmatpush1.bf16.msra.mxu0 %v538
      %671 = vmatprep.subr.bf16.mxu0 0
      %672 = vmatpush1.bf16.msra.mxu0 %v539
      %673 = vmatprep.subr.bf16.mxu0 0
      %674 = vmatpush1.bf16.msra.mxu0 %v540
      %675 = vmatprep.subr.bf16.mxu0 0
      %676 = vmatpush1.bf16.msra.mxu0 %v541
      %677 = vmatprep.subr.bf16.mxu0 0
      %678 = vmatpush1.bf16.msra.mxu0 %v542
      %679 = vmatprep.subr.bf16.mxu0 0
      %680 = vmatpush1.bf16.msra.mxu0 %v543
      %681 = vmatprep.subr.bf16.mxu0 0
      %682 = vmatpush1.bf16.msra.mxu0 %v544
      %683 = vmatprep.subr.bf16.mxu0 0
      %684 = vmatpush1.bf16.msra.mxu0 0
      %685 = vmatprep.subr.bf16.mxu0 0
      %686 = vmatpush1.bf16.msra.mxu0 0
      %687 = vmatprep.subr.bf16.mxu0 0
      %688 = vmatpush1.bf16.msra.mxu0 0
      %689 = vmatprep.subr.bf16.mxu0 0
      %690 = vmatpush1.bf16.msra.mxu0 0
      %691 = vmatprep.subr.bf16.mxu0 0
      %692 = vmatpush1.bf16.msra.mxu0 0
      %693 = vmatprep.subr.bf16.mxu0 0
      %694 = vmatpush1.bf16.msra.mxu0 0
      %695 = vmatprep.subr.bf16.mxu0 0
      %696 = vmatpush1.bf16.msra.mxu0 0
      %697 = vmatprep.subr.bf16.mxu0 0
      %698 = vmatpush1.bf16.msra.mxu0 0
      %699 = vmatprep.mubr.bf16.mxu0 0
      %700 = vmatmul.mubr.bf16.gmra.mrb[0].mxu0 %v339
      %v701 = vpop.f32.mrb[0].mxu0
      %v702 = vadd.f32 %v661, %v701
      %v703 = vpop.f32.mrb[0].mxu0
      %v704 = vpop.f32.mrb[0].mxu0
      %v705 = vadd.f32 %v664, %v704
      %v706 = vpop.f32.mrb[0].mxu0
      %707 = vdwg.mxu0
      %v708 = vld [vmem:[%s3] sm:$0x1]
      %vm711 = vcmask 1040384
      %v712 = vrot.slane %v702, 7
      %v713 = vrot.slane %v705, 7
      %v714 = vsel %vm711, %v712, %v713
      %v718 = vsel %vm711, %v708, %v712
      %v719 = vld [vmem:[%s4] sm:$0xff]
      %v720 = vld [vmem:[%s4 + $0x8] sm:$0xff]
      %v721 = vld [vmem:[%s4 + $0x10] sm:$0x1]
      %v722 = vadd.f32 %v718, %v719
      %v723 = vadd.f32 %v714, %v720
      %v724 = vadd.f32 %v713, %v721
      %725 = vst [vmem:[%s224] sm:$0xff] %v722
      %726 = vst [vmem:[%s224 + $0x8] sm:$0xff] %v723
      %727 = vst [vmem:[%s224 + $0x10] sm:$0x1] %v724
      %p728 = scmp.lt.s32.totalorder %s16, 1
      %s729 = scalar_select %p728, %s16, 1
      %s730 = smul.addr %s729, 3
      %s731 = smul.addr %s730, 8
      %s732 = scalar_lea.vmem %s5, %s731
      // Predicated region
      $region41: #{dinov2_feature_extractor.7} parent=39 // pred_check
        %p733 = pneg %p144
      $region42: #{dinov2_feature_extractor.7} parent=39 // pred_check_branch
        %735 = sbr.rel (%p733) target = $region44
      $region43: #{dinov2_feature_extractor.7} parent=39 // pred_region
        _
      $region44: #{dinov2_feature_extractor.7} parent=39 // pred_fallthru
        _
    $region40: #{dinov2_feature_extractor.7} parent=5 // pred_fallthru
      _
    %p736 = scmp.le.s32.totalorder 2, %s11
    // Predicated region
    $region45: #{dinov2_feature_extractor.7} parent=5 // pred_check
      %p737 = pneg %p736
    $region46: #{dinov2_feature_extractor.7} parent=5 // pred_check_branch
      %739 = sbr.rel (%p737) target = $region48
    $region47: #{dinov2_feature_extractor.7} parent=5 // pred_region
      %s740 = ssub.s32 %s11, 2
      // Predicated region
      $region49: #{dinov2_feature_extractor.7} parent=47 // pred_check
        %p741 = pneg %p150
      $region50: #{dinov2_feature_extractor.7} parent=47 // pred_check_branch
        %743 = sbr.rel (%p741) target = $region52
      $region51: #{dinov2_feature_extractor.7} parent=47 // pred_region
        %p744 = scmp.lt.s32.totalorder %s17, 1
        %s745 = scalar_select %p744, %s17, 1
        %s746 = smul.addr %s745, 3
        %s747 = smul.addr %s746, 8
        %s748 = scalar_lea.vmem %s5, %s747
      $region52: #{dinov2_feature_extractor.7} parent=47 // pred_fallthru
        _
    $region48: #{dinov2_feature_extractor.7} parent=5 // pred_fallthru
      _
  $region6: #{dinov2_feature_extractor.7} parent=0 // loop_footer
    %s15 = sadd.s32 1, %s11
  $region7: #{dinov2_feature_extractor.7} parent=0 // loop_footer_branch
    %10 = sbr.rel target = $region3
  $region8: #{dinov2_feature_extractor.7} parent=0 // loop_exit
    _

// kernel: dinov2_feature_extractor.8
$region0: #{dinov2_feature_extractor.8}
  #allocation0 [shape = 'u32[]', space=smem, size = 0x4, offset = 0x4, fixed_abs, tag = 'smem constant byte address 0x4 - core index']
  #allocation1 [shape = 'u32[144,128]{1,0:T(1,128)}', space=vmem, size = 0x12000, scoped, tag = 'internal scratch']
  %s0 = inlined_call_operand.vmem [shape: f32[2,17,128], index: 0, kind: input, shape index: {}]
  %s1 = inlined_call_operand.vmem [shape: f32[1,128], index: 1, kind: input, shape index: {}]
  %s2 = inlined_call_operand.vmem [shape: f32[1,128], index: 2, kind: input, shape index: {}]
  %s3 = inlined_call_operand.vmem [shape: bf16[128,128], index: 3, kind: input, shape index: {}]
  %s4 = inlined_call_operand.vmem [shape: bf16[128,128], index: 4, kind: input, shape index: {}]
  %s5 = inlined_call_operand.vmem [shape: bf16[128,128], index: 5, kind: input, shape index: {}]
  %s6 = inlined_call_operand.vmem [shape: f32[1,128], index: 6, kind: input, shape index: {}]
  %s7 = inlined_call_operand.vmem [shape: f32[1,128], index: 7, kind: input, shape index: {}]
  %s8 = inlined_call_operand.vmem [shape: f32[1,128], index: 8, kind: input, shape index: {}]
  %s9 = inlined_call_operand.vmem [shape: bf16[2,17,128], index: 9, kind: output, shape index: {0}]
  %s10 = inlined_call_operand.vmem [shape: bf16[2,17,128], index: 10, kind: output, shape index: {1}]
  %s11 = inlined_call_operand.vmem [shape: bf16[2,17,128], index: 11, kind: output, shape index: {2}]
  %12 = xla_tuple %s9, %s10, %s11
  %s13 = sld [smem:[#allocation0]]
  $region85: #{dinov2_feature_extractor.8} parent=0
    _
  %s15 = ssub.s32 1, %s13
  %s16 = scalar_select 0, %s15, %s13
  loop: start=0, step=1, limit=4
  $region2: #{dinov2_feature_extractor.8} parent=0 // loop_pre_header
    _
  $region3: #{dinov2_feature_extractor.8} parent=0 // loop_header
    %s18 = sphi 0, %s22
    %p19 = scmp.ge.s32.totalorder %s18, 4
    %s25 = sphi 0, %s37
    %s26 = sphi 0, %s33
    %s27 = sphi 0, %s25
    %s28 = sphi 0, %s26
    %s29 = sphi 0, %s27
    %s30 = sphi 0, %s28
    %s42 = sphi 0, %s44
    %s45 = sphi 0, %s42
    %s46 = sphi 0, %s45
    %s62 = sphi 0, %s46
    %s66 = sphi 0, %s66
    %s68 = sphi 0, %s66
    %s69 = sphi 0, %s68
    %s83 = sphi 0, %s69
    %s87 = sphi 0, %s87
    %s89 = sphi 0, %s87
    %s90 = sphi 0, %s89
    %s104 = sphi 0, %s90
    %s108 = sphi 0, %s108
    %s110 = sphi 0, %s108
    %s111 = sphi 0, %s110
    %s125 = sphi 0, %s111
    %s129 = sphi 0, %s129
    %s131 = sphi 0, %s129
    %s132 = sphi 0, %s131
    %s146 = sphi 0, %s132
    %s150 = sphi 0, %s150
    %s152 = sphi 0, %s150
    %s153 = sphi 0, %s152
    %s167 = sphi 0, %s153
    %s171 = sphi 0, %s171
    %s173 = sphi 0, %s171
    %s174 = sphi 0, %s173
    %s188 = sphi 0, %s174
    %s192 = sphi 0, %s192
    %s194 = sphi 0, %s192
    %s195 = sphi 0, %s194
    %s209 = sphi 0, %s195
    %s213 = sphi 0, %s213
    %s215 = sphi 0, %s213
    %s216 = sphi 0, %s215
    %s230 = sphi 0, %s216
    %s238 = sphi 0, %s240
    %s241 = sphi 0, %s238
    %s242 = sphi 0, %s241
    %s258 = sphi 0, %s242
    %s266 = sphi 0, %s268
    %s269 = sphi 0, %s266
    %s270 = sphi 0, %s269
    %s286 = sphi 0, %s270
    %s294 = sphi 0, %s296
    %s297 = sphi 0, %s294
    %s298 = sphi 0, %s297
    %s314 = sphi 0, %s298
  $region4: #{dinov2_feature_extractor.8} parent=0 // loop_header_branch
    %21 = sbr.rel (%p19) target = $region8
  $region5: #{dinov2_feature_extractor.8} parent=0 // loop_body
    %s23 = ssub.s32 %s18, 1
    %s24 = ssub.s32 %s18, 2
    %s31 = sadd.s32 1, %s26
    %p32 = scmp.ge.s32.totalorder %s31, 1
    %s33 = scalar_select %p32, 0, %s31
    %s34 = sadd.s32 1, %s25
    %s35 = scalar_select %p32, %s34, %s25
    %p36 = scmp.ge.s32.totalorder %s35, 2
    %s37 = scalar_select %p36, 0, %s35
    %s38 = ssub.s32 %s25, %s37
    %s39 = ssub.s32 %s26, %s33
    %s40 = sor.u32 %s38, %s39
    %p41 = scmp.eq.s32.totalorder %s40, 0
    %s43 = sadd.s32 %s42, 1
    %s44 = scalar_select %p41, %s42, %s43
    %p47 = pneg %p41
    %p48 = scmp.eq.s32.totalorder %s18, 1
    %p49 = por %p47, %p48
    %p50 = scmp.ne.s32.totalorder %s42, %s45
    %p51 = scmp.eq.s32.totalorder %s18, 0
    %p52 = por %p50, %p51
    %p53 = scmp.ne.s32.totalorder %s42, %s45
    %p54 = scmp.eq.s32.totalorder %s23, 1
    %p55 = por %p53, %p54
    %p56 = scmp.ne.s32.totalorder %s45, %s46
    %p57 = scmp.eq.s32.totalorder %s23, 0
    %p58 = por %p56, %p57
    %p59 = scmp.ne.s32.totalorder %s45, %s46
    %p60 = scmp.eq.s32.totalorder %s24, 1
    %p61 = por %p59, %p60
    %p63 = scmp.ne.s32.totalorder %s46, %s62
    %p64 = scmp.eq.s32.totalorder %s24, 0
    %p65 = por %p63, %p64
    %s67 = sadd.s32 %s66, 1
    %p70 = scmp.eq.s32.totalorder %s18, 1
    %p71 = scmp.ne.s32.totalorder %s66, %s68
    %p72 = scmp.eq.s32.totalorder %s18, 0
    %p73 = por %p71, %p72
    %p74 = scmp.ne.s32.totalorder %s66, %s68
    %p75 = scmp.eq.s32.totalorder %s23, 1
    %p76 = por %p74, %p75
    %p77 = scmp.ne.s32.totalorder %s68, %s69
    %p78 = scmp.eq.s32.totalorder %s23, 0
    %p79 = por %p77, %p78
    %p80 = scmp.ne.s32.totalorder %s68, %s69
    %p81 = scmp.eq.s32.totalorder %s24, 1
    %p82 = por %p80, %p81
    %p84 = scmp.ne.s32.totalorder %s69, %s83
    %p85 = scmp.eq.s32.totalorder %s24, 0
    %p86 = por %p84, %p85
    %s88 = sadd.s32 %s87, 1
    %p91 = scmp.eq.s32.totalorder %s18, 1
    %p92 = scmp.ne.s32.totalorder %s87, %s89
    %p93 = scmp.eq.s32.totalorder %s18, 0
    %p94 = por %p92, %p93
    %p95 = scmp.ne.s32.totalorder %s87, %s89
    %p96 = scmp.eq.s32.totalorder %s23, 1
    %p97 = por %p95, %p96
    %p98 = scmp.ne.s32.totalorder %s89, %s90
    %p99 = scmp.eq.s32.totalorder %s23, 0
    %p100 = por %p98, %p99
    %p101 = scmp.ne.s32.totalorder %s89, %s90
    %p102 = scmp.eq.s32.totalorder %s24, 1
    %p103 = por %p101, %p102
    %p105 = scmp.ne.s32.totalorder %s90, %s104
    %p106 = scmp.eq.s32.totalorder %s24, 0
    %p107 = por %p105, %p106
    %s109 = sadd.s32 %s108, 1
    %p112 = scmp.eq.s32.totalorder %s18, 1
    %p113 = scmp.ne.s32.totalorder %s108, %s110
    %p114 = scmp.eq.s32.totalorder %s18, 0
    %p115 = por %p113, %p114
    %p116 = scmp.ne.s32.totalorder %s108, %s110
    %p117 = scmp.eq.s32.totalorder %s23, 1
    %p118 = por %p116, %p117
    %p119 = scmp.ne.s32.totalorder %s110, %s111
    %p120 = scmp.eq.s32.totalorder %s23, 0
    %p121 = por %p119, %p120
    %p122 = scmp.ne.s32.totalorder %s110, %s111
    %p123 = scmp.eq.s32.totalorder %s24, 1
    %p124 = por %p122, %p123
    %p126 = scmp.ne.s32.totalorder %s111, %s125
    %p127 = scmp.eq.s32.totalorder %s24, 0
    %p128 = por %p126, %p127
    %s130 = sadd.s32 %s129, 1
    %p133 = scmp.eq.s32.totalorder %s18, 1
    %p134 = scmp.ne.s32.totalorder %s129, %s131
    %p135 = scmp.eq.s32.totalorder %s18, 0
    %p136 = por %p134, %p135
    %p137 = scmp.ne.s32.totalorder %s129, %s131
    %p138 = scmp.eq.s32.totalorder %s23, 1
    %p139 = por %p137, %p138
    %p140 = scmp.ne.s32.totalorder %s131, %s132
    %p141 = scmp.eq.s32.totalorder %s23, 0
    %p142 = por %p140, %p141
    %p143 = scmp.ne.s32.totalorder %s131, %s132
    %p144 = scmp.eq.s32.totalorder %s24, 1
    %p145 = por %p143, %p144
    %p147 = scmp.ne.s32.totalorder %s132, %s146
    %p148 = scmp.eq.s32.totalorder %s24, 0
    %p149 = por %p147, %p148
    %s151 = sadd.s32 %s150, 1
    %p154 = scmp.eq.s32.totalorder %s18, 1
    %p155 = scmp.ne.s32.totalorder %s150, %s152
    %p156 = scmp.eq.s32.totalorder %s18, 0
    %p157 = por %p155, %p156
    %p158 = scmp.ne.s32.totalorder %s150, %s152
    %p159 = scmp.eq.s32.totalorder %s23, 1
    %p160 = por %p158, %p159
    %p161 = scmp.ne.s32.totalorder %s152, %s153
    %p162 = scmp.eq.s32.totalorder %s23, 0
    %p163 = por %p161, %p162
    %p164 = scmp.ne.s32.totalorder %s152, %s153
    %p165 = scmp.eq.s32.totalorder %s24, 1
    %p166 = por %p164, %p165
    %p168 = scmp.ne.s32.totalorder %s153, %s167
    %p169 = scmp.eq.s32.totalorder %s24, 0
    %p170 = por %p168, %p169
    %s172 = sadd.s32 %s171, 1
    %p175 = scmp.eq.s32.totalorder %s18, 1
    %p176 = scmp.ne.s32.totalorder %s171, %s173
    %p177 = scmp.eq.s32.totalorder %s18, 0
    %p178 = por %p176, %p177
    %p179 = scmp.ne.s32.totalorder %s171, %s173
    %p180 = scmp.eq.s32.totalorder %s23, 1
    %p181 = por %p179, %p180
    %p182 = scmp.ne.s32.totalorder %s173, %s174
    %p183 = scmp.eq.s32.totalorder %s23, 0
    %p184 = por %p182, %p183
    %p185 = scmp.ne.s32.totalorder %s173, %s174
    %p186 = scmp.eq.s32.totalorder %s24, 1
    %p187 = por %p185, %p186
    %p189 = scmp.ne.s32.totalorder %s174, %s188
    %p190 = scmp.eq.s32.totalorder %s24, 0
    %p191 = por %p189, %p190
    %s193 = sadd.s32 %s192, 1
    %p196 = scmp.eq.s32.totalorder %s18, 1
    %p197 = scmp.ne.s32.totalorder %s192, %s194
    %p198 = scmp.eq.s32.totalorder %s18, 0
    %p199 = por %p197, %p198
    %p200 = scmp.ne.s32.totalorder %s192, %s194
    %p201 = scmp.eq.s32.totalorder %s23, 1
    %p202 = por %p200, %p201
    %p203 = scmp.ne.s32.totalorder %s194, %s195
    %p204 = scmp.eq.s32.totalorder %s23, 0
    %p205 = por %p203, %p204
    %p206 = scmp.ne.s32.totalorder %s194, %s195
    %p207 = scmp.eq.s32.totalorder %s24, 1
    %p208 = por %p206, %p207
    %p210 = scmp.ne.s32.totalorder %s195, %s209
    %p211 = scmp.eq.s32.totalorder %s24, 0
    %p212 = por %p210, %p211
    %s214 = sadd.s32 %s213, 1
    %p217 = scmp.eq.s32.totalorder %s18, 1
    %p218 = scmp.ne.s32.totalorder %s213, %s215
    %p219 = scmp.eq.s32.totalorder %s18, 0
    %p220 = por %p218, %p219
    %p221 = scmp.ne.s32.totalorder %s213, %s215
    %p222 = scmp.eq.s32.totalorder %s23, 1
    %p223 = por %p221, %p222
    %p224 = scmp.ne.s32.totalorder %s215, %s216
    %p225 = scmp.eq.s32.totalorder %s23, 0
    %p226 = por %p224, %p225
    %p227 = scmp.ne.s32.totalorder %s215, %s216
    %p228 = scmp.eq.s32.totalorder %s24, 1
    %p229 = por %p227, %p228
    %p231 = scmp.ne.s32.totalorder %s216, %s230
    %p232 = scmp.eq.s32.totalorder %s24, 0
    %p233 = por %p231, %p232
    %s234 = ssub.s32 %s25, %s37
    %s235 = ssub.s32 %s26, %s33
    %s236 = sor.u32 %s234, %s235
    %p237 = scmp.eq.s32.totalorder %s236, 0
    %s239 = sadd.s32 %s238, 1
    %s240 = scalar_select %p237, %s238, %s239
    %p243 = pneg %p237
    %p244 = scmp.eq.s32.totalorder %s18, 1
    %p245 = por %p243, %p244
    %p246 = scmp.ne.s32.totalorder %s238, %s241
    %p247 = scmp.eq.s32.totalorder %s18, 0
    %p248 = por %p246, %p247
    %p249 = scmp.ne.s32.totalorder %s238, %s241
    %p250 = scmp.eq.s32.totalorder %s23, 1
    %p251 = por %p249, %p250
    %p252 = scmp.ne.s32.totalorder %s241, %s242
    %p253 = scmp.eq.s32.totalorder %s23, 0
    %p254 = por %p252, %p253
    %p255 = scmp.ne.s32.totalorder %s241, %s242
    %p256 = scmp.eq.s32.totalorder %s24, 1
    %p257 = por %p255, %p256
    %p259 = scmp.ne.s32.totalorder %s242, %s258
    %p260 = scmp.eq.s32.totalorder %s24, 0
    %p261 = por %p259, %p260
    %s262 = ssub.s32 %s25, %s37
    %s263 = ssub.s32 %s26, %s33
    %s264 = sor.u32 %s262, %s263
    %p265 = scmp.eq.s32.totalorder %s264, 0
    %s267 = sadd.s32 %s266, 1
    %s268 = scalar_select %p265, %s266, %s267
    %p271 = pneg %p265
    %p272 = scmp.eq.s32.totalorder %s18, 1
    %p273 = por %p271, %p272
    %p274 = scmp.ne.s32.totalorder %s266, %s269
    %p275 = scmp.eq.s32.totalorder %s18, 0
    %p276 = por %p274, %p275
    %p277 = scmp.ne.s32.totalorder %s266, %s269
    %p278 = scmp.eq.s32.totalorder %s23, 1
    %p279 = por %p277, %p278
    %p280 = scmp.ne.s32.totalorder %s269, %s270
    %p281 = scmp.eq.s32.totalorder %s23, 0
    %p282 = por %p280, %p281
    %p283 = scmp.ne.s32.totalorder %s269, %s270
    %p284 = scmp.eq.s32.totalorder %s24, 1
    %p285 = por %p283, %p284
    %p287 = scmp.ne.s32.totalorder %s270, %s286
    %p288 = scmp.eq.s32.totalorder %s24, 0
    %p289 = por %p287, %p288
    %s290 = ssub.s32 %s25, %s37
    %s291 = ssub.s32 %s26, %s33
    %s292 = sor.u32 %s290, %s291
    %p293 = scmp.eq.s32.totalorder %s292, 0
    %s295 = sadd.s32 %s294, 1
    %s296 = scalar_select %p293, %s294, %s295
    %p299 = pneg %p293
    %p300 = scmp.eq.s32.totalorder %s18, 1
    %p301 = por %p299, %p300
    %p302 = scmp.ne.s32.totalorder %s294, %s297
    %p303 = scmp.eq.s32.totalorder %s18, 0
    %p304 = por %p302, %p303
    %p305 = scmp.ne.s32.totalorder %s294, %s297
    %p306 = scmp.eq.s32.totalorder %s23, 1
    %p307 = por %p305, %p306
    %p308 = scmp.ne.s32.totalorder %s297, %s298
    %p309 = scmp.eq.s32.totalorder %s23, 0
    %p310 = por %p308, %p309
    %p311 = scmp.ne.s32.totalorder %s297, %s298
    %p312 = scmp.eq.s32.totalorder %s24, 1
    %p313 = por %p311, %p312
    %p315 = scmp.ne.s32.totalorder %s298, %s314
    %p316 = scmp.eq.s32.totalorder %s24, 0
    %p317 = por %p315, %p316
    %p318 = scmp.le.s32.totalorder 1, %s18
    %p319 = scmp.lt.s32.totalorder %s18, 3
    %p320 = pnand %p318, %p319
    %p321 = pneg %p320
    // Predicated region
    $region9: #{dinov2_feature_extractor.8} parent=5 // pred_check
      _
    $region10: #{dinov2_feature_extractor.8} parent=5 // pred_check_branch
      %323 = sbr.rel (%p320) target = $region12
    $region11: #{dinov2_feature_extractor.8} parent=5 // pred_region
      %s324 = ssub.s32 %s18, 1
      // Predicated region
      $region13: #{dinov2_feature_extractor.8} parent=11 // pred_check
        %p325 = pneg %p79
      $region14: #{dinov2_feature_extractor.8} parent=11 // pred_check_branch
        %327 = sbr.rel (%p325) target = $region16
      $region15: #{dinov2_feature_extractor.8} parent=11 // pred_region
        _
      $region16: #{dinov2_feature_extractor.8} parent=11 // pred_fallthru
        _
      // Predicated region
      $region17: #{dinov2_feature_extractor.8} parent=11 // pred_check
        %p328 = pneg %p100
      $region18: #{dinov2_feature_extractor.8} parent=11 // pred_check_branch
        %330 = sbr.rel (%p328) target = $region20
      $region19: #{dinov2_feature_extractor.8} parent=11 // pred_region
        _
      $region20: #{dinov2_feature_extractor.8} parent=11 // pred_fallthru
        _
      // Predicated region
      $region21: #{dinov2_feature_extractor.8} parent=11 // pred_check
        %p331 = pneg %p121
      $region22: #{dinov2_feature_extractor.8} parent=11 // pred_check_branch
        %333 = sbr.rel (%p331) target = $region24
      $region23: #{dinov2_feature_extractor.8} parent=11 // pred_region
        _
      $region24: #{dinov2_feature_extractor.8} parent=11 // pred_fallthru
        _
      // Predicated region
      $region25: #{dinov2_feature_extractor.8} parent=11 // pred_check
        %p334 = pneg %p142
      $region26: #{dinov2_feature_extractor.8} parent=11 // pred_check_branch
        %336 = sbr.rel (%p334) target = $region28
      $region27: #{dinov2_feature_extractor.8} parent=11 // pred_region
        _
      $region28: #{dinov2_feature_extractor.8} parent=11 // pred_fallthru
        _
      // Predicated region
      $region29: #{dinov2_feature_extractor.8} parent=11 // pred_check
        %p337 = pneg %p163
      $region30: #{dinov2_feature_extractor.8} parent=11 // pred_check_branch
        %339 = sbr.rel (%p337) target = $region32
      $region31: #{dinov2_feature_extractor.8} parent=11 // pred_region
        _
      $region32: #{dinov2_feature_extractor.8} parent=11 // pred_fallthru
        _
      // Predicated region
      $region33: #{dinov2_feature_extractor.8} parent=11 // pred_check
        %p340 = pneg %p184
      $region34: #{dinov2_feature_extractor.8} parent=11 // pred_check_branch
        %342 = sbr.rel (%p340) target = $region36
      $region35: #{dinov2_feature_extractor.8} parent=11 // pred_region
        _
      $region36: #{dinov2_feature_extractor.8} parent=11 // pred_fallthru
        _
      // Predicated region
      $region37: #{dinov2_feature_extractor.8} parent=11 // pred_check
        %p343 = pneg %p205
      $region38: #{dinov2_feature_extractor.8} parent=11 // pred_check_branch
        %345 = sbr.rel (%p343) target = $region40
      $region39: #{dinov2_feature_extractor.8} parent=11 // pred_region
        _
      $region40: #{dinov2_feature_extractor.8} parent=11 // pred_fallthru
        _
      // Predicated region
      $region41: #{dinov2_feature_extractor.8} parent=11 // pred_check
        %p346 = pneg %p226
      $region42: #{dinov2_feature_extractor.8} parent=11 // pred_check_branch
        %348 = sbr.rel (%p346) target = $region44
      $region43: #{dinov2_feature_extractor.8} parent=11 // pred_region
        _
      $region44: #{dinov2_feature_extractor.8} parent=11 // pred_fallthru
        _
    $region12: #{dinov2_feature_extractor.8} parent=5 // pred_fallthru
      _
    %p349 = scmp.lt.s32.totalorder %s18, 2
    // Predicated region
    $region45: #{dinov2_feature_extractor.8} parent=5 // pred_check
      %p350 = pneg %p349
    $region46: #{dinov2_feature_extractor.8} parent=5 // pred_check_branch
      %352 = sbr.rel (%p350) target = $region48
    $region47: #{dinov2_feature_extractor.8} parent=5 // pred_region
      // Predicated region
      $region49: #{dinov2_feature_extractor.8} parent=47 // pred_check
        %p353 = pneg %p52
      $region50: #{dinov2_feature_extractor.8} parent=47 // pred_check_branch
        %355 = sbr.rel (%p353) target = $region52
      $region51: #{dinov2_feature_extractor.8} parent=47 // pred_region
        %s356 = smul.u32 3, %s26
        %p357 = scmp.lt.s32.totalorder %s25, 1
        %s358 = scalar_select %p357, %s25, 1
        %p359 = scmp.lt.s32.totalorder %s356, 2
        %s360 = scalar_select %p359, %s356, 2
        %s361 = smul.addr %s358, 3
        %s362 = sadd.s32 %s360, %s361
        %s363 = smul.addr %s362, 8
        %s364 = scalar_lea.vmem %s0, %s363
        %s365 = smul.u32 3, %s26
      $region52: #{dinov2_feature_extractor.8} parent=47 // pred_fallthru
        _
    $region48: #{dinov2_feature_extractor.8} parent=5 // pred_fallthru
      _
    %p366 = scmp.le.s32.totalorder 1, %s18
    %p367 = scmp.lt.s32.totalorder %s18, 3
    %p368 = pnand %p366, %p367
    %p369 = pneg %p368
    // Predicated region
    $region53: #{dinov2_feature_extractor.8} parent=5 // pred_check
      _
    $region54: #{dinov2_feature_extractor.8} parent=5 // pred_check_branch
      %371 = sbr.rel (%p368) target = $region56
    $region55: #{dinov2_feature_extractor.8} parent=5 // pred_region
      %s372 = ssub.s32 %s18, 1
      %s373 = smul.u32 3, %s28
      %p374 = scmp.lt.s32.totalorder %s27, 1
      %s375 = scalar_select %p374, %s27, 1
      %p376 = scmp.lt.s32.totalorder %s373, 2
      %s377 = scalar_select %p376, %s373, 2
      %s378 = smul.addr %s375, 3
      %s379 = sadd.s32 %s377, %s378
      %s380 = smul.addr %s379, 8
      %s381 = scalar_lea.vmem %s0, %s380
      %p382 = pneg %p58
      %p383 = pneg %p55
      %p384 = pneg %p79
      %p385 = pneg %p76
      %p386 = pneg %p100
      %p387 = pneg %p97
      %p388 = pneg %p121
      %p389 = pneg %p118
      %p390 = pneg %p142
      %p391 = pneg %p139
      %p392 = pneg %p163
      %p393 = pneg %p160
      %p394 = pneg %p184
      %p395 = pneg %p181
      %p396 = pneg %p205
      %p397 = pneg %p202
      %p398 = pneg %p226
      %p399 = pneg %p223
      %p400 = pneg %p254
      %p401 = pneg %p251
      %s402 = smul.u32 3, %s28
      %p403 = scmp.lt.s32.totalorder %s27, 1
      %s404 = scalar_select %p403, %s27, 1
      %p405 = scmp.lt.s32.totalorder %s402, 2
      %s406 = scalar_select %p405, %s402, 2
      %s407 = smul.addr %s404, 3
      %s408 = sadd.s32 %s406, %s407
      %s409 = smul.addr %s408, 4
      %s410 = scalar_lea.vmem %s9, %s409
      %p411 = pneg %p282
      %p412 = pneg %p279
      %s413 = smul.u32 3, %s28
      %p414 = scmp.lt.s32.totalorder %s27, 1
      %s415 = scalar_select %p414, %s27, 1
      %p416 = scmp.lt.s32.totalorder %s413, 2
      %s417 = scalar_select %p416, %s413, 2
      %s418 = smul.addr %s415, 3
      %s419 = sadd.s32 %s417, %s418
      %s420 = smul.addr %s419, 4
      %s421 = scalar_lea.vmem %s10, %s420
      %p422 = pneg %p310
      %p423 = pneg %p307
      %s424 = smul.u32 3, %s28
      %p425 = scmp.lt.s32.totalorder %s27, 1
      %s426 = scalar_select %p425, %s27, 1
      %p427 = scmp.lt.s32.totalorder %s424, 2
      %s428 = scalar_select %p427, %s424, 2
      %s429 = smul.addr %s426, 3
      %s430 = sadd.s32 %s428, %s429
      %s431 = smul.addr %s430, 4
      %s432 = scalar_lea.vmem %s11, %s431
      %s433 = smul.u32 3, %s28
      %p434 = scmp.lt.s32.totalorder %s27, 1
      %s435 = scalar_select %p434, %s27, 1
      %p436 = scmp.lt.s32.totalorder %s433, 2
      %s437 = scalar_select %p436, %s433, 2
      %s438 = smul.addr %s435, 3
      %s439 = sadd.s32 %s437, %s438
      %s440 = smul.addr %s439, 8
      %s441 = scalar_lea.vmem %s0, %s440
      %s442 = smul.u32 3, %s28
      %s443 = smul.u32 3, %s28
      %p444 = scmp.lt.s32.totalorder %s27, 1
      %s445 = scalar_select %p444, %s27, 1
      %p446 = scmp.lt.s32.totalorder %s443, 2
      %s447 = scalar_select %p446, %s443, 2
      %s448 = smul.addr %s445, 3
      %s449 = sadd.s32 %s447, %s448
      %s450 = smul.addr %s449, 4
      %s451 = scalar_lea.vmem %s9, %s450
      %s452 = smul.u32 3, %s28
      %s453 = smul.u32 3, %s28
      %p454 = scmp.lt.s32.totalorder %s27, 1
      %s455 = scalar_select %p454, %s27, 1
      %p456 = scmp.lt.s32.totalorder %s453, 2
      %s457 = scalar_select %p456, %s453, 2
      %s458 = smul.addr %s455, 3
      %s459 = sadd.s32 %s457, %s458
      %s460 = smul.addr %s459, 4
      %s461 = scalar_lea.vmem %s10, %s460
      %s462 = smul.u32 3, %s28
      %s463 = smul.u32 3, %s28
      %p464 = scmp.lt.s32.totalorder %s27, 1
      %s465 = scalar_select %p464, %s27, 1
      %p466 = scmp.lt.s32.totalorder %s463, 2
      %s467 = scalar_select %p466, %s463, 2
      %s468 = smul.addr %s465, 3
      %s469 = sadd.s32 %s467, %s468
      %s470 = smul.addr %s469, 4
      %s471 = scalar_lea.vmem %s11, %s470
      %s472 = smul.u32 3, %s28
      %v474 = vld [vmem:[%s441] sm:$0xff]
      %v475 = vld [vmem:[%s441 + $0x8] sm:$0xff]
      %v476 = vld [vmem:[%s441 + $0x10] sm:$0x1]
      %v477 = vld [vmem:[%s1] sm:$0x1]
      %v478 = vld [vmem:[%s2] sm:$0x1]
      %479 = vadd.xlane.f32.xlu0 %v474
      %v480 = vpop.xlane.xlu0 %479
      %481 = vadd.xlane.f32.xlu0 %v475
      %v482 = vpop.xlane.xlu0 %481
      %vm483 = vcmask 1040384
      %v484 = vsel %vm483, %v476, 0.0
      %485 = vadd.xlane.f32.xlu0 %v484
      %v486 = vpop.xlane.xlu0 %485
      %v487 = vrcp.pop 128.0
      %v488 = vmul.f32 %v480, %v487
      %v489 = vmul.f32 %v482, %v487
      %v490 = vmul.f32 %v486, %v487
      %v491 = vsub.f32 %v474, %v488
      %v492 = vsub.f32 %v475, %v489
      %v493 = vsub.f32 %v476, %v490
      %v494 = vmul.f32 %v491, %v491
      %v495 = vmul.f32 %v492, %v492
      %v496 = vmul.f32 %v493, %v493
      %497 = vadd.xlane.f32.xlu0 %v494
      %v498 = vpop.xlane.xlu0 %497
      %499 = vadd.xlane.f32.xlu0 %v495
      %v500 = vpop.xlane.xlu0 %499
      %v501 = vsel %vm483, %v496, 0.0
      %502 = vadd.xlane.f32.xlu0 %v501
      %v503 = vpop.xlane.xlu0 %502
      %v504 = vmul.f32 %v498, %v487
      %v505 = vmul.f32 %v500, %v487
      %v506 = vmul.f32 %v503, %v487
      %v507 = vadd.f32 %v504, 1e-06
      %v508 = vadd.f32 %v505, 1e-06
      %v509 = vadd.f32 %v506, 1e-06
      %v510 = vrsqrt.pop %v507
      %v511 = vrsqrt.pop %v508
      %v512 = vrsqrt.pop %v509
      %v513 = vmul.f32 %v491, %v510
      %v514 = vmul.f32 %v492, %v511
      %v515 = vmul.f32 %v493, %v512
      %v517 = vlaneseq
      %v518 = vshrl.u32 %v517, 7
      %v519 = vsub.s32 0, %v518
      %v520 = vrot.slane %v477, %v519
      %v522 = vmul.f32 %v513, %v520
      %v523 = vmul.f32 %v514, %v520
      %v524 = vmul.f32 %v515, %v520
      %v526 = vlaneseq
      %v527 = vshrl.u32 %v526, 7
      %v528 = vsub.s32 0, %v527
      %v529 = vrot.slane %v478, %v528
      %v531 = vadd.f32 %v522, %v529
      %v532 = vadd.f32 %v523, %v529
      %v533 = vadd.f32 %v524, %v529
      %v534 = vpack.c.bf16 %v532, %v531
      %v535 = vpack.c.bf16 %v533, %v533
      %v536 = vld [vmem:[%s3] sm:$0xf]
      %v537 = vld [vmem:[%s3 + $0x4] sm:$0xf]
      %v538 = vld [vmem:[%s3 + $0x8] sm:$0xf]
      %v539 = vld [vmem:[%s3 + $0xc] sm:$0xf]
      %v540 = vld [vmem:[%s3 + $0x10] sm:$0xf]
      %v541 = vld [vmem:[%s3 + $0x14] sm:$0xf]
      %v542 = vld [vmem:[%s3 + $0x18] sm:$0xf]
      %v543 = vld [vmem:[%s3 + $0x1c] sm:$0xf]
      %v544 = vld [vmem:[%s3 + $0x20] sm:$0xf]
      %v545 = vld [vmem:[%s3 + $0x24] sm:$0xf]
      %v546 = vld [vmem:[%s3 + $0x28] sm:$0xf]
      %v547 = vld [vmem:[%s3 + $0x2c] sm:$0xf]
      %v548 = vld [vmem:[%s3 + $0x30] sm:$0xf]
      %v549 = vld [vmem:[%s3 + $0x34] sm:$0xf]
      %v550 = vld [vmem:[%s3 + $0x38] sm:$0xf]
      %v551 = vld [vmem:[%s3 + $0x3c] sm:$0xf]
      %v552 = vld [vmem:[%s6] sm:$0x1]
      %v554 = vlaneseq
      %v555 = vshrl.u32 %v554, 7
      %v556 = vsub.s32 0, %v555
      %v557 = vrot.slane %v552, %v556
      %v575 = vunpack.c.l.b16 %v536
      %v576 = vunpack.c.l.b16 %v537
      %v577 = vunpack.c.l.b16 %v538
      %v578 = vunpack.c.l.b16 %v539
      %v579 = vunpack.c.l.b16 %v540
      %v580 = vunpack.c.l.b16 %v541
      %v581 = vunpack.c.l.b16 %v542
      %v582 = vunpack.c.l.b16 %v543
      %v583 = vunpack.c.l.b16 %v544
      %v584 = vunpack.c.l.b16 %v545
      %v585 = vunpack.c.l.b16 %v546
      %v586 = vunpack.c.l.b16 %v547
      %v587 = vunpack.c.l.b16 %v548
      %v588 = vunpack.c.l.b16 %v549
      %v589 = vunpack.c.l.b16 %v550
      %v590 = vunpack.c.l.b16 %v551
      %v591 = vpack.c.b16 %v576, %v575
      %v592 = vpack.c.b16 %v578, %v577
      %v593 = vpack.c.b16 %v580, %v579
      %v594 = vpack.c.b16 %v582, %v581
      %v595 = vpack.c.b16 %v584, %v583
      %v596 = vpack.c.b16 %v586, %v585
      %v597 = vpack.c.b16 %v588, %v587
      %v598 = vpack.c.b16 %v590, %v589
      %607 = vmatprep.subr.bf16.mxu0 0
      %608 = vmatpush1.bf16.msra.mxu0 %v591
      %609 = vmatprep.subr.bf16.mxu0 0
      %610 = vmatpush1.bf16.msra.mxu0 %v592
      %611 = vmatprep.subr.bf16.mxu0 0
      %612 = vmatpush1.bf16.msra.mxu0 %v593
      %613 = vmatprep.subr.bf16.mxu0 0
      %614 = vmatpush1.bf16.msra.mxu0 %v594
      %615 = vmatprep.subr.bf16.mxu0 0
      %616 = vmatpush1.bf16.msra.mxu0 %v595
      %617 = vmatprep.subr.bf16.mxu0 0
      %618 = vmatpush1.bf16.msra.mxu0 %v596
      %619 = vmatprep.subr.bf16.mxu0 0
      %620 = vmatpush1.bf16.msra.mxu0 %v597
      %621 = vmatprep.subr.bf16.mxu0 0
      %622 = vmatpush1.bf16.msra.mxu0 %v598
      %623 = vmatprep.subr.bf16.mxu0 0
      %624 = vmatpush1.bf16.msra.mxu0 0
      %625 = vmatprep.subr.bf16.mxu0 0
      %626 = vmatpush1.bf16.msra.mxu0 0
      %627 = vmatprep.subr.bf16.mxu0 0
      %628 = vmatpush1.bf16.msra.mxu0 0
      %629 = vmatprep.subr.bf16.mxu0 0
      %630 = vmatpush1.bf16.msra.mxu0 0
      %631 = vmatprep.subr.bf16.mxu0 0
      %632 = vmatpush1.bf16.msra.mxu0 0
      %633 = vmatprep.subr.bf16.mxu0 0
      %634 = vmatpush1.bf16.msra.mxu0 0
      %635 = vmatprep.subr.bf16.mxu0 0
      %636 = vmatpush1.bf16.msra.mxu0 0
      %637 = vmatprep.subr.bf16.mxu0 0
      %638 = vmatpush1.bf16.msra.mxu0 0
      %639 = vmatprep.mubr.bf16.mxu0 0
      %640 = vmatmul.mubr.bf16.gmra.mrb[0].mxu0 %v534
      %v641 = vpop.f32.mrb[0].mxu0
      %v642 = vadd.f32 %v557, %v641
      %v643 = vpop.f32.mrb[0].mxu0
      %v644 = vpop.f32.mrb[0].mxu0
      %v645 = vadd.f32 %v557, %v644
      %v646 = vpop.f32.mrb[0].mxu0
      %647 = vmatprep.mubr.bf16.mxu0 0
      %648 = vmatmul.mubr.bf16.gmra.mrb[0].mxu0 %v535
      %v649 = vpop.f32.mrb[0].mxu0
      %v650 = vadd.f32 %v557, %v649
      %v651 = vpop.f32.mrb[0].mxu0
      %v652 = vpop.f32.mrb[0].mxu0
      %v653 = vpop.f32.mrb[0].mxu0
      %654 = vdwg.mxu0
      %v655 = vpack.c.bf16 %v645, %v642
      %v656 = vpack.c.bf16 %v650, %v650
      %v659 = vunpack.c.l.b16 %v655
      %v660 = vunpack.c.h.b16 %v655
      %v661 = vunpack.c.l.b16 %v656
      %v662 = vpack.c.b16 %v659, %v659
      %v663 = vpack.c.b16 %v660, %v660
      %v664 = vpack.c.b16 %v661, %v661
      %668 = vst [vmem:[%s451] sm:$0xf] %v662
      %669 = vst [vmem:[%s451 + $0x4] sm:$0xf] %v663
      %vm670 = vcmask 1040384
      %vm671 = vsmask.f32 256
      %vm672 = vmand %vm670, %vm671
      %v673 = vld [vmem:[%s451 + $0x8] sm:$0x1]
      %v674 = vsel %vm672, %v664, %v673
      %675 = vst [vmem:[%s451 + $0x8] sm:$0x1] %v674
      %v676 = vld [vmem:[%s4] sm:$0xf]
      %v677 = vld [vmem:[%s4 + $0x4] sm:$0xf]
      %v678 = vld [vmem:[%s4 + $0x8] sm:$0xf]
      %v679 = vld [vmem:[%s4 + $0xc] sm:$0xf]
      %v680 = vld [vmem:[%s4 + $0x10] sm:$0xf]
      %v681 = vld [vmem:[%s4 + $0x14] sm:$0xf]
      %v682 = vld [vmem:[%s4 + $0x18] sm:$0xf]
      %v683 = vld [vmem:[%s4 + $0x1c] sm:$0xf]
      %v684 = vld [vmem:[%s4 + $0x20] sm:$0xf]
      %v685 = vld [vmem:[%s4 + $0x24] sm:$0xf]
      %v686 = vld [vmem:[%s4 + $0x28] sm:$0xf]
      %v687 = vld [vmem:[%s4 + $0x2c] sm:$0xf]
      %v688 = vld [vmem:[%s4 + $0x30] sm:$0xf]
      %v689 = vld [vmem:[%s4 + $0x34] sm:$0xf]
      %v690 = vld [vmem:[%s4 + $0x38] sm:$0xf]
      %v691 = vld [vmem:[%s4 + $0x3c] sm:$0xf]
      %v692 = vld [vmem:[%s7] sm:$0x1]
      %v694 = vlaneseq
      %v695 = vshrl.u32 %v694, 7
      %v696 = vsub.s32 0, %v695
      %v697 = vrot.slane %v692, %v696
      %v715 = vunpack.c.l.b16 %v676
      %v716 = vunpack.c.l.b16 %v677
      %v717 = vunpack.c.l.b16 %v678
      %v718 = vunpack.c.l.b16 %v679
      %v719 = vunpack.c.l.b16 %v680
      %v720 = vunpack.c.l.b16 %v681
      %v721 = vunpack.c.l.b16 %v682
      %v722 = vunpack.c.l.b16 %v683
      %v723 = vunpack.c.l.b16 %v684
      %v724 = vunpack.c.l.b16 %v685
      %v725 = vunpack.c.l.b16 %v686
      %v726 = vunpack.c.l.b16 %v687
      %v727 = vunpack.c.l.b16 %v688
      %v728 = vunpack.c.l.b16 %v689
      %v729 = vunpack.c.l.b16 %v690
      %v730 = vunpack.c.l.b16 %v691
      %v731 = vpack.c.b16 %v716, %v715
      %v732 = vpack.c.b16 %v718, %v717
      %v733 = vpack.c.b16 %v720, %v719
      %v734 = vpack.c.b16 %v722, %v721
      %v735 = vpack.c.b16 %v724, %v723
      %v736 = vpack.c.b16 %v726, %v725
      %v737 = vpack.c.b16 %v728, %v727
      %v738 = vpack.c.b16 %v730, %v729
      %747 = vmatprep.subr.bf16.mxu0 0
      %748 = vmatpush1.bf16.msra.mxu0 %v731
      %749 = vmatprep.subr.bf16.mxu0 0
      %750 = vmatpush1.bf16.msra.mxu0 %v732
      %751 = vmatprep.subr.bf16.mxu0 0
      %752 = vmatpush1.bf16.msra.mxu0 %v733
      %753 = vmatprep.subr.bf16.mxu0 0
      %754 = vmatpush1.bf16.msra.mxu0 %v734
      %755 = vmatprep.subr.bf16.mxu0 0
      %756 = vmatpush1.bf16.msra.mxu0 %v735
      %757 = vmatprep.subr.bf16.mxu0 0
      %758 = vmatpush1.bf16.msra.mxu0 %v736
      %759 = vmatprep.subr.bf16.mxu0 0
      %760 = vmatpush1.bf16.msra.mxu0 %v737
      %761 = vmatprep.subr.bf16.mxu0 0
      %762 = vmatpush1.bf16.msra.mxu0 %v738
      %763 = vmatprep.subr.bf16.mxu0 0
      %764 = vmatpush1.bf16.msra.mxu0 0
      %765 = vmatprep.subr.bf16.mxu0 0
      %766 = vmatpush1.bf16.msra.mxu0 0
      %767 = vmatprep.subr.bf16.mxu0 0
      %768 = vmatpush1.bf16.msra.mxu0 0
      %769 = vmatprep.subr.bf16.mxu0 0
      %770 = vmatpush1.bf16.msra.mxu0 0
      %771 = vmatprep.subr.bf16.mxu0 0
      %772 = vmatpush1.bf16.msra.mxu0 0
      %773 = vmatprep.subr.bf16.mxu0 0
      %774 = vmatpush1.bf16.msra.mxu0 0
      %775 = vmatprep.subr.bf16.mxu0 0
      %776 = vmatpush1.bf16.msra.mxu0 0
      %777 = vmatprep.subr.bf16.mxu0 0
      %778 = vmatpush1.bf16.msra.mxu0 0
      %779 = vmatprep.mubr.bf16.mxu0 0
      %780 = vmatmul.mubr.bf16.gmra.mrb[0].mxu0 %v534
      %v781 = vpop.f32.mrb[0].mxu0
      %v782 = vadd.f32 %v697, %v781
      %v783 = vpop.f32.mrb[0].mxu0
      %v784 = vpop.f32.mrb[0].mxu0
      %v785 = vadd.f32 %v697, %v784
      %v786 = vpop.f32.mrb[0].mxu0
      %787 = vmatprep.mubr.bf16.mxu0 0
      %788 = vmatmul.mubr.bf16.gmra.mrb[0].mxu0 %v535
      %v789 = vpop.f32.mrb[0].mxu0
      %v790 = vadd.f32 %v697, %v789
      %v791 = vpop.f32.mrb[0].mxu0
      %v792 = vpop.f32.mrb[0].mxu0
      %v793 = vpop.f32.mrb[0].mxu0
      %794 = vdwg.mxu0
      %v795 = vpack.c.bf16 %v785, %v782
      %v796 = vpack.c.bf16 %v790, %v790
      %v799 = vunpack.c.l.b16 %v795
      %v800 = vunpack.c.h.b16 %v795
      %v801 = vunpack.c.l.b16 %v796
      %v802 = vpack.c.b16 %v799, %v799
      %v803 = vpack.c.b16 %v800, %v800
      %v804 = vpack.c.b16 %v801, %v801
      %808 = vst [vmem:[%s461] sm:$0xf] %v802
      %809 = vst [vmem:[%s461 + $0x4] sm:$0xf] %v803
      %v810 = vld [vmem:[%s461 + $0x8] sm:$0x1]
      %v811 = vsel %vm672, %v804, %v810
      %812 = vst [vmem:[%s461 + $0x8] sm:$0x1] %v811
      %v813 = vld [vmem:[%s5] sm:$0xf]
      %v814 = vld [vmem:[%s5 + $0x4] sm:$0xf]
      %v815 = vld [vmem:[%s5 + $0x8] sm:$0xf]
      %v816 = vld [vmem:[%s5 + $0xc] sm:$0xf]
      %v817 = vld [vmem:[%s5 + $0x10] sm:$0xf]
      %v818 = vld [vmem:[%s5 + $0x14] sm:$0xf]
      %v819 = vld [vmem:[%s5 + $0x18] sm:$0xf]
      %v820 = vld [vmem:[%s5 + $0x1c] sm:$0xf]
      %v821 = vld [vmem:[%s5 + $0x20] sm:$0xf]
      %v822 = vld [vmem:[%s5 + $0x24] sm:$0xf]
      %v823 = vld [vmem:[%s5 + $0x28] sm:$0xf]
      %v824 = vld [vmem:[%s5 + $0x2c] sm:$0xf]
      %v825 = vld [vmem:[%s5 + $0x30] sm:$0xf]
      %v826 = vld [vmem:[%s5 + $0x34] sm:$0xf]
      %v827 = vld [vmem:[%s5 + $0x38] sm:$0xf]
      %v828 = vld [vmem:[%s5 + $0x3c] sm:$0xf]
      %v829 = vld [vmem:[%s8] sm:$0x1]
      %v831 = vlaneseq
      %v832 = vshrl.u32 %v831, 7
      %v833 = vsub.s32 0, %v832
      %v834 = vrot.slane %v829, %v833
      %v852 = vunpack.c.l.b16 %v813
      %v853 = vunpack.c.l.b16 %v814
      %v854 = vunpack.c.l.b16 %v815
      %v855 = vunpack.c.l.b16 %v816
      %v856 = vunpack.c.l.b16 %v817
      %v857 = vunpack.c.l.b16 %v818
      %v858 = vunpack.c.l.b16 %v819
      %v859 = vunpack.c.l.b16 %v820
      %v860 = vunpack.c.l.b16 %v821
      %v861 = vunpack.c.l.b16 %v822
      %v862 = vunpack.c.l.b16 %v823
      %v863 = vunpack.c.l.b16 %v824
      %v864 = vunpack.c.l.b16 %v825
      %v865 = vunpack.c.l.b16 %v826
      %v866 = vunpack.c.l.b16 %v827
      %v867 = vunpack.c.l.b16 %v828
      %v868 = vpack.c.b16 %v853, %v852
      %v869 = vpack.c.b16 %v855, %v854
      %v870 = vpack.c.b16 %v857, %v856
      %v871 = vpack.c.b16 %v859, %v858
      %v872 = vpack.c.b16 %v861, %v860
      %v873 = vpack.c.b16 %v863, %v862
      %v874 = vpack.c.b16 %v865, %v864
      %v875 = vpack.c.b16 %v867, %v866
      %884 = vmatprep.subr.bf16.mxu0 0
      %885 = vmatpush1.bf16.msra.mxu0 %v868
      %886 = vmatprep.subr.bf16.mxu0 0
      %887 = vmatpush1.bf16.msra.mxu0 %v869
      %888 = vmatprep.subr.bf16.mxu0 0
      %889 = vmatpush1.bf16.msra.mxu0 %v870
      %890 = vmatprep.subr.bf16.mxu0 0
      %891 = vmatpush1.bf16.msra.mxu0 %v871
      %892 = vmatprep.subr.bf16.mxu0 0
      %893 = vmatpush1.bf16.msra.mxu0 %v872
      %894 = vmatprep.subr.bf16.mxu0 0
      %895 = vmatpush1.bf16.msra.mxu0 %v873
      %896 = vmatprep.subr.bf16.mxu0 0
      %897 = vmatpush1.bf16.msra.mxu0 %v874
      %898 = vmatprep.subr.bf16.mxu0 0
      %899 = vmatpush1.bf16.msra.mxu0 %v875
      %900 = vmatprep.subr.bf16.mxu0 0
      %901 = vmatpush1.bf16.msra.mxu0 0
      %902 = vmatprep.subr.bf16.mxu0 0
      %903 = vmatpush1.bf16.msra.mxu0 0
      %904 = vmatprep.subr.bf16.mxu0 0
      %905 = vmatpush1.bf16.msra.mxu0 0
      %906 = vmatprep.subr.bf16.mxu0 0
      %907 = vmatpush1.bf16.msra.mxu0 0
      %908 = vmatprep.subr.bf16.mxu0 0
      %909 = vmatpush1.bf16.msra.mxu0 0
      %910 = vmatprep.subr.bf16.mxu0 0
      %911 = vmatpush1.bf16.msra.mxu0 0
      %912 = vmatprep.subr.bf16.mxu0 0
      %913 = vmatpush1.bf16.msra.mxu0 0
      %914 = vmatprep.subr.bf16.mxu0 0
      %915 = vmatpush1.bf16.msra.mxu0 0
      %916 = vmatprep.mubr.bf16.mxu0 0
      %917 = vmatmul.mubr.bf16.gmra.mrb[0].mxu0 %v534
      %v918 = vpop.f32.mrb[0].mxu0
      %v919 = vadd.f32 %v834, %v918
      %v920 = vpop.f32.mrb[0].mxu0
      %v921 = vpop.f32.mrb[0].mxu0
      %v922 = vadd.f32 %v834, %v921
      %v923 = vpop.f32.mrb[0].mxu0
      %924 = vmatprep.mubr.bf16.mxu0 0
      %925 = vmatmul.mubr.bf16.gmra.mrb[0].mxu0 %v535
      %v926 = vpop.f32.mrb[0].mxu0
      %v927 = vadd.f32 %v834, %v926
      %v928 = vpop.f32.mrb[0].mxu0
      %v929 = vpop.f32.mrb[0].mxu0
      %v930 = vpop.f32.mrb[0].mxu0
      %931 = vdwg.mxu0
      %v932 = vpack.c.bf16 %v922, %v919
      %v933 = vpack.c.bf16 %v927, %v927
      %v936 = vunpack.c.l.b16 %v932
      %v937 = vunpack.c.h.b16 %v932
      %v938 = vunpack.c.l.b16 %v933
      %v939 = vpack.c.b16 %v936, %v936
      %v940 = vpack.c.b16 %v937, %v937
      %v941 = vpack.c.b16 %v938, %v938
      %945 = vst [vmem:[%s471] sm:$0xf] %v939
      %946 = vst [vmem:[%s471 + $0x4] sm:$0xf] %v940
      %v947 = vld [vmem:[%s471 + $0x8] sm:$0x1]
      %v948 = vsel %vm672, %v941, %v947
      %949 = vst [vmem:[%s471 + $0x8] sm:$0x1] %v948
      %s950 = smul.u32 3, %s28
      %p951 = scmp.lt.s32.totalorder %s27, 1
      %s952 = scalar_select %p951, %s27, 1
      %p953 = scmp.lt.s32.totalorder %s950, 2
      %s954 = scalar_select %p953, %s950, 2
      %s955 = smul.addr %s952, 3
      %s956 = sadd.s32 %s954, %s955
      %s957 = smul.addr %s956, 4
      %s958 = scalar_lea.vmem %s9, %s957
      %s959 = smul.u32 3, %s28
      %p960 = scmp.lt.s32.totalorder %s27, 1
      %s961 = scalar_select %p960, %s27, 1
      %p962 = scmp.lt.s32.totalorder %s959, 2
      %s963 = scalar_select %p962, %s959, 2
      %s964 = smul.addr %s961, 3
      %s965 = sadd.s32 %s963, %s964
      %s966 = smul.addr %s965, 4
      %s967 = scalar_lea.vmem %s10, %s966
      %s968 = smul.u32 3, %s28
      %p969 = scmp.lt.s32.totalorder %s27, 1
      %s970 = scalar_select %p969, %s27, 1
      %p971 = scmp.lt.s32.totalorder %s968, 2
      %s972 = scalar_select %p971, %s968, 2
      %s973 = smul.addr %s970, 3
      %s974 = sadd.s32 %s972, %s973
      %s975 = smul.addr %s974, 4
      %s976 = scalar_lea.vmem %s11, %s975
      // Predicated region
      $region57: #{dinov2_feature_extractor.8} parent=55 // pred_check
        %p977 = pneg %p251
      $region58: #{dinov2_feature_extractor.8} parent=55 // pred_check_branch
        %979 = sbr.rel (%p977) target = $region60
      $region59: #{dinov2_feature_extractor.8} parent=55 // pred_region
        %s980 = smul.u32 3, %s28
      $region60: #{dinov2_feature_extractor.8} parent=55 // pred_fallthru
        _
      // Predicated region
      $region61: #{dinov2_feature_extractor.8} parent=55 // pred_check
        %p981 = pneg %p279
      $region62: #{dinov2_feature_extractor.8} parent=55 // pred_check_branch
        %983 = sbr.rel (%p981) target = $region64
      $region63: #{dinov2_feature_extractor.8} parent=55 // pred_region
        %s984 = smul.u32 3, %s28
      $region64: #{dinov2_feature_extractor.8} parent=55 // pred_fallthru
        _
      // Predicated region
      $region65: #{dinov2_feature_extractor.8} parent=55 // pred_check
        %p985 = pneg %p307
      $region66: #{dinov2_feature_extractor.8} parent=55 // pred_check_branch
        %987 = sbr.rel (%p985) target = $region68
      $region67: #{dinov2_feature_extractor.8} parent=55 // pred_region
        %s988 = smul.u32 3, %s28
      $region68: #{dinov2_feature_extractor.8} parent=55 // pred_fallthru
        _
    $region56: #{dinov2_feature_extractor.8} parent=5 // pred_fallthru
      _
    %p989 = scmp.le.s32.totalorder 2, %s18
    // Predicated region
    $region69: #{dinov2_feature_extractor.8} parent=5 // pred_check
      %p990 = pneg %p989
    $region70: #{dinov2_feature_extractor.8} parent=5 // pred_check_branch
      %992 = sbr.rel (%p990) target = $region72
    $region71: #{dinov2_feature_extractor.8} parent=5 // pred_region
      %s993 = ssub.s32 %s18, 2
      // Predicated region
      $region73: #{dinov2_feature_extractor.8} parent=71 // pred_check
        %p994 = pneg %p257
      $region74: #{dinov2_feature_extractor.8} parent=71 // pred_check_branch
        %996 = sbr.rel (%p994) target = $region76
      $region75: #{dinov2_feature_extractor.8} parent=71 // pred_region
        %s997 = smul.u32 3, %s30
        %p998 = scmp.lt.s32.totalorder %s29, 1
        %s999 = scalar_select %p998, %s29, 1
        %p1000 = scmp.lt.s32.totalorder %s997, 2
        %s1001 = scalar_select %p1000, %s997, 2
        %s1002 = smul.addr %s999, 3
        %s1003 = sadd.s32 %s1001, %s1002
        %s1004 = smul.addr %s1003, 4
        %s1005 = scalar_lea.vmem %s9, %s1004
      $region76: #{dinov2_feature_extractor.8} parent=71 // pred_fallthru
        _
      // Predicated region
      $region77: #{dinov2_feature_extractor.8} parent=71 // pred_check
        %p1006 = pneg %p285
      $region78: #{dinov2_feature_extractor.8} parent=71 // pred_check_branch
        %1008 = sbr.rel (%p1006) target = $region80
      $region79: #{dinov2_feature_extractor.8} parent=71 // pred_region
        %s1009 = smul.u32 3, %s30
        %p1010 = scmp.lt.s32.totalorder %s29, 1
        %s1011 = scalar_select %p1010, %s29, 1
        %p1012 = scmp.lt.s32.totalorder %s1009, 2
        %s1013 = scalar_select %p1012, %s1009, 2
        %s1014 = smul.addr %s1011, 3
        %s1015 = sadd.s32 %s1013, %s1014
        %s1016 = smul.addr %s1015, 4
        %s1017 = scalar_lea.vmem %s10, %s1016
      $region80: #{dinov2_feature_extractor.8} parent=71 // pred_fallthru
        _
      // Predicated region
      $region81: #{dinov2_feature_extractor.8} parent=71 // pred_check
        %p1018 = pneg %p313
      $region82: #{dinov2_feature_extractor.8} parent=71 // pred_check_branch
        %1020 = sbr.rel (%p1018) target = $region84
      $region83: #{dinov2_feature_extractor.8} parent=71 // pred_region
        %s1021 = smul.u32 3, %s30
        %p1022 = scmp.lt.s32.totalorder %s29, 1
        %s1023 = scalar_select %p1022, %s29, 1
        %p1024 = scmp.lt.s32.totalorder %s1021, 2
        %s1025 = scalar_select %p1024, %s1021, 2
        %s1026 = smul.addr %s1023, 3
        %s1027 = sadd.s32 %s1025, %s1026
        %s1028 = smul.addr %s1027, 4
        %s1029 = scalar_lea.vmem %s11, %s1028
      $region84: #{dinov2_feature_extractor.8} parent=71 // pred_fallthru
        _
    $region72: #{dinov2_feature_extractor.8} parent=5 // pred_fallthru
      _
  $region6: #{dinov2_feature_extractor.8} parent=0 // loop_footer
    %s22 = sadd.s32 1, %s18
  $region7: #{dinov2_feature_extractor.8} parent=0 // loop_footer_branch
    %17 = sbr.rel target = $region3
  $region8: #{dinov2_feature_extractor.8} parent=0 // loop_exit
    _

// kernel: dinov2_feature_extractor.9
$region0: #{dinov2_feature_extractor.9}
  #allocation0 [shape = 'u32[]', space=smem, size = 0x4, offset = 0x4, fixed_abs, tag = 'smem constant byte address 0x4 - core index']
  #allocation1 [shape = 'u32[144,128]{1,0:T(1,128)}', space=vmem, size = 0x12000, scoped, tag = 'internal scratch']
  %s0 = inlined_call_operand.vmem [shape: bf16[2,17,128], index: 0, kind: input, shape index: {}]
  %s1 = inlined_call_operand.vmem [shape: bf16[2,17,128], index: 1, kind: input, shape index: {}]
  %s2 = inlined_call_operand.vmem [shape: bf16[2,17,128], index: 2, kind: input, shape index: {}]
  %s3 = inlined_call_operand.vmem [shape: bf16[2,17,128], index: 3, kind: output, shape index: {}]
  %s4 = sld [smem:[#allocation0]]
  $region45: #{dinov2_feature_extractor.9} parent=0
    _
  %s6 = ssub.s32 1, %s4
  %s7 = scalar_select 0, %s6, %s4
  loop: start=0, step=1, limit=4
  $region2: #{dinov2_feature_extractor.9} parent=0 // loop_pre_header
    _
  $region3: #{dinov2_feature_extractor.9} parent=0 // loop_header
    %s9 = sphi 0, %s13
    %p10 = scmp.ge.s32.totalorder %s9, 4
    %s16 = sphi 0, %s28
    %s17 = sphi 0, %s24
    %s18 = sphi 0, %s16
    %s19 = sphi 0, %s17
    %s20 = sphi 0, %s18
    %s21 = sphi 0, %s19
    %s33 = sphi 0, %s35
    %s36 = sphi 0, %s33
    %s37 = sphi 0, %s36
    %s53 = sphi 0, %s37
    %s61 = sphi 0, %s63
    %s64 = sphi 0, %s61
    %s65 = sphi 0, %s64
    %s81 = sphi 0, %s65
    %s89 = sphi 0, %s91
    %s92 = sphi 0, %s89
    %s93 = sphi 0, %s92
    %s109 = sphi 0, %s93
    %s117 = sphi 0, %s119
    %s120 = sphi 0, %s117
    %s121 = sphi 0, %s120
    %s137 = sphi 0, %s121
  $region4: #{dinov2_feature_extractor.9} parent=0 // loop_header_branch
    %12 = sbr.rel (%p10) target = $region8
  $region5: #{dinov2_feature_extractor.9} parent=0 // loop_body
    %s14 = ssub.s32 %s9, 1
    %s15 = ssub.s32 %s9, 2
    %s22 = sadd.s32 1, %s17
    %p23 = scmp.ge.s32.totalorder %s22, 1
    %s24 = scalar_select %p23, 0, %s22
    %s25 = sadd.s32 1, %s16
    %s26 = scalar_select %p23, %s25, %s16
    %p27 = scmp.ge.s32.totalorder %s26, 2
    %s28 = scalar_select %p27, 0, %s26
    %s29 = ssub.s32 %s16, %s28
    %s30 = ssub.s32 %s17, %s24
    %s31 = sor.u32 %s29, %s30
    %p32 = scmp.eq.s32.totalorder %s31, 0
    %s34 = sadd.s32 %s33, 1
    %s35 = scalar_select %p32, %s33, %s34
    %p38 = pneg %p32
    %p39 = scmp.eq.s32.totalorder %s9, 1
    %p40 = por %p38, %p39
    %p41 = scmp.ne.s32.totalorder %s33, %s36
    %p42 = scmp.eq.s32.totalorder %s9, 0
    %p43 = por %p41, %p42
    %p44 = scmp.ne.s32.totalorder %s33, %s36
    %p45 = scmp.eq.s32.totalorder %s14, 1
    %p46 = por %p44, %p45
    %p47 = scmp.ne.s32.totalorder %s36, %s37
    %p48 = scmp.eq.s32.totalorder %s14, 0
    %p49 = por %p47, %p48
    %p50 = scmp.ne.s32.totalorder %s36, %s37
    %p51 = scmp.eq.s32.totalorder %s15, 1
    %p52 = por %p50, %p51
    %p54 = scmp.ne.s32.totalorder %s37, %s53
    %p55 = scmp.eq.s32.totalorder %s15, 0
    %p56 = por %p54, %p55
    %s57 = ssub.s32 %s16, %s28
    %s58 = ssub.s32 %s17, %s24
    %s59 = sor.u32 %s57, %s58
    %p60 = scmp.eq.s32.totalorder %s59, 0
    %s62 = sadd.s32 %s61, 1
    %s63 = scalar_select %p60, %s61, %s62
    %p66 = pneg %p60
    %p67 = scmp.eq.s32.totalorder %s9, 1
    %p68 = por %p66, %p67
    %p69 = scmp.ne.s32.totalorder %s61, %s64
    %p70 = scmp.eq.s32.totalorder %s9, 0
    %p71 = por %p69, %p70
    %p72 = scmp.ne.s32.totalorder %s61, %s64
    %p73 = scmp.eq.s32.totalorder %s14, 1
    %p74 = por %p72, %p73
    %p75 = scmp.ne.s32.totalorder %s64, %s65
    %p76 = scmp.eq.s32.totalorder %s14, 0
    %p77 = por %p75, %p76
    %p78 = scmp.ne.s32.totalorder %s64, %s65
    %p79 = scmp.eq.s32.totalorder %s15, 1
    %p80 = por %p78, %p79
    %p82 = scmp.ne.s32.totalorder %s65, %s81
    %p83 = scmp.eq.s32.totalorder %s15, 0
    %p84 = por %p82, %p83
    %s85 = ssub.s32 %s16, %s28
    %s86 = ssub.s32 %s17, %s24
    %s87 = sor.u32 %s85, %s86
    %p88 = scmp.eq.s32.totalorder %s87, 0
    %s90 = sadd.s32 %s89, 1
    %s91 = scalar_select %p88, %s89, %s90
    %p94 = pneg %p88
    %p95 = scmp.eq.s32.totalorder %s9, 1
    %p96 = por %p94, %p95
    %p97 = scmp.ne.s32.totalorder %s89, %s92
    %p98 = scmp.eq.s32.totalorder %s9, 0
    %p99 = por %p97, %p98
    %p100 = scmp.ne.s32.totalorder %s89, %s92
    %p101 = scmp.eq.s32.totalorder %s14, 1
    %p102 = por %p100, %p101
    %p103 = scmp.ne.s32.totalorder %s92, %s93
    %p104 = scmp.eq.s32.totalorder %s14, 0
    %p105 = por %p103, %p104
    %p106 = scmp.ne.s32.totalorder %s92, %s93
    %p107 = scmp.eq.s32.totalorder %s15, 1
    %p108 = por %p106, %p107
    %p110 = scmp.ne.s32.totalorder %s93, %s109
    %p111 = scmp.eq.s32.totalorder %s15, 0
    %p112 = por %p110, %p111
    %s113 = ssub.s32 %s16, %s28
    %s114 = ssub.s32 %s17, %s24
    %s115 = sor.u32 %s113, %s114
    %p116 = scmp.eq.s32.totalorder %s115, 0
    %s118 = sadd.s32 %s117, 1
    %s119 = scalar_select %p116, %s117, %s118
    %p122 = pneg %p116
    %p123 = scmp.eq.s32.totalorder %s9, 1
    %p124 = por %p122, %p123
    %p125 = scmp.ne.s32.totalorder %s117, %s120
    %p126 = scmp.eq.s32.totalorder %s9, 0
    %p127 = por %p125, %p126
    %p128 = scmp.ne.s32.totalorder %s117, %s120
    %p129 = scmp.eq.s32.totalorder %s14, 1
    %p130 = por %p128, %p129
    %p131 = scmp.ne.s32.totalorder %s120, %s121
    %p132 = scmp.eq.s32.totalorder %s14, 0
    %p133 = por %p131, %p132
    %p134 = scmp.ne.s32.totalorder %s120, %s121
    %p135 = scmp.eq.s32.totalorder %s15, 1
    %p136 = por %p134, %p135
    %p138 = scmp.ne.s32.totalorder %s121, %s137
    %p139 = scmp.eq.s32.totalorder %s15, 0
    %p140 = por %p138, %p139
    %p141 = scmp.le.s32.totalorder 1, %s9
    %p142 = scmp.lt.s32.totalorder %s9, 3
    %p143 = pnand %p141, %p142
    %p144 = pneg %p143
    // Predicated region
    $region9: #{dinov2_feature_extractor.9} parent=5 // pred_check
      _
    $region10: #{dinov2_feature_extractor.9} parent=5 // pred_check_branch
      %146 = sbr.rel (%p143) target = $region12
    $region11: #{dinov2_feature_extractor.9} parent=5 // pred_region
      %s147 = ssub.s32 %s9, 1
    $region12: #{dinov2_feature_extractor.9} parent=5 // pred_fallthru
      _
    %p148 = scmp.lt.s32.totalorder %s9, 2
    // Predicated region
    $region13: #{dinov2_feature_extractor.9} parent=5 // pred_check
      %p149 = pneg %p148
    $region14: #{dinov2_feature_extractor.9} parent=5 // pred_check_branch
      %151 = sbr.rel (%p149) target = $region16
    $region15: #{dinov2_feature_extractor.9} parent=5 // pred_region
      // Predicated region
      $region17: #{dinov2_feature_extractor.9} parent=15 // pred_check
        %p152 = pneg %p43
      $region18: #{dinov2_feature_extractor.9} parent=15 // pred_check_branch
        %154 = sbr.rel (%p152) target = $region20
      $region19: #{dinov2_feature_extractor.9} parent=15 // pred_region
        %p155 = scmp.lt.s32.totalorder %s16, 1
        %s156 = scalar_select %p155, %s16, 1
        %p157 = scmp.lt.s32.totalorder %s17, 0
        %s158 = scalar_select %p157, %s17, 0
        %s159 = smul.addr %s156, 3
        %s160 = sadd.s32 %s158, %s159
        %s161 = smul.addr %s160, 4
        %s162 = scalar_lea.vmem %s0, %s161
      $region20: #{dinov2_feature_extractor.9} parent=15 // pred_fallthru
        _
      // Predicated region
      $region21: #{dinov2_feature_extractor.9} parent=15 // pred_check
        %p163 = pneg %p71
      $region22: #{dinov2_feature_extractor.9} parent=15 // pred_check_branch
        %165 = sbr.rel (%p163) target = $region24
      $region23: #{dinov2_feature_extractor.9} parent=15 // pred_region
        %p166 = scmp.lt.s32.totalorder %s16, 1
        %s167 = scalar_select %p166, %s16, 1
        %p168 = scmp.lt.s32.totalorder %s17, 0
        %s169 = scalar_select %p168, %s17, 0
        %s170 = smul.addr %s167, 3
        %s171 = sadd.s32 %s169, %s170
        %s172 = smul.addr %s171, 4
        %s173 = scalar_lea.vmem %s1, %s172
      $region24: #{dinov2_feature_extractor.9} parent=15 // pred_fallthru
        _
      // Predicated region
      $region25: #{dinov2_feature_extractor.9} parent=15 // pred_check
        %p174 = pneg %p99
      $region26: #{dinov2_feature_extractor.9} parent=15 // pred_check_branch
        %176 = sbr.rel (%p174) target = $region28
      $region27: #{dinov2_feature_extractor.9} parent=15 // pred_region
        %p177 = scmp.lt.s32.totalorder %s16, 1
        %s178 = scalar_select %p177, %s16, 1
        %p179 = scmp.lt.s32.totalorder %s17, 0
        %s180 = scalar_select %p179, %s17, 0
        %s181 = smul.addr %s178, 3
        %s182 = sadd.s32 %s180, %s181
        %s183 = smul.addr %s182, 4
        %s184 = scalar_lea.vmem %s2, %s183
      $region28: #{dinov2_feature_extractor.9} parent=15 // pred_fallthru
        _
    $region16: #{dinov2_feature_extractor.9} parent=5 // pred_fallthru
      _
    %p185 = scmp.le.s32.totalorder 1, %s9
    %p186 = scmp.lt.s32.totalorder %s9, 3
    %p187 = pnand %p185, %p186
    %p188 = pneg %p187
    // Predicated region
    $region29: #{dinov2_feature_extractor.9} parent=5 // pred_check
      _
    $region30: #{dinov2_feature_extractor.9} parent=5 // pred_check_branch
      %190 = sbr.rel (%p187) target = $region32
    $region31: #{dinov2_feature_extractor.9} parent=5 // pred_region
      %s191 = ssub.s32 %s9, 1
      %p192 = scmp.lt.s32.totalorder %s18, 1
      %s193 = scalar_select %p192, %s18, 1
      %p194 = scmp.lt.s32.totalorder %s19, 0
      %s195 = scalar_select %p194, %s19, 0
      %s196 = smul.addr %s193, 3
      %s197 = sadd.s32 %s195, %s196
      %s198 = smul.addr %s197, 4
      %s199 = scalar_lea.vmem %s0, %s198
      %p200 = pneg %p49
      %p201 = pneg %p46
      %p202 = scmp.lt.s32.totalorder %s18, 1
      %s203 = scalar_select %p202, %s18, 1
      %p204 = scmp.lt.s32.totalorder %s19, 0
      %s205 = scalar_select %p204, %s19, 0
      %s206 = smul.addr %s203, 3
      %s207 = sadd.s32 %s205, %s206
      %s208 = smul.addr %s207, 4
      %s209 = scalar_lea.vmem %s1, %s208
      %p210 = pneg %p77
      %p211 = pneg %p74
      %p212 = scmp.lt.s32.totalorder %s18, 1
      %s213 = scalar_select %p212, %s18, 1
      %p214 = scmp.lt.s32.totalorder %s19, 0
      %s215 = scalar_select %p214, %s19, 0
      %s216 = smul.addr %s213, 3
      %s217 = sadd.s32 %s215, %s216
      %s218 = smul.addr %s217, 4
      %s219 = scalar_lea.vmem %s2, %s218
      %p220 = pneg %p105
      %p221 = pneg %p102
      %p222 = pneg %p133
      %p223 = pneg %p130
      %p224 = scmp.lt.s32.totalorder %s18, 1
      %s225 = scalar_select %p224, %s18, 1
      %p226 = scmp.lt.s32.totalorder %s19, 0
      %s227 = scalar_select %p226, %s19, 0
      %s228 = smul.addr %s225, 3
      %s229 = sadd.s32 %s227, %s228
      %s230 = smul.addr %s229, 4
      %s231 = scalar_lea.vmem %s3, %s230
      %p232 = scmp.lt.s32.totalorder %s18, 1
      %s233 = scalar_select %p232, %s18, 1
      %p234 = scmp.lt.s32.totalorder %s19, 0
      %s235 = scalar_select %p234, %s19, 0
      %s236 = smul.addr %s233, 3
      %s237 = sadd.s32 %s235, %s236
      %s238 = smul.addr %s237, 4
      %s239 = scalar_lea.vmem %s0, %s238
      %p240 = scmp.lt.s32.totalorder %s18, 1
      %s241 = scalar_select %p240, %s18, 1
      %p242 = scmp.lt.s32.totalorder %s19, 0
      %s243 = scalar_select %p242, %s19, 0
      %s244 = smul.addr %s241, 3
      %s245 = sadd.s32 %s243, %s244
      %s246 = smul.addr %s245, 4
      %s247 = scalar_lea.vmem %s1, %s246
      %p248 = scmp.lt.s32.totalorder %s18, 1
      %s249 = scalar_select %p248, %s18, 1
      %p250 = scmp.lt.s32.totalorder %s19, 0
      %s251 = scalar_select %p250, %s19, 0
      %s252 = smul.addr %s249, 3
      %s253 = sadd.s32 %s251, %s252
      %s254 = smul.addr %s253, 4
      %s255 = scalar_lea.vmem %s2, %s254
      %p256 = scmp.lt.s32.totalorder %s18, 1
      %s257 = scalar_select %p256, %s18, 1
      %p258 = scmp.lt.s32.totalorder %s19, 0
      %s259 = scalar_select %p258, %s19, 0
      %s260 = smul.addr %s257, 3
      %s261 = sadd.s32 %s259, %s260
      %s262 = smul.addr %s261, 4
      %s263 = scalar_lea.vmem %s3, %s262
      %v265 = vld [vmem:[%s239] sm:$0xf]
      %v266 = vld [vmem:[%s239 + $0x4] sm:$0xf]
      %v267 = vld [vmem:[%s239 + $0x8] sm:$0x1]
      %v268 = vld [vmem:[%s247] sm:$0xf]
      %v269 = vld [vmem:[%s247 + $0x4] sm:$0xf]
      %v270 = vld [vmem:[%s247 + $0x8] sm:$0x1]
      %v271 = vld [vmem:[%s255] sm:$0xf]
      %v272 = vld [vmem:[%s255 + $0x4] sm:$0xf]
      %v273 = vld [vmem:[%s255 + $0x8] sm:$0x1]
      %v277 = vunpack.c.l.b16 %v265
      %v278 = vunpack.c.l.b16 %v266
      %v279 = vunpack.c.l.b16 %v267
      %v280 = vpack.c.b16 %v278, %v277
      %v281 = vpack.c.b16 %v279, %v279
      %v285 = vunpack.c.l.b16 %v268
      %v286 = vunpack.c.l.b16 %v269
      %v287 = vunpack.c.l.b16 %v270
      %v288 = vpack.c.b16 %v286, %v285
      %v289 = vpack.c.b16 %v287, %v287
      %vm290 = vcmask 261120
      %v292 = vsel %vm290, %v280, 0
      %v295 = vsel %vm290, %v281, 0
      %v298 = vsel %vm290, %v288, 0
      %v301 = vsel %vm290, %v289, 0
      %303 = vmatprep.subr.bf16.mxu0 0
      %304 = vmatpush1.bf16.xpose.msra.mxu0 %v298
      %305 = vmatprep.subr.bf16.mxu0 0
      %306 = vmatpush1.bf16.xpose.msra.mxu0 %v301
      %307 = vmatprep.subr.bf16.mxu0 0
      %308 = vmatpush1.bf16.xpose.msra.mxu0 0
      %309 = vmatprep.subr.bf16.mxu0 0
      %310 = vmatpush1.bf16.xpose.msra.mxu0 0
      %311 = vmatprep.subr.bf16.mxu0 0
      %312 = vmatpush1.bf16.xpose.msra.mxu0 0
      %313 = vmatprep.subr.bf16.mxu0 0
      %314 = vmatpush1.bf16.xpose.msra.mxu0 0
      %315 = vmatprep.subr.bf16.mxu0 0
      %316 = vmatpush1.bf16.xpose.msra.mxu0 0
      %317 = vmatprep.subr.bf16.mxu0 0
      %318 = vmatpush1.bf16.xpose.msra.mxu0 0
      %319 = vmatprep.subr.bf16.mxu0 0
      %320 = vmatpush1.bf16.xpose.msra.mxu0 0
      %321 = vmatprep.subr.bf16.mxu0 0
      %322 = vmatpush1.bf16.xpose.msra.mxu0 0
      %323 = vmatprep.subr.bf16.mxu0 0
      %324 = vmatpush1.bf16.xpose.msra.mxu0 0
      %325 = vmatprep.subr.bf16.mxu0 0
      %326 = vmatpush1.bf16.xpose.msra.mxu0 0
      %327 = vmatprep.subr.bf16.mxu0 0
      %328 = vmatpush1.bf16.xpose.msra.mxu0 0
      %329 = vmatprep.subr.bf16.mxu0 0
      %330 = vmatpush1.bf16.xpose.msra.mxu0 0
      %331 = vmatprep.subr.bf16.mxu0 0
      %332 = vmatpush1.bf16.xpose.msra.mxu0 0
      %333 = vmatprep.subr.bf16.mxu0 0
      %334 = vmatpush1.bf16.xpose.msra.mxu0 0
      %335 = vmatprep.mubr.bf16.mxu0 0
      %336 = vmatmul.mubr.bf16.gmra.mrb[0].mxu0 %v292
      %v337 = vpop.f32.mrb[0].mxu0
      %v338 = vadd.f32 0.0, %v337
      %v339 = vpop.f32.mrb[0].mxu0
      %v340 = vpop.f32.mrb[0].mxu0
      %v341 = vadd.f32 0.0, %v340
      %v342 = vpop.f32.mrb[0].mxu0
      %343 = vmatprep.mubr.bf16.mxu0 0
      %344 = vmatmul.mubr.bf16.gmra.mrb[0].mxu0 %v295
      %v345 = vpop.f32.mrb[0].mxu0
      %v346 = vadd.f32 0.0, %v345
      %v347 = vpop.f32.mrb[0].mxu0
      %v348 = vpop.f32.mrb[0].mxu0
      %v349 = vpop.f32.mrb[0].mxu0
      %350 = vdwg.mxu0
      %vm351 = vcmask 138240
      %v352 = vsel %vm351, %v338, -inf
      %353 = vmax.xlane.f32.xlu0 %v352
      %v354 = vpop.xlane.xlu0 %353
      %v355 = vsel %vm351, %v341, -inf
      %356 = vmax.xlane.f32.xlu0 %v355
      %v357 = vpop.xlane.xlu0 %356
      %vm358 = vcmask 131072
      %v359 = vsel %vm358, %v346, -inf
      %360 = vmax.xlane.f32.xlu0 %v359
      %v361 = vpop.xlane.xlu0 %360
      %v362 = vsub.f32 %v338, %v354
      %v363 = vsub.f32 %v341, %v357
      %v364 = vsub.f32 %v346, %v361
      %v365 = vmul.f32 %v362, 1.442695
      %v366 = vpow.pop %v365
      %v367 = vmul.f32 %v363, 1.442695
      %v368 = vpow.pop %v367
      %v369 = vmul.f32 %v364, 1.442695
      %v370 = vpow.pop %v369
      %v371 = vsel %vm351, %v366, 0.0
      %372 = vadd.xlane.f32.xlu0 %v371
      %v373 = vpop.xlane.xlu0 %372
      %v374 = vsel %vm351, %v368, 0.0
      %375 = vadd.xlane.f32.xlu0 %v374
      %v376 = vpop.xlane.xlu0 %375
      %v377 = vsel %vm358, %v370, 0.0
      %378 = vadd.xlane.f32.xlu0 %v377
      %v379 = vpop.xlane.xlu0 %378
      %v380 = vrcp.pop %v373
      %v381 = vrcp.pop %v376
      %v382 = vrcp.pop %v379
      %v383 = vmul.f32 %v366, %v380
      %v384 = vmul.f32 %v368, %v381
      %v385 = vmul.f32 %v370, %v382
      %v386 = vpack.c.bf16 %v384, %v383
      %v387 = vpack.c.bf16 %v385, %v385
      %v391 = vunpack.c.l.b16 %v271
      %v392 = vunpack.c.l.b16 %v272
      %v393 = vunpack.c.l.b16 %v273
      %v394 = vpack.c.b16 %v392, %v391
      %v395 = vpack.c.b16 %v393, %v393
      %v398 = vsel %vm351, %v386, 0
      %v401 = vsel %vm351, %v387, 0
      %vm403 = vcmask 1040384
      %v404 = vsel 0, 4294967295, 65535
      %v405 = vsel %vm403, %v404, 0
      %v407 = vand.u32 %v395, %v405
      %409 = vmatprep.subr.bf16.mxu0 0
      %410 = vmatpush1.bf16.msra.mxu0 %v394
      %411 = vmatprep.subr.bf16.mxu0 0
      %412 = vmatpush1.bf16.msra.mxu0 %v407
      %413 = vmatprep.subr.bf16.mxu0 0
      %414 = vmatpush1.bf16.msra.mxu0 0
      %415 = vmatprep.subr.bf16.mxu0 0
      %416 = vmatpush1.bf16.msra.mxu0 0
      %417 = vmatprep.subr.bf16.mxu0 0
      %418 = vmatpush1.bf16.msra.mxu0 0
      %419 = vmatprep.subr.bf16.mxu0 0
      %420 = vmatpush1.bf16.msra.mxu0 0
      %421 = vmatprep.subr.bf16.mxu0 0
      %422 = vmatpush1.bf16.msra.mxu0 0
      %423 = vmatprep.subr.bf16.mxu0 0
      %424 = vmatpush1.bf16.msra.mxu0 0
      %425 = vmatprep.subr.bf16.mxu0 0
      %426 = vmatpush1.bf16.msra.mxu0 0
      %427 = vmatprep.subr.bf16.mxu0 0
      %428 = vmatpush1.bf16.msra.mxu0 0
      %429 = vmatprep.subr.bf16.mxu0 0
      %430 = vmatpush1.bf16.msra.mxu0 0
      %431 = vmatprep.subr.bf16.mxu0 0
      %432 = vmatpush1.bf16.msra.mxu0 0
      %433 = vmatprep.subr.bf16.mxu0 0
      %434 = vmatpush1.bf16.msra.mxu0 0
      %435 = vmatprep.subr.bf16.mxu0 0
      %436 = vmatpush1.bf16.msra.mxu0 0
      %437 = vmatprep.subr.bf16.mxu0 0
      %438 = vmatpush1.bf16.msra.mxu0 0
      %439 = vmatprep.subr.bf16.mxu0 0
      %440 = vmatpush1.bf16.msra.mxu0 0
      %441 = vmatprep.mubr.bf16.mxu0 0
      %442 = vmatmul.mubr.bf16.gmra.mrb[0].mxu0 %v398
      %v443 = vpop.f32.mrb[0].mxu0
      %v444 = vadd.f32 0.0, %v443
      %v445 = vpop.f32.mrb[0].mxu0
      %v446 = vpop.f32.mrb[0].mxu0
      %v447 = vadd.f32 0.0, %v446
      %v448 = vpop.f32.mrb[0].mxu0
      %449 = vmatprep.mubr.bf16.mxu0 0
      %450 = vmatmul.mubr.bf16.gmra.mrb[0].mxu0 %v401
      %v451 = vpop.f32.mrb[0].mxu0
      %v452 = vadd.f32 0.0, %v451
      %v453 = vpop.f32.mrb[0].mxu0
      %v454 = vpop.f32.mrb[0].mxu0
      %v455 = vpop.f32.mrb[0].mxu0
      %456 = vdwg.mxu0
      %457 = vrot.lane.b32.xlu0 %v280, 96
      %v458 = vpop.permute.xlu0 %457
      %459 = vrot.lane.b32.xlu0 %v281, 96
      %v460 = vpop.permute.xlu0 %459
      %461 = vrot.lane.b32.xlu0 %v288, 96
      %v462 = vpop.permute.xlu0 %461
      %463 = vrot.lane.b32.xlu0 %v289, 96
      %v464 = vpop.permute.xlu0 %463
      %v466 = vsel %vm290, %v458, 0
      %v469 = vsel %vm290, %v460, 0
      %v472 = vsel %vm290, %v462, 0
      %v475 = vsel %vm290, %v464, 0
      %477 = vmatprep.subr.bf16.mxu0 0
      %478 = vmatpush1.bf16.xpose.msra.mxu0 %v472
      %479 = vmatprep.subr.bf16.mxu0 0
      %480 = vmatpush1.bf16.xpose.msra.mxu0 %v475
      %481 = vmatprep.subr.bf16.mxu0 0
      %482 = vmatpush1.bf16.xpose.msra.mxu0 0
      %483 = vmatprep.subr.bf16.mxu0 0
      %484 = vmatpush1.bf16.xpose.msra.mxu0 0
      %485 = vmatprep.subr.bf16.mxu0 0
      %486 = vmatpush1.bf16.xpose.msra.mxu0 0
      %487 = vmatprep.subr.bf16.mxu0 0
      %488 = vmatpush1.bf16.xpose.msra.mxu0 0
      %489 = vmatprep.subr.bf16.mxu0 0
      %490 = vmatpush1.bf16.xpose.msra.mxu0 0
      %491 = vmatprep.subr.bf16.mxu0 0
      %492 = vmatpush1.bf16.xpose.msra.mxu0 0
      %493 = vmatprep.subr.bf16.mxu0 0
      %494 = vmatpush1.bf16.xpose.msra.mxu0 0
      %495 = vmatprep.subr.bf16.mxu0 0
      %496 = vmatpush1.bf16.xpose.msra.mxu0 0
      %497 = vmatprep.subr.bf16.mxu0 0
      %498 = vmatpush1.bf16.xpose.msra.mxu0 0
      %499 = vmatprep.subr.bf16.mxu0 0
      %500 = vmatpush1.bf16.xpose.msra.mxu0 0
      %501 = vmatprep.subr.bf16.mxu0 0
      %502 = vmatpush1.bf16.xpose.msra.mxu0 0
      %503 = vmatprep.subr.bf16.mxu0 0
      %504 = vmatpush1.bf16.xpose.msra.mxu0 0
      %505 = vmatprep.subr.bf16.mxu0 0
      %506 = vmatpush1.bf16.xpose.msra.mxu0 0
      %507 = vmatprep.subr.bf16.mxu0 0
      %508 = vmatpush1.bf16.xpose.msra.mxu0 0
      %509 = vmatprep.mubr.bf16.mxu0 0
      %510 = vmatmul.mubr.bf16.gmra.mrb[0].mxu0 %v466
      %v511 = vpop.f32.mrb[0].mxu0
      %v512 = vadd.f32 0.0, %v511
      %v513 = vpop.f32.mrb[0].mxu0
      %v514 = vpop.f32.mrb[0].mxu0
      %v515 = vadd.f32 0.0, %v514
      %v516 = vpop.f32.mrb[0].mxu0
      %517 = vmatprep.mubr.bf16.mxu0 0
      %518 = vmatmul.mubr.bf16.gmra.mrb[0].mxu0 %v469
      %v519 = vpop.f32.mrb[0].mxu0
      %v520 = vadd.f32 0.0, %v519
      %v521 = vpop.f32.mrb[0].mxu0
      %v522 = vpop.f32.mrb[0].mxu0
      %v523 = vpop.f32.mrb[0].mxu0
      %524 = vdwg.mxu0
      %v525 = vsel %vm351, %v512, -inf
      %526 = vmax.xlane.f32.xlu0 %v525
      %v527 = vpop.xlane.xlu0 %526
      %v528 = vsel %vm351, %v515, -inf
      %529 = vmax.xlane.f32.xlu0 %v528
      %v530 = vpop.xlane.xlu0 %529
      %v531 = vsel %vm358, %v520, -inf
      %532 = vmax.xlane.f32.xlu0 %v531
      %v533 = vpop.xlane.xlu0 %532
      %v534 = vsub.f32 %v512, %v527
      %v535 = vsub.f32 %v515, %v530
      %v536 = vsub.f32 %v520, %v533
      %v537 = vmul.f32 %v534, 1.442695
      %v538 = vpow.pop %v537
      %v539 = vmul.f32 %v535, 1.442695
      %v540 = vpow.pop %v539
      %v541 = vmul.f32 %v536, 1.442695
      %v542 = vpow.pop %v541
      %v543 = vsel %vm351, %v538, 0.0
      %544 = vadd.xlane.f32.xlu0 %v543
      %v545 = vpop.xlane.xlu0 %544
      %v546 = vsel %vm351, %v540, 0.0
      %547 = vadd.xlane.f32.xlu0 %v546
      %v548 = vpop.xlane.xlu0 %547
      %v549 = vsel %vm358, %v542, 0.0
      %550 = vadd.xlane.f32.xlu0 %v549
      %v551 = vpop.xlane.xlu0 %550
      %v552 = vrcp.pop %v545
      %v553 = vrcp.pop %v548
      %v554 = vrcp.pop %v551
      %v555 = vmul.f32 %v538, %v552
      %v556 = vmul.f32 %v540, %v553
      %v557 = vmul.f32 %v542, %v554
      %v558 = vpack.c.bf16 %v556, %v555
      %v559 = vpack.c.bf16 %v557, %v557
      %560 = vrot.lane.b32.xlu0 %v394, 96
      %v561 = vpop.permute.xlu0 %560
      %562 = vrot.lane.b32.xlu0 %v395, 96
      %v563 = vpop.permute.xlu0 %562
      %v566 = vsel %vm351, %v558, 0
      %v569 = vsel %vm351, %v559, 0
      %v572 = vand.u32 %v563, %v405
      %574 = vmatprep.subr.bf16.mxu0 0
      %575 = vmatpush1.bf16.msra.mxu0 %v561
      %576 = vmatprep.subr.bf16.mxu0 0
      %577 = vmatpush1.bf16.msra.mxu0 %v572
      %578 = vmatprep.subr.bf16.mxu0 0
      %579 = vmatpush1.bf16.msra.mxu0 0
      %580 = vmatprep.subr.bf16.mxu0 0
      %581 = vmatpush1.bf16.msra.mxu0 0
      %582 = vmatprep.subr.bf16.mxu0 0
      %583 = vmatpush1.bf16.msra.mxu0 0
      %584 = vmatprep.subr.bf16.mxu0 0
      %585 = vmatpush1.bf16.msra.mxu0 0
      %586 = vmatprep.subr.bf16.mxu0 0
      %587 = vmatpush1.bf16.msra.mxu0 0
      %588 = vmatprep.subr.bf16.mxu0 0
      %589 = vmatpush1.bf16.msra.mxu0 0
      %590 = vmatprep.subr.bf16.mxu0 0
      %591 = vmatpush1.bf16.msra.mxu0 0
      %592 = vmatprep.subr.bf16.mxu0 0
      %593 = vmatpush1.bf16.msra.mxu0 0
      %594 = vmatprep.subr.bf16.mxu0 0
      %595 = vmatpush1.bf16.msra.mxu0 0
      %596 = vmatprep.subr.bf16.mxu0 0
      %597 = vmatpush1.bf16.msra.mxu0 0
      %598 = vmatprep.subr.bf16.mxu0 0
      %599 = vmatpush1.bf16.msra.mxu0 0
      %600 = vmatprep.subr.bf16.mxu0 0
      %601 = vmatpush1.bf16.msra.mxu0 0
      %602 = vmatprep.subr.bf16.mxu0 0
      %603 = vmatpush1.bf16.msra.mxu0 0
      %604 = vmatprep.subr.bf16.mxu0 0
      %605 = vmatpush1.bf16.msra.mxu0 0
      %606 = vmatprep.mubr.bf16.mxu0 0
      %607 = vmatmul.mubr.bf16.gmra.mrb[0].mxu0 %v566
      %v608 = vpop.f32.mrb[0].mxu0
      %v609 = vadd.f32 0.0, %v608
      %v610 = vpop.f32.mrb[0].mxu0
      %v611 = vpop.f32.mrb[0].mxu0
      %v612 = vadd.f32 0.0, %v611
      %v613 = vpop.f32.mrb[0].mxu0
      %614 = vmatprep.mubr.bf16.mxu0 0
      %615 = vmatmul.mubr.bf16.gmra.mrb[0].mxu0 %v569
      %v616 = vpop.f32.mrb[0].mxu0
      %v617 = vadd.f32 0.0, %v616
      %v618 = vpop.f32.mrb[0].mxu0
      %v619 = vpop.f32.mrb[0].mxu0
      %v620 = vpop.f32.mrb[0].mxu0
      %621 = vdwg.mxu0
      %622 = vrot.lane.b32.xlu0 %v280, 64
      %v623 = vpop.permute.xlu0 %622
      %624 = vrot.lane.b32.xlu0 %v281, 64
      %v625 = vpop.permute.xlu0 %624
      %626 = vrot.lane.b32.xlu0 %v288, 64
      %v627 = vpop.permute.xlu0 %626
      %628 = vrot.lane.b32.xlu0 %v289, 64
      %v629 = vpop.permute.xlu0 %628
      %v631 = vsel %vm290, %v623, 0
      %v634 = vsel %vm290, %v625, 0
      %v637 = vsel %vm290, %v627, 0
      %v640 = vsel %vm290, %v629, 0
      %642 = vmatprep.subr.bf16.mxu0 0
      %643 = vmatpush1.bf16.xpose.msra.mxu0 %v637
      %644 = vmatprep.subr.bf16.mxu0 0
      %645 = vmatpush1.bf16.xpose.msra.mxu0 %v640
      %646 = vmatprep.subr.bf16.mxu0 0
      %647 = vmatpush1.bf16.xpose.msra.mxu0 0
      %648 = vmatprep.subr.bf16.mxu0 0
      %649 = vmatpush1.bf16.xpose.msra.mxu0 0
      %650 = vmatprep.subr.bf16.mxu0 0
      %651 = vmatpush1.bf16.xpose.msra.mxu0 0
      %652 = vmatprep.subr.bf16.mxu0 0
      %653 = vmatpush1.bf16.xpose.msra.mxu0 0
      %654 = vmatprep.subr.bf16.mxu0 0
      %655 = vmatpush1.bf16.xpose.msra.mxu0 0
      %656 = vmatprep.subr.bf16.mxu0 0
      %657 = vmatpush1.bf16.xpose.msra.mxu0 0
      %658 = vmatprep.subr.bf16.mxu0 0
      %659 = vmatpush1.bf16.xpose.msra.mxu0 0
      %660 = vmatprep.subr.bf16.mxu0 0
      %661 = vmatpush1.bf16.xpose.msra.mxu0 0
      %662 = vmatprep.subr.bf16.mxu0 0
      %663 = vmatpush1.bf16.xpose.msra.mxu0 0
      %664 = vmatprep.subr.bf16.mxu0 0
      %665 = vmatpush1.bf16.xpose.msra.mxu0 0
      %666 = vmatprep.subr.bf16.mxu0 0
      %667 = vmatpush1.bf16.xpose.msra.mxu0 0
      %668 = vmatprep.subr.bf16.mxu0 0
      %669 = vmatpush1.bf16.xpose.msra.mxu0 0
      %670 = vmatprep.subr.bf16.mxu0 0
      %671 = vmatpush1.bf16.xpose.msra.mxu0 0
      %672 = vmatprep.subr.bf16.mxu0 0
      %673 = vmatpush1.bf16.xpose.msra.mxu0 0
      %674 = vmatprep.mubr.bf16.mxu0 0
      %675 = vmatmul.mubr.bf16.gmra.mrb[0].mxu0 %v631
      %v676 = vpop.f32.mrb[0].mxu0
      %v677 = vadd.f32 0.0, %v676
      %v678 = vpop.f32.mrb[0].mxu0
      %v679 = vpop.f32.mrb[0].mxu0
      %v680 = vadd.f32 0.0, %v679
      %v681 = vpop.f32.mrb[0].mxu0
      %682 = vmatprep.mubr.bf16.mxu0 0
      %683 = vmatmul.mubr.bf16.gmra.mrb[0].mxu0 %v634
      %v684 = vpop.f32.mrb[0].mxu0
      %v685 = vadd.f32 0.0, %v684
      %v686 = vpop.f32.mrb[0].mxu0
      %v687 = vpop.f32.mrb[0].mxu0
      %v688 = vpop.f32.mrb[0].mxu0
      %689 = vdwg.mxu0
      %v690 = vsel %vm351, %v677, -inf
      %691 = vmax.xlane.f32.xlu0 %v690
      %v692 = vpop.xlane.xlu0 %691
      %v693 = vsel %vm351, %v680, -inf
      %694 = vmax.xlane.f32.xlu0 %v693
      %v695 = vpop.xlane.xlu0 %694
      %v696 = vsel %vm358, %v685, -inf
      %697 = vmax.xlane.f32.xlu0 %v696
      %v698 = vpop.xlane.xlu0 %697
      %v699 = vsub.f32 %v677, %v692
      %v700 = vsub.f32 %v680, %v695
      %v701 = vsub.f32 %v685, %v698
      %v702 = vmul.f32 %v699, 1.442695
      %v703 = vpow.pop %v702
      %v704 = vmul.f32 %v700, 1.442695
      %v705 = vpow.pop %v704
      %v706 = vmul.f32 %v701, 1.442695
      %v707 = vpow.pop %v706
      %v708 = vsel %vm351, %v703, 0.0
      %709 = vadd.xlane.f32.xlu0 %v708
      %v710 = vpop.xlane.xlu0 %709
      %v711 = vsel %vm351, %v705, 0.0
      %712 = vadd.xlane.f32.xlu0 %v711
      %v713 = vpop.xlane.xlu0 %712
      %v714 = vsel %vm358, %v707, 0.0
      %715 = vadd.xlane.f32.xlu0 %v714
      %v716 = vpop.xlane.xlu0 %715
      %v717 = vrcp.pop %v710
      %v718 = vrcp.pop %v713
      %v719 = vrcp.pop %v716
      %v720 = vmul.f32 %v703, %v717
      %v721 = vmul.f32 %v705, %v718
      %v722 = vmul.f32 %v707, %v719
      %v723 = vpack.c.bf16 %v721, %v720
      %v724 = vpack.c.bf16 %v722, %v722
      %725 = vrot.lane.b32.xlu0 %v394, 64
      %v726 = vpop.permute.xlu0 %725
      %727 = vrot.lane.b32.xlu0 %v395, 64
      %v728 = vpop.permute.xlu0 %727
      %v731 = vsel %vm351, %v723, 0
      %v734 = vsel %vm351, %v724, 0
      %v737 = vand.u32 %v728, %v405
      %739 = vmatprep.subr.bf16.mxu0 0
      %740 = vmatpush1.bf16.msra.mxu0 %v726
      %741 = vmatprep.subr.bf16.mxu0 0
      %742 = vmatpush1.bf16.msra.mxu0 %v737
      %743 = vmatprep.subr.bf16.mxu0 0
      %744 = vmatpush1.bf16.msra.mxu0 0
      %745 = vmatprep.subr.bf16.mxu0 0
      %746 = vmatpush1.bf16.msra.mxu0 0
      %747 = vmatprep.subr.bf16.mxu0 0
      %748 = vmatpush1.bf16.msra.mxu0 0
      %749 = vmatprep.subr.bf16.mxu0 0
      %750 = vmatpush1.bf16.msra.mxu0 0
      %751 = vmatprep.subr.bf16.mxu0 0
      %752 = vmatpush1.bf16.msra.mxu0 0
      %753 = vmatprep.subr.bf16.mxu0 0
      %754 = vmatpush1.bf16.msra.mxu0 0
      %755 = vmatprep.subr.bf16.mxu0 0
      %756 = vmatpush1.bf16.msra.mxu0 0
      %757 = vmatprep.subr.bf16.mxu0 0
      %758 = vmatpush1.bf16.msra.mxu0 0
      %759 = vmatprep.subr.bf16.mxu0 0
      %760 = vmatpush1.bf16.msra.mxu0 0
      %761 = vmatprep.subr.bf16.mxu0 0
      %762 = vmatpush1.bf16.msra.mxu0 0
      %763 = vmatprep.subr.bf16.mxu0 0
      %764 = vmatpush1.bf16.msra.mxu0 0
      %765 = vmatprep.subr.bf16.mxu0 0
      %766 = vmatpush1.bf16.msra.mxu0 0
      %767 = vmatprep.subr.bf16.mxu0 0
      %768 = vmatpush1.bf16.msra.mxu0 0
      %769 = vmatprep.subr.bf16.mxu0 0
      %770 = vmatpush1.bf16.msra.mxu0 0
      %771 = vmatprep.mubr.bf16.mxu0 0
      %772 = vmatmul.mubr.bf16.gmra.mrb[0].mxu0 %v731
      %v773 = vpop.f32.mrb[0].mxu0
      %v774 = vadd.f32 0.0, %v773
      %v775 = vpop.f32.mrb[0].mxu0
      %v776 = vpop.f32.mrb[0].mxu0
      %v777 = vadd.f32 0.0, %v776
      %v778 = vpop.f32.mrb[0].mxu0
      %779 = vmatprep.mubr.bf16.mxu0 0
      %780 = vmatmul.mubr.bf16.gmra.mrb[0].mxu0 %v734
      %v781 = vpop.f32.mrb[0].mxu0
      %v782 = vadd.f32 0.0, %v781
      %v783 = vpop.f32.mrb[0].mxu0
      %v784 = vpop.f32.mrb[0].mxu0
      %v785 = vpop.f32.mrb[0].mxu0
      %786 = vdwg.mxu0
      %787 = vrot.lane.b32.xlu0 %v280, 32
      %v788 = vpop.permute.xlu0 %787
      %789 = vrot.lane.b32.xlu0 %v281, 32
      %v790 = vpop.permute.xlu0 %789
      %791 = vrot.lane.b32.xlu0 %v288, 32
      %v792 = vpop.permute.xlu0 %791
      %793 = vrot.lane.b32.xlu0 %v289, 32
      %v794 = vpop.permute.xlu0 %793
      %v796 = vsel %vm290, %v788, 0
      %v799 = vsel %vm290, %v790, 0
      %v802 = vsel %vm290, %v792, 0
      %v805 = vsel %vm290, %v794, 0
      %807 = vmatprep.subr.bf16.mxu0 0
      %808 = vmatpush1.bf16.xpose.msra.mxu0 %v802
      %809 = vmatprep.subr.bf16.mxu0 0
      %810 = vmatpush1.bf16.xpose.msra.mxu0 %v805
      %811 = vmatprep.subr.bf16.mxu0 0
      %812 = vmatpush1.bf16.xpose.msra.mxu0 0
      %813 = vmatprep.subr.bf16.mxu0 0
      %814 = vmatpush1.bf16.xpose.msra.mxu0 0
      %815 = vmatprep.subr.bf16.mxu0 0
      %816 = vmatpush1.bf16.xpose.msra.mxu0 0
      %817 = vmatprep.subr.bf16.mxu0 0
      %818 = vmatpush1.bf16.xpose.msra.mxu0 0
      %819 = vmatprep.subr.bf16.mxu0 0
      %820 = vmatpush1.bf16.xpose.msra.mxu0 0
      %821 = vmatprep.subr.bf16.mxu0 0
      %822 = vmatpush1.bf16.xpose.msra.mxu0 0
      %823 = vmatprep.subr.bf16.mxu0 0
      %824 = vmatpush1.bf16.xpose.msra.mxu0 0
      %825 = vmatprep.subr.bf16.mxu0 0
      %826 = vmatpush1.bf16.xpose.msra.mxu0 0
      %827 = vmatprep.subr.bf16.mxu0 0
      %828 = vmatpush1.bf16.xpose.msra.mxu0 0
      %829 = vmatprep.subr.bf16.mxu0 0
      %830 = vmatpush1.bf16.xpose.msra.mxu0 0
      %831 = vmatprep.subr.bf16.mxu0 0
      %832 = vmatpush1.bf16.xpose.msra.mxu0 0
      %833 = vmatprep.subr.bf16.mxu0 0
      %834 = vmatpush1.bf16.xpose.msra.mxu0 0
      %835 = vmatprep.subr.bf16.mxu0 0
      %836 = vmatpush1.bf16.xpose.msra.mxu0 0
      %837 = vmatprep.subr.bf16.mxu0 0
      %838 = vmatpush1.bf16.xpose.msra.mxu0 0
      %839 = vmatprep.mubr.bf16.mxu0 0
      %840 = vmatmul.mubr.bf16.gmra.mrb[0].mxu0 %v796
      %v841 = vpop.f32.mrb[0].mxu0
      %v842 = vadd.f32 0.0, %v841
      %v843 = vpop.f32.mrb[0].mxu0
      %v844 = vpop.f32.mrb[0].mxu0
      %v845 = vadd.f32 0.0, %v844
      %v846 = vpop.f32.mrb[0].mxu0
      %847 = vmatprep.mubr.bf16.mxu0 0
      %848 = vmatmul.mubr.bf16.gmra.mrb[0].mxu0 %v799
      %v849 = vpop.f32.mrb[0].mxu0
      %v850 = vadd.f32 0.0, %v849
      %v851 = vpop.f32.mrb[0].mxu0
      %v852 = vpop.f32.mrb[0].mxu0
      %v853 = vpop.f32.mrb[0].mxu0
      %854 = vdwg.mxu0
      %v855 = vsel %vm351, %v842, -inf
      %856 = vmax.xlane.f32.xlu0 %v855
      %v857 = vpop.xlane.xlu0 %856
      %v858 = vsel %vm351, %v845, -inf
      %859 = vmax.xlane.f32.xlu0 %v858
      %v860 = vpop.xlane.xlu0 %859
      %v861 = vsel %vm358, %v850, -inf
      %862 = vmax.xlane.f32.xlu0 %v861
      %v863 = vpop.xlane.xlu0 %862
      %v864 = vsub.f32 %v842, %v857
      %v865 = vsub.f32 %v845, %v860
      %v866 = vsub.f32 %v850, %v863
      %v867 = vmul.f32 %v864, 1.442695
      %v868 = vpow.pop %v867
      %v869 = vmul.f32 %v865, 1.442695
      %v870 = vpow.pop %v869
      %v871 = vmul.f32 %v866, 1.442695
      %v872 = vpow.pop %v871
      %v873 = vsel %vm351, %v868, 0.0
      %874 = vadd.xlane.f32.xlu0 %v873
      %v875 = vpop.xlane.xlu0 %874
      %v876 = vsel %vm351, %v870, 0.0
      %877 = vadd.xlane.f32.xlu0 %v876
      %v878 = vpop.xlane.xlu0 %877
      %v879 = vsel %vm358, %v872, 0.0
      %880 = vadd.xlane.f32.xlu0 %v879
      %v881 = vpop.xlane.xlu0 %880
      %v882 = vrcp.pop %v875
      %v883 = vrcp.pop %v878
      %v884 = vrcp.pop %v881
      %v885 = vmul.f32 %v868, %v882
      %v886 = vmul.f32 %v870, %v883
      %v887 = vmul.f32 %v872, %v884
      %v888 = vpack.c.bf16 %v886, %v885
      %v889 = vpack.c.bf16 %v887, %v887
      %890 = vrot.lane.b32.xlu0 %v394, 32
      %v891 = vpop.permute.xlu0 %890
      %892 = vrot.lane.b32.xlu0 %v395, 32
      %v893 = vpop.permute.xlu0 %892
      %v896 = vsel %vm351, %v888, 0
      %v899 = vsel %vm351, %v889, 0
      %v902 = vand.u32 %v893, %v405
      %904 = vmatprep.subr.bf16.mxu0 0
      %905 = vmatpush1.bf16.msra.mxu0 %v891
      %906 = vmatprep.subr.bf16.mxu0 0
      %907 = vmatpush1.bf16.msra.mxu0 %v902
      %908 = vmatprep.subr.bf16.mxu0 0
      %909 = vmatpush1.bf16.msra.mxu0 0
      %910 = vmatprep.subr.bf16.mxu0 0
      %911 = vmatpush1.bf16.msra.mxu0 0
      %912 = vmatprep.subr.bf16.mxu0 0
      %913 = vmatpush1.bf16.msra.mxu0 0
      %914 = vmatprep.subr.bf16.mxu0 0
      %915 = vmatpush1.bf16.msra.mxu0 0
      %916 = vmatprep.subr.bf16.mxu0 0
      %917 = vmatpush1.bf16.msra.mxu0 0
      %918 = vmatprep.subr.bf16.mxu0 0
      %919 = vmatpush1.bf16.msra.mxu0 0
      %920 = vmatprep.subr.bf16.mxu0 0
      %921 = vmatpush1.bf16.msra.mxu0 0
      %922 = vmatprep.subr.bf16.mxu0 0
      %923 = vmatpush1.bf16.msra.mxu0 0
      %924 = vmatprep.subr.bf16.mxu0 0
      %925 = vmatpush1.bf16.msra.mxu0 0
      %926 = vmatprep.subr.bf16.mxu0 0
      %927 = vmatpush1.bf16.msra.mxu0 0
      %928 = vmatprep.subr.bf16.mxu0 0
      %929 = vmatpush1.bf16.msra.mxu0 0
      %930 = vmatprep.subr.bf16.mxu0 0
      %931 = vmatpush1.bf16.msra.mxu0 0
      %932 = vmatprep.subr.bf16.mxu0 0
      %933 = vmatpush1.bf16.msra.mxu0 0
      %934 = vmatprep.subr.bf16.mxu0 0
      %935 = vmatpush1.bf16.msra.mxu0 0
      %936 = vmatprep.mubr.bf16.mxu0 0
      %937 = vmatmul.mubr.bf16.gmra.mrb[0].mxu0 %v896
      %v938 = vpop.f32.mrb[0].mxu0
      %v939 = vadd.f32 0.0, %v938
      %v940 = vpop.f32.mrb[0].mxu0
      %v941 = vpop.f32.mrb[0].mxu0
      %v942 = vadd.f32 0.0, %v941
      %v943 = vpop.f32.mrb[0].mxu0
      %944 = vmatprep.mubr.bf16.mxu0 0
      %945 = vmatmul.mubr.bf16.gmra.mrb[0].mxu0 %v899
      %v946 = vpop.f32.mrb[0].mxu0
      %v947 = vadd.f32 0.0, %v946
      %v948 = vpop.f32.mrb[0].mxu0
      %v949 = vpop.f32.mrb[0].mxu0
      %v950 = vpop.f32.mrb[0].mxu0
      %951 = vdwg.mxu0
      %955 = vrot.lane.b32.xlu0 %v609, 32
      %v956 = vpop.permute.xlu0 %955
      %957 = vrot.lane.b32.xlu0 %v612, 32
      %v958 = vpop.permute.xlu0 %957
      %959 = vrot.lane.b32.xlu0 %v617, 32
      %v960 = vpop.permute.xlu0 %959
      %967 = vrot.lane.b32.xlu0 %v774, 64
      %v968 = vpop.permute.xlu0 %967
      %969 = vrot.lane.b32.xlu0 %v777, 64
      %v970 = vpop.permute.xlu0 %969
      %971 = vrot.lane.b32.xlu0 %v782, 64
      %v972 = vpop.permute.xlu0 %971
      %979 = vrot.lane.b32.xlu0 %v939, 96
      %v980 = vpop.permute.xlu0 %979
      %981 = vrot.lane.b32.xlu0 %v942, 96
      %v982 = vpop.permute.xlu0 %981
      %983 = vrot.lane.b32.xlu0 %v947, 96
      %v984 = vpop.permute.xlu0 %983
      %v988 = vsel %vm290, %v444, %v956
      %v989 = vsel %vm290, %v447, %v958
      %v990 = vsel %vm290, %v452, %v960
      %vm991 = vcmask 523264
      %v992 = vsel %vm991, %v988, %v968
      %v993 = vsel %vm991, %v989, %v970
      %v994 = vsel %vm991, %v990, %v972
      %vm995 = vcmask 785408
      %v996 = vsel %vm995, %v992, %v980
      %v997 = vsel %vm995, %v993, %v982
      %v998 = vsel %vm995, %v994, %v984
      %v999 = vpack.c.bf16 %v997, %v996
      %v1000 = vpack.c.bf16 %v998, %v998
      %v1003 = vunpack.c.l.b16 %v999
      %v1004 = vunpack.c.h.b16 %v999
      %v1005 = vunpack.c.l.b16 %v1000
      %v1006 = vpack.c.b16 %v1003, %v1003
      %v1007 = vpack.c.b16 %v1004, %v1004
      %v1008 = vpack.c.b16 %v1005, %v1005
      %1012 = vst [vmem:[%s263] sm:$0xf] %v1006
      %1013 = vst [vmem:[%s263 + $0x4] sm:$0xf] %v1007
      %vm1014 = vcmask 1040384
      %vm1015 = vsmask.f32 256
      %vm1016 = vmand %vm1014, %vm1015
      %v1017 = vld [vmem:[%s263 + $0x8] sm:$0x1]
      %v1018 = vsel %vm1016, %v1008, %v1017
      %1019 = vst [vmem:[%s263 + $0x8] sm:$0x1] %v1018
      %p1020 = scmp.lt.s32.totalorder %s18, 1
      %s1021 = scalar_select %p1020, %s18, 1
      %p1022 = scmp.lt.s32.totalorder %s19, 0
      %s1023 = scalar_select %p1022, %s19, 0
      %s1024 = smul.addr %s1021, 3
      %s1025 = sadd.s32 %s1023, %s1024
      %s1026 = smul.addr %s1025, 4
      %s1027 = scalar_lea.vmem %s3, %s1026
      // Predicated region
      $region33: #{dinov2_feature_extractor.9} parent=31 // pred_check
        %p1028 = pneg %p130
      $region34: #{dinov2_feature_extractor.9} parent=31 // pred_check_branch
        %1030 = sbr.rel (%p1028) target = $region36
      $region35: #{dinov2_feature_extractor.9} parent=31 // pred_region
        _
      $region36: #{dinov2_feature_extractor.9} parent=31 // pred_fallthru
        _
    $region32: #{dinov2_feature_extractor.9} parent=5 // pred_fallthru
      _
    %p1031 = scmp.le.s32.totalorder 2, %s9
    // Predicated region
    $region37: #{dinov2_feature_extractor.9} parent=5 // pred_check
      %p1032 = pneg %p1031
    $region38: #{dinov2_feature_extractor.9} parent=5 // pred_check_branch
      %1034 = sbr.rel (%p1032) target = $region40
    $region39: #{dinov2_feature_extractor.9} parent=5 // pred_region
      %s1035 = ssub.s32 %s9, 2
      // Predicated region
      $region41: #{dinov2_feature_extractor.9} parent=39 // pred_check
        %p1036 = pneg %p136
      $region42: #{dinov2_feature_extractor.9} parent=39 // pred_check_branch
        %1038 = sbr.rel (%p1036) target = $region44
      $region43: #{dinov2_feature_extractor.9} parent=39 // pred_region
        %p1039 = scmp.lt.s32.totalorder %s20, 1
        %s1040 = scalar_select %p1039, %s20, 1
        %p1041 = scmp.lt.s32.totalorder %s21, 0
        %s1042 = scalar_select %p1041, %s21, 0
        %s1043 = smul.addr %s1040, 3
        %s1044 = sadd.s32 %s1042, %s1043
        %s1045 = smul.addr %s1044, 4
        %s1046 = scalar_lea.vmem %s3, %s1045
      $region44: #{dinov2_feature_extractor.9} parent=39 // pred_fallthru
        _
    $region40: #{dinov2_feature_extractor.9} parent=5 // pred_fallthru
      _
  $region6: #{dinov2_feature_extractor.9} parent=0 // loop_footer
    %s13 = sadd.s32 1, %s9
  $region7: #{dinov2_feature_extractor.9} parent=0 // loop_footer_branch
    %8 = sbr.rel target = $region3
  $region8: #{dinov2_feature_extractor.9} parent=0 // loop_exit
    _

// kernel: dinov2_feature_extractor.13
$region0: #{dinov2_feature_extractor.13}
  #allocation0 [shape = 'u32[]', space=smem, size = 0x4, offset = 0x4, fixed_abs, tag = 'smem constant byte address 0x4 - core index']
  #allocation1 [shape = 'u32[144,128]{1,0:T(1,128)}', space=vmem, size = 0x12000, scoped, tag = 'internal scratch']
  %s0 = inlined_call_operand.vmem [shape: f32[2,17,128], index: 0, kind: input, shape index: {}, may-alias: {0,12}]
  %s1 = inlined_call_operand.vmem [shape: bf16[2,17,128], index: 1, kind: input, shape index: {}]
  %s2 = inlined_call_operand.vmem [shape: bf16[128,128], index: 2, kind: input, shape index: {}]
  %s3 = inlined_call_operand.vmem [shape: f32[1,128], index: 3, kind: input, shape index: {}]
  %s4 = inlined_call_operand.vmem [shape: f32[1,128], index: 4, kind: input, shape index: {}]
  %s5 = inlined_call_operand.vmem [shape: f32[1,128], index: 5, kind: input, shape index: {}]
  %s6 = inlined_call_operand.vmem [shape: bf16[128,512], index: 6, kind: input, shape index: {}]
  %s7 = inlined_call_operand.vmem [shape: f32[1,512], index: 7, kind: input, shape index: {}]
  %s8 = inlined_call_operand.vmem [shape: bf16[512,128], index: 8, kind: input, shape index: {}]
  %s9 = inlined_call_operand.vmem [shape: f32[1,128], index: 9, kind: input, shape index: {}]
  %s10 = inlined_call_operand.vmem [shape: f32[1,128], index: 10, kind: input, shape index: {}]
  %s11 = inlined_call_operand.vmem [shape: f32[1,128], index: 11, kind: input, shape index: {}]
  %s12 = inlined_call_operand.vmem [shape: f32[2,17,128], index: 12, kind: output, shape index: {}, may-alias: {0,12}]
  %s13 = sld [smem:[#allocation0]]
  $region81: #{dinov2_feature_extractor.13} parent=0
    _
  %s15 = ssub.s32 1, %s13
  %s16 = scalar_select 0, %s15, %s13
  loop: start=0, step=1, limit=4
  $region2: #{dinov2_feature_extractor.13} parent=0 // loop_pre_header
    _
  $region3: #{dinov2_feature_extractor.13} parent=0 // loop_header
    %s18 = sphi 0, %s22
    %p19 = scmp.ge.s32.totalorder %s18, 4
    %s25 = sphi 0, %s37
    %s26 = sphi 0, %s33
    %s27 = sphi 0, %s25
    %s28 = sphi 0, %s26
    %s29 = sphi 0, %s27
    %s30 = sphi 0, %s28
    %s42 = sphi 0, %s44
    %s45 = sphi 0, %s42
    %s46 = sphi 0, %s45
    %s62 = sphi 0, %s46
    %s70 = sphi 0, %s72
    %s73 = sphi 0, %s70
    %s74 = sphi 0, %s73
    %s90 = sphi 0, %s74
    %s94 = sphi 0, %s94
    %s96 = sphi 0, %s94
    %s97 = sphi 0, %s96
    %s111 = sphi 0, %s97
    %s115 = sphi 0, %s115
    %s117 = sphi 0, %s115
    %s118 = sphi 0, %s117
    %s132 = sphi 0, %s118
    %s136 = sphi 0, %s136
    %s138 = sphi 0, %s136
    %s139 = sphi 0, %s138
    %s153 = sphi 0, %s139
    %s157 = sphi 0, %s157
    %s159 = sphi 0, %s157
    %s160 = sphi 0, %s159
    %s174 = sphi 0, %s160
    %s178 = sphi 0, %s178
    %s180 = sphi 0, %s178
    %s181 = sphi 0, %s180
    %s195 = sphi 0, %s181
    %s199 = sphi 0, %s199
    %s201 = sphi 0, %s199
    %s202 = sphi 0, %s201
    %s216 = sphi 0, %s202
    %s220 = sphi 0, %s220
    %s222 = sphi 0, %s220
    %s223 = sphi 0, %s222
    %s237 = sphi 0, %s223
    %s241 = sphi 0, %s241
    %s243 = sphi 0, %s241
    %s244 = sphi 0, %s243
    %s258 = sphi 0, %s244
    %s262 = sphi 0, %s262
    %s264 = sphi 0, %s262
    %s265 = sphi 0, %s264
    %s279 = sphi 0, %s265
    %s283 = sphi 0, %s283
    %s285 = sphi 0, %s283
    %s286 = sphi 0, %s285
    %s300 = sphi 0, %s286
    %s308 = sphi 0, %s310
    %s311 = sphi 0, %s308
    %s312 = sphi 0, %s311
    %s328 = sphi 0, %s312
  $region4: #{dinov2_feature_extractor.13} parent=0 // loop_header_branch
    %21 = sbr.rel (%p19) target = $region8
  $region5: #{dinov2_feature_extractor.13} parent=0 // loop_body
    %s23 = ssub.s32 %s18, 1
    %s24 = ssub.s32 %s18, 2
    %s31 = sadd.s32 1, %s26
    %p32 = scmp.ge.s32.totalorder %s31, 1
    %s33 = scalar_select %p32, 0, %s31
    %s34 = sadd.s32 1, %s25
    %s35 = scalar_select %p32, %s34, %s25
    %p36 = scmp.ge.s32.totalorder %s35, 2
    %s37 = scalar_select %p36, 0, %s35
    %s38 = ssub.s32 %s25, %s37
    %s39 = ssub.s32 %s26, %s33
    %s40 = sor.u32 %s38, %s39
    %p41 = scmp.eq.s32.totalorder %s40, 0
    %s43 = sadd.s32 %s42, 1
    %s44 = scalar_select %p41, %s42, %s43
    %p47 = pneg %p41
    %p48 = scmp.eq.s32.totalorder %s18, 1
    %p49 = por %p47, %p48
    %p50 = scmp.ne.s32.totalorder %s42, %s45
    %p51 = scmp.eq.s32.totalorder %s18, 0
    %p52 = por %p50, %p51
    %p53 = scmp.ne.s32.totalorder %s42, %s45
    %p54 = scmp.eq.s32.totalorder %s23, 1
    %p55 = por %p53, %p54
    %p56 = scmp.ne.s32.totalorder %s45, %s46
    %p57 = scmp.eq.s32.totalorder %s23, 0
    %p58 = por %p56, %p57
    %p59 = scmp.ne.s32.totalorder %s45, %s46
    %p60 = scmp.eq.s32.totalorder %s24, 1
    %p61 = por %p59, %p60
    %p63 = scmp.ne.s32.totalorder %s46, %s62
    %p64 = scmp.eq.s32.totalorder %s24, 0
    %p65 = por %p63, %p64
    %s66 = ssub.s32 %s25, %s37
    %s67 = ssub.s32 %s26, %s33
    %s68 = sor.u32 %s66, %s67
    %p69 = scmp.eq.s32.totalorder %s68, 0
    %s71 = sadd.s32 %s70, 1
    %s72 = scalar_select %p69, %s70, %s71
    %p75 = pneg %p69
    %p76 = scmp.eq.s32.totalorder %s18, 1
    %p77 = por %p75, %p76
    %p78 = scmp.ne.s32.totalorder %s70, %s73
    %p79 = scmp.eq.s32.totalorder %s18, 0
    %p80 = por %p78, %p79
    %p81 = scmp.ne.s32.totalorder %s70, %s73
    %p82 = scmp.eq.s32.totalorder %s23, 1
    %p83 = por %p81, %p82
    %p84 = scmp.ne.s32.totalorder %s73, %s74
    %p85 = scmp.eq.s32.totalorder %s23, 0
    %p86 = por %p84, %p85
    %p87 = scmp.ne.s32.totalorder %s73, %s74
    %p88 = scmp.eq.s32.totalorder %s24, 1
    %p89 = por %p87, %p88
    %p91 = scmp.ne.s32.totalorder %s74, %s90
    %p92 = scmp.eq.s32.totalorder %s24, 0
    %p93 = por %p91, %p92
    %s95 = sadd.s32 %s94, 1
    %p98 = scmp.eq.s32.totalorder %s18, 1
    %p99 = scmp.ne.s32.totalorder %s94, %s96
    %p100 = scmp.eq.s32.totalorder %s18, 0
    %p101 = por %p99, %p100
    %p102 = scmp.ne.s32.totalorder %s94, %s96
    %p103 = scmp.eq.s32.totalorder %s23, 1
    %p104 = por %p102, %p103
    %p105 = scmp.ne.s32.totalorder %s96, %s97
    %p106 = scmp.eq.s32.totalorder %s23, 0
    %p107 = por %p105, %p106
    %p108 = scmp.ne.s32.totalorder %s96, %s97
    %p109 = scmp.eq.s32.totalorder %s24, 1
    %p110 = por %p108, %p109
    %p112 = scmp.ne.s32.totalorder %s97, %s111
    %p113 = scmp.eq.s32.totalorder %s24, 0
    %p114 = por %p112, %p113
    %s116 = sadd.s32 %s115, 1
    %p119 = scmp.eq.s32.totalorder %s18, 1
    %p120 = scmp.ne.s32.totalorder %s115, %s117
    %p121 = scmp.eq.s32.totalorder %s18, 0
    %p122 = por %p120, %p121
    %p123 = scmp.ne.s32.totalorder %s115, %s117
    %p124 = scmp.eq.s32.totalorder %s23, 1
    %p125 = por %p123, %p124
    %p126 = scmp.ne.s32.totalorder %s117, %s118
    %p127 = scmp.eq.s32.totalorder %s23, 0
    %p128 = por %p126, %p127
    %p129 = scmp.ne.s32.totalorder %s117, %s118
    %p130 = scmp.eq.s32.totalorder %s24, 1
    %p131 = por %p129, %p130
    %p133 = scmp.ne.s32.totalorder %s118, %s132
    %p134 = scmp.eq.s32.totalorder %s24, 0
    %p135 = por %p133, %p134
    %s137 = sadd.s32 %s136, 1
    %p140 = scmp.eq.s32.totalorder %s18, 1
    %p141 = scmp.ne.s32.totalorder %s136, %s138
    %p142 = scmp.eq.s32.totalorder %s18, 0
    %p143 = por %p141, %p142
    %p144 = scmp.ne.s32.totalorder %s136, %s138
    %p145 = scmp.eq.s32.totalorder %s23, 1
    %p146 = por %p144, %p145
    %p147 = scmp.ne.s32.totalorder %s138, %s139
    %p148 = scmp.eq.s32.totalorder %s23, 0
    %p149 = por %p147, %p148
    %p150 = scmp.ne.s32.totalorder %s138, %s139
    %p151 = scmp.eq.s32.totalorder %s24, 1
    %p152 = por %p150, %p151
    %p154 = scmp.ne.s32.totalorder %s139, %s153
    %p155 = scmp.eq.s32.totalorder %s24, 0
    %p156 = por %p154, %p155
    %s158 = sadd.s32 %s157, 1
    %p161 = scmp.eq.s32.totalorder %s18, 1
    %p162 = scmp.ne.s32.totalorder %s157, %s159
    %p163 = scmp.eq.s32.totalorder %s18, 0
    %p164 = por %p162, %p163
    %p165 = scmp.ne.s32.totalorder %s157, %s159
    %p166 = scmp.eq.s32.totalorder %s23, 1
    %p167 = por %p165, %p166
    %p168 = scmp.ne.s32.totalorder %s159, %s160
    %p169 = scmp.eq.s32.totalorder %s23, 0
    %p170 = por %p168, %p169
    %p171 = scmp.ne.s32.totalorder %s159, %s160
    %p172 = scmp.eq.s32.totalorder %s24, 1
    %p173 = por %p171, %p172
    %p175 = scmp.ne.s32.totalorder %s160, %s174
    %p176 = scmp.eq.s32.totalorder %s24, 0
    %p177 = por %p175, %p176
    %s179 = sadd.s32 %s178, 1
    %p182 = scmp.eq.s32.totalorder %s18, 1
    %p183 = scmp.ne.s32.totalorder %s178, %s180
    %p184 = scmp.eq.s32.totalorder %s18, 0
    %p185 = por %p183, %p184
    %p186 = scmp.ne.s32.totalorder %s178, %s180
    %p187 = scmp.eq.s32.totalorder %s23, 1
    %p188 = por %p186, %p187
    %p189 = scmp.ne.s32.totalorder %s180, %s181
    %p190 = scmp.eq.s32.totalorder %s23, 0
    %p191 = por %p189, %p190
    %p192 = scmp.ne.s32.totalorder %s180, %s181
    %p193 = scmp.eq.s32.totalorder %s24, 1
    %p194 = por %p192, %p193
    %p196 = scmp.ne.s32.totalorder %s181, %s195
    %p197 = scmp.eq.s32.totalorder %s24, 0
    %p198 = por %p196, %p197
    %s200 = sadd.s32 %s199, 1
    %p203 = scmp.eq.s32.totalorder %s18, 1
    %p204 = scmp.ne.s32.totalorder %s199, %s201
    %p205 = scmp.eq.s32.totalorder %s18, 0
    %p206 = por %p204, %p205
    %p207 = scmp.ne.s32.totalorder %s199, %s201
    %p208 = scmp.eq.s32.totalorder %s23, 1
    %p209 = por %p207, %p208
    %p210 = scmp.ne.s32.totalorder %s201, %s202
    %p211 = scmp.eq.s32.totalorder %s23, 0
    %p212 = por %p210, %p211
    %p213 = scmp.ne.s32.totalorder %s201, %s202
    %p214 = scmp.eq.s32.totalorder %s24, 1
    %p215 = por %p213, %p214
    %p217 = scmp.ne.s32.totalorder %s202, %s216
    %p218 = scmp.eq.s32.totalorder %s24, 0
    %p219 = por %p217, %p218
    %s221 = sadd.s32 %s220, 1
    %p224 = scmp.eq.s32.totalorder %s18, 1
    %p225 = scmp.ne.s32.totalorder %s220, %s222
    %p226 = scmp.eq.s32.totalorder %s18, 0
    %p227 = por %p225, %p226
    %p228 = scmp.ne.s32.totalorder %s220, %s222
    %p229 = scmp.eq.s32.totalorder %s23, 1
    %p230 = por %p228, %p229
    %p231 = scmp.ne.s32.totalorder %s222, %s223
    %p232 = scmp.eq.s32.totalorder %s23, 0
    %p233 = por %p231, %p232
    %p234 = scmp.ne.s32.totalorder %s222, %s223
    %p235 = scmp.eq.s32.totalorder %s24, 1
    %p236 = por %p234, %p235
    %p238 = scmp.ne.s32.totalorder %s223, %s237
    %p239 = scmp.eq.s32.totalorder %s24, 0
    %p240 = por %p238, %p239
    %s242 = sadd.s32 %s241, 1
    %p245 = scmp.eq.s32.totalorder %s18, 1
    %p246 = scmp.ne.s32.totalorder %s241, %s243
    %p247 = scmp.eq.s32.totalorder %s18, 0
    %p248 = por %p246, %p247
    %p249 = scmp.ne.s32.totalorder %s241, %s243
    %p250 = scmp.eq.s32.totalorder %s23, 1
    %p251 = por %p249, %p250
    %p252 = scmp.ne.s32.totalorder %s243, %s244
    %p253 = scmp.eq.s32.totalorder %s23, 0
    %p254 = por %p252, %p253
    %p255 = scmp.ne.s32.totalorder %s243, %s244
    %p256 = scmp.eq.s32.totalorder %s24, 1
    %p257 = por %p255, %p256
    %p259 = scmp.ne.s32.totalorder %s244, %s258
    %p260 = scmp.eq.s32.totalorder %s24, 0
    %p261 = por %p259, %p260
    %s263 = sadd.s32 %s262, 1
    %p266 = scmp.eq.s32.totalorder %s18, 1
    %p267 = scmp.ne.s32.totalorder %s262, %s264
    %p268 = scmp.eq.s32.totalorder %s18, 0
    %p269 = por %p267, %p268
    %p270 = scmp.ne.s32.totalorder %s262, %s264
    %p271 = scmp.eq.s32.totalorder %s23, 1
    %p272 = por %p270, %p271
    %p273 = scmp.ne.s32.totalorder %s264, %s265
    %p274 = scmp.eq.s32.totalorder %s23, 0
    %p275 = por %p273, %p274
    %p276 = scmp.ne.s32.totalorder %s264, %s265
    %p277 = scmp.eq.s32.totalorder %s24, 1
    %p278 = por %p276, %p277
    %p280 = scmp.ne.s32.totalorder %s265, %s279
    %p281 = scmp.eq.s32.totalorder %s24, 0
    %p282 = por %p280, %p281
    %s284 = sadd.s32 %s283, 1
    %p287 = scmp.eq.s32.totalorder %s18, 1
    %p288 = scmp.ne.s32.totalorder %s283, %s285
    %p289 = scmp.eq.s32.totalorder %s18, 0
    %p290 = por %p288, %p289
    %p291 = scmp.ne.s32.totalorder %s283, %s285
    %p292 = scmp.eq.s32.totalorder %s23, 1
    %p293 = por %p291, %p292
    %p294 = scmp.ne.s32.totalorder %s285, %s286
    %p295 = scmp.eq.s32.totalorder %s23, 0
    %p296 = por %p294, %p295
    %p297 = scmp.ne.s32.totalorder %s285, %s286
    %p298 = scmp.eq.s32.totalorder %s24, 1
    %p299 = por %p297, %p298
    %p301 = scmp.ne.s32.totalorder %s286, %s300
    %p302 = scmp.eq.s32.totalorder %s24, 0
    %p303 = por %p301, %p302
    %s304 = ssub.s32 %s25, %s37
    %s305 = ssub.s32 %s26, %s33
    %s306 = sor.u32 %s304, %s305
    %p307 = scmp.eq.s32.totalorder %s306, 0
    %s309 = sadd.s32 %s308, 1
    %s310 = scalar_select %p307, %s308, %s309
    %p313 = pneg %p307
    %p314 = scmp.eq.s32.totalorder %s18, 1
    %p315 = por %p313, %p314
    %p316 = scmp.ne.s32.totalorder %s308, %s311
    %p317 = scmp.eq.s32.totalorder %s18, 0
    %p318 = por %p316, %p317
    %p319 = scmp.ne.s32.totalorder %s308, %s311
    %p320 = scmp.eq.s32.totalorder %s23, 1
    %p321 = por %p319, %p320
    %p322 = scmp.ne.s32.totalorder %s311, %s312
    %p323 = scmp.eq.s32.totalorder %s23, 0
    %p324 = por %p322, %p323
    %p325 = scmp.ne.s32.totalorder %s311, %s312
    %p326 = scmp.eq.s32.totalorder %s24, 1
    %p327 = por %p325, %p326
    %p329 = scmp.ne.s32.totalorder %s312, %s328
    %p330 = scmp.eq.s32.totalorder %s24, 0
    %p331 = por %p329, %p330
    %p332 = scmp.le.s32.totalorder 1, %s18
    %p333 = scmp.lt.s32.totalorder %s18, 3
    %p334 = pnand %p332, %p333
    %p335 = pneg %p334
    // Predicated region
    $region9: #{dinov2_feature_extractor.13} parent=5 // pred_check
      _
    $region10: #{dinov2_feature_extractor.13} parent=5 // pred_check_branch
      %337 = sbr.rel (%p334) target = $region12
    $region11: #{dinov2_feature_extractor.13} parent=5 // pred_region
      %s338 = ssub.s32 %s18, 1
      // Predicated region
      $region13: #{dinov2_feature_extractor.13} parent=11 // pred_check
        %p339 = pneg %p107
      $region14: #{dinov2_feature_extractor.13} parent=11 // pred_check_branch
        %341 = sbr.rel (%p339) target = $region16
      $region15: #{dinov2_feature_extractor.13} parent=11 // pred_region
        _
      $region16: #{dinov2_feature_extractor.13} parent=11 // pred_fallthru
        _
      // Predicated region
      $region17: #{dinov2_feature_extractor.13} parent=11 // pred_check
        %p342 = pneg %p128
      $region18: #{dinov2_feature_extractor.13} parent=11 // pred_check_branch
        %344 = sbr.rel (%p342) target = $region20
      $region19: #{dinov2_feature_extractor.13} parent=11 // pred_region
        _
      $region20: #{dinov2_feature_extractor.13} parent=11 // pred_fallthru
        _
      // Predicated region
      $region21: #{dinov2_feature_extractor.13} parent=11 // pred_check
        %p345 = pneg %p149
      $region22: #{dinov2_feature_extractor.13} parent=11 // pred_check_branch
        %347 = sbr.rel (%p345) target = $region24
      $region23: #{dinov2_feature_extractor.13} parent=11 // pred_region
        _
      $region24: #{dinov2_feature_extractor.13} parent=11 // pred_fallthru
        _
      // Predicated region
      $region25: #{dinov2_feature_extractor.13} parent=11 // pred_check
        %p348 = pneg %p170
      $region26: #{dinov2_feature_extractor.13} parent=11 // pred_check_branch
        %350 = sbr.rel (%p348) target = $region28
      $region27: #{dinov2_feature_extractor.13} parent=11 // pred_region
        _
      $region28: #{dinov2_feature_extractor.13} parent=11 // pred_fallthru
        _
      // Predicated region
      $region29: #{dinov2_feature_extractor.13} parent=11 // pred_check
        %p351 = pneg %p191
      $region30: #{dinov2_feature_extractor.13} parent=11 // pred_check_branch
        %353 = sbr.rel (%p351) target = $region32
      $region31: #{dinov2_feature_extractor.13} parent=11 // pred_region
        _
      $region32: #{dinov2_feature_extractor.13} parent=11 // pred_fallthru
        _
      // Predicated region
      $region33: #{dinov2_feature_extractor.13} parent=11 // pred_check
        %p354 = pneg %p212
      $region34: #{dinov2_feature_extractor.13} parent=11 // pred_check_branch
        %356 = sbr.rel (%p354) target = $region36
      $region35: #{dinov2_feature_extractor.13} parent=11 // pred_region
        _
      $region36: #{dinov2_feature_extractor.13} parent=11 // pred_fallthru
        _
      // Predicated region
      $region37: #{dinov2_feature_extractor.13} parent=11 // pred_check
        %p357 = pneg %p233
      $region38: #{dinov2_feature_extractor.13} parent=11 // pred_check_branch
        %359 = sbr.rel (%p357) target = $region40
      $region39: #{dinov2_feature_extractor.13} parent=11 // pred_region
        _
      $region40: #{dinov2_feature_extractor.13} parent=11 // pred_fallthru
        _
      // Predicated region
      $region41: #{dinov2_feature_extractor.13} parent=11 // pred_check
        %p360 = pneg %p254
      $region42: #{dinov2_feature_extractor.13} parent=11 // pred_check_branch
        %362 = sbr.rel (%p360) target = $region44
      $region43: #{dinov2_feature_extractor.13} parent=11 // pred_region
        _
      $region44: #{dinov2_feature_extractor.13} parent=11 // pred_fallthru
        _
      // Predicated region
      $region45: #{dinov2_feature_extractor.13} parent=11 // pred_check
        %p363 = pneg %p275
      $region46: #{dinov2_feature_extractor.13} parent=11 // pred_check_branch
        %365 = sbr.rel (%p363) target = $region48
      $region47: #{dinov2_feature_extractor.13} parent=11 // pred_region
        _
      $region48: #{dinov2_feature_extractor.13} parent=11 // pred_fallthru
        _
      // Predicated region
      $region49: #{dinov2_feature_extractor.13} parent=11 // pred_check
        %p366 = pneg %p296
      $region50: #{dinov2_feature_extractor.13} parent=11 // pred_check_branch
        %368 = sbr.rel (%p366) target = $region52
      $region51: #{dinov2_feature_extractor.13} parent=11 // pred_region
        _
      $region52: #{dinov2_feature_extractor.13} parent=11 // pred_fallthru
        _
    $region12: #{dinov2_feature_extractor.13} parent=5 // pred_fallthru
      _
    %p369 = scmp.lt.s32.totalorder %s18, 2
    // Predicated region
    $region53: #{dinov2_feature_extractor.13} parent=5 // pred_check
      %p370 = pneg %p369
    $region54: #{dinov2_feature_extractor.13} parent=5 // pred_check_branch
      %372 = sbr.rel (%p370) target = $region56
    $region55: #{dinov2_feature_extractor.13} parent=5 // pred_region
      // Predicated region
      $region57: #{dinov2_feature_extractor.13} parent=55 // pred_check
        %p373 = pneg %p52
      $region58: #{dinov2_feature_extractor.13} parent=55 // pred_check_branch
        %375 = sbr.rel (%p373) target = $region60
      $region59: #{dinov2_feature_extractor.13} parent=55 // pred_region
        %s376 = smul.u32 3, %s26
        %p377 = scmp.lt.s32.totalorder %s25, 1
        %s378 = scalar_select %p377, %s25, 1
        %p379 = scmp.lt.s32.totalorder %s376, 2
        %s380 = scalar_select %p379, %s376, 2
        %s381 = smul.addr %s378, 3
        %s382 = sadd.s32 %s380, %s381
        %s383 = smul.addr %s382, 8
        %s384 = scalar_lea.vmem %s0, %s383
        %s385 = smul.u32 3, %s26
      $region60: #{dinov2_feature_extractor.13} parent=55 // pred_fallthru
        _
      // Predicated region
      $region61: #{dinov2_feature_extractor.13} parent=55 // pred_check
        %p386 = pneg %p80
      $region62: #{dinov2_feature_extractor.13} parent=55 // pred_check_branch
        %388 = sbr.rel (%p386) target = $region64
      $region63: #{dinov2_feature_extractor.13} parent=55 // pred_region
        %s389 = smul.u32 3, %s26
        %p390 = scmp.lt.s32.totalorder %s25, 1
        %s391 = scalar_select %p390, %s25, 1
        %p392 = scmp.lt.s32.totalorder %s389, 2
        %s393 = scalar_select %p392, %s389, 2
        %s394 = smul.addr %s391, 3
        %s395 = sadd.s32 %s393, %s394
        %s396 = smul.addr %s395, 4
        %s397 = scalar_lea.vmem %s1, %s396
        %s398 = smul.u32 3, %s26
      $region64: #{dinov2_feature_extractor.13} parent=55 // pred_fallthru
        _
    $region56: #{dinov2_feature_extractor.13} parent=5 // pred_fallthru
      _
    %p399 = scmp.le.s32.totalorder 1, %s18
    %p400 = scmp.lt.s32.totalorder %s18, 3
    %p401 = pnand %p399, %p400
    %p402 = pneg %p401
    // Predicated region
    $region65: #{dinov2_feature_extractor.13} parent=5 // pred_check
      _
    $region66: #{dinov2_feature_extractor.13} parent=5 // pred_check_branch
      %404 = sbr.rel (%p401) target = $region68
    $region67: #{dinov2_feature_extractor.13} parent=5 // pred_region
      %s405 = ssub.s32 %s18, 1
      %s406 = smul.u32 3, %s28
      %p407 = scmp.lt.s32.totalorder %s27, 1
      %s408 = scalar_select %p407, %s27, 1
      %p409 = scmp.lt.s32.totalorder %s406, 2
      %s410 = scalar_select %p409, %s406, 2
      %s411 = smul.addr %s408, 3
      %s412 = sadd.s32 %s410, %s411
      %s413 = smul.addr %s412, 8
      %s414 = scalar_lea.vmem %s0, %s413
      %p415 = pneg %p58
      %p416 = pneg %p55
      %s417 = smul.u32 3, %s28
      %p418 = scmp.lt.s32.totalorder %s27, 1
      %s419 = scalar_select %p418, %s27, 1
      %p420 = scmp.lt.s32.totalorder %s417, 2
      %s421 = scalar_select %p420, %s417, 2
      %s422 = smul.addr %s419, 3
      %s423 = sadd.s32 %s421, %s422
      %s424 = smul.addr %s423, 4
      %s425 = scalar_lea.vmem %s1, %s424
      %p426 = pneg %p86
      %p427 = pneg %p83
      %p428 = pneg %p107
      %p429 = pneg %p104
      %p430 = pneg %p128
      %p431 = pneg %p125
      %p432 = pneg %p149
      %p433 = pneg %p146
      %p434 = pneg %p170
      %p435 = pneg %p167
      %p436 = pneg %p191
      %p437 = pneg %p188
      %p438 = pneg %p212
      %p439 = pneg %p209
      %p440 = pneg %p233
      %p441 = pneg %p230
      %p442 = pneg %p254
      %p443 = pneg %p251
      %p444 = pneg %p275
      %p445 = pneg %p272
      %p446 = pneg %p296
      %p447 = pneg %p293
      %p448 = pneg %p324
      %p449 = pneg %p321
      %s450 = smul.u32 3, %s28
      %p451 = scmp.lt.s32.totalorder %s27, 1
      %s452 = scalar_select %p451, %s27, 1
      %p453 = scmp.lt.s32.totalorder %s450, 2
      %s454 = scalar_select %p453, %s450, 2
      %s455 = smul.addr %s452, 3
      %s456 = sadd.s32 %s454, %s455
      %s457 = smul.addr %s456, 8
      %s458 = scalar_lea.vmem %s12, %s457
      %s459 = smul.u32 3, %s28
      %p460 = scmp.lt.s32.totalorder %s27, 1
      %s461 = scalar_select %p460, %s27, 1
      %p462 = scmp.lt.s32.totalorder %s459, 2
      %s463 = scalar_select %p462, %s459, 2
      %s464 = smul.addr %s461, 3
      %s465 = sadd.s32 %s463, %s464
      %s466 = smul.addr %s465, 8
      %s467 = scalar_lea.vmem %s0, %s466
      %s468 = smul.u32 3, %s28
      %s469 = smul.u32 3, %s28
      %p470 = scmp.lt.s32.totalorder %s27, 1
      %s471 = scalar_select %p470, %s27, 1
      %p472 = scmp.lt.s32.totalorder %s469, 2
      %s473 = scalar_select %p472, %s469, 2
      %s474 = smul.addr %s471, 3
      %s475 = sadd.s32 %s473, %s474
      %s476 = smul.addr %s475, 4
      %s477 = scalar_lea.vmem %s1, %s476
      %s478 = smul.u32 3, %s28
      %s479 = smul.u32 3, %s28
      %p480 = scmp.lt.s32.totalorder %s27, 1
      %s481 = scalar_select %p480, %s27, 1
      %p482 = scmp.lt.s32.totalorder %s479, 2
      %s483 = scalar_select %p482, %s479, 2
      %s484 = smul.addr %s481, 3
      %s485 = sadd.s32 %s483, %s484
      %s486 = smul.addr %s485, 8
      %s487 = scalar_lea.vmem %s12, %s486
      %s488 = smul.u32 3, %s28
      %v490 = vld [vmem:[%s467] sm:$0xff]
      %v491 = vld [vmem:[%s467 + $0x8] sm:$0xff]
      %v492 = vld [vmem:[%s467 + $0x10] sm:$0x1]
      %v493 = vld [vmem:[%s477] sm:$0xf]
      %v494 = vld [vmem:[%s477 + $0x4] sm:$0xf]
      %v495 = vld [vmem:[%s477 + $0x8] sm:$0x1]
      %v496 = vld [vmem:[%s2] sm:$0xf]
      %v497 = vld [vmem:[%s2 + $0x4] sm:$0xf]
      %v498 = vld [vmem:[%s2 + $0x8] sm:$0xf]
      %v499 = vld [vmem:[%s2 + $0xc] sm:$0xf]
      %v500 = vld [vmem:[%s2 + $0x10] sm:$0xf]
      %v501 = vld [vmem:[%s2 + $0x14] sm:$0xf]
      %v502 = vld [vmem:[%s2 + $0x18] sm:$0xf]
      %v503 = vld [vmem:[%s2 + $0x1c] sm:$0xf]
      %v504 = vld [vmem:[%s2 + $0x20] sm:$0xf]
      %v505 = vld [vmem:[%s2 + $0x24] sm:$0xf]
      %v506 = vld [vmem:[%s2 + $0x28] sm:$0xf]
      %v507 = vld [vmem:[%s2 + $0x2c] sm:$0xf]
      %v508 = vld [vmem:[%s2 + $0x30] sm:$0xf]
      %v509 = vld [vmem:[%s2 + $0x34] sm:$0xf]
      %v510 = vld [vmem:[%s2 + $0x38] sm:$0xf]
      %v511 = vld [vmem:[%s2 + $0x3c] sm:$0xf]
      %v512 = vld [vmem:[%s3] sm:$0x1]
      %v514 = vlaneseq
      %v515 = vshrl.u32 %v514, 7
      %v516 = vsub.s32 0, %v515
      %v517 = vrot.slane %v512, %v516
      %v522 = vunpack.c.l.b16 %v493
      %v523 = vunpack.c.l.b16 %v494
      %v524 = vunpack.c.l.b16 %v495
      %v525 = vpack.c.b16 %v523, %v522
      %v526 = vpack.c.b16 %v524, %v524
      %v545 = vunpack.c.l.b16 %v496
      %v546 = vunpack.c.l.b16 %v497
      %v547 = vunpack.c.l.b16 %v498
      %v548 = vunpack.c.l.b16 %v499
      %v549 = vunpack.c.l.b16 %v500
      %v550 = vunpack.c.l.b16 %v501
      %v551 = vunpack.c.l.b16 %v502
      %v552 = vunpack.c.l.b16 %v503
      %v553 = vunpack.c.l.b16 %v504
      %v554 = vunpack.c.l.b16 %v505
      %v555 = vunpack.c.l.b16 %v506
      %v556 = vunpack.c.l.b16 %v507
      %v557 = vunpack.c.l.b16 %v508
      %v558 = vunpack.c.l.b16 %v509
      %v559 = vunpack.c.l.b16 %v510
      %v560 = vunpack.c.l.b16 %v511
      %v561 = vpack.c.b16 %v546, %v545
      %v562 = vpack.c.b16 %v548, %v547
      %v563 = vpack.c.b16 %v550, %v549
      %v564 = vpack.c.b16 %v552, %v551
      %v565 = vpack.c.b16 %v554, %v553
      %v566 = vpack.c.b16 %v556, %v555
      %v567 = vpack.c.b16 %v558, %v557
      %v568 = vpack.c.b16 %v560, %v559
      %577 = vmatprep.subr.bf16.mxu0 0
      %578 = vmatpush1.bf16.msra.mxu0 %v561
      %579 = vmatprep.subr.bf16.mxu0 0
      %580 = vmatpush1.bf16.msra.mxu0 %v562
      %581 = vmatprep.subr.bf16.mxu0 0
      %582 = vmatpush1.bf16.msra.mxu0 %v563
      %583 = vmatprep.subr.bf16.mxu0 0
      %584 = vmatpush1.bf16.msra.mxu0 %v564
      %585 = vmatprep.subr.bf16.mxu0 0
      %586 = vmatpush1.bf16.msra.mxu0 %v565
      %587 = vmatprep.subr.bf16.mxu0 0
      %588 = vmatpush1.bf16.msra.mxu0 %v566
      %589 = vmatprep.subr.bf16.mxu0 0
      %590 = vmatpush1.bf16.msra.mxu0 %v567
      %591 = vmatprep.subr.bf16.mxu0 0
      %592 = vmatpush1.bf16.msra.mxu0 %v568
      %593 = vmatprep.subr.bf16.mxu0 0
      %594 = vmatpush1.bf16.msra.mxu0 0
      %595 = vmatprep.subr.bf16.mxu0 0
      %596 = vmatpush1.bf16.msra.mxu0 0
      %597 = vmatprep.subr.bf16.mxu0 0
      %598 = vmatpush1.bf16.msra.mxu0 0
      %599 = vmatprep.subr.bf16.mxu0 0
      %600 = vmatpush1.bf16.msra.mxu0 0
      %601 = vmatprep.subr.bf16.mxu0 0
      %602 = vmatpush1.bf16.msra.mxu0 0
      %603 = vmatprep.subr.bf16.mxu0 0
      %604 = vmatpush1.bf16.msra.mxu0 0
      %605 = vmatprep.subr.bf16.mxu0 0
      %606 = vmatpush1.bf16.msra.mxu0 0
      %607 = vmatprep.subr.bf16.mxu0 0
      %608 = vmatpush1.bf16.msra.mxu0 0
      %609 = vmatprep.mubr.bf16.mxu0 0
      %610 = vmatmul.mubr.bf16.gmra.mrb[0].mxu0 %v525
      %v611 = vpop.f32.mrb[0].mxu0
      %v612 = vadd.f32 %v517, %v611
      %v613 = vpop.f32.mrb[0].mxu0
      %v614 = vpop.f32.mrb[0].mxu0
      %v615 = vadd.f32 %v517, %v614
      %v616 = vpop.f32.mrb[0].mxu0
      %617 = vmatprep.mubr.bf16.mxu0 0
      %618 = vmatmul.mubr.bf16.gmra.mrb[0].mxu0 %v526
      %v619 = vpop.f32.mrb[0].mxu0
      %v620 = vadd.f32 %v517, %v619
      %v621 = vpop.f32.mrb[0].mxu0
      %v622 = vpop.f32.mrb[0].mxu0
      %v623 = vpop.f32.mrb[0].mxu0
      %624 = vdwg.mxu0
      %v625 = vadd.f32 %v490, %v612
      %v626 = vadd.f32 %v491, %v615
      %v627 = vadd.f32 %v492, %v620
      %v628 = vld [vmem:[%s4] sm:$0x1]
      %v629 = vld [vmem:[%s5] sm:$0x1]
      %630 = vadd.xlane.f32.xlu0 %v625
      %v631 = vpop.xlane.xlu0 %630
      %632 = vadd.xlane.f32.xlu0 %v626
      %v633 = vpop.xlane.xlu0 %632
      %vm634 = vcmask 1040384
      %v635 = vsel %vm634, %v627, 0.0
      %636 = vadd.xlane.f32.xlu0 %v635
      %v637 = vpop.xlane.xlu0 %636
      %v638 = vrcp.pop 128.0
      %v639 = vmul.f32 %v631, %v638
      %v640 = vmul.f32 %v633, %v638
      %v641 = vmul.f32 %v637, %v638
      %v642 = vsub.f32 %v625, %v639
      %v643 = vsub.f32 %v626, %v640
      %v644 = vsub.f32 %v627, %v641
      %v645 = vmul.f32 %v642, %v642
      %v646 = vmul.f32 %v643, %v643
      %v647 = vmul.f32 %v644, %v644
      %648 = vadd.xlane.f32.xlu0 %v645
      %v649 = vpop.xlane.xlu0 %648
      %650 = vadd.xlane.f32.xlu0 %v646
      %v651 = vpop.xlane.xlu0 %650
      %v652 = vsel %vm634, %v647, 0.0
      %653 = vadd.xlane.f32.xlu0 %v652
      %v654 = vpop.xlane.xlu0 %653
      %v655 = vmul.f32 %v649, %v638
      %v656 = vmul.f32 %v651, %v638
      %v657 = vmul.f32 %v654, %v638
      %v658 = vadd.f32 %v655, 1e-06
      %v659 = vadd.f32 %v656, 1e-06
      %v660 = vadd.f32 %v657, 1e-06
      %v661 = vrsqrt.pop %v658
      %v662 = vrsqrt.pop %v659
      %v663 = vrsqrt.pop %v660
      %v664 = vmul.f32 %v642, %v661
      %v665 = vmul.f32 %v643, %v662
      %v666 = vmul.f32 %v644, %v663
      %v668 = vlaneseq
      %v669 = vshrl.u32 %v668, 7
      %v670 = vsub.s32 0, %v669
      %v671 = vrot.slane %v628, %v670
      %v673 = vmul.f32 %v664, %v671
      %v674 = vmul.f32 %v665, %v671
      %v675 = vmul.f32 %v666, %v671
      %v677 = vlaneseq
      %v678 = vshrl.u32 %v677, 7
      %v679 = vsub.s32 0, %v678
      %v680 = vrot.slane %v629, %v679
      %v682 = vadd.f32 %v673, %v680
      %v683 = vadd.f32 %v674, %v680
      %v684 = vadd.f32 %v675, %v680
      %v685 = vpack.c.bf16 %v683, %v682
      %v686 = vpack.c.bf16 %v684, %v684
      %v687 = vld [vmem:[%s6] sm:$0xff]
      %v688 = vld [vmem:[%s6 + $0x8] sm:$0xff]
      %v689 = vld [vmem:[%s6 + $0x10] sm:$0xff]
      %v690 = vld [vmem:[%s6 + $0x18] sm:$0xff]
      %v691 = vld [vmem:[%s6 + $0x20] sm:$0xff]
      %v692 = vld [vmem:[%s6 + $0x28] sm:$0xff]
      %v693 = vld [vmem:[%s6 + $0x30] sm:$0xff]
      %v694 = vld [vmem:[%s6 + $0x38] sm:$0xff]
      %v695 = vld [vmem:[%s6 + $0x40] sm:$0xff]
      %v696 = vld [vmem:[%s6 + $0x48] sm:$0xff]
      %v697 = vld [vmem:[%s6 + $0x50] sm:$0xff]
      %v698 = vld [vmem:[%s6 + $0x58] sm:$0xff]
      %v699 = vld [vmem:[%s6 + $0x60] sm:$0xff]
      %v700 = vld [vmem:[%s6 + $0x68] sm:$0xff]
      %v701 = vld [vmem:[%s6 + $0x70] sm:$0xff]
      %v702 = vld [vmem:[%s6 + $0x78] sm:$0xff]
      %v703 = vld [vmem:[%s6 + $0x80] sm:$0xff]
      %v704 = vld [vmem:[%s6 + $0x88] sm:$0xff]
      %v705 = vld [vmem:[%s6 + $0x90] sm:$0xff]
      %v706 = vld [vmem:[%s6 + $0x98] sm:$0xff]
      %v707 = vld [vmem:[%s6 + $0xa0] sm:$0xff]
      %v708 = vld [vmem:[%s6 + $0xa8] sm:$0xff]
      %v709 = vld [vmem:[%s6 + $0xb0] sm:$0xff]
      %v710 = vld [vmem:[%s6 + $0xb8] sm:$0xff]
      %v711 = vld [vmem:[%s6 + $0xc0] sm:$0xff]
      %v712 = vld [vmem:[%s6 + $0xc8] sm:$0xff]
      %v713 = vld [vmem:[%s6 + $0xd0] sm:$0xff]
      %v714 = vld [vmem:[%s6 + $0xd8] sm:$0xff]
      %v715 = vld [vmem:[%s6 + $0xe0] sm:$0xff]
      %v716 = vld [vmem:[%s6 + $0xe8] sm:$0xff]
      %v717 = vld [vmem:[%s6 + $0xf0] sm:$0xff]
      %v718 = vld [vmem:[%s6 + $0xf8] sm:$0xff]
      %v719 = vld [vmem:[%s7] sm:$0xf]
      %v721 = vlaneseq
      %v722 = vshrl.u32 %v721, 7
      %v723 = vsub.s32 0, %v722
      %v724 = vrot.slane %v719, %v723
      %v725 = vlaneseq
      %v726 = vshrl.u32 %v725, 7
      %v727 = vsub.s32 1, %v726
      %v728 = vrot.slane %v719, %v727
      %v729 = vlaneseq
      %v730 = vshrl.u32 %v729, 7
      %v731 = vsub.s32 2, %v730
      %v732 = vrot.slane %v719, %v731
      %v733 = vlaneseq
      %v734 = vshrl.u32 %v733, 7
      %v735 = vsub.s32 3, %v734
      %v736 = vrot.slane %v719, %v735
      %v773 = vunpack.c.l.b16 %v687
      %v774 = vunpack.c.h.b16 %v687
      %v775 = vunpack.c.l.b16 %v688
      %v776 = vunpack.c.h.b16 %v688
      %v777 = vunpack.c.l.b16 %v689
      %v778 = vunpack.c.h.b16 %v689
      %v779 = vunpack.c.l.b16 %v690
      %v780 = vunpack.c.h.b16 %v690
      %v781 = vunpack.c.l.b16 %v691
      %v782 = vunpack.c.h.b16 %v691
      %v783 = vunpack.c.l.b16 %v692
      %v784 = vunpack.c.h.b16 %v692
      %v785 = vunpack.c.l.b16 %v693
      %v786 = vunpack.c.h.b16 %v693
      %v787 = vunpack.c.l.b16 %v694
      %v788 = vunpack.c.h.b16 %v694
      %v789 = vunpack.c.l.b16 %v695
      %v790 = vunpack.c.h.b16 %v695
      %v791 = vunpack.c.l.b16 %v696
      %v792 = vunpack.c.h.b16 %v696
      %v793 = vunpack.c.l.b16 %v697
      %v794 = vunpack.c.h.b16 %v697
      %v795 = vunpack.c.l.b16 %v698
      %v796 = vunpack.c.h.b16 %v698
      %v797 = vunpack.c.l.b16 %v699
      %v798 = vunpack.c.h.b16 %v699
      %v799 = vunpack.c.l.b16 %v700
      %v800 = vunpack.c.h.b16 %v700
      %v801 = vunpack.c.l.b16 %v701
      %v802 = vunpack.c.h.b16 %v701
      %v803 = vunpack.c.l.b16 %v702
      %v804 = vunpack.c.h.b16 %v702
      %v805 = vunpack.c.l.b16 %v703
      %v806 = vunpack.c.h.b16 %v703
      %v807 = vunpack.c.l.b16 %v704
      %v808 = vunpack.c.h.b16 %v704
      %v809 = vunpack.c.l.b16 %v705
      %v810 = vunpack.c.h.b16 %v705
      %v811 = vunpack.c.l.b16 %v706
      %v812 = vunpack.c.h.b16 %v706
      %v813 = vunpack.c.l.b16 %v707
      %v814 = vunpack.c.h.b16 %v707
      %v815 = vunpack.c.l.b16 %v708
      %v816 = vunpack.c.h.b16 %v708
      %v817 = vunpack.c.l.b16 %v709
      %v818 = vunpack.c.h.b16 %v709
      %v819 = vunpack.c.l.b16 %v710
      %v820 = vunpack.c.h.b16 %v710
      %v821 = vunpack.c.l.b16 %v711
      %v822 = vunpack.c.h.b16 %v711
      %v823 = vunpack.c.l.b16 %v712
      %v824 = vunpack.c.h.b16 %v712
      %v825 = vunpack.c.l.b16 %v713
      %v826 = vunpack.c.h.b16 %v713
      %v827 = vunpack.c.l.b16 %v714
      %v828 = vunpack.c.h.b16 %v714
      %v829 = vunpack.c.l.b16 %v715
      %v830 = vunpack.c.h.b16 %v715
      %v831 = vunpack.c.l.b16 %v716
      %v832 = vunpack.c.h.b16 %v716
      %v833 = vunpack.c.l.b16 %v717
      %v834 = vunpack.c.h.b16 %v717
      %v835 = vunpack.c.l.b16 %v718
      %v836 = vunpack.c.h.b16 %v718
      %v837 = vpack.c.b16 %v777, %v773
      %v838 = vpack.c.b16 %v778, %v774
      %v839 = vpack.c.b16 %v779, %v775
      %v840 = vpack.c.b16 %v780, %v776
      %v841 = vpack.c.b16 %v785, %v781
      %v842 = vpack.c.b16 %v786, %v782
      %v843 = vpack.c.b16 %v787, %v783
      %v844 = vpack.c.b16 %v788, %v784
      %v845 = vpack.c.b16 %v793, %v789
      %v846 = vpack.c.b16 %v794, %v790
      %v847 = vpack.c.b16 %v795, %v791
      %v848 = vpack.c.b16 %v796, %v792
      %v849 = vpack.c.b16 %v801, %v797
      %v850 = vpack.c.b16 %v802, %v798
      %v851 = vpack.c.b16 %v803, %v799
      %v852 = vpack.c.b16 %v804, %v800
      %v853 = vpack.c.b16 %v809, %v805
      %v854 = vpack.c.b16 %v810, %v806
      %v855 = vpack.c.b16 %v811, %v807
      %v856 = vpack.c.b16 %v812, %v808
      %v857 = vpack.c.b16 %v817, %v813
      %v858 = vpack.c.b16 %v818, %v814
      %v859 = vpack.c.b16 %v819, %v815
      %v860 = vpack.c.b16 %v820, %v816
      %v861 = vpack.c.b16 %v825, %v821
      %v862 = vpack.c.b16 %v826, %v822
      %v863 = vpack.c.b16 %v827, %v823
      %v864 = vpack.c.b16 %v828, %v824
      %v865 = vpack.c.b16 %v833, %v829
      %v866 = vpack.c.b16 %v834, %v830
      %v867 = vpack.c.b16 %v835, %v831
      %v868 = vpack.c.b16 %v836, %v832
      %901 = vmatprep.subr.bf16.mxu0 %v838
      %902 = vmatpush1.bf16.msra.mxu0 %v837
      %903 = vmatprep.subr.bf16.mxu0 %v842
      %904 = vmatpush1.bf16.msra.mxu0 %v841
      %905 = vmatprep.subr.bf16.mxu0 %v846
      %906 = vmatpush1.bf16.msra.mxu0 %v845
      %907 = vmatprep.subr.bf16.mxu0 %v850
      %908 = vmatpush1.bf16.msra.mxu0 %v849
      %909 = vmatprep.subr.bf16.mxu0 %v854
      %910 = vmatpush1.bf16.msra.mxu0 %v853
      %911 = vmatprep.subr.bf16.mxu0 %v858
      %912 = vmatpush1.bf16.msra.mxu0 %v857
      %913 = vmatprep.subr.bf16.mxu0 %v862
      %914 = vmatpush1.bf16.msra.mxu0 %v861
      %915 = vmatprep.subr.bf16.mxu0 %v866
      %916 = vmatpush1.bf16.msra.mxu0 %v865
      %917 = vmatprep.subr.bf16.mxu0 0
      %918 = vmatpush1.bf16.msra.mxu0 0
      %919 = vmatprep.subr.bf16.mxu0 0
      %920 = vmatpush1.bf16.msra.mxu0 0
      %921 = vmatprep.subr.bf16.mxu0 0
      %922 = vmatpush1.bf16.msra.mxu0 0
      %923 = vmatprep.subr.bf16.mxu0 0
      %924 = vmatpush1.bf16.msra.mxu0 0
      %925 = vmatprep.subr.bf16.mxu0 0
      %926 = vmatpush1.bf16.msra.mxu0 0
      %927 = vmatprep.subr.bf16.mxu0 0
      %928 = vmatpush1.bf16.msra.mxu0 0
      %929 = vmatprep.subr.bf16.mxu0 0
      %930 = vmatpush1.bf16.msra.mxu0 0
      %931 = vmatprep.subr.bf16.mxu0 0
      %932 = vmatpush1.bf16.msra.mxu0 0
      %933 = vmatprep.mubr.bf16.mxu0 0
      %934 = vmatmul.mubr.bf16.gmra.mrb[0].mxu0 %v685
      %v935 = vpop.f32.mrb[0].mxu0
      %v936 = vadd.f32 %v724, %v935
      %v937 = vpop.f32.mrb[0].mxu0
      %v938 = vadd.f32 %v728, %v937
      %v939 = vpop.f32.mrb[0].mxu0
      %v940 = vadd.f32 %v724, %v939
      %v941 = vpop.f32.mrb[0].mxu0
      %v942 = vadd.f32 %v728, %v941
      %943 = vmatprep.mubr.bf16.mxu0 0
      %944 = vmatmul.mubr.bf16.gmra.mrb[0].mxu0 %v686
      %v945 = vpop.f32.mrb[0].mxu0
      %v946 = vadd.f32 %v724, %v945
      %v947 = vpop.f32.mrb[0].mxu0
      %v948 = vadd.f32 %v728, %v947
      %v949 = vpop.f32.mrb[0].mxu0
      %v950 = vpop.f32.mrb[0].mxu0
      %951 = vdwg.mxu0
      %952 = vmatprep.subr.bf16.mxu0 %v840
      %953 = vmatpush1.bf16.msra.mxu0 %v839
      %954 = vmatprep.subr.bf16.mxu0 %v844
      %955 = vmatpush1.bf16.msra.mxu0 %v843
      %956 = vmatprep.subr.bf16.mxu0 %v848
      %957 = vmatpush1.bf16.msra.mxu0 %v847
      %958 = vmatprep.subr.bf16.mxu0 %v852
      %959 = vmatpush1.bf16.msra.mxu0 %v851
      %960 = vmatprep.subr.bf16.mxu0 %v856
      %961 = vmatpush1.bf16.msra.mxu0 %v855
      %962 = vmatprep.subr.bf16.mxu0 %v860
      %963 = vmatpush1.bf16.msra.mxu0 %v859
      %964 = vmatprep.subr.bf16.mxu0 %v864
      %965 = vmatpush1.bf16.msra.mxu0 %v863
      %966 = vmatprep.subr.bf16.mxu0 %v868
      %967 = vmatpush1.bf16.msra.mxu0 %v867
      %968 = vmatprep.subr.bf16.mxu0 0
      %969 = vmatpush1.bf16.msra.mxu0 0
      %970 = vmatprep.subr.bf16.mxu0 0
      %971 = vmatpush1.bf16.msra.mxu0 0
      %972 = vmatprep.subr.bf16.mxu0 0
      %973 = vmatpush1.bf16.msra.mxu0 0
      %974 = vmatprep.subr.bf16.mxu0 0
      %975 = vmatpush1.bf16.msra.mxu0 0
      %976 = vmatprep.subr.bf16.mxu0 0
      %977 = vmatpush1.bf16.msra.mxu0 0
      %978 = vmatprep.subr.bf16.mxu0 0
      %979 = vmatpush1.bf16.msra.mxu0 0
      %980 = vmatprep.subr.bf16.mxu0 0
      %981 = vmatpush1.bf16.msra.mxu0 0
      %982 = vmatprep.subr.bf16.mxu0 0
      %983 = vmatpush1.bf16.msra.mxu0 0
      %984 = vmatprep.mubr.bf16.mxu0 0
      %985 = vmatmul.mubr.bf16.gmra.mrb[0].mxu0 %v685
      %v986 = vpop.f32.mrb[0].mxu0
      %v987 = vadd.f32 %v732, %v986
      %v988 = vpop.f32.mrb[0].mxu0
      %v989 = vadd.f32 %v736, %v988
      %v990 = vpop.f32.mrb[0].mxu0
      %v991 = vadd.f32 %v732, %v990
      %v992 = vpop.f32.mrb[0].mxu0
      %v993 = vadd.f32 %v736, %v992
      %994 = vmatprep.mubr.bf16.mxu0 0
      %995 = vmatmul.mubr.bf16.gmra.mrb[0].mxu0 %v686
      %v996 = vpop.f32.mrb[0].mxu0
      %v997 = vadd.f32 %v732, %v996
      %v998 = vpop.f32.mrb[0].mxu0
      %v999 = vadd.f32 %v736, %v998
      %v1000 = vpop.f32.mrb[0].mxu0
      %v1001 = vpop.f32.mrb[0].mxu0
      %1002 = vdwg.mxu0
      %v1003 = vmul.f32 %v936, 0.5
      %v1004 = vmul.f32 %v938, 0.5
      %v1005 = vmul.f32 %v987, 0.5
      %v1006 = vmul.f32 %v989, 0.5
      %v1007 = vmul.f32 %v940, 0.5
      %v1008 = vmul.f32 %v942, 0.5
      %v1009 = vmul.f32 %v991, 0.5
      %v1010 = vmul.f32 %v993, 0.5
      %v1011 = vmul.f32 %v946, 0.5
      %v1012 = vmul.f32 %v948, 0.5
      %v1013 = vmul.f32 %v997, 0.5
      %v1014 = vmul.f32 %v999, 0.5
      %v1015 = vmul.f32 %v936, 0.044715
      %v1016 = vmul.f32 %v938, 0.044715
      %v1017 = vmul.f32 %v987, 0.044715
      %v1018 = vmul.f32 %v989, 0.044715
      %v1019 = vmul.f32 %v940, 0.044715
      %v1020 = vmul.f32 %v942, 0.044715
      %v1021 = vmul.f32 %v991, 0.044715
      %v1022 = vmul.f32 %v993, 0.044715
      %v1023 = vmul.f32 %v946, 0.044715
      %v1024 = vmul.f32 %v948, 0.044715
      %v1025 = vmul.f32 %v997, 0.044715
      %v1026 = vmul.f32 %v999, 0.044715
      %v1027 = vmul.f32 %v1015, %v936
      %v1028 = vmul.f32 %v1016, %v938
      %v1029 = vmul.f32 %v1017, %v987
      %v1030 = vmul.f32 %v1018, %v989
      %v1031 = vmul.f32 %v1019, %v940
      %v1032 = vmul.f32 %v1020, %v942
      %v1033 = vmul.f32 %v1021, %v991
      %v1034 = vmul.f32 %v1022, %v993
      %v1035 = vmul.f32 %v1023, %v946
      %v1036 = vmul.f32 %v1024, %v948
      %v1037 = vmul.f32 %v1025, %v997
      %v1038 = vmul.f32 %v1026, %v999
      %v1039 = vmul.f32 %v1027, %v936
      %v1040 = vmul.f32 %v1028, %v938
      %v1041 = vmul.f32 %v1029, %v987
      %v1042 = vmul.f32 %v1030, %v989
      %v1043 = vmul.f32 %v1031, %v940
      %v1044 = vmul.f32 %v1032, %v942
      %v1045 = vmul.f32 %v1033, %v991
      %v1046 = vmul.f32 %v1034, %v993
      %v1047 = vmul.f32 %v1035, %v946
      %v1048 = vmul.f32 %v1036, %v948
      %v1049 = vmul.f32 %v1037, %v997
      %v1050 = vmul.f32 %v1038, %v999
      %v1051 = vadd.f32 %v936, %v1039
      %v1052 = vadd.f32 %v938, %v1040
      %v1053 = vadd.f32 %v987, %v1041
      %v1054 = vadd.f32 %v989, %v1042
      %v1055 = vadd.f32 %v940, %v1043
      %v1056 = vadd.f32 %v942, %v1044
      %v1057 = vadd.f32 %v991, %v1045
      %v1058 = vadd.f32 %v993, %v1046
      %v1059 = vadd.f32 %v946, %v1047
      %v1060 = vadd.f32 %v948, %v1048
      %v1061 = vadd.f32 %v997, %v1049
      %v1062 = vadd.f32 %v999, %v1050
      %v1063 = vmul.f32 %v1051, 0.7978846
      %v1064 = vmul.f32 %v1052, 0.7978846
      %v1065 = vmul.f32 %v1053, 0.7978846
      %v1066 = vmul.f32 %v1054, 0.7978846
      %v1067 = vmul.f32 %v1055, 0.7978846
      %v1068 = vmul.f32 %v1056, 0.7978846
      %v1069 = vmul.f32 %v1057, 0.7978846
      %v1070 = vmul.f32 %v1058, 0.7978846
      %v1071 = vmul.f32 %v1059, 0.7978846
      %v1072 = vmul.f32 %v1060, 0.7978846
      %v1073 = vmul.f32 %v1061, 0.7978846
      %v1074 = vmul.f32 %v1062, 0.7978846
      %v1075 = vtanh.pop %v1063
      %v1076 = vtanh.pop %v1064
      %v1077 = vtanh.pop %v1065
      %v1078 = vtanh.pop %v1066
      %v1079 = vtanh.pop %v1067
      %v1080 = vtanh.pop %v1068
      %v1081 = vtanh.pop %v1069
      %v1082 = vtanh.pop %v1070
      %v1083 = vtanh.pop %v1071
      %v1084 = vtanh.pop %v1072
      %v1085 = vtanh.pop %v1073
      %v1086 = vtanh.pop %v1074
      %v1087 = vadd.f32 %v1075, 1.0
      %v1088 = vadd.f32 %v1076, 1.0
      %v1089 = vadd.f32 %v1077, 1.0
      %v1090 = vadd.f32 %v1078, 1.0
      %v1091 = vadd.f32 %v1079, 1.0
      %v1092 = vadd.f32 %v1080, 1.0
      %v1093 = vadd.f32 %v1081, 1.0
      %v1094 = vadd.f32 %v1082, 1.0
      %v1095 = vadd.f32 %v1083, 1.0
      %v1096 = vadd.f32 %v1084, 1.0
      %v1097 = vadd.f32 %v1085, 1.0
      %v1098 = vadd.f32 %v1086, 1.0
      %v1099 = vmul.f32 %v1003, %v1087
      %v1100 = vmul.f32 %v1004, %v1088
      %v1101 = vmul.f32 %v1005, %v1089
      %v1102 = vmul.f32 %v1006, %v1090
      %v1103 = vmul.f32 %v1007, %v1091
      %v1104 = vmul.f32 %v1008, %v1092
      %v1105 = vmul.f32 %v1009, %v1093
      %v1106 = vmul.f32 %v1010, %v1094
      %v1107 = vmul.f32 %v1011, %v1095
      %v1108 = vmul.f32 %v1012, %v1096
      %v1109 = vmul.f32 %v1013, %v1097
      %v1110 = vmul.f32 %v1014, %v1098
      %v1111 = vpack.c.bf16 %v1103, %v1099
      %v1112 = vpack.c.bf16 %v1104, %v1100
      %v1113 = vpack.c.bf16 %v1105, %v1101
      %v1114 = vpack.c.bf16 %v1106, %v1102
      %v1115 = vpack.c.bf16 %v1107, %v1107
      %v1116 = vpack.c.bf16 %v1108, %v1108
      %v1117 = vpack.c.bf16 %v1109, %v1109
      %v1118 = vpack.c.bf16 %v1110, %v1110
      %v1119 = vld [vmem:[%s8] sm:$0xf]
      %v1120 = vld [vmem:[%s8 + $0x4] sm:$0xf]
      %v1121 = vld [vmem:[%s8 + $0x8] sm:$0xf]
      %v1122 = vld [vmem:[%s8 + $0xc] sm:$0xf]
      %v1123 = vld [vmem:[%s8 + $0x10] sm:$0xf]
      %v1124 = vld [vmem:[%s8 + $0x14] sm:$0xf]
      %v1125 = vld [vmem:[%s8 + $0x18] sm:$0xf]
      %v1126 = vld [vmem:[%s8 + $0x1c] sm:$0xf]
      %v1127 = vld [vmem:[%s8 + $0x20] sm:$0xf]
      %v1128 = vld [vmem:[%s8 + $0x24] sm:$0xf]
      %v1129 = vld [vmem:[%s8 + $0x28] sm:$0xf]
      %v1130 = vld [vmem:[%s8 + $0x2c] sm:$0xf]
      %v1131 = vld [vmem:[%s8 + $0x30] sm:$0xf]
      %v1132 = vld [vmem:[%s8 + $0x34] sm:$0xf]
      %v1133 = vld [vmem:[%s8 + $0x38] sm:$0xf]
      %v1134 = vld [vmem:[%s8 + $0x3c] sm:$0xf]
      %v1135 = vld [vmem:[%s8 + $0x40] sm:$0xf]
      %v1136 = vld [vmem:[%s8 + $0x44] sm:$0xf]
      %v1137 = vld [vmem:[%s8 + $0x48] sm:$0xf]
      %v1138 = vld [vmem:[%s8 + $0x4c] sm:$0xf]
      %v1139 = vld [vmem:[%s8 + $0x50] sm:$0xf]
      %v1140 = vld [vmem:[%s8 + $0x54] sm:$0xf]
      %v1141 = vld [vmem:[%s8 + $0x58] sm:$0xf]
      %v1142 = vld [vmem:[%s8 + $0x5c] sm:$0xf]
      %v1143 = vld [vmem:[%s8 + $0x60] sm:$0xf]
      %v1144 = vld [vmem:[%s8 + $0x64] sm:$0xf]
      %v1145 = vld [vmem:[%s8 + $0x68] sm:$0xf]
      %v1146 = vld [vmem:[%s8 + $0x6c] sm:$0xf]
      %v1147 = vld [vmem:[%s8 + $0x70] sm:$0xf]
      %v1148 = vld [vmem:[%s8 + $0x74] sm:$0xf]
      %v1149 = vld [vmem:[%s8 + $0x78] sm:$0xf]
      %v1150 = vld [vmem:[%s8 + $0x7c] sm:$0xf]
      %v1151 = vld [vmem:[%s8 + $0x80] sm:$0xf]
      %v1152 = vld [vmem:[%s8 + $0x84] sm:$0xf]
      %v1153 = vld [vmem:[%s8 + $0x88] sm:$0xf]
      %v1154 = vld [vmem:[%s8 + $0x8c] sm:$0xf]
      %v1155 = vld [vmem:[%s8 + $0x90] sm:$0xf]
      %v1156 = vld [vmem:[%s8 + $0x94] sm:$0xf]
      %v1157 = vld [vmem:[%s8 + $0x98] sm:$0xf]
      %v1158 = vld [vmem:[%s8 + $0x9c] sm:$0xf]
      %v1159 = vld [vmem:[%s8 + $0xa0] sm:$0xf]
      %v1160 = vld [vmem:[%s8 + $0xa4] sm:$0xf]
      %v1161 = vld [vmem:[%s8 + $0xa8] sm:$0xf]
      %v1162 = vld [vmem:[%s8 + $0xac] sm:$0xf]
      %v1163 = vld [vmem:[%s8 + $0xb0] sm:$0xf]
      %v1164 = vld [vmem:[%s8 + $0xb4] sm:$0xf]
      %v1165 = vld [vmem:[%s8 + $0xb8] sm:$0xf]
      %v1166 = vld [vmem:[%s8 + $0xbc] sm:$0xf]
      %v1167 = vld [vmem:[%s8 + $0xc0] sm:$0xf]
      %v1168 = vld [vmem:[%s8 + $0xc4] sm:$0xf]
      %v1169 = vld [vmem:[%s8 + $0xc8] sm:$0xf]
      %v1170 = vld [vmem:[%s8 + $0xcc] sm:$0xf]
      %v1171 = vld [vmem:[%s8 + $0xd0] sm:$0xf]
      %v1172 = vld [vmem:[%s8 + $0xd4] sm:$0xf]
      %v1173 = vld [vmem:[%s8 + $0xd8] sm:$0xf]
      %v1174 = vld [vmem:[%s8 + $0xdc] sm:$0xf]
      %v1175 = vld [vmem:[%s8 + $0xe0] sm:$0xf]
      %v1176 = vld [vmem:[%s8 + $0xe4] sm:$0xf]
      %v1177 = vld [vmem:[%s8 + $0xe8] sm:$0xf]
      %v1178 = vld [vmem:[%s8 + $0xec] sm:$0xf]
      %v1179 = vld [vmem:[%s8 + $0xf0] sm:$0xf]
      %v1180 = vld [vmem:[%s8 + $0xf4] sm:$0xf]
      %v1181 = vld [vmem:[%s8 + $0xf8] sm:$0xf]
      %v1182 = vld [vmem:[%s8 + $0xfc] sm:$0xf]
      %v1183 = vld [vmem:[%s9] sm:$0x1]
      %v1185 = vlaneseq
      %v1186 = vshrl.u32 %v1185, 7
      %v1187 = vsub.s32 0, %v1186
      %v1188 = vrot.slane %v1183, %v1187
      %v1254 = vunpack.c.l.b16 %v1119
      %v1255 = vunpack.c.l.b16 %v1120
      %v1256 = vunpack.c.l.b16 %v1121
      %v1257 = vunpack.c.l.b16 %v1122
      %v1258 = vunpack.c.l.b16 %v1123
      %v1259 = vunpack.c.l.b16 %v1124
      %v1260 = vunpack.c.l.b16 %v1125
      %v1261 = vunpack.c.l.b16 %v1126
      %v1262 = vunpack.c.l.b16 %v1127
      %v1263 = vunpack.c.l.b16 %v1128
      %v1264 = vunpack.c.l.b16 %v1129
      %v1265 = vunpack.c.l.b16 %v1130
      %v1266 = vunpack.c.l.b16 %v1131
      %v1267 = vunpack.c.l.b16 %v1132
      %v1268 = vunpack.c.l.b16 %v1133
      %v1269 = vunpack.c.l.b16 %v1134
      %v1270 = vunpack.c.l.b16 %v1135
      %v1271 = vunpack.c.l.b16 %v1136
      %v1272 = vunpack.c.l.b16 %v1137
      %v1273 = vunpack.c.l.b16 %v1138
      %v1274 = vunpack.c.l.b16 %v1139
      %v1275 = vunpack.c.l.b16 %v1140
      %v1276 = vunpack.c.l.b16 %v1141
      %v1277 = vunpack.c.l.b16 %v1142
      %v1278 = vunpack.c.l.b16 %v1143
      %v1279 = vunpack.c.l.b16 %v1144
      %v1280 = vunpack.c.l.b16 %v1145
      %v1281 = vunpack.c.l.b16 %v1146
      %v1282 = vunpack.c.l.b16 %v1147
      %v1283 = vunpack.c.l.b16 %v1148
      %v1284 = vunpack.c.l.b16 %v1149
      %v1285 = vunpack.c.l.b16 %v1150
      %v1286 = vunpack.c.l.b16 %v1151
      %v1287 = vunpack.c.l.b16 %v1152
      %v1288 = vunpack.c.l.b16 %v1153
      %v1289 = vunpack.c.l.b16 %v1154
      %v1290 = vunpack.c.l.b16 %v1155
      %v1291 = vunpack.c.l.b16 %v1156
      %v1292 = vunpack.c.l.b16 %v1157
      %v1293 = vunpack.c.l.b16 %v1158
      %v1294 = vunpack.c.l.b16 %v1159
      %v1295 = vunpack.c.l.b16 %v1160
      %v1296 = vunpack.c.l.b16 %v1161
      %v1297 = vunpack.c.l.b16 %v1162
      %v1298 = vunpack.c.l.b16 %v1163
      %v1299 = vunpack.c.l.b16 %v1164
      %v1300 = vunpack.c.l.b16 %v1165
      %v1301 = vunpack.c.l.b16 %v1166
      %v1302 = vunpack.c.l.b16 %v1167
      %v1303 = vunpack.c.l.b16 %v1168
      %v1304 = vunpack.c.l.b16 %v1169
      %v1305 = vunpack.c.l.b16 %v1170
      %v1306 = vunpack.c.l.b16 %v1171
      %v1307 = vunpack.c.l.b16 %v1172
      %v1308 = vunpack.c.l.b16 %v1173
      %v1309 = vunpack.c.l.b16 %v1174
      %v1310 = vunpack.c.l.b16 %v1175
      %v1311 = vunpack.c.l.b16 %v1176
      %v1312 = vunpack.c.l.b16 %v1177
      %v1313 = vunpack.c.l.b16 %v1178
      %v1314 = vunpack.c.l.b16 %v1179
      %v1315 = vunpack.c.l.b16 %v1180
      %v1316 = vunpack.c.l.b16 %v1181
      %v1317 = vunpack.c.l.b16 %v1182
      %v1318 = vpack.c.b16 %v1255, %v1254
      %v1319 = vpack.c.b16 %v1257, %v1256
      %v1320 = vpack.c.b16 %v1259, %v1258
      %v1321 = vpack.c.b16 %v1261, %v1260
      %v1322 = vpack.c.b16 %v1263, %v1262
      %v1323 = vpack.c.b16 %v1265, %v1264
      %v1324 = vpack.c.b16 %v1267, %v1266
      %v1325 = vpack.c.b16 %v1269, %v1268
      %v1326 = vpack.c.b16 %v1271, %v1270
      %v1327 = vpack.c.b16 %v1273, %v1272
      %v1328 = vpack.c.b16 %v1275, %v1274
      %v1329 = vpack.c.b16 %v1277, %v1276
      %v1330 = vpack.c.b16 %v1279, %v1278
      %v1331 = vpack.c.b16 %v1281, %v1280
      %v1332 = vpack.c.b16 %v1283, %v1282
      %v1333 = vpack.c.b16 %v1285, %v1284
      %v1334 = vpack.c.b16 %v1287, %v1286
      %v1335 = vpack.c.b16 %v1289, %v1288
      %v1336 = vpack.c.b16 %v1291, %v1290
      %v1337 = vpack.c.b16 %v1293, %v1292
      %v1338 = vpack.c.b16 %v1295, %v1294
      %v1339 = vpack.c.b16 %v1297, %v1296
      %v1340 = vpack.c.b16 %v1299, %v1298
      %v1341 = vpack.c.b16 %v1301, %v1300
      %v1342 = vpack.c.b16 %v1303, %v1302
      %v1343 = vpack.c.b16 %v1305, %v1304
      %v1344 = vpack.c.b16 %v1307, %v1306
      %v1345 = vpack.c.b16 %v1309, %v1308
      %v1346 = vpack.c.b16 %v1311, %v1310
      %v1347 = vpack.c.b16 %v1313, %v1312
      %v1348 = vpack.c.b16 %v1315, %v1314
      %v1349 = vpack.c.b16 %v1317, %v1316
      %1382 = vmatprep.subr.bf16.mxu0 0
      %1383 = vmatpush1.bf16.msra.mxu0 %v1318
      %1384 = vmatprep.subr.bf16.mxu0 0
      %1385 = vmatpush1.bf16.msra.mxu0 %v1319
      %1386 = vmatprep.subr.bf16.mxu0 0
      %1387 = vmatpush1.bf16.msra.mxu0 %v1320
      %1388 = vmatprep.subr.bf16.mxu0 0
      %1389 = vmatpush1.bf16.msra.mxu0 %v1321
      %1390 = vmatprep.subr.bf16.mxu0 0
      %1391 = vmatpush1.bf16.msra.mxu0 %v1322
      %1392 = vmatprep.subr.bf16.mxu0 0
      %1393 = vmatpush1.bf16.msra.mxu0 %v1323
      %1394 = vmatprep.subr.bf16.mxu0 0
      %1395 = vmatpush1.bf16.msra.mxu0 %v1324
      %1396 = vmatprep.subr.bf16.mxu0 0
      %1397 = vmatpush1.bf16.msra.mxu0 %v1325
      %1398 = vmatprep.subr.bf16.mxu0 0
      %1399 = vmatpush1.bf16.msra.mxu0 %v1326
      %1400 = vmatprep.subr.bf16.mxu0 0
      %1401 = vmatpush1.bf16.msra.mxu0 %v1327
      %1402 = vmatprep.subr.bf16.mxu0 0
      %1403 = vmatpush1.bf16.msra.mxu0 %v1328
      %1404 = vmatprep.subr.bf16.mxu0 0
      %1405 = vmatpush1.bf16.msra.mxu0 %v1329
      %1406 = vmatprep.subr.bf16.mxu0 0
      %1407 = vmatpush1.bf16.msra.mxu0 %v1330
      %1408 = vmatprep.subr.bf16.mxu0 0
      %1409 = vmatpush1.bf16.msra.mxu0 %v1331
      %1410 = vmatprep.subr.bf16.mxu0 0
      %1411 = vmatpush1.bf16.msra.mxu0 %v1332
      %1412 = vmatprep.subr.bf16.mxu0 0
      %1413 = vmatpush1.bf16.msra.mxu0 %v1333
      %1414 = vmatprep.mubr.bf16.mxu0 %v1112
      %1415 = vmatmul.mubr.bf16.gmra.mrb[0].mxu0 %v1111
      %v1416 = vpop.f32.mrb[0].mxu0
      %v1417 = vadd.f32 %v1188, %v1416
      %v1418 = vpop.f32.mrb[0].mxu0
      %v1419 = vpop.f32.mrb[0].mxu0
      %v1420 = vadd.f32 %v1188, %v1419
      %v1421 = vpop.f32.mrb[0].mxu0
      %1422 = vmatprep.mubr.bf16.mxu0 %v1116
      %1423 = vmatmul.mubr.bf16.gmra.mrb[0].mxu0 %v1115
      %v1424 = vpop.f32.mrb[0].mxu0
      %v1425 = vadd.f32 %v1188, %v1424
      %v1426 = vpop.f32.mrb[0].mxu0
      %v1427 = vpop.f32.mrb[0].mxu0
      %v1428 = vpop.f32.mrb[0].mxu0
      %1429 = vdwg.mxu0
      %1430 = vmatprep.subr.bf16.mxu0 0
      %1431 = vmatpush1.bf16.msra.mxu0 %v1334
      %1432 = vmatprep.subr.bf16.mxu0 0
      %1433 = vmatpush1.bf16.msra.mxu0 %v1335
      %1434 = vmatprep.subr.bf16.mxu0 0
      %1435 = vmatpush1.bf16.msra.mxu0 %v1336
      %1436 = vmatprep.subr.bf16.mxu0 0
      %1437 = vmatpush1.bf16.msra.mxu0 %v1337
      %1438 = vmatprep.subr.bf16.mxu0 0
      %1439 = vmatpush1.bf16.msra.mxu0 %v1338
      %1440 = vmatprep.subr.bf16.mxu0 0
      %1441 = vmatpush1.bf16.msra.mxu0 %v1339
      %1442 = vmatprep.subr.bf16.mxu0 0
      %1443 = vmatpush1.bf16.msra.mxu0 %v1340
      %1444 = vmatprep.subr.bf16.mxu0 0
      %1445 = vmatpush1.bf16.msra.mxu0 %v1341
      %1446 = vmatprep.subr.bf16.mxu0 0
      %1447 = vmatpush1.bf16.msra.mxu0 %v1342
      %1448 = vmatprep.subr.bf16.mxu0 0
      %1449 = vmatpush1.bf16.msra.mxu0 %v1343
      %1450 = vmatprep.subr.bf16.mxu0 0
      %1451 = vmatpush1.bf16.msra.mxu0 %v1344
      %1452 = vmatprep.subr.bf16.mxu0 0
      %1453 = vmatpush1.bf16.msra.mxu0 %v1345
      %1454 = vmatprep.subr.bf16.mxu0 0
      %1455 = vmatpush1.bf16.msra.mxu0 %v1346
      %1456 = vmatprep.subr.bf16.mxu0 0
      %1457 = vmatpush1.bf16.msra.mxu0 %v1347
      %1458 = vmatprep.subr.bf16.mxu0 0
      %1459 = vmatpush1.bf16.msra.mxu0 %v1348
      %1460 = vmatprep.subr.bf16.mxu0 0
      %1461 = vmatpush1.bf16.msra.mxu0 %v1349
      %1462 = vmatprep.mubr.bf16.mxu0 %v1114
      %1463 = vmatmul.mubr.bf16.gmra.mrb[0].mxu0 %v1113
      %v1464 = vpop.f32.mrb[0].mxu0
      %v1465 = vadd.f32 %v1417, %v1464
      %v1466 = vpop.f32.mrb[0].mxu0
      %v1467 = vpop.f32.mrb[0].mxu0
      %v1468 = vadd.f32 %v1420, %v1467
      %v1469 = vpop.f32.mrb[0].mxu0
      %1470 = vmatprep.mubr.bf16.mxu0 %v1118
      %1471 = vmatmul.mubr.bf16.gmra.mrb[0].mxu0 %v1117
      %v1472 = vpop.f32.mrb[0].mxu0
      %v1473 = vadd.f32 %v1425, %v1472
      %v1474 = vpop.f32.mrb[0].mxu0
      %v1475 = vpop.f32.mrb[0].mxu0
      %v1476 = vpop.f32.mrb[0].mxu0
      %1477 = vdwg.mxu0
      %v1478 = vadd.f32 %v625, %v1465
      %v1479 = vadd.f32 %v626, %v1468
      %v1480 = vadd.f32 %v627, %v1473
      %v1481 = vld [vmem:[%s10] sm:$0x1]
      %v1482 = vld [vmem:[%s11] sm:$0x1]
      %1483 = vadd.xlane.f32.xlu0 %v1478
      %v1484 = vpop.xlane.xlu0 %1483
      %1485 = vadd.xlane.f32.xlu0 %v1479
      %v1486 = vpop.xlane.xlu0 %1485
      %v1487 = vsel %vm634, %v1480, 0.0
      %1488 = vadd.xlane.f32.xlu0 %v1487
      %v1489 = vpop.xlane.xlu0 %1488
      %v1490 = vmul.f32 %v1484, %v638
      %v1491 = vmul.f32 %v1486, %v638
      %v1492 = vmul.f32 %v1489, %v638
      %v1493 = vsub.f32 %v1478, %v1490
      %v1494 = vsub.f32 %v1479, %v1491
      %v1495 = vsub.f32 %v1480, %v1492
      %v1496 = vmul.f32 %v1493, %v1493
      %v1497 = vmul.f32 %v1494, %v1494
      %v1498 = vmul.f32 %v1495, %v1495
      %1499 = vadd.xlane.f32.xlu0 %v1496
      %v1500 = vpop.xlane.xlu0 %1499
      %1501 = vadd.xlane.f32.xlu0 %v1497
      %v1502 = vpop.xlane.xlu0 %1501
      %v1503 = vsel %vm634, %v1498, 0.0
      %1504 = vadd.xlane.f32.xlu0 %v1503
      %v1505 = vpop.xlane.xlu0 %1504
      %v1506 = vmul.f32 %v1500, %v638
      %v1507 = vmul.f32 %v1502, %v638
      %v1508 = vmul.f32 %v1505, %v638
      %v1509 = vadd.f32 %v1506, 1e-06
      %v1510 = vadd.f32 %v1507, 1e-06
      %v1511 = vadd.f32 %v1508, 1e-06
      %v1512 = vrsqrt.pop %v1509
      %v1513 = vrsqrt.pop %v1510
      %v1514 = vrsqrt.pop %v1511
      %v1515 = vmul.f32 %v1493, %v1512
      %v1516 = vmul.f32 %v1494, %v1513
      %v1517 = vmul.f32 %v1495, %v1514
      %v1519 = vlaneseq
      %v1520 = vshrl.u32 %v1519, 7
      %v1521 = vsub.s32 0, %v1520
      %v1522 = vrot.slane %v1481, %v1521
      %v1524 = vmul.f32 %v1515, %v1522
      %v1525 = vmul.f32 %v1516, %v1522
      %v1526 = vmul.f32 %v1517, %v1522
      %v1528 = vlaneseq
      %v1529 = vshrl.u32 %v1528, 7
      %v1530 = vsub.s32 0, %v1529
      %v1531 = vrot.slane %v1482, %v1530
      %v1533 = vadd.f32 %v1524, %v1531
      %v1534 = vadd.f32 %v1525, %v1531
      %v1535 = vadd.f32 %v1526, %v1531
      %1536 = vst [vmem:[%s487] sm:$0xff] %v1533
      %1537 = vst [vmem:[%s487 + $0x8] sm:$0xff] %v1534
      %1538 = vst [vmem:[%s487 + $0x10] sm:$0x1] %v1535
      %s1539 = smul.u32 3, %s28
      %p1540 = scmp.lt.s32.totalorder %s27, 1
      %s1541 = scalar_select %p1540, %s27, 1
      %p1542 = scmp.lt.s32.totalorder %s1539, 2
      %s1543 = scalar_select %p1542, %s1539, 2
      %s1544 = smul.addr %s1541, 3
      %s1545 = sadd.s32 %s1543, %s1544
      %s1546 = smul.addr %s1545, 8
      %s1547 = scalar_lea.vmem %s12, %s1546
      // Predicated region
      $region69: #{dinov2_feature_extractor.13} parent=67 // pred_check
        %p1548 = pneg %p321
      $region70: #{dinov2_feature_extractor.13} parent=67 // pred_check_branch
        %1550 = sbr.rel (%p1548) target = $region72
      $region71: #{dinov2_feature_extractor.13} parent=67 // pred_region
        %s1551 = smul.u32 3, %s28
      $region72: #{dinov2_feature_extractor.13} parent=67 // pred_fallthru
        _
    $region68: #{dinov2_feature_extractor.13} parent=5 // pred_fallthru
      _
    %p1552 = scmp.le.s32.totalorder 2, %s18
    // Predicated region
    $region73: #{dinov2_feature_extractor.13} parent=5 // pred_check
      %p1553 = pneg %p1552
    $region74: #{dinov2_feature_extractor.13} parent=5 // pred_check_branch
      %1555 = sbr.rel (%p1553) target = $region76
    $region75: #{dinov2_feature_extractor.13} parent=5 // pred_region
      %s1556 = ssub.s32 %s18, 2
      // Predicated region
      $region77: #{dinov2_feature_extractor.13} parent=75 // pred_check
        %p1557 = pneg %p327
      $region78: #{dinov2_feature_extractor.13} parent=75 // pred_check_branch
        %1559 = sbr.rel (%p1557) target = $region80
      $region79: #{dinov2_feature_extractor.13} parent=75 // pred_region
        %s1560 = smul.u32 3, %s30
        %p1561 = scmp.lt.s32.totalorder %s29, 1
        %s1562 = scalar_select %p1561, %s29, 1
        %p1563 = scmp.lt.s32.totalorder %s1560, 2
        %s1564 = scalar_select %p1563, %s1560, 2
        %s1565 = smul.addr %s1562, 3
        %s1566 = sadd.s32 %s1564, %s1565
        %s1567 = smul.addr %s1566, 8
        %s1568 = scalar_lea.vmem %s12, %s1567
      $region80: #{dinov2_feature_extractor.13} parent=75 // pred_fallthru
        _
    $region76: #{dinov2_feature_extractor.13} parent=5 // pred_fallthru
      _
  $region6: #{dinov2_feature_extractor.13} parent=0 // loop_footer
    %s22 = sadd.s32 1, %s18
  $region7: #{dinov2_feature_extractor.13} parent=0 // loop_footer_branch
    %17 = sbr.rel target = $region3
  $region8: #{dinov2_feature_extractor.13} parent=0 // loop_exit
    _

// kernel: dinov2_feature_extractor.10
$region0: #{dinov2_feature_extractor.10}
  #allocation0 [shape = 'u32[]', space=smem, size = 0x4, offset = 0x4, fixed_abs, tag = 'smem constant byte address 0x4 - core index']
  #allocation1 [shape = 'u32[144,128]{1,0:T(1,128)}', space=vmem, size = 0x12000, scoped, tag = 'internal scratch']
  %s0 = inlined_call_operand.vmem [shape: f32[2,17,128], index: 0, kind: input, shape index: {}, may-alias: {0,12}]
  %s1 = inlined_call_operand.vmem [shape: bf16[2,17,128], index: 1, kind: input, shape index: {}]
  %s2 = inlined_call_operand.vmem [shape: bf16[128,128], index: 2, kind: input, shape index: {}]
  %s3 = inlined_call_operand.vmem [shape: f32[1,128], index: 3, kind: input, shape index: {}]
  %s4 = inlined_call_operand.vmem [shape: f32[1,128], index: 4, kind: input, shape index: {}]
  %s5 = inlined_call_operand.vmem [shape: f32[1,128], index: 5, kind: input, shape index: {}]
  %s6 = inlined_call_operand.vmem [shape: bf16[128,512], index: 6, kind: input, shape index: {}]
  %s7 = inlined_call_operand.vmem [shape: f32[1,512], index: 7, kind: input, shape index: {}]
  %s8 = inlined_call_operand.vmem [shape: bf16[512,128], index: 8, kind: input, shape index: {}]
  %s9 = inlined_call_operand.vmem [shape: f32[1,128], index: 9, kind: input, shape index: {}]
  %s10 = inlined_call_operand.vmem [shape: f32[1,128], index: 10, kind: input, shape index: {}]
  %s11 = inlined_call_operand.vmem [shape: f32[1,128], index: 11, kind: input, shape index: {}]
  %s12 = inlined_call_operand.vmem [shape: f32[2,17,128], index: 12, kind: output, shape index: {}, may-alias: {0,12}]
  %s13 = sld [smem:[#allocation0]]
  $region81: #{dinov2_feature_extractor.10} parent=0
    _
  %s15 = ssub.s32 1, %s13
  %s16 = scalar_select 0, %s15, %s13
  loop: start=0, step=1, limit=4
  $region2: #{dinov2_feature_extractor.10} parent=0 // loop_pre_header
    _
  $region3: #{dinov2_feature_extractor.10} parent=0 // loop_header
    %s18 = sphi 0, %s22
    %p19 = scmp.ge.s32.totalorder %s18, 4
    %s25 = sphi 0, %s37
    %s26 = sphi 0, %s33
    %s27 = sphi 0, %s25
    %s28 = sphi 0, %s26
    %s29 = sphi 0, %s27
    %s30 = sphi 0, %s28
    %s42 = sphi 0, %s44
    %s45 = sphi 0, %s42
    %s46 = sphi 0, %s45
    %s62 = sphi 0, %s46
    %s70 = sphi 0, %s72
    %s73 = sphi 0, %s70
    %s74 = sphi 0, %s73
    %s90 = sphi 0, %s74
    %s94 = sphi 0, %s94
    %s96 = sphi 0, %s94
    %s97 = sphi 0, %s96
    %s111 = sphi 0, %s97
    %s115 = sphi 0, %s115
    %s117 = sphi 0, %s115
    %s118 = sphi 0, %s117
    %s132 = sphi 0, %s118
    %s136 = sphi 0, %s136
    %s138 = sphi 0, %s136
    %s139 = sphi 0, %s138
    %s153 = sphi 0, %s139
    %s157 = sphi 0, %s157
    %s159 = sphi 0, %s157
    %s160 = sphi 0, %s159
    %s174 = sphi 0, %s160
    %s178 = sphi 0, %s178
    %s180 = sphi 0, %s178
    %s181 = sphi 0, %s180
    %s195 = sphi 0, %s181
    %s199 = sphi 0, %s199
    %s201 = sphi 0, %s199
    %s202 = sphi 0, %s201
    %s216 = sphi 0, %s202
    %s220 = sphi 0, %s220
    %s222 = sphi 0, %s220
    %s223 = sphi 0, %s222
    %s237 = sphi 0, %s223
    %s241 = sphi 0, %s241
    %s243 = sphi 0, %s241
    %s244 = sphi 0, %s243
    %s258 = sphi 0, %s244
    %s262 = sphi 0, %s262
    %s264 = sphi 0, %s262
    %s265 = sphi 0, %s264
    %s279 = sphi 0, %s265
    %s283 = sphi 0, %s283
    %s285 = sphi 0, %s283
    %s286 = sphi 0, %s285
    %s300 = sphi 0, %s286
    %s308 = sphi 0, %s310
    %s311 = sphi 0, %s308
    %s312 = sphi 0, %s311
    %s328 = sphi 0, %s312
  $region4: #{dinov2_feature_extractor.10} parent=0 // loop_header_branch
    %21 = sbr.rel (%p19) target = $region8
  $region5: #{dinov2_feature_extractor.10} parent=0 // loop_body
    %s23 = ssub.s32 %s18, 1
    %s24 = ssub.s32 %s18, 2
    %s31 = sadd.s32 1, %s26
    %p32 = scmp.ge.s32.totalorder %s31, 1
    %s33 = scalar_select %p32, 0, %s31
    %s34 = sadd.s32 1, %s25
    %s35 = scalar_select %p32, %s34, %s25
    %p36 = scmp.ge.s32.totalorder %s35, 2
    %s37 = scalar_select %p36, 0, %s35
    %s38 = ssub.s32 %s25, %s37
    %s39 = ssub.s32 %s26, %s33
    %s40 = sor.u32 %s38, %s39
    %p41 = scmp.eq.s32.totalorder %s40, 0
    %s43 = sadd.s32 %s42, 1
    %s44 = scalar_select %p41, %s42, %s43
    %p47 = pneg %p41
    %p48 = scmp.eq.s32.totalorder %s18, 1
    %p49 = por %p47, %p48
    %p50 = scmp.ne.s32.totalorder %s42, %s45
    %p51 = scmp.eq.s32.totalorder %s18, 0
    %p52 = por %p50, %p51
    %p53 = scmp.ne.s32.totalorder %s42, %s45
    %p54 = scmp.eq.s32.totalorder %s23, 1
    %p55 = por %p53, %p54
    %p56 = scmp.ne.s32.totalorder %s45, %s46
    %p57 = scmp.eq.s32.totalorder %s23, 0
    %p58 = por %p56, %p57
    %p59 = scmp.ne.s32.totalorder %s45, %s46
    %p60 = scmp.eq.s32.totalorder %s24, 1
    %p61 = por %p59, %p60
    %p63 = scmp.ne.s32.totalorder %s46, %s62
    %p64 = scmp.eq.s32.totalorder %s24, 0
    %p65 = por %p63, %p64
    %s66 = ssub.s32 %s25, %s37
    %s67 = ssub.s32 %s26, %s33
    %s68 = sor.u32 %s66, %s67
    %p69 = scmp.eq.s32.totalorder %s68, 0
    %s71 = sadd.s32 %s70, 1
    %s72 = scalar_select %p69, %s70, %s71
    %p75 = pneg %p69
    %p76 = scmp.eq.s32.totalorder %s18, 1
    %p77 = por %p75, %p76
    %p78 = scmp.ne.s32.totalorder %s70, %s73
    %p79 = scmp.eq.s32.totalorder %s18, 0
    %p80 = por %p78, %p79
    %p81 = scmp.ne.s32.totalorder %s70, %s73
    %p82 = scmp.eq.s32.totalorder %s23, 1
    %p83 = por %p81, %p82
    %p84 = scmp.ne.s32.totalorder %s73, %s74
    %p85 = scmp.eq.s32.totalorder %s23, 0
    %p86 = por %p84, %p85
    %p87 = scmp.ne.s32.totalorder %s73, %s74
    %p88 = scmp.eq.s32.totalorder %s24, 1
    %p89 = por %p87, %p88
    %p91 = scmp.ne.s32.totalorder %s74, %s90
    %p92 = scmp.eq.s32.totalorder %s24, 0
    %p93 = por %p91, %p92
    %s95 = sadd.s32 %s94, 1
    %p98 = scmp.eq.s32.totalorder %s18, 1
    %p99 = scmp.ne.s32.totalorder %s94, %s96
    %p100 = scmp.eq.s32.totalorder %s18, 0
    %p101 = por %p99, %p100
    %p102 = scmp.ne.s32.totalorder %s94, %s96
    %p103 = scmp.eq.s32.totalorder %s23, 1
    %p104 = por %p102, %p103
    %p105 = scmp.ne.s32.totalorder %s96, %s97
    %p106 = scmp.eq.s32.totalorder %s23, 0
    %p107 = por %p105, %p106
    %p108 = scmp.ne.s32.totalorder %s96, %s97
    %p109 = scmp.eq.s32.totalorder %s24, 1
    %p110 = por %p108, %p109
    %p112 = scmp.ne.s32.totalorder %s97, %s111
    %p113 = scmp.eq.s32.totalorder %s24, 0
    %p114 = por %p112, %p113
    %s116 = sadd.s32 %s115, 1
    %p119 = scmp.eq.s32.totalorder %s18, 1
    %p120 = scmp.ne.s32.totalorder %s115, %s117
    %p121 = scmp.eq.s32.totalorder %s18, 0
    %p122 = por %p120, %p121
    %p123 = scmp.ne.s32.totalorder %s115, %s117
    %p124 = scmp.eq.s32.totalorder %s23, 1
    %p125 = por %p123, %p124
    %p126 = scmp.ne.s32.totalorder %s117, %s118
    %p127 = scmp.eq.s32.totalorder %s23, 0
    %p128 = por %p126, %p127
    %p129 = scmp.ne.s32.totalorder %s117, %s118
    %p130 = scmp.eq.s32.totalorder %s24, 1
    %p131 = por %p129, %p130
    %p133 = scmp.ne.s32.totalorder %s118, %s132
    %p134 = scmp.eq.s32.totalorder %s24, 0
    %p135 = por %p133, %p134
    %s137 = sadd.s32 %s136, 1
    %p140 = scmp.eq.s32.totalorder %s18, 1
    %p141 = scmp.ne.s32.totalorder %s136, %s138
    %p142 = scmp.eq.s32.totalorder %s18, 0
    %p143 = por %p141, %p142
    %p144 = scmp.ne.s32.totalorder %s136, %s138
    %p145 = scmp.eq.s32.totalorder %s23, 1
    %p146 = por %p144, %p145
    %p147 = scmp.ne.s32.totalorder %s138, %s139
    %p148 = scmp.eq.s32.totalorder %s23, 0
    %p149 = por %p147, %p148
    %p150 = scmp.ne.s32.totalorder %s138, %s139
    %p151 = scmp.eq.s32.totalorder %s24, 1
    %p152 = por %p150, %p151
    %p154 = scmp.ne.s32.totalorder %s139, %s153
    %p155 = scmp.eq.s32.totalorder %s24, 0
    %p156 = por %p154, %p155
    %s158 = sadd.s32 %s157, 1
    %p161 = scmp.eq.s32.totalorder %s18, 1
    %p162 = scmp.ne.s32.totalorder %s157, %s159
    %p163 = scmp.eq.s32.totalorder %s18, 0
    %p164 = por %p162, %p163
    %p165 = scmp.ne.s32.totalorder %s157, %s159
    %p166 = scmp.eq.s32.totalorder %s23, 1
    %p167 = por %p165, %p166
    %p168 = scmp.ne.s32.totalorder %s159, %s160
    %p169 = scmp.eq.s32.totalorder %s23, 0
    %p170 = por %p168, %p169
    %p171 = scmp.ne.s32.totalorder %s159, %s160
    %p172 = scmp.eq.s32.totalorder %s24, 1
    %p173 = por %p171, %p172
    %p175 = scmp.ne.s32.totalorder %s160, %s174
    %p176 = scmp.eq.s32.totalorder %s24, 0
    %p177 = por %p175, %p176
    %s179 = sadd.s32 %s178, 1
    %p182 = scmp.eq.s32.totalorder %s18, 1
    %p183 = scmp.ne.s32.totalorder %s178, %s180
    %p184 = scmp.eq.s32.totalorder %s18, 0
    %p185 = por %p183, %p184
    %p186 = scmp.ne.s32.totalorder %s178, %s180
    %p187 = scmp.eq.s32.totalorder %s23, 1
    %p188 = por %p186, %p187
    %p189 = scmp.ne.s32.totalorder %s180, %s181
    %p190 = scmp.eq.s32.totalorder %s23, 0
    %p191 = por %p189, %p190
    %p192 = scmp.ne.s32.totalorder %s180, %s181
    %p193 = scmp.eq.s32.totalorder %s24, 1
    %p194 = por %p192, %p193
    %p196 = scmp.ne.s32.totalorder %s181, %s195
    %p197 = scmp.eq.s32.totalorder %s24, 0
    %p198 = por %p196, %p197
    %s200 = sadd.s32 %s199, 1
    %p203 = scmp.eq.s32.totalorder %s18, 1
    %p204 = scmp.ne.s32.totalorder %s199, %s201
    %p205 = scmp.eq.s32.totalorder %s18, 0
    %p206 = por %p204, %p205
    %p207 = scmp.ne.s32.totalorder %s199, %s201
    %p208 = scmp.eq.s32.totalorder %s23, 1
    %p209 = por %p207, %p208
    %p210 = scmp.ne.s32.totalorder %s201, %s202
    %p211 = scmp.eq.s32.totalorder %s23, 0
    %p212 = por %p210, %p211
    %p213 = scmp.ne.s32.totalorder %s201, %s202
    %p214 = scmp.eq.s32.totalorder %s24, 1
    %p215 = por %p213, %p214
    %p217 = scmp.ne.s32.totalorder %s202, %s216
    %p218 = scmp.eq.s32.totalorder %s24, 0
    %p219 = por %p217, %p218
    %s221 = sadd.s32 %s220, 1
    %p224 = scmp.eq.s32.totalorder %s18, 1
    %p225 = scmp.ne.s32.totalorder %s220, %s222
    %p226 = scmp.eq.s32.totalorder %s18, 0
    %p227 = por %p225, %p226
    %p228 = scmp.ne.s32.totalorder %s220, %s222
    %p229 = scmp.eq.s32.totalorder %s23, 1
    %p230 = por %p228, %p229
    %p231 = scmp.ne.s32.totalorder %s222, %s223
    %p232 = scmp.eq.s32.totalorder %s23, 0
    %p233 = por %p231, %p232
    %p234 = scmp.ne.s32.totalorder %s222, %s223
    %p235 = scmp.eq.s32.totalorder %s24, 1
    %p236 = por %p234, %p235
    %p238 = scmp.ne.s32.totalorder %s223, %s237
    %p239 = scmp.eq.s32.totalorder %s24, 0
    %p240 = por %p238, %p239
    %s242 = sadd.s32 %s241, 1
    %p245 = scmp.eq.s32.totalorder %s18, 1
    %p246 = scmp.ne.s32.totalorder %s241, %s243
    %p247 = scmp.eq.s32.totalorder %s18, 0
    %p248 = por %p246, %p247
    %p249 = scmp.ne.s32.totalorder %s241, %s243
    %p250 = scmp.eq.s32.totalorder %s23, 1
    %p251 = por %p249, %p250
    %p252 = scmp.ne.s32.totalorder %s243, %s244
    %p253 = scmp.eq.s32.totalorder %s23, 0
    %p254 = por %p252, %p253
    %p255 = scmp.ne.s32.totalorder %s243, %s244
    %p256 = scmp.eq.s32.totalorder %s24, 1
    %p257 = por %p255, %p256
    %p259 = scmp.ne.s32.totalorder %s244, %s258
    %p260 = scmp.eq.s32.totalorder %s24, 0
    %p261 = por %p259, %p260
    %s263 = sadd.s32 %s262, 1
    %p266 = scmp.eq.s32.totalorder %s18, 1
    %p267 = scmp.ne.s32.totalorder %s262, %s264
    %p268 = scmp.eq.s32.totalorder %s18, 0
    %p269 = por %p267, %p268
    %p270 = scmp.ne.s32.totalorder %s262, %s264
    %p271 = scmp.eq.s32.totalorder %s23, 1
    %p272 = por %p270, %p271
    %p273 = scmp.ne.s32.totalorder %s264, %s265
    %p274 = scmp.eq.s32.totalorder %s23, 0
    %p275 = por %p273, %p274
    %p276 = scmp.ne.s32.totalorder %s264, %s265
    %p277 = scmp.eq.s32.totalorder %s24, 1
    %p278 = por %p276, %p277
    %p280 = scmp.ne.s32.totalorder %s265, %s279
    %p281 = scmp.eq.s32.totalorder %s24, 0
    %p282 = por %p280, %p281
    %s284 = sadd.s32 %s283, 1
    %p287 = scmp.eq.s32.totalorder %s18, 1
    %p288 = scmp.ne.s32.totalorder %s283, %s285
    %p289 = scmp.eq.s32.totalorder %s18, 0
    %p290 = por %p288, %p289
    %p291 = scmp.ne.s32.totalorder %s283, %s285
    %p292 = scmp.eq.s32.totalorder %s23, 1
    %p293 = por %p291, %p292
    %p294 = scmp.ne.s32.totalorder %s285, %s286
    %p295 = scmp.eq.s32.totalorder %s23, 0
    %p296 = por %p294, %p295
    %p297 = scmp.ne.s32.totalorder %s285, %s286
    %p298 = scmp.eq.s32.totalorder %s24, 1
    %p299 = por %p297, %p298
    %p301 = scmp.ne.s32.totalorder %s286, %s300
    %p302 = scmp.eq.s32.totalorder %s24, 0
    %p303 = por %p301, %p302
    %s304 = ssub.s32 %s25, %s37
    %s305 = ssub.s32 %s26, %s33
    %s306 = sor.u32 %s304, %s305
    %p307 = scmp.eq.s32.totalorder %s306, 0
    %s309 = sadd.s32 %s308, 1
    %s310 = scalar_select %p307, %s308, %s309
    %p313 = pneg %p307
    %p314 = scmp.eq.s32.totalorder %s18, 1
    %p315 = por %p313, %p314
    %p316 = scmp.ne.s32.totalorder %s308, %s311
    %p317 = scmp.eq.s32.totalorder %s18, 0
    %p318 = por %p316, %p317
    %p319 = scmp.ne.s32.totalorder %s308, %s311
    %p320 = scmp.eq.s32.totalorder %s23, 1
    %p321 = por %p319, %p320
    %p322 = scmp.ne.s32.totalorder %s311, %s312
    %p323 = scmp.eq.s32.totalorder %s23, 0
    %p324 = por %p322, %p323
    %p325 = scmp.ne.s32.totalorder %s311, %s312
    %p326 = scmp.eq.s32.totalorder %s24, 1
    %p327 = por %p325, %p326
    %p329 = scmp.ne.s32.totalorder %s312, %s328
    %p330 = scmp.eq.s32.totalorder %s24, 0
    %p331 = por %p329, %p330
    %p332 = scmp.le.s32.totalorder 1, %s18
    %p333 = scmp.lt.s32.totalorder %s18, 3
    %p334 = pnand %p332, %p333
    %p335 = pneg %p334
    // Predicated region
    $region9: #{dinov2_feature_extractor.10} parent=5 // pred_check
      _
    $region10: #{dinov2_feature_extractor.10} parent=5 // pred_check_branch
      %337 = sbr.rel (%p334) target = $region12
    $region11: #{dinov2_feature_extractor.10} parent=5 // pred_region
      %s338 = ssub.s32 %s18, 1
      // Predicated region
      $region13: #{dinov2_feature_extractor.10} parent=11 // pred_check
        %p339 = pneg %p107
      $region14: #{dinov2_feature_extractor.10} parent=11 // pred_check_branch
        %341 = sbr.rel (%p339) target = $region16
      $region15: #{dinov2_feature_extractor.10} parent=11 // pred_region
        _
      $region16: #{dinov2_feature_extractor.10} parent=11 // pred_fallthru
        _
      // Predicated region
      $region17: #{dinov2_feature_extractor.10} parent=11 // pred_check
        %p342 = pneg %p128
      $region18: #{dinov2_feature_extractor.10} parent=11 // pred_check_branch
        %344 = sbr.rel (%p342) target = $region20
      $region19: #{dinov2_feature_extractor.10} parent=11 // pred_region
        _
      $region20: #{dinov2_feature_extractor.10} parent=11 // pred_fallthru
        _
      // Predicated region
      $region21: #{dinov2_feature_extractor.10} parent=11 // pred_check
        %p345 = pneg %p149
      $region22: #{dinov2_feature_extractor.10} parent=11 // pred_check_branch
        %347 = sbr.rel (%p345) target = $region24
      $region23: #{dinov2_feature_extractor.10} parent=11 // pred_region
        _
      $region24: #{dinov2_feature_extractor.10} parent=11 // pred_fallthru
        _
      // Predicated region
      $region25: #{dinov2_feature_extractor.10} parent=11 // pred_check
        %p348 = pneg %p170
      $region26: #{dinov2_feature_extractor.10} parent=11 // pred_check_branch
        %350 = sbr.rel (%p348) target = $region28
      $region27: #{dinov2_feature_extractor.10} parent=11 // pred_region
        _
      $region28: #{dinov2_feature_extractor.10} parent=11 // pred_fallthru
        _
      // Predicated region
      $region29: #{dinov2_feature_extractor.10} parent=11 // pred_check
        %p351 = pneg %p191
      $region30: #{dinov2_feature_extractor.10} parent=11 // pred_check_branch
        %353 = sbr.rel (%p351) target = $region32
      $region31: #{dinov2_feature_extractor.10} parent=11 // pred_region
        _
      $region32: #{dinov2_feature_extractor.10} parent=11 // pred_fallthru
        _
      // Predicated region
      $region33: #{dinov2_feature_extractor.10} parent=11 // pred_check
        %p354 = pneg %p212
      $region34: #{dinov2_feature_extractor.10} parent=11 // pred_check_branch
        %356 = sbr.rel (%p354) target = $region36
      $region35: #{dinov2_feature_extractor.10} parent=11 // pred_region
        _
      $region36: #{dinov2_feature_extractor.10} parent=11 // pred_fallthru
        _
      // Predicated region
      $region37: #{dinov2_feature_extractor.10} parent=11 // pred_check
        %p357 = pneg %p233
      $region38: #{dinov2_feature_extractor.10} parent=11 // pred_check_branch
        %359 = sbr.rel (%p357) target = $region40
      $region39: #{dinov2_feature_extractor.10} parent=11 // pred_region
        _
      $region40: #{dinov2_feature_extractor.10} parent=11 // pred_fallthru
        _
      // Predicated region
      $region41: #{dinov2_feature_extractor.10} parent=11 // pred_check
        %p360 = pneg %p254
      $region42: #{dinov2_feature_extractor.10} parent=11 // pred_check_branch
        %362 = sbr.rel (%p360) target = $region44
      $region43: #{dinov2_feature_extractor.10} parent=11 // pred_region
        _
      $region44: #{dinov2_feature_extractor.10} parent=11 // pred_fallthru
        _
      // Predicated region
      $region45: #{dinov2_feature_extractor.10} parent=11 // pred_check
        %p363 = pneg %p275
      $region46: #{dinov2_feature_extractor.10} parent=11 // pred_check_branch
        %365 = sbr.rel (%p363) target = $region48
      $region47: #{dinov2_feature_extractor.10} parent=11 // pred_region
        _
      $region48: #{dinov2_feature_extractor.10} parent=11 // pred_fallthru
        _
      // Predicated region
      $region49: #{dinov2_feature_extractor.10} parent=11 // pred_check
        %p366 = pneg %p296
      $region50: #{dinov2_feature_extractor.10} parent=11 // pred_check_branch
        %368 = sbr.rel (%p366) target = $region52
      $region51: #{dinov2_feature_extractor.10} parent=11 // pred_region
        _
      $region52: #{dinov2_feature_extractor.10} parent=11 // pred_fallthru
        _
    $region12: #{dinov2_feature_extractor.10} parent=5 // pred_fallthru
      _
    %p369 = scmp.lt.s32.totalorder %s18, 2
    // Predicated region
    $region53: #{dinov2_feature_extractor.10} parent=5 // pred_check
      %p370 = pneg %p369
    $region54: #{dinov2_feature_extractor.10} parent=5 // pred_check_branch
      %372 = sbr.rel (%p370) target = $region56
    $region55: #{dinov2_feature_extractor.10} parent=5 // pred_region
      // Predicated region
      $region57: #{dinov2_feature_extractor.10} parent=55 // pred_check
        %p373 = pneg %p52
      $region58: #{dinov2_feature_extractor.10} parent=55 // pred_check_branch
        %375 = sbr.rel (%p373) target = $region60
      $region59: #{dinov2_feature_extractor.10} parent=55 // pred_region
        %s376 = smul.u32 3, %s26
        %p377 = scmp.lt.s32.totalorder %s25, 1
        %s378 = scalar_select %p377, %s25, 1
        %p379 = scmp.lt.s32.totalorder %s376, 2
        %s380 = scalar_select %p379, %s376, 2
        %s381 = smul.addr %s378, 3
        %s382 = sadd.s32 %s380, %s381
        %s383 = smul.addr %s382, 8
        %s384 = scalar_lea.vmem %s0, %s383
        %s385 = smul.u32 3, %s26
      $region60: #{dinov2_feature_extractor.10} parent=55 // pred_fallthru
        _
      // Predicated region
      $region61: #{dinov2_feature_extractor.10} parent=55 // pred_check
        %p386 = pneg %p80
      $region62: #{dinov2_feature_extractor.10} parent=55 // pred_check_branch
        %388 = sbr.rel (%p386) target = $region64
      $region63: #{dinov2_feature_extractor.10} parent=55 // pred_region
        %s389 = smul.u32 3, %s26
        %p390 = scmp.lt.s32.totalorder %s25, 1
        %s391 = scalar_select %p390, %s25, 1
        %p392 = scmp.lt.s32.totalorder %s389, 2
        %s393 = scalar_select %p392, %s389, 2
        %s394 = smul.addr %s391, 3
        %s395 = sadd.s32 %s393, %s394
        %s396 = smul.addr %s395, 4
        %s397 = scalar_lea.vmem %s1, %s396
        %s398 = smul.u32 3, %s26
      $region64: #{dinov2_feature_extractor.10} parent=55 // pred_fallthru
        _
    $region56: #{dinov2_feature_extractor.10} parent=5 // pred_fallthru
      _
    %p399 = scmp.le.s32.totalorder 1, %s18
    %p400 = scmp.lt.s32.totalorder %s18, 3
    %p401 = pnand %p399, %p400
    %p402 = pneg %p401
    // Predicated region
    $region65: #{dinov2_feature_extractor.10} parent=5 // pred_check
      _
    $region66: #{dinov2_feature_extractor.10} parent=5 // pred_check_branch
      %404 = sbr.rel (%p401) target = $region68
    $region67: #{dinov2_feature_extractor.10} parent=5 // pred_region
      %s405 = ssub.s32 %s18, 1
      %s406 = smul.u32 3, %s28
      %p407 = scmp.lt.s32.totalorder %s27, 1
      %s408 = scalar_select %p407, %s27, 1
      %p409 = scmp.lt.s32.totalorder %s406, 2
      %s410 = scalar_select %p409, %s406, 2
      %s411 = smul.addr %s408, 3
      %s412 = sadd.s32 %s410, %s411
      %s413 = smul.addr %s412, 8
      %s414 = scalar_lea.vmem %s0, %s413
      %p415 = pneg %p58
      %p416 = pneg %p55
      %s417 = smul.u32 3, %s28
      %p418 = scmp.lt.s32.totalorder %s27, 1
      %s419 = scalar_select %p418, %s27, 1
      %p420 = scmp.lt.s32.totalorder %s417, 2
      %s421 = scalar_select %p420, %s417, 2
      %s422 = smul.addr %s419, 3
      %s423 = sadd.s32 %s421, %s422
      %s424 = smul.addr %s423, 4
      %s425 = scalar_lea.vmem %s1, %s424
      %p426 = pneg %p86
      %p427 = pneg %p83
      %p428 = pneg %p107
      %p429 = pneg %p104
      %p430 = pneg %p128
      %p431 = pneg %p125
      %p432 = pneg %p149
      %p433 = pneg %p146
      %p434 = pneg %p170
      %p435 = pneg %p167
      %p436 = pneg %p191
      %p437 = pneg %p188
      %p438 = pneg %p212
      %p439 = pneg %p209
      %p440 = pneg %p233
      %p441 = pneg %p230
      %p442 = pneg %p254
      %p443 = pneg %p251
      %p444 = pneg %p275
      %p445 = pneg %p272
      %p446 = pneg %p296
      %p447 = pneg %p293
      %p448 = pneg %p324
      %p449 = pneg %p321
      %s450 = smul.u32 3, %s28
      %p451 = scmp.lt.s32.totalorder %s27, 1
      %s452 = scalar_select %p451, %s27, 1
      %p453 = scmp.lt.s32.totalorder %s450, 2
      %s454 = scalar_select %p453, %s450, 2
      %s455 = smul.addr %s452, 3
      %s456 = sadd.s32 %s454, %s455
      %s457 = smul.addr %s456, 8
      %s458 = scalar_lea.vmem %s12, %s457
      %s459 = smul.u32 3, %s28
      %p460 = scmp.lt.s32.totalorder %s27, 1
      %s461 = scalar_select %p460, %s27, 1
      %p462 = scmp.lt.s32.totalorder %s459, 2
      %s463 = scalar_select %p462, %s459, 2
      %s464 = smul.addr %s461, 3
      %s465 = sadd.s32 %s463, %s464
      %s466 = smul.addr %s465, 8
      %s467 = scalar_lea.vmem %s0, %s466
      %s468 = smul.u32 3, %s28
      %s469 = smul.u32 3, %s28
      %p470 = scmp.lt.s32.totalorder %s27, 1
      %s471 = scalar_select %p470, %s27, 1
      %p472 = scmp.lt.s32.totalorder %s469, 2
      %s473 = scalar_select %p472, %s469, 2
      %s474 = smul.addr %s471, 3
      %s475 = sadd.s32 %s473, %s474
      %s476 = smul.addr %s475, 4
      %s477 = scalar_lea.vmem %s1, %s476
      %s478 = smul.u32 3, %s28
      %s479 = smul.u32 3, %s28
      %p480 = scmp.lt.s32.totalorder %s27, 1
      %s481 = scalar_select %p480, %s27, 1
      %p482 = scmp.lt.s32.totalorder %s479, 2
      %s483 = scalar_select %p482, %s479, 2
      %s484 = smul.addr %s481, 3
      %s485 = sadd.s32 %s483, %s484
      %s486 = smul.addr %s485, 8
      %s487 = scalar_lea.vmem %s12, %s486
      %s488 = smul.u32 3, %s28
      %v490 = vld [vmem:[%s467] sm:$0xff]
      %v491 = vld [vmem:[%s467 + $0x8] sm:$0xff]
      %v492 = vld [vmem:[%s467 + $0x10] sm:$0x1]
      %v493 = vld [vmem:[%s477] sm:$0xf]
      %v494 = vld [vmem:[%s477 + $0x4] sm:$0xf]
      %v495 = vld [vmem:[%s477 + $0x8] sm:$0x1]
      %v496 = vld [vmem:[%s2] sm:$0xf]
      %v497 = vld [vmem:[%s2 + $0x4] sm:$0xf]
      %v498 = vld [vmem:[%s2 + $0x8] sm:$0xf]
      %v499 = vld [vmem:[%s2 + $0xc] sm:$0xf]
      %v500 = vld [vmem:[%s2 + $0x10] sm:$0xf]
      %v501 = vld [vmem:[%s2 + $0x14] sm:$0xf]
      %v502 = vld [vmem:[%s2 + $0x18] sm:$0xf]
      %v503 = vld [vmem:[%s2 + $0x1c] sm:$0xf]
      %v504 = vld [vmem:[%s2 + $0x20] sm:$0xf]
      %v505 = vld [vmem:[%s2 + $0x24] sm:$0xf]
      %v506 = vld [vmem:[%s2 + $0x28] sm:$0xf]
      %v507 = vld [vmem:[%s2 + $0x2c] sm:$0xf]
      %v508 = vld [vmem:[%s2 + $0x30] sm:$0xf]
      %v509 = vld [vmem:[%s2 + $0x34] sm:$0xf]
      %v510 = vld [vmem:[%s2 + $0x38] sm:$0xf]
      %v511 = vld [vmem:[%s2 + $0x3c] sm:$0xf]
      %v512 = vld [vmem:[%s3] sm:$0x1]
      %v514 = vlaneseq
      %v515 = vshrl.u32 %v514, 7
      %v516 = vsub.s32 0, %v515
      %v517 = vrot.slane %v512, %v516
      %v522 = vunpack.c.l.b16 %v493
      %v523 = vunpack.c.l.b16 %v494
      %v524 = vunpack.c.l.b16 %v495
      %v525 = vpack.c.b16 %v523, %v522
      %v526 = vpack.c.b16 %v524, %v524
      %v545 = vunpack.c.l.b16 %v496
      %v546 = vunpack.c.l.b16 %v497
      %v547 = vunpack.c.l.b16 %v498
      %v548 = vunpack.c.l.b16 %v499
      %v549 = vunpack.c.l.b16 %v500
      %v550 = vunpack.c.l.b16 %v501
      %v551 = vunpack.c.l.b16 %v502
      %v552 = vunpack.c.l.b16 %v503
      %v553 = vunpack.c.l.b16 %v504
      %v554 = vunpack.c.l.b16 %v505
      %v555 = vunpack.c.l.b16 %v506
      %v556 = vunpack.c.l.b16 %v507
      %v557 = vunpack.c.l.b16 %v508
      %v558 = vunpack.c.l.b16 %v509
      %v559 = vunpack.c.l.b16 %v510
      %v560 = vunpack.c.l.b16 %v511
      %v561 = vpack.c.b16 %v546, %v545
      %v562 = vpack.c.b16 %v548, %v547
      %v563 = vpack.c.b16 %v550, %v549
      %v564 = vpack.c.b16 %v552, %v551
      %v565 = vpack.c.b16 %v554, %v553
      %v566 = vpack.c.b16 %v556, %v555
      %v567 = vpack.c.b16 %v558, %v557
      %v568 = vpack.c.b16 %v560, %v559
      %577 = vmatprep.subr.bf16.mxu0 0
      %578 = vmatpush1.bf16.msra.mxu0 %v561
      %579 = vmatprep.subr.bf16.mxu0 0
      %580 = vmatpush1.bf16.msra.mxu0 %v562
      %581 = vmatprep.subr.bf16.mxu0 0
      %582 = vmatpush1.bf16.msra.mxu0 %v563
      %583 = vmatprep.subr.bf16.mxu0 0
      %584 = vmatpush1.bf16.msra.mxu0 %v564
      %585 = vmatprep.subr.bf16.mxu0 0
      %586 = vmatpush1.bf16.msra.mxu0 %v565
      %587 = vmatprep.subr.bf16.mxu0 0
      %588 = vmatpush1.bf16.msra.mxu0 %v566
      %589 = vmatprep.subr.bf16.mxu0 0
      %590 = vmatpush1.bf16.msra.mxu0 %v567
      %591 = vmatprep.subr.bf16.mxu0 0
      %592 = vmatpush1.bf16.msra.mxu0 %v568
      %593 = vmatprep.subr.bf16.mxu0 0
      %594 = vmatpush1.bf16.msra.mxu0 0
      %595 = vmatprep.subr.bf16.mxu0 0
      %596 = vmatpush1.bf16.msra.mxu0 0
      %597 = vmatprep.subr.bf16.mxu0 0
      %598 = vmatpush1.bf16.msra.mxu0 0
      %599 = vmatprep.subr.bf16.mxu0 0
      %600 = vmatpush1.bf16.msra.mxu0 0
      %601 = vmatprep.subr.bf16.mxu0 0
      %602 = vmatpush1.bf16.msra.mxu0 0
      %603 = vmatprep.subr.bf16.mxu0 0
      %604 = vmatpush1.bf16.msra.mxu0 0
      %605 = vmatprep.subr.bf16.mxu0 0
      %606 = vmatpush1.bf16.msra.mxu0 0
      %607 = vmatprep.subr.bf16.mxu0 0
      %608 = vmatpush1.bf16.msra.mxu0 0
      %609 = vmatprep.mubr.bf16.mxu0 0
      %610 = vmatmul.mubr.bf16.gmra.mrb[0].mxu0 %v525
      %v611 = vpop.f32.mrb[0].mxu0
      %v612 = vadd.f32 %v517, %v611
      %v613 = vpop.f32.mrb[0].mxu0
      %v614 = vpop.f32.mrb[0].mxu0
      %v615 = vadd.f32 %v517, %v614
      %v616 = vpop.f32.mrb[0].mxu0
      %617 = vmatprep.mubr.bf16.mxu0 0
      %618 = vmatmul.mubr.bf16.gmra.mrb[0].mxu0 %v526
      %v619 = vpop.f32.mrb[0].mxu0
      %v620 = vadd.f32 %v517, %v619
      %v621 = vpop.f32.mrb[0].mxu0
      %v622 = vpop.f32.mrb[0].mxu0
      %v623 = vpop.f32.mrb[0].mxu0
      %624 = vdwg.mxu0
      %v625 = vadd.f32 %v490, %v612
      %v626 = vadd.f32 %v491, %v615
      %v627 = vadd.f32 %v492, %v620
      %v628 = vld [vmem:[%s4] sm:$0x1]
      %v629 = vld [vmem:[%s5] sm:$0x1]
      %630 = vadd.xlane.f32.xlu0 %v625
      %v631 = vpop.xlane.xlu0 %630
      %632 = vadd.xlane.f32.xlu0 %v626
      %v633 = vpop.xlane.xlu0 %632
      %vm634 = vcmask 1040384
      %v635 = vsel %vm634, %v627, 0.0
      %636 = vadd.xlane.f32.xlu0 %v635
      %v637 = vpop.xlane.xlu0 %636
      %v638 = vrcp.pop 128.0
      %v639 = vmul.f32 %v631, %v638
      %v640 = vmul.f32 %v633, %v638
      %v641 = vmul.f32 %v637, %v638
      %v642 = vsub.f32 %v625, %v639
      %v643 = vsub.f32 %v626, %v640
      %v644 = vsub.f32 %v627, %v641
      %v645 = vmul.f32 %v642, %v642
      %v646 = vmul.f32 %v643, %v643
      %v647 = vmul.f32 %v644, %v644
      %648 = vadd.xlane.f32.xlu0 %v645
      %v649 = vpop.xlane.xlu0 %648
      %650 = vadd.xlane.f32.xlu0 %v646
      %v651 = vpop.xlane.xlu0 %650
      %v652 = vsel %vm634, %v647, 0.0
      %653 = vadd.xlane.f32.xlu0 %v652
      %v654 = vpop.xlane.xlu0 %653
      %v655 = vmul.f32 %v649, %v638
      %v656 = vmul.f32 %v651, %v638
      %v657 = vmul.f32 %v654, %v638
      %v658 = vadd.f32 %v655, 1e-06
      %v659 = vadd.f32 %v656, 1e-06
      %v660 = vadd.f32 %v657, 1e-06
      %v661 = vrsqrt.pop %v658
      %v662 = vrsqrt.pop %v659
      %v663 = vrsqrt.pop %v660
      %v664 = vmul.f32 %v642, %v661
      %v665 = vmul.f32 %v643, %v662
      %v666 = vmul.f32 %v644, %v663
      %v668 = vlaneseq
      %v669 = vshrl.u32 %v668, 7
      %v670 = vsub.s32 0, %v669
      %v671 = vrot.slane %v628, %v670
      %v673 = vmul.f32 %v664, %v671
      %v674 = vmul.f32 %v665, %v671
      %v675 = vmul.f32 %v666, %v671
      %v677 = vlaneseq
      %v678 = vshrl.u32 %v677, 7
      %v679 = vsub.s32 0, %v678
      %v680 = vrot.slane %v629, %v679
      %v682 = vadd.f32 %v673, %v680
      %v683 = vadd.f32 %v674, %v680
      %v684 = vadd.f32 %v675, %v680
      %v685 = vpack.c.bf16 %v683, %v682
      %v686 = vpack.c.bf16 %v684, %v684
      %v687 = vld [vmem:[%s6] sm:$0xff]
      %v688 = vld [vmem:[%s6 + $0x8] sm:$0xff]
      %v689 = vld [vmem:[%s6 + $0x10] sm:$0xff]
      %v690 = vld [vmem:[%s6 + $0x18] sm:$0xff]
      %v691 = vld [vmem:[%s6 + $0x20] sm:$0xff]
      %v692 = vld [vmem:[%s6 + $0x28] sm:$0xff]
      %v693 = vld [vmem:[%s6 + $0x30] sm:$0xff]
      %v694 = vld [vmem:[%s6 + $0x38] sm:$0xff]
      %v695 = vld [vmem:[%s6 + $0x40] sm:$0xff]
      %v696 = vld [vmem:[%s6 + $0x48] sm:$0xff]
      %v697 = vld [vmem:[%s6 + $0x50] sm:$0xff]
      %v698 = vld [vmem:[%s6 + $0x58] sm:$0xff]
      %v699 = vld [vmem:[%s6 + $0x60] sm:$0xff]
      %v700 = vld [vmem:[%s6 + $0x68] sm:$0xff]
      %v701 = vld [vmem:[%s6 + $0x70] sm:$0xff]
      %v702 = vld [vmem:[%s6 + $0x78] sm:$0xff]
      %v703 = vld [vmem:[%s6 + $0x80] sm:$0xff]
      %v704 = vld [vmem:[%s6 + $0x88] sm:$0xff]
      %v705 = vld [vmem:[%s6 + $0x90] sm:$0xff]
      %v706 = vld [vmem:[%s6 + $0x98] sm:$0xff]
      %v707 = vld [vmem:[%s6 + $0xa0] sm:$0xff]
      %v708 = vld [vmem:[%s6 + $0xa8] sm:$0xff]
      %v709 = vld [vmem:[%s6 + $0xb0] sm:$0xff]
      %v710 = vld [vmem:[%s6 + $0xb8] sm:$0xff]
      %v711 = vld [vmem:[%s6 + $0xc0] sm:$0xff]
      %v712 = vld [vmem:[%s6 + $0xc8] sm:$0xff]
      %v713 = vld [vmem:[%s6 + $0xd0] sm:$0xff]
      %v714 = vld [vmem:[%s6 + $0xd8] sm:$0xff]
      %v715 = vld [vmem:[%s6 + $0xe0] sm:$0xff]
      %v716 = vld [vmem:[%s6 + $0xe8] sm:$0xff]
      %v717 = vld [vmem:[%s6 + $0xf0] sm:$0xff]
      %v718 = vld [vmem:[%s6 + $0xf8] sm:$0xff]
      %v719 = vld [vmem:[%s7] sm:$0xf]
      %v721 = vlaneseq
      %v722 = vshrl.u32 %v721, 7
      %v723 = vsub.s32 0, %v722
      %v724 = vrot.slane %v719, %v723
      %v725 = vlaneseq
      %v726 = vshrl.u32 %v725, 7
      %v727 = vsub.s32 1, %v726
      %v728 = vrot.slane %v719, %v727
      %v729 = vlaneseq
      %v730 = vshrl.u32 %v729, 7
      %v731 = vsub.s32 2, %v730
      %v732 = vrot.slane %v719, %v731
      %v733 = vlaneseq
      %v734 = vshrl.u32 %v733, 7
      %v735 = vsub.s32 3, %v734
      %v736 = vrot.slane %v719, %v735
      %v773 = vunpack.c.l.b16 %v687
      %v774 = vunpack.c.h.b16 %v687
      %v775 = vunpack.c.l.b16 %v688
      %v776 = vunpack.c.h.b16 %v688
      %v777 = vunpack.c.l.b16 %v689
      %v778 = vunpack.c.h.b16 %v689
      %v779 = vunpack.c.l.b16 %v690
      %v780 = vunpack.c.h.b16 %v690
      %v781 = vunpack.c.l.b16 %v691
      %v782 = vunpack.c.h.b16 %v691
      %v783 = vunpack.c.l.b16 %v692
      %v784 = vunpack.c.h.b16 %v692
      %v785 = vunpack.c.l.b16 %v693
      %v786 = vunpack.c.h.b16 %v693
      %v787 = vunpack.c.l.b16 %v694
      %v788 = vunpack.c.h.b16 %v694
      %v789 = vunpack.c.l.b16 %v695
      %v790 = vunpack.c.h.b16 %v695
      %v791 = vunpack.c.l.b16 %v696
      %v792 = vunpack.c.h.b16 %v696
      %v793 = vunpack.c.l.b16 %v697
      %v794 = vunpack.c.h.b16 %v697
      %v795 = vunpack.c.l.b16 %v698
      %v796 = vunpack.c.h.b16 %v698
      %v797 = vunpack.c.l.b16 %v699
      %v798 = vunpack.c.h.b16 %v699
      %v799 = vunpack.c.l.b16 %v700
      %v800 = vunpack.c.h.b16 %v700
      %v801 = vunpack.c.l.b16 %v701
      %v802 = vunpack.c.h.b16 %v701
      %v803 = vunpack.c.l.b16 %v702
      %v804 = vunpack.c.h.b16 %v702
      %v805 = vunpack.c.l.b16 %v703
      %v806 = vunpack.c.h.b16 %v703
      %v807 = vunpack.c.l.b16 %v704
      %v808 = vunpack.c.h.b16 %v704
      %v809 = vunpack.c.l.b16 %v705
      %v810 = vunpack.c.h.b16 %v705
      %v811 = vunpack.c.l.b16 %v706
      %v812 = vunpack.c.h.b16 %v706
      %v813 = vunpack.c.l.b16 %v707
      %v814 = vunpack.c.h.b16 %v707
      %v815 = vunpack.c.l.b16 %v708
      %v816 = vunpack.c.h.b16 %v708
      %v817 = vunpack.c.l.b16 %v709
      %v818 = vunpack.c.h.b16 %v709
      %v819 = vunpack.c.l.b16 %v710
      %v820 = vunpack.c.h.b16 %v710
      %v821 = vunpack.c.l.b16 %v711
      %v822 = vunpack.c.h.b16 %v711
      %v823 = vunpack.c.l.b16 %v712
      %v824 = vunpack.c.h.b16 %v712
      %v825 = vunpack.c.l.b16 %v713
      %v826 = vunpack.c.h.b16 %v713
      %v827 = vunpack.c.l.b16 %v714
      %v828 = vunpack.c.h.b16 %v714
      %v829 = vunpack.c.l.b16 %v715
      %v830 = vunpack.c.h.b16 %v715
      %v831 = vunpack.c.l.b16 %v716
      %v832 = vunpack.c.h.b16 %v716
      %v833 = vunpack.c.l.b16 %v717
      %v834 = vunpack.c.h.b16 %v717
      %v835 = vunpack.c.l.b16 %v718
      %v836 = vunpack.c.h.b16 %v718
      %v837 = vpack.c.b16 %v777, %v773
      %v838 = vpack.c.b16 %v778, %v774
      %v839 = vpack.c.b16 %v779, %v775
      %v840 = vpack.c.b16 %v780, %v776
      %v841 = vpack.c.b16 %v785, %v781
      %v842 = vpack.c.b16 %v786, %v782
      %v843 = vpack.c.b16 %v787, %v783
      %v844 = vpack.c.b16 %v788, %v784
      %v845 = vpack.c.b16 %v793, %v789
      %v846 = vpack.c.b16 %v794, %v790
      %v847 = vpack.c.b16 %v795, %v791
      %v848 = vpack.c.b16 %v796, %v792
      %v849 = vpack.c.b16 %v801, %v797
      %v850 = vpack.c.b16 %v802, %v798
      %v851 = vpack.c.b16 %v803, %v799
      %v852 = vpack.c.b16 %v804, %v800
      %v853 = vpack.c.b16 %v809, %v805
      %v854 = vpack.c.b16 %v810, %v806
      %v855 = vpack.c.b16 %v811, %v807
      %v856 = vpack.c.b16 %v812, %v808
      %v857 = vpack.c.b16 %v817, %v813
      %v858 = vpack.c.b16 %v818, %v814
      %v859 = vpack.c.b16 %v819, %v815
      %v860 = vpack.c.b16 %v820, %v816
      %v861 = vpack.c.b16 %v825, %v821
      %v862 = vpack.c.b16 %v826, %v822
      %v863 = vpack.c.b16 %v827, %v823
      %v864 = vpack.c.b16 %v828, %v824
      %v865 = vpack.c.b16 %v833, %v829
      %v866 = vpack.c.b16 %v834, %v830
      %v867 = vpack.c.b16 %v835, %v831
      %v868 = vpack.c.b16 %v836, %v832
      %901 = vmatprep.subr.bf16.mxu0 %v838
      %902 = vmatpush1.bf16.msra.mxu0 %v837
      %903 = vmatprep.subr.bf16.mxu0 %v842
      %904 = vmatpush1.bf16.msra.mxu0 %v841
      %905 = vmatprep.subr.bf16.mxu0 %v846
      %906 = vmatpush1.bf16.msra.mxu0 %v845
      %907 = vmatprep.subr.bf16.mxu0 %v850
      %908 = vmatpush1.bf16.msra.mxu0 %v849
      %909 = vmatprep.subr.bf16.mxu0 %v854
      %910 = vmatpush1.bf16.msra.mxu0 %v853
      %911 = vmatprep.subr.bf16.mxu0 %v858
      %912 = vmatpush1.bf16.msra.mxu0 %v857
      %913 = vmatprep.subr.bf16.mxu0 %v862
      %914 = vmatpush1.bf16.msra.mxu0 %v861
      %915 = vmatprep.subr.bf16.mxu0 %v866
      %916 = vmatpush1.bf16.msra.mxu0 %v865
      %917 = vmatprep.subr.bf16.mxu0 0
      %918 = vmatpush1.bf16.msra.mxu0 0
      %919 = vmatprep.subr.bf16.mxu0 0
      %920 = vmatpush1.bf16.msra.mxu0 0
      %921 = vmatprep.subr.bf16.mxu0 0
      %922 = vmatpush1.bf16.msra.mxu0 0
      %923 = vmatprep.subr.bf16.mxu0 0
      %924 = vmatpush1.bf16.msra.mxu0 0
      %925 = vmatprep.subr.bf16.mxu0 0
      %926 = vmatpush1.bf16.msra.mxu0 0
      %927 = vmatprep.subr.bf16.mxu0 0
      %928 = vmatpush1.bf16.msra.mxu0 0
      %929 = vmatprep.subr.bf16.mxu0 0
      %930 = vmatpush1.bf16.msra.mxu0 0
      %931 = vmatprep.subr.bf16.mxu0 0
      %932 = vmatpush1.bf16.msra.mxu0 0
      %933 = vmatprep.mubr.bf16.mxu0 0
      %934 = vmatmul.mubr.bf16.gmra.mrb[0].mxu0 %v685
      %v935 = vpop.f32.mrb[0].mxu0
      %v936 = vadd.f32 %v724, %v935
      %v937 = vpop.f32.mrb[0].mxu0
      %v938 = vadd.f32 %v728, %v937
      %v939 = vpop.f32.mrb[0].mxu0
      %v940 = vadd.f32 %v724, %v939
      %v941 = vpop.f32.mrb[0].mxu0
      %v942 = vadd.f32 %v728, %v941
      %943 = vmatprep.mubr.bf16.mxu0 0
      %944 = vmatmul.mubr.bf16.gmra.mrb[0].mxu0 %v686
      %v945 = vpop.f32.mrb[0].mxu0
      %v946 = vadd.f32 %v724, %v945
      %v947 = vpop.f32.mrb[0].mxu0
      %v948 = vadd.f32 %v728, %v947
      %v949 = vpop.f32.mrb[0].mxu0
      %v950 = vpop.f32.mrb[0].mxu0
      %951 = vdwg.mxu0
      %952 = vmatprep.subr.bf16.mxu0 %v840
      %953 = vmatpush1.bf16.msra.mxu0 %v839
      %954 = vmatprep.subr.bf16.mxu0 %v844
      %955 = vmatpush1.bf16.msra.mxu0 %v843
      %956 = vmatprep.subr.bf16.mxu0 %v848
      %957 = vmatpush1.bf16.msra.mxu0 %v847
      %958 = vmatprep.subr.bf16.mxu0 %v852
      %959 = vmatpush1.bf16.msra.mxu0 %v851
      %960 = vmatprep.subr.bf16.mxu0 %v856
      %961 = vmatpush1.bf16.msra.mxu0 %v855
      %962 = vmatprep.subr.bf16.mxu0 %v860
      %963 = vmatpush1.bf16.msra.mxu0 %v859
      %964 = vmatprep.subr.bf16.mxu0 %v864
      %965 = vmatpush1.bf16.msra.mxu0 %v863
      %966 = vmatprep.subr.bf16.mxu0 %v868
      %967 = vmatpush1.bf16.msra.mxu0 %v867
      %968 = vmatprep.subr.bf16.mxu0 0
      %969 = vmatpush1.bf16.msra.mxu0 0
      %970 = vmatprep.subr.bf16.mxu0 0
      %971 = vmatpush1.bf16.msra.mxu0 0
      %972 = vmatprep.subr.bf16.mxu0 0
      %973 = vmatpush1.bf16.msra.mxu0 0
      %974 = vmatprep.subr.bf16.mxu0 0
      %975 = vmatpush1.bf16.msra.mxu0 0
      %976 = vmatprep.subr.bf16.mxu0 0
      %977 = vmatpush1.bf16.msra.mxu0 0
      %978 = vmatprep.subr.bf16.mxu0 0
      %979 = vmatpush1.bf16.msra.mxu0 0
      %980 = vmatprep.subr.bf16.mxu0 0
      %981 = vmatpush1.bf16.msra.mxu0 0
      %982 = vmatprep.subr.bf16.mxu0 0
      %983 = vmatpush1.bf16.msra.mxu0 0
      %984 = vmatprep.mubr.bf16.mxu0 0
      %985 = vmatmul.mubr.bf16.gmra.mrb[0].mxu0 %v685
      %v986 = vpop.f32.mrb[0].mxu0
      %v987 = vadd.f32 %v732, %v986
      %v988 = vpop.f32.mrb[0].mxu0
      %v989 = vadd.f32 %v736, %v988
      %v990 = vpop.f32.mrb[0].mxu0
      %v991 = vadd.f32 %v732, %v990
      %v992 = vpop.f32.mrb[0].mxu0
      %v993 = vadd.f32 %v736, %v992
      %994 = vmatprep.mubr.bf16.mxu0 0
      %995 = vmatmul.mubr.bf16.gmra.mrb[0].mxu0 %v686
      %v996 = vpop.f32.mrb[0].mxu0
      %v997 = vadd.f32 %v732, %v996
      %v998 = vpop.f32.mrb[0].mxu0
      %v999 = vadd.f32 %v736, %v998
      %v1000 = vpop.f32.mrb[0].mxu0
      %v1001 = vpop.f32.mrb[0].mxu0
      %1002 = vdwg.mxu0
      %v1003 = vmul.f32 %v936, 0.5
      %v1004 = vmul.f32 %v938, 0.5
      %v1005 = vmul.f32 %v987, 0.5
      %v1006 = vmul.f32 %v989, 0.5
      %v1007 = vmul.f32 %v940, 0.5
      %v1008 = vmul.f32 %v942, 0.5
      %v1009 = vmul.f32 %v991, 0.5
      %v1010 = vmul.f32 %v993, 0.5
      %v1011 = vmul.f32 %v946, 0.5
      %v1012 = vmul.f32 %v948, 0.5
      %v1013 = vmul.f32 %v997, 0.5
      %v1014 = vmul.f32 %v999, 0.5
      %v1015 = vmul.f32 %v936, 0.044715
      %v1016 = vmul.f32 %v938, 0.044715
      %v1017 = vmul.f32 %v987, 0.044715
      %v1018 = vmul.f32 %v989, 0.044715
      %v1019 = vmul.f32 %v940, 0.044715
      %v1020 = vmul.f32 %v942, 0.044715
      %v1021 = vmul.f32 %v991, 0.044715
      %v1022 = vmul.f32 %v993, 0.044715
      %v1023 = vmul.f32 %v946, 0.044715
      %v1024 = vmul.f32 %v948, 0.044715
      %v1025 = vmul.f32 %v997, 0.044715
      %v1026 = vmul.f32 %v999, 0.044715
      %v1027 = vmul.f32 %v1015, %v936
      %v1028 = vmul.f32 %v1016, %v938
      %v1029 = vmul.f32 %v1017, %v987
      %v1030 = vmul.f32 %v1018, %v989
      %v1031 = vmul.f32 %v1019, %v940
      %v1032 = vmul.f32 %v1020, %v942
      %v1033 = vmul.f32 %v1021, %v991
      %v1034 = vmul.f32 %v1022, %v993
      %v1035 = vmul.f32 %v1023, %v946
      %v1036 = vmul.f32 %v1024, %v948
      %v1037 = vmul.f32 %v1025, %v997
      %v1038 = vmul.f32 %v1026, %v999
      %v1039 = vmul.f32 %v1027, %v936
      %v1040 = vmul.f32 %v1028, %v938
      %v1041 = vmul.f32 %v1029, %v987
      %v1042 = vmul.f32 %v1030, %v989
      %v1043 = vmul.f32 %v1031, %v940
      %v1044 = vmul.f32 %v1032, %v942
      %v1045 = vmul.f32 %v1033, %v991
      %v1046 = vmul.f32 %v1034, %v993
      %v1047 = vmul.f32 %v1035, %v946
      %v1048 = vmul.f32 %v1036, %v948
      %v1049 = vmul.f32 %v1037, %v997
      %v1050 = vmul.f32 %v1038, %v999
      %v1051 = vadd.f32 %v936, %v1039
      %v1052 = vadd.f32 %v938, %v1040
      %v1053 = vadd.f32 %v987, %v1041
      %v1054 = vadd.f32 %v989, %v1042
      %v1055 = vadd.f32 %v940, %v1043
      %v1056 = vadd.f32 %v942, %v1044
      %v1057 = vadd.f32 %v991, %v1045
      %v1058 = vadd.f32 %v993, %v1046
      %v1059 = vadd.f32 %v946, %v1047
      %v1060 = vadd.f32 %v948, %v1048
      %v1061 = vadd.f32 %v997, %v1049
      %v1062 = vadd.f32 %v999, %v1050
      %v1063 = vmul.f32 %v1051, 0.7978846
      %v1064 = vmul.f32 %v1052, 0.7978846
      %v1065 = vmul.f32 %v1053, 0.7978846
      %v1066 = vmul.f32 %v1054, 0.7978846
      %v1067 = vmul.f32 %v1055, 0.7978846
      %v1068 = vmul.f32 %v1056, 0.7978846
      %v1069 = vmul.f32 %v1057, 0.7978846
      %v1070 = vmul.f32 %v1058, 0.7978846
      %v1071 = vmul.f32 %v1059, 0.7978846
      %v1072 = vmul.f32 %v1060, 0.7978846
      %v1073 = vmul.f32 %v1061, 0.7978846
      %v1074 = vmul.f32 %v1062, 0.7978846
      %v1075 = vtanh.pop %v1063
      %v1076 = vtanh.pop %v1064
      %v1077 = vtanh.pop %v1065
      %v1078 = vtanh.pop %v1066
      %v1079 = vtanh.pop %v1067
      %v1080 = vtanh.pop %v1068
      %v1081 = vtanh.pop %v1069
      %v1082 = vtanh.pop %v1070
      %v1083 = vtanh.pop %v1071
      %v1084 = vtanh.pop %v1072
      %v1085 = vtanh.pop %v1073
      %v1086 = vtanh.pop %v1074
      %v1087 = vadd.f32 %v1075, 1.0
      %v1088 = vadd.f32 %v1076, 1.0
      %v1089 = vadd.f32 %v1077, 1.0
      %v1090 = vadd.f32 %v1078, 1.0
      %v1091 = vadd.f32 %v1079, 1.0
      %v1092 = vadd.f32 %v1080, 1.0
      %v1093 = vadd.f32 %v1081, 1.0
      %v1094 = vadd.f32 %v1082, 1.0
      %v1095 = vadd.f32 %v1083, 1.0
      %v1096 = vadd.f32 %v1084, 1.0
      %v1097 = vadd.f32 %v1085, 1.0
      %v1098 = vadd.f32 %v1086, 1.0
      %v1099 = vmul.f32 %v1003, %v1087
      %v1100 = vmul.f32 %v1004, %v1088
      %v1101 = vmul.f32 %v1005, %v1089
      %v1102 = vmul.f32 %v1006, %v1090
      %v1103 = vmul.f32 %v1007, %v1091
      %v1104 = vmul.f32 %v1008, %v1092
      %v1105 = vmul.f32 %v1009, %v1093
      %v1106 = vmul.f32 %v1010, %v1094
      %v1107 = vmul.f32 %v1011, %v1095
      %v1108 = vmul.f32 %v1012, %v1096
      %v1109 = vmul.f32 %v1013, %v1097
      %v1110 = vmul.f32 %v1014, %v1098
      %v1111 = vpack.c.bf16 %v1103, %v1099
      %v1112 = vpack.c.bf16 %v1104, %v1100
      %v1113 = vpack.c.bf16 %v1105, %v1101
      %v1114 = vpack.c.bf16 %v1106, %v1102
      %v1115 = vpack.c.bf16 %v1107, %v1107
      %v1116 = vpack.c.bf16 %v1108, %v1108
      %v1117 = vpack.c.bf16 %v1109, %v1109
      %v1118 = vpack.c.bf16 %v1110, %v1110
      %v1119 = vld [vmem:[%s8] sm:$0xf]
      %v1120 = vld [vmem:[%s8 + $0x4] sm:$0xf]
      %v1121 = vld [vmem:[%s8 + $0x8] sm:$0xf]
      %v1122 = vld [vmem:[%s8 + $0xc] sm:$0xf]
      %v1123 = vld [vmem:[%s8 + $0x10] sm:$0xf]
      %v1124 = vld [vmem:[%s8 + $0x14] sm:$0xf]
      %v1125 = vld [vmem:[%s8 + $0x18] sm:$0xf]
      %v1126 = vld [vmem:[%s8 + $0x1c] sm:$0xf]
      %v1127 = vld [vmem:[%s8 + $0x20] sm:$0xf]
      %v1128 = vld [vmem:[%s8 + $0x24] sm:$0xf]
      %v1129 = vld [vmem:[%s8 + $0x28] sm:$0xf]
      %v1130 = vld [vmem:[%s8 + $0x2c] sm:$0xf]
      %v1131 = vld [vmem:[%s8 + $0x30] sm:$0xf]
      %v1132 = vld [vmem:[%s8 + $0x34] sm:$0xf]
      %v1133 = vld [vmem:[%s8 + $0x38] sm:$0xf]
      %v1134 = vld [vmem:[%s8 + $0x3c] sm:$0xf]
      %v1135 = vld [vmem:[%s8 + $0x40] sm:$0xf]
      %v1136 = vld [vmem:[%s8 + $0x44] sm:$0xf]
      %v1137 = vld [vmem:[%s8 + $0x48] sm:$0xf]
      %v1138 = vld [vmem:[%s8 + $0x4c] sm:$0xf]
      %v1139 = vld [vmem:[%s8 + $0x50] sm:$0xf]
      %v1140 = vld [vmem:[%s8 + $0x54] sm:$0xf]
      %v1141 = vld [vmem:[%s8 + $0x58] sm:$0xf]
      %v1142 = vld [vmem:[%s8 + $0x5c] sm:$0xf]
      %v1143 = vld [vmem:[%s8 + $0x60] sm:$0xf]
      %v1144 = vld [vmem:[%s8 + $0x64] sm:$0xf]
      %v1145 = vld [vmem:[%s8 + $0x68] sm:$0xf]
      %v1146 = vld [vmem:[%s8 + $0x6c] sm:$0xf]
      %v1147 = vld [vmem:[%s8 + $0x70] sm:$0xf]
      %v1148 = vld [vmem:[%s8 + $0x74] sm:$0xf]
      %v1149 = vld [vmem:[%s8 + $0x78] sm:$0xf]
      %v1150 = vld [vmem:[%s8 + $0x7c] sm:$0xf]
      %v1151 = vld [vmem:[%s8 + $0x80] sm:$0xf]
      %v1152 = vld [vmem:[%s8 + $0x84] sm:$0xf]
      %v1153 = vld [vmem:[%s8 + $0x88] sm:$0xf]
      %v1154 = vld [vmem:[%s8 + $0x8c] sm:$0xf]
      %v1155 = vld [vmem:[%s8 + $0x90] sm:$0xf]
      %v1156 = vld [vmem:[%s8 + $0x94] sm:$0xf]
      %v1157 = vld [vmem:[%s8 + $0x98] sm:$0xf]
      %v1158 = vld [vmem:[%s8 + $0x9c] sm:$0xf]
      %v1159 = vld [vmem:[%s8 + $0xa0] sm:$0xf]
      %v1160 = vld [vmem:[%s8 + $0xa4] sm:$0xf]
      %v1161 = vld [vmem:[%s8 + $0xa8] sm:$0xf]
      %v1162 = vld [vmem:[%s8 + $0xac] sm:$0xf]
      %v1163 = vld [vmem:[%s8 + $0xb0] sm:$0xf]
      %v1164 = vld [vmem:[%s8 + $0xb4] sm:$0xf]
      %v1165 = vld [vmem:[%s8 + $0xb8] sm:$0xf]
      %v1166 = vld [vmem:[%s8 + $0xbc] sm:$0xf]
      %v1167 = vld [vmem:[%s8 + $0xc0] sm:$0xf]
      %v1168 = vld [vmem:[%s8 + $0xc4] sm:$0xf]
      %v1169 = vld [vmem:[%s8 + $0xc8] sm:$0xf]
      %v1170 = vld [vmem:[%s8 + $0xcc] sm:$0xf]
      %v1171 = vld [vmem:[%s8 + $0xd0] sm:$0xf]
      %v1172 = vld [vmem:[%s8 + $0xd4] sm:$0xf]
      %v1173 = vld [vmem:[%s8 + $0xd8] sm:$0xf]
      %v1174 = vld [vmem:[%s8 + $0xdc] sm:$0xf]
      %v1175 = vld [vmem:[%s8 + $0xe0] sm:$0xf]
      %v1176 = vld [vmem:[%s8 + $0xe4] sm:$0xf]
      %v1177 = vld [vmem:[%s8 + $0xe8] sm:$0xf]
      %v1178 = vld [vmem:[%s8 + $0xec] sm:$0xf]
      %v1179 = vld [vmem:[%s8 + $0xf0] sm:$0xf]
      %v1180 = vld [vmem:[%s8 + $0xf4] sm:$0xf]
      %v1181 = vld [vmem:[%s8 + $0xf8] sm:$0xf]
      %v1182 = vld [vmem:[%s8 + $0xfc] sm:$0xf]
      %v1183 = vld [vmem:[%s9] sm:$0x1]
      %v1185 = vlaneseq
      %v1186 = vshrl.u32 %v1185, 7
      %v1187 = vsub.s32 0, %v1186
      %v1188 = vrot.slane %v1183, %v1187
      %v1254 = vunpack.c.l.b16 %v1119
      %v1255 = vunpack.c.l.b16 %v1120
      %v1256 = vunpack.c.l.b16 %v1121
      %v1257 = vunpack.c.l.b16 %v1122
      %v1258 = vunpack.c.l.b16 %v1123
      %v1259 = vunpack.c.l.b16 %v1124
      %v1260 = vunpack.c.l.b16 %v1125
      %v1261 = vunpack.c.l.b16 %v1126
      %v1262 = vunpack.c.l.b16 %v1127
      %v1263 = vunpack.c.l.b16 %v1128
      %v1264 = vunpack.c.l.b16 %v1129
      %v1265 = vunpack.c.l.b16 %v1130
      %v1266 = vunpack.c.l.b16 %v1131
      %v1267 = vunpack.c.l.b16 %v1132
      %v1268 = vunpack.c.l.b16 %v1133
      %v1269 = vunpack.c.l.b16 %v1134
      %v1270 = vunpack.c.l.b16 %v1135
      %v1271 = vunpack.c.l.b16 %v1136
      %v1272 = vunpack.c.l.b16 %v1137
      %v1273 = vunpack.c.l.b16 %v1138
      %v1274 = vunpack.c.l.b16 %v1139
      %v1275 = vunpack.c.l.b16 %v1140
      %v1276 = vunpack.c.l.b16 %v1141
      %v1277 = vunpack.c.l.b16 %v1142
      %v1278 = vunpack.c.l.b16 %v1143
      %v1279 = vunpack.c.l.b16 %v1144
      %v1280 = vunpack.c.l.b16 %v1145
      %v1281 = vunpack.c.l.b16 %v1146
      %v1282 = vunpack.c.l.b16 %v1147
      %v1283 = vunpack.c.l.b16 %v1148
      %v1284 = vunpack.c.l.b16 %v1149
      %v1285 = vunpack.c.l.b16 %v1150
      %v1286 = vunpack.c.l.b16 %v1151
      %v1287 = vunpack.c.l.b16 %v1152
      %v1288 = vunpack.c.l.b16 %v1153
      %v1289 = vunpack.c.l.b16 %v1154
      %v1290 = vunpack.c.l.b16 %v1155
      %v1291 = vunpack.c.l.b16 %v1156
      %v1292 = vunpack.c.l.b16 %v1157
      %v1293 = vunpack.c.l.b16 %v1158
      %v1294 = vunpack.c.l.b16 %v1159
      %v1295 = vunpack.c.l.b16 %v1160
      %v1296 = vunpack.c.l.b16 %v1161
      %v1297 = vunpack.c.l.b16 %v1162
      %v1298 = vunpack.c.l.b16 %v1163
      %v1299 = vunpack.c.l.b16 %v1164
      %v1300 = vunpack.c.l.b16 %v1165
      %v1301 = vunpack.c.l.b16 %v1166
      %v1302 = vunpack.c.l.b16 %v1167
      %v1303 = vunpack.c.l.b16 %v1168
      %v1304 = vunpack.c.l.b16 %v1169
      %v1305 = vunpack.c.l.b16 %v1170
      %v1306 = vunpack.c.l.b16 %v1171
      %v1307 = vunpack.c.l.b16 %v1172
      %v1308 = vunpack.c.l.b16 %v1173
      %v1309 = vunpack.c.l.b16 %v1174
      %v1310 = vunpack.c.l.b16 %v1175
      %v1311 = vunpack.c.l.b16 %v1176
      %v1312 = vunpack.c.l.b16 %v1177
      %v1313 = vunpack.c.l.b16 %v1178
      %v1314 = vunpack.c.l.b16 %v1179
      %v1315 = vunpack.c.l.b16 %v1180
      %v1316 = vunpack.c.l.b16 %v1181
      %v1317 = vunpack.c.l.b16 %v1182
      %v1318 = vpack.c.b16 %v1255, %v1254
      %v1319 = vpack.c.b16 %v1257, %v1256
      %v1320 = vpack.c.b16 %v1259, %v1258
      %v1321 = vpack.c.b16 %v1261, %v1260
      %v1322 = vpack.c.b16 %v1263, %v1262
      %v1323 = vpack.c.b16 %v1265, %v1264
      %v1324 = vpack.c.b16 %v1267, %v1266
      %v1325 = vpack.c.b16 %v1269, %v1268
      %v1326 = vpack.c.b16 %v1271, %v1270
      %v1327 = vpack.c.b16 %v1273, %v1272
      %v1328 = vpack.c.b16 %v1275, %v1274
      %v1329 = vpack.c.b16 %v1277, %v1276
      %v1330 = vpack.c.b16 %v1279, %v1278
      %v1331 = vpack.c.b16 %v1281, %v1280
      %v1332 = vpack.c.b16 %v1283, %v1282
      %v1333 = vpack.c.b16 %v1285, %v1284
      %v1334 = vpack.c.b16 %v1287, %v1286
      %v1335 = vpack.c.b16 %v1289, %v1288
      %v1336 = vpack.c.b16 %v1291, %v1290
      %v1337 = vpack.c.b16 %v1293, %v1292
      %v1338 = vpack.c.b16 %v1295, %v1294
      %v1339 = vpack.c.b16 %v1297, %v1296
      %v1340 = vpack.c.b16 %v1299, %v1298
      %v1341 = vpack.c.b16 %v1301, %v1300
      %v1342 = vpack.c.b16 %v1303, %v1302
      %v1343 = vpack.c.b16 %v1305, %v1304
      %v1344 = vpack.c.b16 %v1307, %v1306
      %v1345 = vpack.c.b16 %v1309, %v1308
      %v1346 = vpack.c.b16 %v1311, %v1310
      %v1347 = vpack.c.b16 %v1313, %v1312
      %v1348 = vpack.c.b16 %v1315, %v1314
      %v1349 = vpack.c.b16 %v1317, %v1316
      %1382 = vmatprep.subr.bf16.mxu0 0
      %1383 = vmatpush1.bf16.msra.mxu0 %v1318
      %1384 = vmatprep.subr.bf16.mxu0 0
      %1385 = vmatpush1.bf16.msra.mxu0 %v1319
      %1386 = vmatprep.subr.bf16.mxu0 0
      %1387 = vmatpush1.bf16.msra.mxu0 %v1320
      %1388 = vmatprep.subr.bf16.mxu0 0
      %1389 = vmatpush1.bf16.msra.mxu0 %v1321
      %1390 = vmatprep.subr.bf16.mxu0 0
      %1391 = vmatpush1.bf16.msra.mxu0 %v1322
      %1392 = vmatprep.subr.bf16.mxu0 0
      %1393 = vmatpush1.bf16.msra.mxu0 %v1323
      %1394 = vmatprep.subr.bf16.mxu0 0
      %1395 = vmatpush1.bf16.msra.mxu0 %v1324
      %1396 = vmatprep.subr.bf16.mxu0 0
      %1397 = vmatpush1.bf16.msra.mxu0 %v1325
      %1398 = vmatprep.subr.bf16.mxu0 0
      %1399 = vmatpush1.bf16.msra.mxu0 %v1326
      %1400 = vmatprep.subr.bf16.mxu0 0
      %1401 = vmatpush1.bf16.msra.mxu0 %v1327
      %1402 = vmatprep.subr.bf16.mxu0 0
      %1403 = vmatpush1.bf16.msra.mxu0 %v1328
      %1404 = vmatprep.subr.bf16.mxu0 0
      %1405 = vmatpush1.bf16.msra.mxu0 %v1329
      %1406 = vmatprep.subr.bf16.mxu0 0
      %1407 = vmatpush1.bf16.msra.mxu0 %v1330
      %1408 = vmatprep.subr.bf16.mxu0 0
      %1409 = vmatpush1.bf16.msra.mxu0 %v1331
      %1410 = vmatprep.subr.bf16.mxu0 0
      %1411 = vmatpush1.bf16.msra.mxu0 %v1332
      %1412 = vmatprep.subr.bf16.mxu0 0
      %1413 = vmatpush1.bf16.msra.mxu0 %v1333
      %1414 = vmatprep.mubr.bf16.mxu0 %v1112
      %1415 = vmatmul.mubr.bf16.gmra.mrb[0].mxu0 %v1111
      %v1416 = vpop.f32.mrb[0].mxu0
      %v1417 = vadd.f32 %v1188, %v1416
      %v1418 = vpop.f32.mrb[0].mxu0
      %v1419 = vpop.f32.mrb[0].mxu0
      %v1420 = vadd.f32 %v1188, %v1419
      %v1421 = vpop.f32.mrb[0].mxu0
      %1422 = vmatprep.mubr.bf16.mxu0 %v1116
      %1423 = vmatmul.mubr.bf16.gmra.mrb[0].mxu0 %v1115
      %v1424 = vpop.f32.mrb[0].mxu0
      %v1425 = vadd.f32 %v1188, %v1424
      %v1426 = vpop.f32.mrb[0].mxu0
      %v1427 = vpop.f32.mrb[0].mxu0
      %v1428 = vpop.f32.mrb[0].mxu0
      %1429 = vdwg.mxu0
      %1430 = vmatprep.subr.bf16.mxu0 0
      %1431 = vmatpush1.bf16.msra.mxu0 %v1334
      %1432 = vmatprep.subr.bf16.mxu0 0
      %1433 = vmatpush1.bf16.msra.mxu0 %v1335
      %1434 = vmatprep.subr.bf16.mxu0 0
      %1435 = vmatpush1.bf16.msra.mxu0 %v1336
      %1436 = vmatprep.subr.bf16.mxu0 0
      %1437 = vmatpush1.bf16.msra.mxu0 %v1337
      %1438 = vmatprep.subr.bf16.mxu0 0
      %1439 = vmatpush1.bf16.msra.mxu0 %v1338
      %1440 = vmatprep.subr.bf16.mxu0 0
      %1441 = vmatpush1.bf16.msra.mxu0 %v1339
      %1442 = vmatprep.subr.bf16.mxu0 0
      %1443 = vmatpush1.bf16.msra.mxu0 %v1340
      %1444 = vmatprep.subr.bf16.mxu0 0
      %1445 = vmatpush1.bf16.msra.mxu0 %v1341
      %1446 = vmatprep.subr.bf16.mxu0 0
      %1447 = vmatpush1.bf16.msra.mxu0 %v1342
      %1448 = vmatprep.subr.bf16.mxu0 0
      %1449 = vmatpush1.bf16.msra.mxu0 %v1343
      %1450 = vmatprep.subr.bf16.mxu0 0
      %1451 = vmatpush1.bf16.msra.mxu0 %v1344
      %1452 = vmatprep.subr.bf16.mxu0 0
      %1453 = vmatpush1.bf16.msra.mxu0 %v1345
      %1454 = vmatprep.subr.bf16.mxu0 0
      %1455 = vmatpush1.bf16.msra.mxu0 %v1346
      %1456 = vmatprep.subr.bf16.mxu0 0
      %1457 = vmatpush1.bf16.msra.mxu0 %v1347
      %1458 = vmatprep.subr.bf16.mxu0 0
      %1459 = vmatpush1.bf16.msra.mxu0 %v1348
      %1460 = vmatprep.subr.bf16.mxu0 0
      %1461 = vmatpush1.bf16.msra.mxu0 %v1349
      %1462 = vmatprep.mubr.bf16.mxu0 %v1114
      %1463 = vmatmul.mubr.bf16.gmra.mrb[0].mxu0 %v1113
      %v1464 = vpop.f32.mrb[0].mxu0
      %v1465 = vadd.f32 %v1417, %v1464
      %v1466 = vpop.f32.mrb[0].mxu0
      %v1467 = vpop.f32.mrb[0].mxu0
      %v1468 = vadd.f32 %v1420, %v1467
      %v1469 = vpop.f32.mrb[0].mxu0
      %1470 = vmatprep.mubr.bf16.mxu0 %v1118
      %1471 = vmatmul.mubr.bf16.gmra.mrb[0].mxu0 %v1117
      %v1472 = vpop.f32.mrb[0].mxu0
      %v1473 = vadd.f32 %v1425, %v1472
      %v1474 = vpop.f32.mrb[0].mxu0
      %v1475 = vpop.f32.mrb[0].mxu0
      %v1476 = vpop.f32.mrb[0].mxu0
      %1477 = vdwg.mxu0
      %v1478 = vadd.f32 %v625, %v1465
      %v1479 = vadd.f32 %v626, %v1468
      %v1480 = vadd.f32 %v627, %v1473
      %1481 = vst [vmem:[%s487] sm:$0xff] %v1478
      %1482 = vst [vmem:[%s487 + $0x8] sm:$0xff] %v1479
      %1483 = vst [vmem:[%s487 + $0x10] sm:$0x1] %v1480
      %s1484 = smul.u32 3, %s28
      %p1485 = scmp.lt.s32.totalorder %s27, 1
      %s1486 = scalar_select %p1485, %s27, 1
      %p1487 = scmp.lt.s32.totalorder %s1484, 2
      %s1488 = scalar_select %p1487, %s1484, 2
      %s1489 = smul.addr %s1486, 3
      %s1490 = sadd.s32 %s1488, %s1489
      %s1491 = smul.addr %s1490, 8
      %s1492 = scalar_lea.vmem %s12, %s1491
      // Predicated region
      $region69: #{dinov2_feature_extractor.10} parent=67 // pred_check
        %p1493 = pneg %p321
      $region70: #{dinov2_feature_extractor.10} parent=67 // pred_check_branch
        %1495 = sbr.rel (%p1493) target = $region72
      $region71: #{dinov2_feature_extractor.10} parent=67 // pred_region
        %s1496 = smul.u32 3, %s28
      $region72: #{dinov2_feature_extractor.10} parent=67 // pred_fallthru
        _
    $region68: #{dinov2_feature_extractor.10} parent=5 // pred_fallthru
      _
    %p1497 = scmp.le.s32.totalorder 2, %s18
    // Predicated region
    $region73: #{dinov2_feature_extractor.10} parent=5 // pred_check
      %p1498 = pneg %p1497
    $region74: #{dinov2_feature_extractor.10} parent=5 // pred_check_branch
      %1500 = sbr.rel (%p1498) target = $region76
    $region75: #{dinov2_feature_extractor.10} parent=5 // pred_region
      %s1501 = ssub.s32 %s18, 2
      // Predicated region
      $region77: #{dinov2_feature_extractor.10} parent=75 // pred_check
        %p1502 = pneg %p327
      $region78: #{dinov2_feature_extractor.10} parent=75 // pred_check_branch
        %1504 = sbr.rel (%p1502) target = $region80
      $region79: #{dinov2_feature_extractor.10} parent=75 // pred_region
        %s1505 = smul.u32 3, %s30
        %p1506 = scmp.lt.s32.totalorder %s29, 1
        %s1507 = scalar_select %p1506, %s29, 1
        %p1508 = scmp.lt.s32.totalorder %s1505, 2
        %s1509 = scalar_select %p1508, %s1505, 2
        %s1510 = smul.addr %s1507, 3
        %s1511 = sadd.s32 %s1509, %s1510
        %s1512 = smul.addr %s1511, 8
        %s1513 = scalar_lea.vmem %s12, %s1512
      $region80: #{dinov2_feature_extractor.10} parent=75 // pred_fallthru
        _
    $region76: #{dinov2_feature_extractor.10} parent=5 // pred_fallthru
      _
  $region6: #{dinov2_feature_extractor.10} parent=0 // loop_footer
    %s22 = sadd.s32 1, %s18
  $region7: #{dinov2_feature_extractor.10} parent=0 // loop_footer_branch
    %17 = sbr.rel target = $region3
  $region8: #{dinov2_feature_extractor.10} parent=0 // loop_exit
    _

</llo_original>
